<compile_context>
chip_gen: v5e
topology: v5e:2x2
jax: 0.10.0
libtpu: 0.0.40
codegen_flags: <defaults>
</compile_context>

<pallas_src>
import functools

import jax
import jax.numpy as jnp
from jax import lax
from jax.experimental import pallas as pl
from jax.experimental.pallas import tpu as pltpu


def _round_up(x, m):
    return (x + m - 1) // m * m


# ----------------------------------------------------------------------------
# Fused CBR kernel: GEMM + bias + BatchNorm(batch stats, two-pass) + LeakyReLU
# Single grid step; all operands resident in VMEM.
# ----------------------------------------------------------------------------
def cbr_fused_kernel(a_ref, w_ref, b_ref, g_ref, beta_ref, o_ref,
                     *, m_valid, neg_slope, eps):
    # im2col GEMM on the MXU: bf16 x bf16 -> f32 accumulate
    y = jnp.dot(a_ref[...], w_ref[...], preferred_element_type=jnp.float32)
    y = y + b_ref[...]

    mp = y.shape[0]
    if m_valid == mp:
        # Two-pass mean/variance (avoids E[y^2]-E[y]^2 cancellation).
        mean = jnp.mean(y, axis=0, keepdims=True)
        d = y - mean
        var = jnp.mean(d * d, axis=0, keepdims=True)
    else:
        # Rows >= m_valid are zero padding; mask them out of the statistics.
        row = lax.broadcasted_iota(jnp.int32, y.shape, 0)
        mask = (row < m_valid).astype(jnp.float32)
        inv_m = 1.0 / float(m_valid)
        mean = jnp.sum(y * mask, axis=0, keepdims=True) * inv_m
        d = (y - mean) * mask
        var = jnp.sum(d * d, axis=0, keepdims=True) * inv_m

    # BatchNorm affine (biased variance, eps=1e-5, training-mode batch stats)
    scale = g_ref[...] * lax.rsqrt(var + eps)
    shift = beta_ref[...] - mean * scale
    yn = y * scale + shift

    # LeakyReLU (nn.LeakyReLU() default negative_slope = 0.01)
    o_ref[...] = jnp.where(yn >= 0, yn, neg_slope * yn)


def fused_cbr_call(A, Wm, bias, gamma, beta, *, m_valid):
    Mp, Kp = A.shape
    Cout = Wm.shape[1]

    kern = functools.partial(
        cbr_fused_kernel, m_valid=m_valid, neg_slope=0.01, eps=1e-5)

    return pl.pallas_call(
        kern,
        out_shape=jax.ShapeDtypeStruct((Mp, Cout), jnp.float32),
        grid=(1,),
        in_specs=[
            pl.BlockSpec((Mp, Kp), lambda i: (0, 0)),
            pl.BlockSpec((Kp, Cout), lambda i: (0, 0)),
            pl.BlockSpec((1, Cout), lambda i: (0, 0)),
            pl.BlockSpec((1, Cout), lambda i: (0, 0)),
            pl.BlockSpec((1, Cout), lambda i: (0, 0)),
        ],
        out_specs=pl.BlockSpec((Mp, Cout), lambda i: (0, 0)),
        compiler_params=pltpu.CompilerParams(
            dimension_semantics=("arbitrary",)),
    )(A, Wm,
      bias.reshape(1, Cout).astype(jnp.float32),
      gamma.reshape(1, Cout).astype(jnp.float32),
      beta.reshape(1, Cout).astype(jnp.float32))


# ----------------------------------------------------------------------------
# CBR layer: Conv(4,2,1) -> BatchNorm2d (batch stats) -> LeakyReLU(0.01)
# ----------------------------------------------------------------------------
def cbr_layer(x, w, b, gamma, beta):
    # x: (N, H, W, Cin) float32 NHWC ; w: (4, 4, Cin, Cout)
    N, H, W, Cin = x.shape
    Cout = w.shape[-1]
    OH, OW = H // 2, W // 2

    # Pad Cin to a multiple of 8 so K = 16*Cin is a multiple of 128 (lane-dense
    # A loads; zero channels x zero weight rows -> no semantic change).
    cin_p = _round_up(Cin, 8)
    if cin_p != Cin:
        x = jnp.pad(x, ((0, 0), (0, 0), (0, 0), (0, cin_p - Cin)))
        w = jnp.pad(w, ((0, 0), (0, 0), (0, cin_p - Cin), (0, 0)))

    # bf16 GEMM inputs (f32 accumulation inside the kernel).
    xb = x.astype(jnp.bfloat16)
    wb = w.astype(jnp.bfloat16)

    # im2col (XLA glue): pad=1, kernel=4, stride=2.
    # TODO(synk): im2col is still materialized by XLA (~4x the raw activation,
    # in bf16); an in-kernel strided-slice im2col would remove this remaining
    # HBM expansion for scaled-up configs.
    xp = jnp.pad(xb, ((0, 0), (1, 1), (1, 1), (0, 0)))
    cols = [
        xp[:, kh: kh + 2 * OH: 2, kw: kw + 2 * OW: 2, :]
        for kh in range(4)
        for kw in range(4)
    ]
    patches = jnp.stack(cols, axis=3)          # (N, OH, OW, 16, cin_p)

    M = N * OH * OW
    K = 16 * cin_p
    A = patches.reshape(M, K)
    Wm = wb.reshape(K, Cout)                   # (kh, kw, ci) order matches patches

    Mp = _round_up(M, 8)
    if Mp != M:
        A = jnp.pad(A, ((0, Mp - M), (0, 0)))

    out = fused_cbr_call(A, Wm, b, gamma, beta, m_valid=M)
    if Mp != M:
        out = out[:M]
    return out.reshape(N, OH, OW, Cout)


# ----------------------------------------------------------------------------
# Full discriminator forward (NCHW in / NCHW out, like PyTorch)
# ----------------------------------------------------------------------------
@jax.jit
def discriminator_forward(x_nchw, params):
    x = jnp.transpose(x_nchw, (0, 2, 3, 1)).astype(jnp.float32)  # -> NHWC
    for (w, b, gamma, beta) in params[:-1]:
        x = cbr_layer(x, w, b, gamma, beta)

    # Final 1x1 conv (Cout=1): left to XLA on purpose — a pallas_call here is
    # pure launch overhead (output lanes 1/128, M=8).
    wf, bf = params[-1]
    N, H, W, Cin = x.shape
    y = x.reshape(N * H * W, Cin) @ wf.reshape(Cin, 1) + bf
    y = y.reshape(N, H, W, 1)
    return jnp.transpose(y, (0, 3, 1, 2))  # -> NCHW

    # TODO(synk): BatchNorm running_mean/running_var (momentum) updates are not
    # tracked; only forward (training-mode batch-stat) semantics are modeled.


# ----------------------------------------------------------------------------
# Deterministic synthetic parameter init (mirrors weights_init_normal shapes)
# ----------------------------------------------------------------------------
def init_params(key, base=8):
    chans = [3, base, base * 2, base * 4, base * 8, base * 16]
    params = []
    for i in range(5):
        key, kw = jax.random.split(key)
        w = 0.02 * jax.random.normal(kw, (4, 4, chans[i], chans[i + 1]), jnp.float32)
        b = jnp.zeros((chans[i + 1],), jnp.float32)
        key, kg = jax.random.split(key)
        gamma = 1.0 + 0.02 * jax.random.normal(kg, (chans[i + 1],), jnp.float32)
        beta = jnp.zeros((chans[i + 1],), jnp.float32)
        params.append((w, b, gamma, beta))
    key, kf = jax.random.split(key)
    wf = 0.02 * jax.random.normal(kf, (1, 1, chans[5], 1), jnp.float32)
    bf = jnp.zeros((1,), jnp.float32)
    params.append((wf, bf))
    return params


if __name__ == "__main__":
    key = jax.random.PRNGKey(0)
    key, kx = jax.random.split(key)

    # small but consistent shapes: batch=2, RGB input, 64x64 spatial, base=8
    base = 8
    x = jax.random.normal(kx, (2, 3, 64, 64), jnp.float32)  # NCHW, like PyTorch
    params = init_params(key, base=base)

    out = discriminator_forward(x, params)
    out = jax.block_until_ready(out)

    assert out.shape == (2, 1, 2, 2), out.shape
    assert out.dtype == jnp.float32
    assert bool(jnp.all(jnp.isfinite(out)))

    print("KERNEL_OK")
</pallas_src>

<mosaic_0001>
module attributes {stable_mosaic.version = 11 : i64} {
  func.func @cbr_fused_kernel(%arg0: i32, %arg1: memref<2048x128xbf16, #tpu.memory_space<vmem>>, %arg2: memref<128x8xbf16, #tpu.memory_space<vmem>>, %arg3: memref<1x8xf32, #tpu.memory_space<vmem>>, %arg4: memref<1x8xf32, #tpu.memory_space<vmem>>, %arg5: memref<1x8xf32, #tpu.memory_space<vmem>>, %arg6: memref<2048x8xf32, #tpu.memory_space<vmem>>) attributes {dimension_semantics = [#tpu.dimension_semantics<arbitrary>], iteration_bounds = array<i64: 1>, scalar_prefetch = 0 : i64, scratch_operands = 0 : i64, tpu.core_type = #tpu.core_type<tc>, window_params = [{pipeline_mode = #tpu.pipeline_mode<synchronous>, transform_indices = @transform_0, window_bounds = array<i64: 2048, 128>}, {pipeline_mode = #tpu.pipeline_mode<synchronous>, transform_indices = @transform_1, window_bounds = array<i64: 128, 8>}, {pipeline_mode = #tpu.pipeline_mode<synchronous>, transform_indices = @transform_2, window_bounds = array<i64: 1, 8>}, {pipeline_mode = #tpu.pipeline_mode<synchronous>, transform_indices = @transform_3, window_bounds = array<i64: 1, 8>}, {pipeline_mode = #tpu.pipeline_mode<synchronous>, transform_indices = @transform_4, window_bounds = array<i64: 1, 8>}, {pipeline_mode = #tpu.pipeline_mode<synchronous>, transform_indices = @transform_5, window_bounds = array<i64: 2048, 8>}]} {
    %c0 = arith.constant 0 : index
    %c0_0 = arith.constant 0 : index
    %0 = vector.load %arg1[%c0, %c0_0] : memref<2048x128xbf16, #tpu.memory_space<vmem>>, vector<2048x128xbf16>
    %c0_1 = arith.constant 0 : index
    %c0_2 = arith.constant 0 : index
    %1 = vector.load %arg2[%c0_1, %c0_2] : memref<128x8xbf16, #tpu.memory_space<vmem>>, vector<128x8xbf16>
    %cst = arith.constant dense<0.000000e+00> : vector<2048x8xf32>
    %2 = tpu.matmul %0, %1, %cst {dimension_numbers = #tpu.dot_dimension_numbers<[1], [0], [0], [1], [0, 0, 1, 1], [], []>} : vector<2048x128xbf16>, vector<128x8xbf16>, vector<2048x8xf32> -> vector<2048x8xf32>
    %c0_3 = arith.constant 0 : index
    %c0_4 = arith.constant 0 : index
    %3 = vector.load %arg3[%c0_3, %c0_4] : memref<1x8xf32, #tpu.memory_space<vmem>>, vector<1x8xf32>
    %4 = vector.broadcast %3 : vector<1x8xf32> to vector<2048x8xf32>
    %5 = arith.addf %2, %4 : vector<2048x8xf32>
    %cst_5 = arith.constant dense<0.000000e+00> : vector<8xf32>
    %6 = vector.multi_reduction <add>, %5, %cst_5 [0] : vector<2048x8xf32> to vector<8xf32>
    %7 = vector.shape_cast %6 : vector<8xf32> to vector<1x8xf32>
    %cst_6 = arith.constant 2.048000e+03 : f32
    %8 = vector.broadcast %cst_6 : f32 to vector<1x8xf32>
    %9 = arith.divf %7, %8 : vector<1x8xf32>
    %10 = vector.broadcast %9 : vector<1x8xf32> to vector<2048x8xf32>
    %11 = arith.subf %5, %10 : vector<2048x8xf32>
    %12 = arith.mulf %11, %11 : vector<2048x8xf32>
    %cst_7 = arith.constant dense<0.000000e+00> : vector<8xf32>
    %13 = vector.multi_reduction <add>, %12, %cst_7 [0] : vector<2048x8xf32> to vector<8xf32>
    %14 = vector.shape_cast %13 : vector<8xf32> to vector<1x8xf32>
    %cst_8 = arith.constant 2.048000e+03 : f32
    %15 = vector.broadcast %cst_8 : f32 to vector<1x8xf32>
    %16 = arith.divf %14, %15 : vector<1x8xf32>
    %c0_9 = arith.constant 0 : index
    %c0_10 = arith.constant 0 : index
    %17 = vector.load %arg4[%c0_9, %c0_10] : memref<1x8xf32, #tpu.memory_space<vmem>>, vector<1x8xf32>
    %cst_11 = arith.constant 9.99999974E-6 : f32
    %18 = vector.broadcast %cst_11 : f32 to vector<1x8xf32>
    %19 = arith.addf %16, %18 : vector<1x8xf32>
    %20 = math.rsqrt %19 : vector<1x8xf32>
    %21 = arith.mulf %17, %20 : vector<1x8xf32>
    %c0_12 = arith.constant 0 : index
    %c0_13 = arith.constant 0 : index
    %22 = vector.load %arg5[%c0_12, %c0_13] : memref<1x8xf32, #tpu.memory_space<vmem>>, vector<1x8xf32>
    %23 = arith.mulf %9, %21 : vector<1x8xf32>
    %24 = arith.subf %22, %23 : vector<1x8xf32>
    %25 = vector.broadcast %21 : vector<1x8xf32> to vector<2048x8xf32>
    %26 = arith.mulf %5, %25 : vector<2048x8xf32>
    %27 = vector.broadcast %24 : vector<1x8xf32> to vector<2048x8xf32>
    %28 = arith.addf %26, %27 : vector<2048x8xf32>
    %cst_14 = arith.constant 0.000000e+00 : f32
    %29 = vector.broadcast %cst_14 : f32 to vector<2048x8xf32>
    %30 = arith.cmpf oge, %28, %29 : vector<2048x8xf32>
    %cst_15 = arith.constant 0.00999999977 : f32
    %31 = vector.broadcast %cst_15 : f32 to vector<2048x8xf32>
    %32 = arith.mulf %31, %28 : vector<2048x8xf32>
    %33 = arith.select %30, %28, %32 : vector<2048x8xi1>, vector<2048x8xf32>
    %c0_16 = arith.constant 0 : index
    %c0_17 = arith.constant 0 : index
    %34 = vector.load %arg6[%c0_16, %c0_17] : memref<2048x8xf32, #tpu.memory_space<vmem>>, vector<2048x8xf32>
    tpu.vector_store %arg6[%c0_16, %c0_17], %33 {strides = array<i32>} : memref<2048x8xf32, #tpu.memory_space<vmem>>, vector<2048x8xf32>,
    return
  }
  func.func @transform_0(%arg0: i32) -> (i32, i32) {
    %c0_i32 = arith.constant 0 : i32
    %c0_i32_0 = arith.constant 0 : i32
    %c0_i32_1 = arith.constant 0 : i32
    return %c0_i32, %c0_i32_0 : i32, i32
  }
  func.func @transform_1(%arg0: i32) -> (i32, i32) {
    %c0_i32 = arith.constant 0 : i32
    %c0_i32_0 = arith.constant 0 : i32
    %c0_i32_1 = arith.constant 0 : i32
    return %c0_i32, %c0_i32_0 : i32, i32
  }
  func.func @transform_2(%arg0: i32) -> (i32, i32) {
    %c0_i32 = arith.constant 0 : i32
    %c0_i32_0 = arith.constant 0 : i32
    %c0_i32_1 = arith.constant 0 : i32
    return %c0_i32, %c0_i32_0 : i32, i32
  }
  func.func @transform_3(%arg0: i32) -> (i32, i32) {
    %c0_i32 = arith.constant 0 : i32
    %c0_i32_0 = arith.constant 0 : i32
    %c0_i32_1 = arith.constant 0 : i32
    return %c0_i32, %c0_i32_0 : i32, i32
  }
  func.func @transform_4(%arg0: i32) -> (i32, i32) {
    %c0_i32 = arith.constant 0 : i32
    %c0_i32_0 = arith.constant 0 : i32
    %c0_i32_1 = arith.constant 0 : i32
    return %c0_i32, %c0_i32_0 : i32, i32
  }
  func.func @transform_5(%arg0: i32) -> (i32, i32) {
    %c0_i32 = arith.constant 0 : i32
    %c0_i32_0 = arith.constant 0 : i32
    %c0_i32_1 = arith.constant 0 : i32
    return %c0_i32, %c0_i32_0 : i32, i32
  }
}

module attributes {stable_mosaic.version = 11 : i64} {
  func.func @cbr_fused_kernel(%arg0: i32, %arg1: memref<512x128xbf16, #tpu.memory_space<vmem>>, %arg2: memref<128x16xbf16, #tpu.memory_space<vmem>>, %arg3: memref<1x16xf32, #tpu.memory_space<vmem>>, %arg4: memref<1x16xf32, #tpu.memory_space<vmem>>, %arg5: memref<1x16xf32, #tpu.memory_space<vmem>>, %arg6: memref<512x16xf32, #tpu.memory_space<vmem>>) attributes {dimension_semantics = [#tpu.dimension_semantics<arbitrary>], iteration_bounds = array<i64: 1>, scalar_prefetch = 0 : i64, scratch_operands = 0 : i64, tpu.core_type = #tpu.core_type<tc>, window_params = [{pipeline_mode = #tpu.pipeline_mode<synchronous>, transform_indices = @transform_0, window_bounds = array<i64: 512, 128>}, {pipeline_mode = #tpu.pipeline_mode<synchronous>, transform_indices = @transform_1, window_bounds = array<i64: 128, 16>}, {pipeline_mode = #tpu.pipeline_mode<synchronous>, transform_indices = @transform_2, window_bounds = array<i64: 1, 16>}, {pipeline_mode = #tpu.pipeline_mode<synchronous>, transform_indices = @transform_3, window_bounds = array<i64: 1, 16>}, {pipeline_mode = #tpu.pipeline_mode<synchronous>, transform_indices = @transform_4, window_bounds = array<i64: 1, 16>}, {pipeline_mode = #tpu.pipeline_mode<synchronous>, transform_indices = @transform_5, window_bounds = array<i64: 512, 16>}]} {
    %c0 = arith.constant 0 : index
    %c0_0 = arith.constant 0 : index
    %0 = vector.load %arg1[%c0, %c0_0] : memref<512x128xbf16, #tpu.memory_space<vmem>>, vector<512x128xbf16>
    %c0_1 = arith.constant 0 : index
    %c0_2 = arith.constant 0 : index
    %1 = vector.load %arg2[%c0_1, %c0_2] : memref<128x16xbf16, #tpu.memory_space<vmem>>, vector<128x16xbf16>
    %cst = arith.constant dense<0.000000e+00> : vector<512x16xf32>
    %2 = tpu.matmul %0, %1, %cst {dimension_numbers = #tpu.dot_dimension_numbers<[1], [0], [0], [1], [0, 0, 1, 1], [], []>} : vector<512x128xbf16>, vector<128x16xbf16>, vector<512x16xf32> -> vector<512x16xf32>
    %c0_3 = arith.constant 0 : index
    %c0_4 = arith.constant 0 : index
    %3 = vector.load %arg3[%c0_3, %c0_4] : memref<1x16xf32, #tpu.memory_space<vmem>>, vector<1x16xf32>
    %4 = vector.broadcast %3 : vector<1x16xf32> to vector<512x16xf32>
    %5 = arith.addf %2, %4 : vector<512x16xf32>
    %cst_5 = arith.constant dense<0.000000e+00> : vector<16xf32>
    %6 = vector.multi_reduction <add>, %5, %cst_5 [0] : vector<512x16xf32> to vector<16xf32>
    %7 = vector.shape_cast %6 : vector<16xf32> to vector<1x16xf32>
    %cst_6 = arith.constant 5.120000e+02 : f32
    %8 = vector.broadcast %cst_6 : f32 to vector<1x16xf32>
    %9 = arith.divf %7, %8 : vector<1x16xf32>
    %10 = vector.broadcast %9 : vector<1x16xf32> to vector<512x16xf32>
    %11 = arith.subf %5, %10 : vector<512x16xf32>
    %12 = arith.mulf %11, %11 : vector<512x16xf32>
    %cst_7 = arith.constant dense<0.000000e+00> : vector<16xf32>
    %13 = vector.multi_reduction <add>, %12, %cst_7 [0] : vector<512x16xf32> to vector<16xf32>
    %14 = vector.shape_cast %13 : vector<16xf32> to vector<1x16xf32>
    %cst_8 = arith.constant 5.120000e+02 : f32
    %15 = vector.broadcast %cst_8 : f32 to vector<1x16xf32>
    %16 = arith.divf %14, %15 : vector<1x16xf32>
    %c0_9 = arith.constant 0 : index
    %c0_10 = arith.constant 0 : index
    %17 = vector.load %arg4[%c0_9, %c0_10] : memref<1x16xf32, #tpu.memory_space<vmem>>, vector<1x16xf32>
    %cst_11 = arith.constant 9.99999974E-6 : f32
    %18 = vector.broadcast %cst_11 : f32 to vector<1x16xf32>
    %19 = arith.addf %16, %18 : vector<1x16xf32>
    %20 = math.rsqrt %19 : vector<1x16xf32>
    %21 = arith.mulf %17, %20 : vector<1x16xf32>
    %c0_12 = arith.constant 0 : index
    %c0_13 = arith.constant 0 : index
    %22 = vector.load %arg5[%c0_12, %c0_13] : memref<1x16xf32, #tpu.memory_space<vmem>>, vector<1x16xf32>
    %23 = arith.mulf %9, %21 : vector<1x16xf32>
    %24 = arith.subf %22, %23 : vector<1x16xf32>
    %25 = vector.broadcast %21 : vector<1x16xf32> to vector<512x16xf32>
    %26 = arith.mulf %5, %25 : vector<512x16xf32>
    %27 = vector.broadcast %24 : vector<1x16xf32> to vector<512x16xf32>
    %28 = arith.addf %26, %27 : vector<512x16xf32>
    %cst_14 = arith.constant 0.000000e+00 : f32
    %29 = vector.broadcast %cst_14 : f32 to vector<512x16xf32>
    %30 = arith.cmpf oge, %28, %29 : vector<512x16xf32>
    %cst_15 = arith.constant 0.00999999977 : f32
    %31 = vector.broadcast %cst_15 : f32 to vector<512x16xf32>
    %32 = arith.mulf %31, %28 : vector<512x16xf32>
    %33 = arith.select %30, %28, %32 : vector<512x16xi1>, vector<512x16xf32>
    %c0_16 = arith.constant 0 : index
    %c0_17 = arith.constant 0 : index
    %34 = vector.load %arg6[%c0_16, %c0_17] : memref<512x16xf32, #tpu.memory_space<vmem>>, vector<512x16xf32>
    tpu.vector_store %arg6[%c0_16, %c0_17], %33 {strides = array<i32>} : memref<512x16xf32, #tpu.memory_space<vmem>>, vector<512x16xf32>,
    return
  }
  func.func @transform_0(%arg0: i32) -> (i32, i32) {
    %c0_i32 = arith.constant 0 : i32
    %c0_i32_0 = arith.constant 0 : i32
    %c0_i32_1 = arith.constant 0 : i32
    return %c0_i32, %c0_i32_0 : i32, i32
  }
  func.func @transform_1(%arg0: i32) -> (i32, i32) {
    %c0_i32 = arith.constant 0 : i32
    %c0_i32_0 = arith.constant 0 : i32
    %c0_i32_1 = arith.constant 0 : i32
    return %c0_i32, %c0_i32_0 : i32, i32
  }
  func.func @transform_2(%arg0: i32) -> (i32, i32) {
    %c0_i32 = arith.constant 0 : i32
    %c0_i32_0 = arith.constant 0 : i32
    %c0_i32_1 = arith.constant 0 : i32
    return %c0_i32, %c0_i32_0 : i32, i32
  }
  func.func @transform_3(%arg0: i32) -> (i32, i32) {
    %c0_i32 = arith.constant 0 : i32
    %c0_i32_0 = arith.constant 0 : i32
    %c0_i32_1 = arith.constant 0 : i32
    return %c0_i32, %c0_i32_0 : i32, i32
  }
  func.func @transform_4(%arg0: i32) -> (i32, i32) {
    %c0_i32 = arith.constant 0 : i32
    %c0_i32_0 = arith.constant 0 : i32
    %c0_i32_1 = arith.constant 0 : i32
    return %c0_i32, %c0_i32_0 : i32, i32
  }
  func.func @transform_5(%arg0: i32) -> (i32, i32) {
    %c0_i32 = arith.constant 0 : i32
    %c0_i32_0 = arith.constant 0 : i32
    %c0_i32_1 = arith.constant 0 : i32
    return %c0_i32, %c0_i32_0 : i32, i32
  }
}

module attributes {stable_mosaic.version = 11 : i64} {
  func.func @cbr_fused_kernel(%arg0: i32, %arg1: memref<128x256xbf16, #tpu.memory_space<vmem>>, %arg2: memref<256x32xbf16, #tpu.memory_space<vmem>>, %arg3: memref<1x32xf32, #tpu.memory_space<vmem>>, %arg4: memref<1x32xf32, #tpu.memory_space<vmem>>, %arg5: memref<1x32xf32, #tpu.memory_space<vmem>>, %arg6: memref<128x32xf32, #tpu.memory_space<vmem>>) attributes {dimension_semantics = [#tpu.dimension_semantics<arbitrary>], iteration_bounds = array<i64: 1>, scalar_prefetch = 0 : i64, scratch_operands = 0 : i64, tpu.core_type = #tpu.core_type<tc>, window_params = [{pipeline_mode = #tpu.pipeline_mode<synchronous>, transform_indices = @transform_0, window_bounds = array<i64: 128, 256>}, {pipeline_mode = #tpu.pipeline_mode<synchronous>, transform_indices = @transform_1, window_bounds = array<i64: 256, 32>}, {pipeline_mode = #tpu.pipeline_mode<synchronous>, transform_indices = @transform_2, window_bounds = array<i64: 1, 32>}, {pipeline_mode = #tpu.pipeline_mode<synchronous>, transform_indices = @transform_3, window_bounds = array<i64: 1, 32>}, {pipeline_mode = #tpu.pipeline_mode<synchronous>, transform_indices = @transform_4, window_bounds = array<i64: 1, 32>}, {pipeline_mode = #tpu.pipeline_mode<synchronous>, transform_indices = @transform_5, window_bounds = array<i64: 128, 32>}]} {
    %c0 = arith.constant 0 : index
    %c0_0 = arith.constant 0 : index
    %0 = vector.load %arg1[%c0, %c0_0] : memref<128x256xbf16, #tpu.memory_space<vmem>>, vector<128x256xbf16>
    %c0_1 = arith.constant 0 : index
    %c0_2 = arith.constant 0 : index
    %1 = vector.load %arg2[%c0_1, %c0_2] : memref<256x32xbf16, #tpu.memory_space<vmem>>, vector<256x32xbf16>
    %cst = arith.constant dense<0.000000e+00> : vector<128x32xf32>
    %2 = tpu.matmul %0, %1, %cst {dimension_numbers = #tpu.dot_dimension_numbers<[1], [0], [0], [1], [0, 0, 1, 1], [], []>} : vector<128x256xbf16>, vector<256x32xbf16>, vector<128x32xf32> -> vector<128x32xf32>
    %c0_3 = arith.constant 0 : index
    %c0_4 = arith.constant 0 : index
    %3 = vector.load %arg3[%c0_3, %c0_4] : memref<1x32xf32, #tpu.memory_space<vmem>>, vector<1x32xf32>
    %4 = vector.broadcast %3 : vector<1x32xf32> to vector<128x32xf32>
    %5 = arith.addf %2, %4 : vector<128x32xf32>
    %cst_5 = arith.constant dense<0.000000e+00> : vector<32xf32>
    %6 = vector.multi_reduction <add>, %5, %cst_5 [0] : vector<128x32xf32> to vector<32xf32>
    %7 = vector.shape_cast %6 : vector<32xf32> to vector<1x32xf32>
    %cst_6 = arith.constant 1.280000e+02 : f32
    %8 = vector.broadcast %cst_6 : f32 to vector<1x32xf32>
    %9 = arith.divf %7, %8 : vector<1x32xf32>
    %10 = vector.broadcast %9 : vector<1x32xf32> to vector<128x32xf32>
    %11 = arith.subf %5, %10 : vector<128x32xf32>
    %12 = arith.mulf %11, %11 : vector<128x32xf32>
    %cst_7 = arith.constant dense<0.000000e+00> : vector<32xf32>
    %13 = vector.multi_reduction <add>, %12, %cst_7 [0] : vector<128x32xf32> to vector<32xf32>
    %14 = vector.shape_cast %13 : vector<32xf32> to vector<1x32xf32>
    %cst_8 = arith.constant 1.280000e+02 : f32
    %15 = vector.broadcast %cst_8 : f32 to vector<1x32xf32>
    %16 = arith.divf %14, %15 : vector<1x32xf32>
    %c0_9 = arith.constant 0 : index
    %c0_10 = arith.constant 0 : index
    %17 = vector.load %arg4[%c0_9, %c0_10] : memref<1x32xf32, #tpu.memory_space<vmem>>, vector<1x32xf32>
    %cst_11 = arith.constant 9.99999974E-6 : f32
    %18 = vector.broadcast %cst_11 : f32 to vector<1x32xf32>
    %19 = arith.addf %16, %18 : vector<1x32xf32>
    %20 = math.rsqrt %19 : vector<1x32xf32>
    %21 = arith.mulf %17, %20 : vector<1x32xf32>
    %c0_12 = arith.constant 0 : index
    %c0_13 = arith.constant 0 : index
    %22 = vector.load %arg5[%c0_12, %c0_13] : memref<1x32xf32, #tpu.memory_space<vmem>>, vector<1x32xf32>
    %23 = arith.mulf %9, %21 : vector<1x32xf32>
    %24 = arith.subf %22, %23 : vector<1x32xf32>
    %25 = vector.broadcast %21 : vector<1x32xf32> to vector<128x32xf32>
    %26 = arith.mulf %5, %25 : vector<128x32xf32>
    %27 = vector.broadcast %24 : vector<1x32xf32> to vector<128x32xf32>
    %28 = arith.addf %26, %27 : vector<128x32xf32>
    %cst_14 = arith.constant 0.000000e+00 : f32
    %29 = vector.broadcast %cst_14 : f32 to vector<128x32xf32>
    %30 = arith.cmpf oge, %28, %29 : vector<128x32xf32>
    %cst_15 = arith.constant 0.00999999977 : f32
    %31 = vector.broadcast %cst_15 : f32 to vector<128x32xf32>
    %32 = arith.mulf %31, %28 : vector<128x32xf32>
    %33 = arith.select %30, %28, %32 : vector<128x32xi1>, vector<128x32xf32>
    %c0_16 = arith.constant 0 : index
    %c0_17 = arith.constant 0 : index
    %34 = vector.load %arg6[%c0_16, %c0_17] : memref<128x32xf32, #tpu.memory_space<vmem>>, vector<128x32xf32>
    tpu.vector_store %arg6[%c0_16, %c0_17], %33 {strides = array<i32>} : memref<128x32xf32, #tpu.memory_space<vmem>>, vector<128x32xf32>,
    return
  }
  func.func @transform_0(%arg0: i32) -> (i32, i32) {
    %c0_i32 = arith.constant 0 : i32
    %c0_i32_0 = arith.constant 0 : i32
    %c0_i32_1 = arith.constant 0 : i32
    return %c0_i32, %c0_i32_0 : i32, i32
  }
  func.func @transform_1(%arg0: i32) -> (i32, i32) {
    %c0_i32 = arith.constant 0 : i32
    %c0_i32_0 = arith.constant 0 : i32
    %c0_i32_1 = arith.constant 0 : i32
    return %c0_i32, %c0_i32_0 : i32, i32
  }
  func.func @transform_2(%arg0: i32) -> (i32, i32) {
    %c0_i32 = arith.constant 0 : i32
    %c0_i32_0 = arith.constant 0 : i32
    %c0_i32_1 = arith.constant 0 : i32
    return %c0_i32, %c0_i32_0 : i32, i32
  }
  func.func @transform_3(%arg0: i32) -> (i32, i32) {
    %c0_i32 = arith.constant 0 : i32
    %c0_i32_0 = arith.constant 0 : i32
    %c0_i32_1 = arith.constant 0 : i32
    return %c0_i32, %c0_i32_0 : i32, i32
  }
  func.func @transform_4(%arg0: i32) -> (i32, i32) {
    %c0_i32 = arith.constant 0 : i32
    %c0_i32_0 = arith.constant 0 : i32
    %c0_i32_1 = arith.constant 0 : i32
    return %c0_i32, %c0_i32_0 : i32, i32
  }
  func.func @transform_5(%arg0: i32) -> (i32, i32) {
    %c0_i32 = arith.constant 0 : i32
    %c0_i32_0 = arith.constant 0 : i32
    %c0_i32_1 = arith.constant 0 : i32
    return %c0_i32, %c0_i32_0 : i32, i32
  }
}

module attributes {stable_mosaic.version = 11 : i64} {
  func.func @cbr_fused_kernel(%arg0: i32, %arg1: memref<32x512xbf16, #tpu.memory_space<vmem>>, %arg2: memref<512x64xbf16, #tpu.memory_space<vmem>>, %arg3: memref<1x64xf32, #tpu.memory_space<vmem>>, %arg4: memref<1x64xf32, #tpu.memory_space<vmem>>, %arg5: memref<1x64xf32, #tpu.memory_space<vmem>>, %arg6: memref<32x64xf32, #tpu.memory_space<vmem>>) attributes {dimension_semantics = [#tpu.dimension_semantics<arbitrary>], iteration_bounds = array<i64: 1>, scalar_prefetch = 0 : i64, scratch_operands = 0 : i64, tpu.core_type = #tpu.core_type<tc>, window_params = [{pipeline_mode = #tpu.pipeline_mode<synchronous>, transform_indices = @transform_0, window_bounds = array<i64: 32, 512>}, {pipeline_mode = #tpu.pipeline_mode<synchronous>, transform_indices = @transform_1, window_bounds = array<i64: 512, 64>}, {pipeline_mode = #tpu.pipeline_mode<synchronous>, transform_indices = @transform_2, window_bounds = array<i64: 1, 64>}, {pipeline_mode = #tpu.pipeline_mode<synchronous>, transform_indices = @transform_3, window_bounds = array<i64: 1, 64>}, {pipeline_mode = #tpu.pipeline_mode<synchronous>, transform_indices = @transform_4, window_bounds = array<i64: 1, 64>}, {pipeline_mode = #tpu.pipeline_mode<synchronous>, transform_indices = @transform_5, window_bounds = array<i64: 32, 64>}]} {
    %c0 = arith.constant 0 : index
    %c0_0 = arith.constant 0 : index
    %0 = vector.load %arg1[%c0, %c0_0] : memref<32x512xbf16, #tpu.memory_space<vmem>>, vector<32x512xbf16>
    %c0_1 = arith.constant 0 : index
    %c0_2 = arith.constant 0 : index
    %1 = vector.load %arg2[%c0_1, %c0_2] : memref<512x64xbf16, #tpu.memory_space<vmem>>, vector<512x64xbf16>
    %cst = arith.constant dense<0.000000e+00> : vector<32x64xf32>
    %2 = tpu.matmul %0, %1, %cst {dimension_numbers = #tpu.dot_dimension_numbers<[1], [0], [0], [1], [0, 0, 1, 1], [], []>} : vector<32x512xbf16>, vector<512x64xbf16>, vector<32x64xf32> -> vector<32x64xf32>
    %c0_3 = arith.constant 0 : index
    %c0_4 = arith.constant 0 : index
    %3 = vector.load %arg3[%c0_3, %c0_4] : memref<1x64xf32, #tpu.memory_space<vmem>>, vector<1x64xf32>
    %4 = vector.broadcast %3 : vector<1x64xf32> to vector<32x64xf32>
    %5 = arith.addf %2, %4 : vector<32x64xf32>
    %cst_5 = arith.constant dense<0.000000e+00> : vector<64xf32>
    %6 = vector.multi_reduction <add>, %5, %cst_5 [0] : vector<32x64xf32> to vector<64xf32>
    %7 = vector.shape_cast %6 : vector<64xf32> to vector<1x64xf32>
    %cst_6 = arith.constant 3.200000e+01 : f32
    %8 = vector.broadcast %cst_6 : f32 to vector<1x64xf32>
    %9 = arith.divf %7, %8 : vector<1x64xf32>
    %10 = vector.broadcast %9 : vector<1x64xf32> to vector<32x64xf32>
    %11 = arith.subf %5, %10 : vector<32x64xf32>
    %12 = arith.mulf %11, %11 : vector<32x64xf32>
    %cst_7 = arith.constant dense<0.000000e+00> : vector<64xf32>
    %13 = vector.multi_reduction <add>, %12, %cst_7 [0] : vector<32x64xf32> to vector<64xf32>
    %14 = vector.shape_cast %13 : vector<64xf32> to vector<1x64xf32>
    %cst_8 = arith.constant 3.200000e+01 : f32
    %15 = vector.broadcast %cst_8 : f32 to vector<1x64xf32>
    %16 = arith.divf %14, %15 : vector<1x64xf32>
    %c0_9 = arith.constant 0 : index
    %c0_10 = arith.constant 0 : index
    %17 = vector.load %arg4[%c0_9, %c0_10] : memref<1x64xf32, #tpu.memory_space<vmem>>, vector<1x64xf32>
    %cst_11 = arith.constant 9.99999974E-6 : f32
    %18 = vector.broadcast %cst_11 : f32 to vector<1x64xf32>
    %19 = arith.addf %16, %18 : vector<1x64xf32>
    %20 = math.rsqrt %19 : vector<1x64xf32>
    %21 = arith.mulf %17, %20 : vector<1x64xf32>
    %c0_12 = arith.constant 0 : index
    %c0_13 = arith.constant 0 : index
    %22 = vector.load %arg5[%c0_12, %c0_13] : memref<1x64xf32, #tpu.memory_space<vmem>>, vector<1x64xf32>
    %23 = arith.mulf %9, %21 : vector<1x64xf32>
    %24 = arith.subf %22, %23 : vector<1x64xf32>
    %25 = vector.broadcast %21 : vector<1x64xf32> to vector<32x64xf32>
    %26 = arith.mulf %5, %25 : vector<32x64xf32>
    %27 = vector.broadcast %24 : vector<1x64xf32> to vector<32x64xf32>
    %28 = arith.addf %26, %27 : vector<32x64xf32>
    %cst_14 = arith.constant 0.000000e+00 : f32
    %29 = vector.broadcast %cst_14 : f32 to vector<32x64xf32>
    %30 = arith.cmpf oge, %28, %29 : vector<32x64xf32>
    %cst_15 = arith.constant 0.00999999977 : f32
    %31 = vector.broadcast %cst_15 : f32 to vector<32x64xf32>
    %32 = arith.mulf %31, %28 : vector<32x64xf32>
    %33 = arith.select %30, %28, %32 : vector<32x64xi1>, vector<32x64xf32>
    %c0_16 = arith.constant 0 : index
    %c0_17 = arith.constant 0 : index
    %34 = vector.load %arg6[%c0_16, %c0_17] : memref<32x64xf32, #tpu.memory_space<vmem>>, vector<32x64xf32>
    tpu.vector_store %arg6[%c0_16, %c0_17], %33 {strides = array<i32>} : memref<32x64xf32, #tpu.memory_space<vmem>>, vector<32x64xf32>,
    return
  }
  func.func @transform_0(%arg0: i32) -> (i32, i32) {
    %c0_i32 = arith.constant 0 : i32
    %c0_i32_0 = arith.constant 0 : i32
    %c0_i32_1 = arith.constant 0 : i32
    return %c0_i32, %c0_i32_0 : i32, i32
  }
  func.func @transform_1(%arg0: i32) -> (i32, i32) {
    %c0_i32 = arith.constant 0 : i32
    %c0_i32_0 = arith.constant 0 : i32
    %c0_i32_1 = arith.constant 0 : i32
    return %c0_i32, %c0_i32_0 : i32, i32
  }
  func.func @transform_2(%arg0: i32) -> (i32, i32) {
    %c0_i32 = arith.constant 0 : i32
    %c0_i32_0 = arith.constant 0 : i32
    %c0_i32_1 = arith.constant 0 : i32
    return %c0_i32, %c0_i32_0 : i32, i32
  }
  func.func @transform_3(%arg0: i32) -> (i32, i32) {
    %c0_i32 = arith.constant 0 : i32
    %c0_i32_0 = arith.constant 0 : i32
    %c0_i32_1 = arith.constant 0 : i32
    return %c0_i32, %c0_i32_0 : i32, i32
  }
  func.func @transform_4(%arg0: i32) -> (i32, i32) {
    %c0_i32 = arith.constant 0 : i32
    %c0_i32_0 = arith.constant 0 : i32
    %c0_i32_1 = arith.constant 0 : i32
    return %c0_i32, %c0_i32_0 : i32, i32
  }
  func.func @transform_5(%arg0: i32) -> (i32, i32) {
    %c0_i32 = arith.constant 0 : i32
    %c0_i32_0 = arith.constant 0 : i32
    %c0_i32_1 = arith.constant 0 : i32
    return %c0_i32, %c0_i32_0 : i32, i32
  }
}

module attributes {stable_mosaic.version = 11 : i64} {
  func.func @cbr_fused_kernel(%arg0: i32, %arg1: memref<8x1024xbf16, #tpu.memory_space<vmem>>, %arg2: memref<1024x128xbf16, #tpu.memory_space<vmem>>, %arg3: memref<1x128xf32, #tpu.memory_space<vmem>>, %arg4: memref<1x128xf32, #tpu.memory_space<vmem>>, %arg5: memref<1x128xf32, #tpu.memory_space<vmem>>, %arg6: memref<8x128xf32, #tpu.memory_space<vmem>>) attributes {dimension_semantics = [#tpu.dimension_semantics<arbitrary>], iteration_bounds = array<i64: 1>, scalar_prefetch = 0 : i64, scratch_operands = 0 : i64, tpu.core_type = #tpu.core_type<tc>, window_params = [{pipeline_mode = #tpu.pipeline_mode<synchronous>, transform_indices = @transform_0, window_bounds = array<i64: 8, 1024>}, {pipeline_mode = #tpu.pipeline_mode<synchronous>, transform_indices = @transform_1, window_bounds = array<i64: 1024, 128>}, {pipeline_mode = #tpu.pipeline_mode<synchronous>, transform_indices = @transform_2, window_bounds = array<i64: 1, 128>}, {pipeline_mode = #tpu.pipeline_mode<synchronous>, transform_indices = @transform_3, window_bounds = array<i64: 1, 128>}, {pipeline_mode = #tpu.pipeline_mode<synchronous>, transform_indices = @transform_4, window_bounds = array<i64: 1, 128>}, {pipeline_mode = #tpu.pipeline_mode<synchronous>, transform_indices = @transform_5, window_bounds = array<i64: 8, 128>}]} {
    %c0 = arith.constant 0 : index
    %c0_0 = arith.constant 0 : index
    %0 = vector.load %arg1[%c0, %c0_0] : memref<8x1024xbf16, #tpu.memory_space<vmem>>, vector<8x1024xbf16>
    %c0_1 = arith.constant 0 : index
    %c0_2 = arith.constant 0 : index
    %1 = vector.load %arg2[%c0_1, %c0_2] : memref<1024x128xbf16, #tpu.memory_space<vmem>>, vector<1024x128xbf16>
    %cst = arith.constant dense<0.000000e+00> : vector<8x128xf32>
    %2 = tpu.matmul %0, %1, %cst {dimension_numbers = #tpu.dot_dimension_numbers<[1], [0], [0], [1], [0, 0, 1, 1], [], []>} : vector<8x1024xbf16>, vector<1024x128xbf16>, vector<8x128xf32> -> vector<8x128xf32>
    %c0_3 = arith.constant 0 : index
    %c0_4 = arith.constant 0 : index
    %3 = vector.load %arg3[%c0_3, %c0_4] : memref<1x128xf32, #tpu.memory_space<vmem>>, vector<1x128xf32>
    %4 = vector.broadcast %3 : vector<1x128xf32> to vector<8x128xf32>
    %5 = arith.addf %2, %4 : vector<8x128xf32>
    %cst_5 = arith.constant dense<0.000000e+00> : vector<128xf32>
    %6 = vector.multi_reduction <add>, %5, %cst_5 [0] : vector<8x128xf32> to vector<128xf32>
    %7 = vector.shape_cast %6 : vector<128xf32> to vector<1x128xf32>
    %cst_6 = arith.constant 8.000000e+00 : f32
    %8 = vector.broadcast %cst_6 : f32 to vector<1x128xf32>
    %9 = arith.divf %7, %8 : vector<1x128xf32>
    %10 = vector.broadcast %9 : vector<1x128xf32> to vector<8x128xf32>
    %11 = arith.subf %5, %10 : vector<8x128xf32>
    %12 = arith.mulf %11, %11 : vector<8x128xf32>
    %cst_7 = arith.constant dense<0.000000e+00> : vector<128xf32>
    %13 = vector.multi_reduction <add>, %12, %cst_7 [0] : vector<8x128xf32> to vector<128xf32>
    %14 = vector.shape_cast %13 : vector<128xf32> to vector<1x128xf32>
    %cst_8 = arith.constant 8.000000e+00 : f32
    %15 = vector.broadcast %cst_8 : f32 to vector<1x128xf32>
    %16 = arith.divf %14, %15 : vector<1x128xf32>
    %c0_9 = arith.constant 0 : index
    %c0_10 = arith.constant 0 : index
    %17 = vector.load %arg4[%c0_9, %c0_10] : memref<1x128xf32, #tpu.memory_space<vmem>>, vector<1x128xf32>
    %cst_11 = arith.constant 9.99999974E-6 : f32
    %18 = vector.broadcast %cst_11 : f32 to vector<1x128xf32>
    %19 = arith.addf %16, %18 : vector<1x128xf32>
    %20 = math.rsqrt %19 : vector<1x128xf32>
    %21 = arith.mulf %17, %20 : vector<1x128xf32>
    %c0_12 = arith.constant 0 : index
    %c0_13 = arith.constant 0 : index
    %22 = vector.load %arg5[%c0_12, %c0_13] : memref<1x128xf32, #tpu.memory_space<vmem>>, vector<1x128xf32>
    %23 = arith.mulf %9, %21 : vector<1x128xf32>
    %24 = arith.subf %22, %23 : vector<1x128xf32>
    %25 = vector.broadcast %21 : vector<1x128xf32> to vector<8x128xf32>
    %26 = arith.mulf %5, %25 : vector<8x128xf32>
    %27 = vector.broadcast %24 : vector<1x128xf32> to vector<8x128xf32>
    %28 = arith.addf %26, %27 : vector<8x128xf32>
    %cst_14 = arith.constant 0.000000e+00 : f32
    %29 = vector.broadcast %cst_14 : f32 to vector<8x128xf32>
    %30 = arith.cmpf oge, %28, %29 : vector<8x128xf32>
    %cst_15 = arith.constant 0.00999999977 : f32
    %31 = vector.broadcast %cst_15 : f32 to vector<8x128xf32>
    %32 = arith.mulf %31, %28 : vector<8x128xf32>
    %33 = arith.select %30, %28, %32 : vector<8x128xi1>, vector<8x128xf32>
    %c0_16 = arith.constant 0 : index
    %c0_17 = arith.constant 0 : index
    %34 = vector.load %arg6[%c0_16, %c0_17] : memref<8x128xf32, #tpu.memory_space<vmem>>, vector<8x128xf32>
    tpu.vector_store %arg6[%c0_16, %c0_17], %33 {strides = array<i32>} : memref<8x128xf32, #tpu.memory_space<vmem>>, vector<8x128xf32>,
    return
  }
  func.func @transform_0(%arg0: i32) -> (i32, i32) {
    %c0_i32 = arith.constant 0 : i32
    %c0_i32_0 = arith.constant 0 : i32
    %c0_i32_1 = arith.constant 0 : i32
    return %c0_i32, %c0_i32_0 : i32, i32
  }
  func.func @transform_1(%arg0: i32) -> (i32, i32) {
    %c0_i32 = arith.constant 0 : i32
    %c0_i32_0 = arith.constant 0 : i32
    %c0_i32_1 = arith.constant 0 : i32
    return %c0_i32, %c0_i32_0 : i32, i32
  }
  func.func @transform_2(%arg0: i32) -> (i32, i32) {
    %c0_i32 = arith.constant 0 : i32
    %c0_i32_0 = arith.constant 0 : i32
    %c0_i32_1 = arith.constant 0 : i32
    return %c0_i32, %c0_i32_0 : i32, i32
  }
  func.func @transform_3(%arg0: i32) -> (i32, i32) {
    %c0_i32 = arith.constant 0 : i32
    %c0_i32_0 = arith.constant 0 : i32
    %c0_i32_1 = arith.constant 0 : i32
    return %c0_i32, %c0_i32_0 : i32, i32
  }
  func.func @transform_4(%arg0: i32) -> (i32, i32) {
    %c0_i32 = arith.constant 0 : i32
    %c0_i32_0 = arith.constant 0 : i32
    %c0_i32_1 = arith.constant 0 : i32
    return %c0_i32, %c0_i32_0 : i32, i32
  }
  func.func @transform_5(%arg0: i32) -> (i32, i32) {
    %c0_i32 = arith.constant 0 : i32
    %c0_i32_0 = arith.constant 0 : i32
    %c0_i32_1 = arith.constant 0 : i32
    return %c0_i32, %c0_i32_0 : i32, i32
  }
}

</mosaic_0001>

<llo_original>
// kernel: discriminator_forward.5
$region0: #{discriminator_forward.5}
  #allocation0 [shape = 'u32[]', space=smem, size = 0x4, offset = 0x4, fixed_abs, tag = 'smem constant byte address 0x4 - core index']
  #allocation1 [shape = 'u32[72,128]{1,0:T(1,128)}', space=vmem, size = 0x9000, scoped, tag = 'internal scratch']
  %s0 = inlined_call_operand.vmem [shape: bf16[2048,128], index: 0, kind: input, shape index: {}]
  %s1 = inlined_call_operand.vmem [shape: bf16[128,8], index: 1, kind: input, shape index: {}]
  %s2 = inlined_call_operand.vmem [shape: f32[1,8], index: 2, kind: input, shape index: {}]
  %s3 = inlined_call_operand.vmem [shape: f32[1,8], index: 3, kind: input, shape index: {}]
  %s4 = inlined_call_operand.vmem [shape: f32[1,8], index: 4, kind: input, shape index: {}]
  %s5 = inlined_call_operand.vmem [shape: f32[2048,8], index: 5, kind: output, shape index: {}]
  %s6 = sld [smem:[#allocation0]]
  $region30: #{discriminator_forward.5} parent=0
    _
  %s8 = ssub.s32 1, %s6
  %s9 = scalar_select 0, %s8, %s6
  // Predicated region
  $region2: #{discriminator_forward.5} parent=0 // pred_check
    _
  $region3: #{discriminator_forward.5} parent=0 // pred_check_branch
    %11 = sbr.rel (0) target = $region5
  $region4: #{discriminator_forward.5} parent=0 // pred_region
    _
  $region5: #{discriminator_forward.5} parent=0 // pred_fallthru
    _
  // Predicated region
  $region6: #{discriminator_forward.5} parent=0 // pred_check
    _
  $region7: #{discriminator_forward.5} parent=0 // pred_check_branch
    %13 = sbr.rel (0) target = $region9
  $region8: #{discriminator_forward.5} parent=0 // pred_region
    _
  $region9: #{discriminator_forward.5} parent=0 // pred_fallthru
    _
  // Predicated region
  $region10: #{discriminator_forward.5} parent=0 // pred_check
    _
  $region11: #{discriminator_forward.5} parent=0 // pred_check_branch
    %15 = sbr.rel (0) target = $region13
  $region12: #{discriminator_forward.5} parent=0 // pred_region
    _
  $region13: #{discriminator_forward.5} parent=0 // pred_fallthru
    _
  // Predicated region
  $region14: #{discriminator_forward.5} parent=0 // pred_check
    _
  $region15: #{discriminator_forward.5} parent=0 // pred_check_branch
    %17 = sbr.rel (0) target = $region17
  $region16: #{discriminator_forward.5} parent=0 // pred_region
    _
  $region17: #{discriminator_forward.5} parent=0 // pred_fallthru
    _
  // Predicated region
  $region18: #{discriminator_forward.5} parent=0 // pred_check
    _
  $region19: #{discriminator_forward.5} parent=0 // pred_check_branch
    %19 = sbr.rel (0) target = $region21
  $region20: #{discriminator_forward.5} parent=0 // pred_region
    _
  $region21: #{discriminator_forward.5} parent=0 // pred_fallthru
    _
  %v20 = vld [vmem:[%s0] sm:$0xf]
  %v21 = vld [vmem:[%s0 + $0x4] sm:$0xf]
  %v22 = vld [vmem:[%s0 + $0x8] sm:$0xf]
  %v23 = vld [vmem:[%s0 + $0xc] sm:$0xf]
  %v24 = vld [vmem:[%s0 + $0x10] sm:$0xf]
  %v25 = vld [vmem:[%s0 + $0x14] sm:$0xf]
  %v26 = vld [vmem:[%s0 + $0x18] sm:$0xf]
  %v27 = vld [vmem:[%s0 + $0x1c] sm:$0xf]
  %v28 = vld [vmem:[%s0 + $0x20] sm:$0xf]
  %v29 = vld [vmem:[%s0 + $0x24] sm:$0xf]
  %v30 = vld [vmem:[%s0 + $0x28] sm:$0xf]
  %v31 = vld [vmem:[%s0 + $0x2c] sm:$0xf]
  %v32 = vld [vmem:[%s0 + $0x30] sm:$0xf]
  %v33 = vld [vmem:[%s0 + $0x34] sm:$0xf]
  %v34 = vld [vmem:[%s0 + $0x38] sm:$0xf]
  %v35 = vld [vmem:[%s0 + $0x3c] sm:$0xf]
  %v36 = vld [vmem:[%s0 + $0x40] sm:$0xf]
  %v37 = vld [vmem:[%s0 + $0x44] sm:$0xf]
  %v38 = vld [vmem:[%s0 + $0x48] sm:$0xf]
  %v39 = vld [vmem:[%s0 + $0x4c] sm:$0xf]
  %v40 = vld [vmem:[%s0 + $0x50] sm:$0xf]
  %v41 = vld [vmem:[%s0 + $0x54] sm:$0xf]
  %v42 = vld [vmem:[%s0 + $0x58] sm:$0xf]
  %v43 = vld [vmem:[%s0 + $0x5c] sm:$0xf]
  %v44 = vld [vmem:[%s0 + $0x60] sm:$0xf]
  %v45 = vld [vmem:[%s0 + $0x64] sm:$0xf]
  %v46 = vld [vmem:[%s0 + $0x68] sm:$0xf]
  %v47 = vld [vmem:[%s0 + $0x6c] sm:$0xf]
  %v48 = vld [vmem:[%s0 + $0x70] sm:$0xf]
  %v49 = vld [vmem:[%s0 + $0x74] sm:$0xf]
  %v50 = vld [vmem:[%s0 + $0x78] sm:$0xf]
  %v51 = vld [vmem:[%s0 + $0x7c] sm:$0xf]
  %v52 = vld [vmem:[%s0 + $0x80] sm:$0xf]
  %v53 = vld [vmem:[%s0 + $0x84] sm:$0xf]
  %v54 = vld [vmem:[%s0 + $0x88] sm:$0xf]
  %v55 = vld [vmem:[%s0 + $0x8c] sm:$0xf]
  %v56 = vld [vmem:[%s0 + $0x90] sm:$0xf]
  %v57 = vld [vmem:[%s0 + $0x94] sm:$0xf]
  %v58 = vld [vmem:[%s0 + $0x98] sm:$0xf]
  %v59 = vld [vmem:[%s0 + $0x9c] sm:$0xf]
  %v60 = vld [vmem:[%s0 + $0xa0] sm:$0xf]
  %v61 = vld [vmem:[%s0 + $0xa4] sm:$0xf]
  %v62 = vld [vmem:[%s0 + $0xa8] sm:$0xf]
  %v63 = vld [vmem:[%s0 + $0xac] sm:$0xf]
  %v64 = vld [vmem:[%s0 + $0xb0] sm:$0xf]
  %v65 = vld [vmem:[%s0 + $0xb4] sm:$0xf]
  %v66 = vld [vmem:[%s0 + $0xb8] sm:$0xf]
  %v67 = vld [vmem:[%s0 + $0xbc] sm:$0xf]
  %v68 = vld [vmem:[%s0 + $0xc0] sm:$0xf]
  %v69 = vld [vmem:[%s0 + $0xc4] sm:$0xf]
  %v70 = vld [vmem:[%s0 + $0xc8] sm:$0xf]
  %v71 = vld [vmem:[%s0 + $0xcc] sm:$0xf]
  %v72 = vld [vmem:[%s0 + $0xd0] sm:$0xf]
  %v73 = vld [vmem:[%s0 + $0xd4] sm:$0xf]
  %v74 = vld [vmem:[%s0 + $0xd8] sm:$0xf]
  %v75 = vld [vmem:[%s0 + $0xdc] sm:$0xf]
  %v76 = vld [vmem:[%s0 + $0xe0] sm:$0xf]
  %v77 = vld [vmem:[%s0 + $0xe4] sm:$0xf]
  %v78 = vld [vmem:[%s0 + $0xe8] sm:$0xf]
  %v79 = vld [vmem:[%s0 + $0xec] sm:$0xf]
  %v80 = vld [vmem:[%s0 + $0xf0] sm:$0xf]
  %v81 = vld [vmem:[%s0 + $0xf4] sm:$0xf]
  %v82 = vld [vmem:[%s0 + $0xf8] sm:$0xf]
  %v83 = vld [vmem:[%s0 + $0xfc] sm:$0xf]
  %v84 = vld [vmem:[%s0 + $0x100] sm:$0xf]
  %v85 = vld [vmem:[%s0 + $0x104] sm:$0xf]
  %v86 = vld [vmem:[%s0 + $0x108] sm:$0xf]
  %v87 = vld [vmem:[%s0 + $0x10c] sm:$0xf]
  %v88 = vld [vmem:[%s0 + $0x110] sm:$0xf]
  %v89 = vld [vmem:[%s0 + $0x114] sm:$0xf]
  %v90 = vld [vmem:[%s0 + $0x118] sm:$0xf]
  %v91 = vld [vmem:[%s0 + $0x11c] sm:$0xf]
  %v92 = vld [vmem:[%s0 + $0x120] sm:$0xf]
  %v93 = vld [vmem:[%s0 + $0x124] sm:$0xf]
  %v94 = vld [vmem:[%s0 + $0x128] sm:$0xf]
  %v95 = vld [vmem:[%s0 + $0x12c] sm:$0xf]
  %v96 = vld [vmem:[%s0 + $0x130] sm:$0xf]
  %v97 = vld [vmem:[%s0 + $0x134] sm:$0xf]
  %v98 = vld [vmem:[%s0 + $0x138] sm:$0xf]
  %v99 = vld [vmem:[%s0 + $0x13c] sm:$0xf]
  %v100 = vld [vmem:[%s0 + $0x140] sm:$0xf]
  %v101 = vld [vmem:[%s0 + $0x144] sm:$0xf]
  %v102 = vld [vmem:[%s0 + $0x148] sm:$0xf]
  %v103 = vld [vmem:[%s0 + $0x14c] sm:$0xf]
  %v104 = vld [vmem:[%s0 + $0x150] sm:$0xf]
  %v105 = vld [vmem:[%s0 + $0x154] sm:$0xf]
  %v106 = vld [vmem:[%s0 + $0x158] sm:$0xf]
  %v107 = vld [vmem:[%s0 + $0x15c] sm:$0xf]
  %v108 = vld [vmem:[%s0 + $0x160] sm:$0xf]
  %v109 = vld [vmem:[%s0 + $0x164] sm:$0xf]
  %v110 = vld [vmem:[%s0 + $0x168] sm:$0xf]
  %v111 = vld [vmem:[%s0 + $0x16c] sm:$0xf]
  %v112 = vld [vmem:[%s0 + $0x170] sm:$0xf]
  %v113 = vld [vmem:[%s0 + $0x174] sm:$0xf]
  %v114 = vld [vmem:[%s0 + $0x178] sm:$0xf]
  %v115 = vld [vmem:[%s0 + $0x17c] sm:$0xf]
  %v116 = vld [vmem:[%s0 + $0x180] sm:$0xf]
  %v117 = vld [vmem:[%s0 + $0x184] sm:$0xf]
  %v118 = vld [vmem:[%s0 + $0x188] sm:$0xf]
  %v119 = vld [vmem:[%s0 + $0x18c] sm:$0xf]
  %v120 = vld [vmem:[%s0 + $0x190] sm:$0xf]
  %v121 = vld [vmem:[%s0 + $0x194] sm:$0xf]
  %v122 = vld [vmem:[%s0 + $0x198] sm:$0xf]
  %v123 = vld [vmem:[%s0 + $0x19c] sm:$0xf]
  %v124 = vld [vmem:[%s0 + $0x1a0] sm:$0xf]
  %v125 = vld [vmem:[%s0 + $0x1a4] sm:$0xf]
  %v126 = vld [vmem:[%s0 + $0x1a8] sm:$0xf]
  %v127 = vld [vmem:[%s0 + $0x1ac] sm:$0xf]
  %v128 = vld [vmem:[%s0 + $0x1b0] sm:$0xf]
  %v129 = vld [vmem:[%s0 + $0x1b4] sm:$0xf]
  %v130 = vld [vmem:[%s0 + $0x1b8] sm:$0xf]
  %v131 = vld [vmem:[%s0 + $0x1bc] sm:$0xf]
  %v132 = vld [vmem:[%s0 + $0x1c0] sm:$0xf]
  %v133 = vld [vmem:[%s0 + $0x1c4] sm:$0xf]
  %v134 = vld [vmem:[%s0 + $0x1c8] sm:$0xf]
  %v135 = vld [vmem:[%s0 + $0x1cc] sm:$0xf]
  %v136 = vld [vmem:[%s0 + $0x1d0] sm:$0xf]
  %v137 = vld [vmem:[%s0 + $0x1d4] sm:$0xf]
  %v138 = vld [vmem:[%s0 + $0x1d8] sm:$0xf]
  %v139 = vld [vmem:[%s0 + $0x1dc] sm:$0xf]
  %v140 = vld [vmem:[%s0 + $0x1e0] sm:$0xf]
  %v141 = vld [vmem:[%s0 + $0x1e4] sm:$0xf]
  %v142 = vld [vmem:[%s0 + $0x1e8] sm:$0xf]
  %v143 = vld [vmem:[%s0 + $0x1ec] sm:$0xf]
  %v144 = vld [vmem:[%s0 + $0x1f0] sm:$0xf]
  %v145 = vld [vmem:[%s0 + $0x1f4] sm:$0xf]
  %v146 = vld [vmem:[%s0 + $0x1f8] sm:$0xf]
  %v147 = vld [vmem:[%s0 + $0x1fc] sm:$0xf]
  %v148 = vld [vmem:[%s0 + $0x200] sm:$0xf]
  %v149 = vld [vmem:[%s0 + $0x204] sm:$0xf]
  %v150 = vld [vmem:[%s0 + $0x208] sm:$0xf]
  %v151 = vld [vmem:[%s0 + $0x20c] sm:$0xf]
  %v152 = vld [vmem:[%s0 + $0x210] sm:$0xf]
  %v153 = vld [vmem:[%s0 + $0x214] sm:$0xf]
  %v154 = vld [vmem:[%s0 + $0x218] sm:$0xf]
  %v155 = vld [vmem:[%s0 + $0x21c] sm:$0xf]
  %v156 = vld [vmem:[%s0 + $0x220] sm:$0xf]
  %v157 = vld [vmem:[%s0 + $0x224] sm:$0xf]
  %v158 = vld [vmem:[%s0 + $0x228] sm:$0xf]
  %v159 = vld [vmem:[%s0 + $0x22c] sm:$0xf]
  %v160 = vld [vmem:[%s0 + $0x230] sm:$0xf]
  %v161 = vld [vmem:[%s0 + $0x234] sm:$0xf]
  %v162 = vld [vmem:[%s0 + $0x238] sm:$0xf]
  %v163 = vld [vmem:[%s0 + $0x23c] sm:$0xf]
  %v164 = vld [vmem:[%s0 + $0x240] sm:$0xf]
  %v165 = vld [vmem:[%s0 + $0x244] sm:$0xf]
  %v166 = vld [vmem:[%s0 + $0x248] sm:$0xf]
  %v167 = vld [vmem:[%s0 + $0x24c] sm:$0xf]
  %v168 = vld [vmem:[%s0 + $0x250] sm:$0xf]
  %v169 = vld [vmem:[%s0 + $0x254] sm:$0xf]
  %v170 = vld [vmem:[%s0 + $0x258] sm:$0xf]
  %v171 = vld [vmem:[%s0 + $0x25c] sm:$0xf]
  %v172 = vld [vmem:[%s0 + $0x260] sm:$0xf]
  %v173 = vld [vmem:[%s0 + $0x264] sm:$0xf]
  %v174 = vld [vmem:[%s0 + $0x268] sm:$0xf]
  %v175 = vld [vmem:[%s0 + $0x26c] sm:$0xf]
  %v176 = vld [vmem:[%s0 + $0x270] sm:$0xf]
  %v177 = vld [vmem:[%s0 + $0x274] sm:$0xf]
  %v178 = vld [vmem:[%s0 + $0x278] sm:$0xf]
  %v179 = vld [vmem:[%s0 + $0x27c] sm:$0xf]
  %v180 = vld [vmem:[%s0 + $0x280] sm:$0xf]
  %v181 = vld [vmem:[%s0 + $0x284] sm:$0xf]
  %v182 = vld [vmem:[%s0 + $0x288] sm:$0xf]
  %v183 = vld [vmem:[%s0 + $0x28c] sm:$0xf]
  %v184 = vld [vmem:[%s0 + $0x290] sm:$0xf]
  %v185 = vld [vmem:[%s0 + $0x294] sm:$0xf]
  %v186 = vld [vmem:[%s0 + $0x298] sm:$0xf]
  %v187 = vld [vmem:[%s0 + $0x29c] sm:$0xf]
  %v188 = vld [vmem:[%s0 + $0x2a0] sm:$0xf]
  %v189 = vld [vmem:[%s0 + $0x2a4] sm:$0xf]
  %v190 = vld [vmem:[%s0 + $0x2a8] sm:$0xf]
  %v191 = vld [vmem:[%s0 + $0x2ac] sm:$0xf]
  %v192 = vld [vmem:[%s0 + $0x2b0] sm:$0xf]
  %v193 = vld [vmem:[%s0 + $0x2b4] sm:$0xf]
  %v194 = vld [vmem:[%s0 + $0x2b8] sm:$0xf]
  %v195 = vld [vmem:[%s0 + $0x2bc] sm:$0xf]
  %v196 = vld [vmem:[%s0 + $0x2c0] sm:$0xf]
  %v197 = vld [vmem:[%s0 + $0x2c4] sm:$0xf]
  %v198 = vld [vmem:[%s0 + $0x2c8] sm:$0xf]
  %v199 = vld [vmem:[%s0 + $0x2cc] sm:$0xf]
  %v200 = vld [vmem:[%s0 + $0x2d0] sm:$0xf]
  %v201 = vld [vmem:[%s0 + $0x2d4] sm:$0xf]
  %v202 = vld [vmem:[%s0 + $0x2d8] sm:$0xf]
  %v203 = vld [vmem:[%s0 + $0x2dc] sm:$0xf]
  %v204 = vld [vmem:[%s0 + $0x2e0] sm:$0xf]
  %v205 = vld [vmem:[%s0 + $0x2e4] sm:$0xf]
  %v206 = vld [vmem:[%s0 + $0x2e8] sm:$0xf]
  %v207 = vld [vmem:[%s0 + $0x2ec] sm:$0xf]
  %v208 = vld [vmem:[%s0 + $0x2f0] sm:$0xf]
  %v209 = vld [vmem:[%s0 + $0x2f4] sm:$0xf]
  %v210 = vld [vmem:[%s0 + $0x2f8] sm:$0xf]
  %v211 = vld [vmem:[%s0 + $0x2fc] sm:$0xf]
  %v212 = vld [vmem:[%s0 + $0x300] sm:$0xf]
  %v213 = vld [vmem:[%s0 + $0x304] sm:$0xf]
  %v214 = vld [vmem:[%s0 + $0x308] sm:$0xf]
  %v215 = vld [vmem:[%s0 + $0x30c] sm:$0xf]
  %v216 = vld [vmem:[%s0 + $0x310] sm:$0xf]
  %v217 = vld [vmem:[%s0 + $0x314] sm:$0xf]
  %v218 = vld [vmem:[%s0 + $0x318] sm:$0xf]
  %v219 = vld [vmem:[%s0 + $0x31c] sm:$0xf]
  %v220 = vld [vmem:[%s0 + $0x320] sm:$0xf]
  %v221 = vld [vmem:[%s0 + $0x324] sm:$0xf]
  %v222 = vld [vmem:[%s0 + $0x328] sm:$0xf]
  %v223 = vld [vmem:[%s0 + $0x32c] sm:$0xf]
  %v224 = vld [vmem:[%s0 + $0x330] sm:$0xf]
  %v225 = vld [vmem:[%s0 + $0x334] sm:$0xf]
  %v226 = vld [vmem:[%s0 + $0x338] sm:$0xf]
  %v227 = vld [vmem:[%s0 + $0x33c] sm:$0xf]
  %v228 = vld [vmem:[%s0 + $0x340] sm:$0xf]
  %v229 = vld [vmem:[%s0 + $0x344] sm:$0xf]
  %v230 = vld [vmem:[%s0 + $0x348] sm:$0xf]
  %v231 = vld [vmem:[%s0 + $0x34c] sm:$0xf]
  %v232 = vld [vmem:[%s0 + $0x350] sm:$0xf]
  %v233 = vld [vmem:[%s0 + $0x354] sm:$0xf]
  %v234 = vld [vmem:[%s0 + $0x358] sm:$0xf]
  %v235 = vld [vmem:[%s0 + $0x35c] sm:$0xf]
  %v236 = vld [vmem:[%s0 + $0x360] sm:$0xf]
  %v237 = vld [vmem:[%s0 + $0x364] sm:$0xf]
  %v238 = vld [vmem:[%s0 + $0x368] sm:$0xf]
  %v239 = vld [vmem:[%s0 + $0x36c] sm:$0xf]
  %v240 = vld [vmem:[%s0 + $0x370] sm:$0xf]
  %v241 = vld [vmem:[%s0 + $0x374] sm:$0xf]
  %v242 = vld [vmem:[%s0 + $0x378] sm:$0xf]
  %v243 = vld [vmem:[%s0 + $0x37c] sm:$0xf]
  %v244 = vld [vmem:[%s0 + $0x380] sm:$0xf]
  %v245 = vld [vmem:[%s0 + $0x384] sm:$0xf]
  %v246 = vld [vmem:[%s0 + $0x388] sm:$0xf]
  %v247 = vld [vmem:[%s0 + $0x38c] sm:$0xf]
  %v248 = vld [vmem:[%s0 + $0x390] sm:$0xf]
  %v249 = vld [vmem:[%s0 + $0x394] sm:$0xf]
  %v250 = vld [vmem:[%s0 + $0x398] sm:$0xf]
  %v251 = vld [vmem:[%s0 + $0x39c] sm:$0xf]
  %v252 = vld [vmem:[%s0 + $0x3a0] sm:$0xf]
  %v253 = vld [vmem:[%s0 + $0x3a4] sm:$0xf]
  %v254 = vld [vmem:[%s0 + $0x3a8] sm:$0xf]
  %v255 = vld [vmem:[%s0 + $0x3ac] sm:$0xf]
  %v256 = vld [vmem:[%s0 + $0x3b0] sm:$0xf]
  %v257 = vld [vmem:[%s0 + $0x3b4] sm:$0xf]
  %v258 = vld [vmem:[%s0 + $0x3b8] sm:$0xf]
  %v259 = vld [vmem:[%s0 + $0x3bc] sm:$0xf]
  %v260 = vld [vmem:[%s0 + $0x3c0] sm:$0xf]
  %v261 = vld [vmem:[%s0 + $0x3c4] sm:$0xf]
  %v262 = vld [vmem:[%s0 + $0x3c8] sm:$0xf]
  %v263 = vld [vmem:[%s0 + $0x3cc] sm:$0xf]
  %v264 = vld [vmem:[%s0 + $0x3d0] sm:$0xf]
  %v265 = vld [vmem:[%s0 + $0x3d4] sm:$0xf]
  %v266 = vld [vmem:[%s0 + $0x3d8] sm:$0xf]
  %v267 = vld [vmem:[%s0 + $0x3dc] sm:$0xf]
  %v268 = vld [vmem:[%s0 + $0x3e0] sm:$0xf]
  %v269 = vld [vmem:[%s0 + $0x3e4] sm:$0xf]
  %v270 = vld [vmem:[%s0 + $0x3e8] sm:$0xf]
  %v271 = vld [vmem:[%s0 + $0x3ec] sm:$0xf]
  %v272 = vld [vmem:[%s0 + $0x3f0] sm:$0xf]
  %v273 = vld [vmem:[%s0 + $0x3f4] sm:$0xf]
  %v274 = vld [vmem:[%s0 + $0x3f8] sm:$0xf]
  %v275 = vld [vmem:[%s0 + $0x3fc] sm:$0xf]
  %v276 = vld [vmem:[%s1] sm:$0xf]
  %v277 = vld [vmem:[%s1 + $0x4] sm:$0xf]
  %v278 = vld [vmem:[%s1 + $0x8] sm:$0xf]
  %v279 = vld [vmem:[%s1 + $0xc] sm:$0xf]
  %v280 = vld [vmem:[%s1 + $0x10] sm:$0xf]
  %v281 = vld [vmem:[%s1 + $0x14] sm:$0xf]
  %v282 = vld [vmem:[%s1 + $0x18] sm:$0xf]
  %v283 = vld [vmem:[%s1 + $0x1c] sm:$0xf]
  %v284 = vld [vmem:[%s1 + $0x20] sm:$0xf]
  %v285 = vld [vmem:[%s1 + $0x24] sm:$0xf]
  %v286 = vld [vmem:[%s1 + $0x28] sm:$0xf]
  %v287 = vld [vmem:[%s1 + $0x2c] sm:$0xf]
  %v288 = vld [vmem:[%s1 + $0x30] sm:$0xf]
  %v289 = vld [vmem:[%s1 + $0x34] sm:$0xf]
  %v290 = vld [vmem:[%s1 + $0x38] sm:$0xf]
  %v291 = vld [vmem:[%s1 + $0x3c] sm:$0xf]
  %v292 = vld [vmem:[%s2] sm:$0x1]
  %v294 = vperm.slane %v292, 0
  %v552 = vunpack.c.l.b16 %v20
  %v553 = vunpack.c.l.b16 %v21
  %v554 = vunpack.c.l.b16 %v22
  %v555 = vunpack.c.l.b16 %v23
  %v556 = vunpack.c.l.b16 %v24
  %v557 = vunpack.c.l.b16 %v25
  %v558 = vunpack.c.l.b16 %v26
  %v559 = vunpack.c.l.b16 %v27
  %v560 = vunpack.c.l.b16 %v28
  %v561 = vunpack.c.l.b16 %v29
  %v562 = vunpack.c.l.b16 %v30
  %v563 = vunpack.c.l.b16 %v31
  %v564 = vunpack.c.l.b16 %v32
  %v565 = vunpack.c.l.b16 %v33
  %v566 = vunpack.c.l.b16 %v34
  %v567 = vunpack.c.l.b16 %v35
  %v568 = vunpack.c.l.b16 %v36
  %v569 = vunpack.c.l.b16 %v37
  %v570 = vunpack.c.l.b16 %v38
  %v571 = vunpack.c.l.b16 %v39
  %v572 = vunpack.c.l.b16 %v40
  %v573 = vunpack.c.l.b16 %v41
  %v574 = vunpack.c.l.b16 %v42
  %v575 = vunpack.c.l.b16 %v43
  %v576 = vunpack.c.l.b16 %v44
  %v577 = vunpack.c.l.b16 %v45
  %v578 = vunpack.c.l.b16 %v46
  %v579 = vunpack.c.l.b16 %v47
  %v580 = vunpack.c.l.b16 %v48
  %v581 = vunpack.c.l.b16 %v49
  %v582 = vunpack.c.l.b16 %v50
  %v583 = vunpack.c.l.b16 %v51
  %v584 = vunpack.c.l.b16 %v52
  %v585 = vunpack.c.l.b16 %v53
  %v586 = vunpack.c.l.b16 %v54
  %v587 = vunpack.c.l.b16 %v55
  %v588 = vunpack.c.l.b16 %v56
  %v589 = vunpack.c.l.b16 %v57
  %v590 = vunpack.c.l.b16 %v58
  %v591 = vunpack.c.l.b16 %v59
  %v592 = vunpack.c.l.b16 %v60
  %v593 = vunpack.c.l.b16 %v61
  %v594 = vunpack.c.l.b16 %v62
  %v595 = vunpack.c.l.b16 %v63
  %v596 = vunpack.c.l.b16 %v64
  %v597 = vunpack.c.l.b16 %v65
  %v598 = vunpack.c.l.b16 %v66
  %v599 = vunpack.c.l.b16 %v67
  %v600 = vunpack.c.l.b16 %v68
  %v601 = vunpack.c.l.b16 %v69
  %v602 = vunpack.c.l.b16 %v70
  %v603 = vunpack.c.l.b16 %v71
  %v604 = vunpack.c.l.b16 %v72
  %v605 = vunpack.c.l.b16 %v73
  %v606 = vunpack.c.l.b16 %v74
  %v607 = vunpack.c.l.b16 %v75
  %v608 = vunpack.c.l.b16 %v76
  %v609 = vunpack.c.l.b16 %v77
  %v610 = vunpack.c.l.b16 %v78
  %v611 = vunpack.c.l.b16 %v79
  %v612 = vunpack.c.l.b16 %v80
  %v613 = vunpack.c.l.b16 %v81
  %v614 = vunpack.c.l.b16 %v82
  %v615 = vunpack.c.l.b16 %v83
  %v616 = vunpack.c.l.b16 %v84
  %v617 = vunpack.c.l.b16 %v85
  %v618 = vunpack.c.l.b16 %v86
  %v619 = vunpack.c.l.b16 %v87
  %v620 = vunpack.c.l.b16 %v88
  %v621 = vunpack.c.l.b16 %v89
  %v622 = vunpack.c.l.b16 %v90
  %v623 = vunpack.c.l.b16 %v91
  %v624 = vunpack.c.l.b16 %v92
  %v625 = vunpack.c.l.b16 %v93
  %v626 = vunpack.c.l.b16 %v94
  %v627 = vunpack.c.l.b16 %v95
  %v628 = vunpack.c.l.b16 %v96
  %v629 = vunpack.c.l.b16 %v97
  %v630 = vunpack.c.l.b16 %v98
  %v631 = vunpack.c.l.b16 %v99
  %v632 = vunpack.c.l.b16 %v100
  %v633 = vunpack.c.l.b16 %v101
  %v634 = vunpack.c.l.b16 %v102
  %v635 = vunpack.c.l.b16 %v103
  %v636 = vunpack.c.l.b16 %v104
  %v637 = vunpack.c.l.b16 %v105
  %v638 = vunpack.c.l.b16 %v106
  %v639 = vunpack.c.l.b16 %v107
  %v640 = vunpack.c.l.b16 %v108
  %v641 = vunpack.c.l.b16 %v109
  %v642 = vunpack.c.l.b16 %v110
  %v643 = vunpack.c.l.b16 %v111
  %v644 = vunpack.c.l.b16 %v112
  %v645 = vunpack.c.l.b16 %v113
  %v646 = vunpack.c.l.b16 %v114
  %v647 = vunpack.c.l.b16 %v115
  %v648 = vunpack.c.l.b16 %v116
  %v649 = vunpack.c.l.b16 %v117
  %v650 = vunpack.c.l.b16 %v118
  %v651 = vunpack.c.l.b16 %v119
  %v652 = vunpack.c.l.b16 %v120
  %v653 = vunpack.c.l.b16 %v121
  %v654 = vunpack.c.l.b16 %v122
  %v655 = vunpack.c.l.b16 %v123
  %v656 = vunpack.c.l.b16 %v124
  %v657 = vunpack.c.l.b16 %v125
  %v658 = vunpack.c.l.b16 %v126
  %v659 = vunpack.c.l.b16 %v127
  %v660 = vunpack.c.l.b16 %v128
  %v661 = vunpack.c.l.b16 %v129
  %v662 = vunpack.c.l.b16 %v130
  %v663 = vunpack.c.l.b16 %v131
  %v664 = vunpack.c.l.b16 %v132
  %v665 = vunpack.c.l.b16 %v133
  %v666 = vunpack.c.l.b16 %v134
  %v667 = vunpack.c.l.b16 %v135
  %v668 = vunpack.c.l.b16 %v136
  %v669 = vunpack.c.l.b16 %v137
  %v670 = vunpack.c.l.b16 %v138
  %v671 = vunpack.c.l.b16 %v139
  %v672 = vunpack.c.l.b16 %v140
  %v673 = vunpack.c.l.b16 %v141
  %v674 = vunpack.c.l.b16 %v142
  %v675 = vunpack.c.l.b16 %v143
  %v676 = vunpack.c.l.b16 %v144
  %v677 = vunpack.c.l.b16 %v145
  %v678 = vunpack.c.l.b16 %v146
  %v679 = vunpack.c.l.b16 %v147
  %v680 = vunpack.c.l.b16 %v148
  %v681 = vunpack.c.l.b16 %v149
  %v682 = vunpack.c.l.b16 %v150
  %v683 = vunpack.c.l.b16 %v151
  %v684 = vunpack.c.l.b16 %v152
  %v685 = vunpack.c.l.b16 %v153
  %v686 = vunpack.c.l.b16 %v154
  %v687 = vunpack.c.l.b16 %v155
  %v688 = vunpack.c.l.b16 %v156
  %v689 = vunpack.c.l.b16 %v157
  %v690 = vunpack.c.l.b16 %v158
  %v691 = vunpack.c.l.b16 %v159
  %v692 = vunpack.c.l.b16 %v160
  %v693 = vunpack.c.l.b16 %v161
  %v694 = vunpack.c.l.b16 %v162
  %v695 = vunpack.c.l.b16 %v163
  %v696 = vunpack.c.l.b16 %v164
  %v697 = vunpack.c.l.b16 %v165
  %v698 = vunpack.c.l.b16 %v166
  %v699 = vunpack.c.l.b16 %v167
  %v700 = vunpack.c.l.b16 %v168
  %v701 = vunpack.c.l.b16 %v169
  %v702 = vunpack.c.l.b16 %v170
  %v703 = vunpack.c.l.b16 %v171
  %v704 = vunpack.c.l.b16 %v172
  %v705 = vunpack.c.l.b16 %v173
  %v706 = vunpack.c.l.b16 %v174
  %v707 = vunpack.c.l.b16 %v175
  %v708 = vunpack.c.l.b16 %v176
  %v709 = vunpack.c.l.b16 %v177
  %v710 = vunpack.c.l.b16 %v178
  %v711 = vunpack.c.l.b16 %v179
  %v712 = vunpack.c.l.b16 %v180
  %v713 = vunpack.c.l.b16 %v181
  %v714 = vunpack.c.l.b16 %v182
  %v715 = vunpack.c.l.b16 %v183
  %v716 = vunpack.c.l.b16 %v184
  %v717 = vunpack.c.l.b16 %v185
  %v718 = vunpack.c.l.b16 %v186
  %v719 = vunpack.c.l.b16 %v187
  %v720 = vunpack.c.l.b16 %v188
  %v721 = vunpack.c.l.b16 %v189
  %v722 = vunpack.c.l.b16 %v190
  %v723 = vunpack.c.l.b16 %v191
  %v724 = vunpack.c.l.b16 %v192
  %v725 = vunpack.c.l.b16 %v193
  %v726 = vunpack.c.l.b16 %v194
  %v727 = vunpack.c.l.b16 %v195
  %v728 = vunpack.c.l.b16 %v196
  %v729 = vunpack.c.l.b16 %v197
  %v730 = vunpack.c.l.b16 %v198
  %v731 = vunpack.c.l.b16 %v199
  %v732 = vunpack.c.l.b16 %v200
  %v733 = vunpack.c.l.b16 %v201
  %v734 = vunpack.c.l.b16 %v202
  %v735 = vunpack.c.l.b16 %v203
  %v736 = vunpack.c.l.b16 %v204
  %v737 = vunpack.c.l.b16 %v205
  %v738 = vunpack.c.l.b16 %v206
  %v739 = vunpack.c.l.b16 %v207
  %v740 = vunpack.c.l.b16 %v208
  %v741 = vunpack.c.l.b16 %v209
  %v742 = vunpack.c.l.b16 %v210
  %v743 = vunpack.c.l.b16 %v211
  %v744 = vunpack.c.l.b16 %v212
  %v745 = vunpack.c.l.b16 %v213
  %v746 = vunpack.c.l.b16 %v214
  %v747 = vunpack.c.l.b16 %v215
  %v748 = vunpack.c.l.b16 %v216
  %v749 = vunpack.c.l.b16 %v217
  %v750 = vunpack.c.l.b16 %v218
  %v751 = vunpack.c.l.b16 %v219
  %v752 = vunpack.c.l.b16 %v220
  %v753 = vunpack.c.l.b16 %v221
  %v754 = vunpack.c.l.b16 %v222
  %v755 = vunpack.c.l.b16 %v223
  %v756 = vunpack.c.l.b16 %v224
  %v757 = vunpack.c.l.b16 %v225
  %v758 = vunpack.c.l.b16 %v226
  %v759 = vunpack.c.l.b16 %v227
  %v760 = vunpack.c.l.b16 %v228
  %v761 = vunpack.c.l.b16 %v229
  %v762 = vunpack.c.l.b16 %v230
  %v763 = vunpack.c.l.b16 %v231
  %v764 = vunpack.c.l.b16 %v232
  %v765 = vunpack.c.l.b16 %v233
  %v766 = vunpack.c.l.b16 %v234
  %v767 = vunpack.c.l.b16 %v235
  %v768 = vunpack.c.l.b16 %v236
  %v769 = vunpack.c.l.b16 %v237
  %v770 = vunpack.c.l.b16 %v238
  %v771 = vunpack.c.l.b16 %v239
  %v772 = vunpack.c.l.b16 %v240
  %v773 = vunpack.c.l.b16 %v241
  %v774 = vunpack.c.l.b16 %v242
  %v775 = vunpack.c.l.b16 %v243
  %v776 = vunpack.c.l.b16 %v244
  %v777 = vunpack.c.l.b16 %v245
  %v778 = vunpack.c.l.b16 %v246
  %v779 = vunpack.c.l.b16 %v247
  %v780 = vunpack.c.l.b16 %v248
  %v781 = vunpack.c.l.b16 %v249
  %v782 = vunpack.c.l.b16 %v250
  %v783 = vunpack.c.l.b16 %v251
  %v784 = vunpack.c.l.b16 %v252
  %v785 = vunpack.c.l.b16 %v253
  %v786 = vunpack.c.l.b16 %v254
  %v787 = vunpack.c.l.b16 %v255
  %v788 = vunpack.c.l.b16 %v256
  %v789 = vunpack.c.l.b16 %v257
  %v790 = vunpack.c.l.b16 %v258
  %v791 = vunpack.c.l.b16 %v259
  %v792 = vunpack.c.l.b16 %v260
  %v793 = vunpack.c.l.b16 %v261
  %v794 = vunpack.c.l.b16 %v262
  %v795 = vunpack.c.l.b16 %v263
  %v796 = vunpack.c.l.b16 %v264
  %v797 = vunpack.c.l.b16 %v265
  %v798 = vunpack.c.l.b16 %v266
  %v799 = vunpack.c.l.b16 %v267
  %v800 = vunpack.c.l.b16 %v268
  %v801 = vunpack.c.l.b16 %v269
  %v802 = vunpack.c.l.b16 %v270
  %v803 = vunpack.c.l.b16 %v271
  %v804 = vunpack.c.l.b16 %v272
  %v805 = vunpack.c.l.b16 %v273
  %v806 = vunpack.c.l.b16 %v274
  %v807 = vunpack.c.l.b16 %v275
  %v808 = vpack.c.b16 %v553, %v552
  %v809 = vpack.c.b16 %v555, %v554
  %v810 = vpack.c.b16 %v557, %v556
  %v811 = vpack.c.b16 %v559, %v558
  %v812 = vpack.c.b16 %v561, %v560
  %v813 = vpack.c.b16 %v563, %v562
  %v814 = vpack.c.b16 %v565, %v564
  %v815 = vpack.c.b16 %v567, %v566
  %v816 = vpack.c.b16 %v569, %v568
  %v817 = vpack.c.b16 %v571, %v570
  %v818 = vpack.c.b16 %v573, %v572
  %v819 = vpack.c.b16 %v575, %v574
  %v820 = vpack.c.b16 %v577, %v576
  %v821 = vpack.c.b16 %v579, %v578
  %v822 = vpack.c.b16 %v581, %v580
  %v823 = vpack.c.b16 %v583, %v582
  %v824 = vpack.c.b16 %v585, %v584
  %v825 = vpack.c.b16 %v587, %v586
  %v826 = vpack.c.b16 %v589, %v588
  %v827 = vpack.c.b16 %v591, %v590
  %v828 = vpack.c.b16 %v593, %v592
  %v829 = vpack.c.b16 %v595, %v594
  %v830 = vpack.c.b16 %v597, %v596
  %v831 = vpack.c.b16 %v599, %v598
  %v832 = vpack.c.b16 %v601, %v600
  %v833 = vpack.c.b16 %v603, %v602
  %v834 = vpack.c.b16 %v605, %v604
  %v835 = vpack.c.b16 %v607, %v606
  %v836 = vpack.c.b16 %v609, %v608
  %v837 = vpack.c.b16 %v611, %v610
  %v838 = vpack.c.b16 %v613, %v612
  %v839 = vpack.c.b16 %v615, %v614
  %v840 = vpack.c.b16 %v617, %v616
  %v841 = vpack.c.b16 %v619, %v618
  %v842 = vpack.c.b16 %v621, %v620
  %v843 = vpack.c.b16 %v623, %v622
  %v844 = vpack.c.b16 %v625, %v624
  %v845 = vpack.c.b16 %v627, %v626
  %v846 = vpack.c.b16 %v629, %v628
  %v847 = vpack.c.b16 %v631, %v630
  %v848 = vpack.c.b16 %v633, %v632
  %v849 = vpack.c.b16 %v635, %v634
  %v850 = vpack.c.b16 %v637, %v636
  %v851 = vpack.c.b16 %v639, %v638
  %v852 = vpack.c.b16 %v641, %v640
  %v853 = vpack.c.b16 %v643, %v642
  %v854 = vpack.c.b16 %v645, %v644
  %v855 = vpack.c.b16 %v647, %v646
  %v856 = vpack.c.b16 %v649, %v648
  %v857 = vpack.c.b16 %v651, %v650
  %v858 = vpack.c.b16 %v653, %v652
  %v859 = vpack.c.b16 %v655, %v654
  %v860 = vpack.c.b16 %v657, %v656
  %v861 = vpack.c.b16 %v659, %v658
  %v862 = vpack.c.b16 %v661, %v660
  %v863 = vpack.c.b16 %v663, %v662
  %v864 = vpack.c.b16 %v665, %v664
  %v865 = vpack.c.b16 %v667, %v666
  %v866 = vpack.c.b16 %v669, %v668
  %v867 = vpack.c.b16 %v671, %v670
  %v868 = vpack.c.b16 %v673, %v672
  %v869 = vpack.c.b16 %v675, %v674
  %v870 = vpack.c.b16 %v677, %v676
  %v871 = vpack.c.b16 %v679, %v678
  %v872 = vpack.c.b16 %v681, %v680
  %v873 = vpack.c.b16 %v683, %v682
  %v874 = vpack.c.b16 %v685, %v684
  %v875 = vpack.c.b16 %v687, %v686
  %v876 = vpack.c.b16 %v689, %v688
  %v877 = vpack.c.b16 %v691, %v690
  %v878 = vpack.c.b16 %v693, %v692
  %v879 = vpack.c.b16 %v695, %v694
  %v880 = vpack.c.b16 %v697, %v696
  %v881 = vpack.c.b16 %v699, %v698
  %v882 = vpack.c.b16 %v701, %v700
  %v883 = vpack.c.b16 %v703, %v702
  %v884 = vpack.c.b16 %v705, %v704
  %v885 = vpack.c.b16 %v707, %v706
  %v886 = vpack.c.b16 %v709, %v708
  %v887 = vpack.c.b16 %v711, %v710
  %v888 = vpack.c.b16 %v713, %v712
  %v889 = vpack.c.b16 %v715, %v714
  %v890 = vpack.c.b16 %v717, %v716
  %v891 = vpack.c.b16 %v719, %v718
  %v892 = vpack.c.b16 %v721, %v720
  %v893 = vpack.c.b16 %v723, %v722
  %v894 = vpack.c.b16 %v725, %v724
  %v895 = vpack.c.b16 %v727, %v726
  %v896 = vpack.c.b16 %v729, %v728
  %v897 = vpack.c.b16 %v731, %v730
  %v898 = vpack.c.b16 %v733, %v732
  %v899 = vpack.c.b16 %v735, %v734
  %v900 = vpack.c.b16 %v737, %v736
  %v901 = vpack.c.b16 %v739, %v738
  %v902 = vpack.c.b16 %v741, %v740
  %v903 = vpack.c.b16 %v743, %v742
  %v904 = vpack.c.b16 %v745, %v744
  %v905 = vpack.c.b16 %v747, %v746
  %v906 = vpack.c.b16 %v749, %v748
  %v907 = vpack.c.b16 %v751, %v750
  %v908 = vpack.c.b16 %v753, %v752
  %v909 = vpack.c.b16 %v755, %v754
  %v910 = vpack.c.b16 %v757, %v756
  %v911 = vpack.c.b16 %v759, %v758
  %v912 = vpack.c.b16 %v761, %v760
  %v913 = vpack.c.b16 %v763, %v762
  %v914 = vpack.c.b16 %v765, %v764
  %v915 = vpack.c.b16 %v767, %v766
  %v916 = vpack.c.b16 %v769, %v768
  %v917 = vpack.c.b16 %v771, %v770
  %v918 = vpack.c.b16 %v773, %v772
  %v919 = vpack.c.b16 %v775, %v774
  %v920 = vpack.c.b16 %v777, %v776
  %v921 = vpack.c.b16 %v779, %v778
  %v922 = vpack.c.b16 %v781, %v780
  %v923 = vpack.c.b16 %v783, %v782
  %v924 = vpack.c.b16 %v785, %v784
  %v925 = vpack.c.b16 %v787, %v786
  %v926 = vpack.c.b16 %v789, %v788
  %v927 = vpack.c.b16 %v791, %v790
  %v928 = vpack.c.b16 %v793, %v792
  %v929 = vpack.c.b16 %v795, %v794
  %v930 = vpack.c.b16 %v797, %v796
  %v931 = vpack.c.b16 %v799, %v798
  %v932 = vpack.c.b16 %v801, %v800
  %v933 = vpack.c.b16 %v803, %v802
  %v934 = vpack.c.b16 %v805, %v804
  %v935 = vpack.c.b16 %v807, %v806
  %v1080 = vunpack.c.l.b16 %v276
  %v1081 = vunpack.c.l.b16 %v277
  %v1082 = vunpack.c.l.b16 %v278
  %v1083 = vunpack.c.l.b16 %v279
  %v1084 = vunpack.c.l.b16 %v280
  %v1085 = vunpack.c.l.b16 %v281
  %v1086 = vunpack.c.l.b16 %v282
  %v1087 = vunpack.c.l.b16 %v283
  %v1088 = vunpack.c.l.b16 %v284
  %v1089 = vunpack.c.l.b16 %v285
  %v1090 = vunpack.c.l.b16 %v286
  %v1091 = vunpack.c.l.b16 %v287
  %v1092 = vunpack.c.l.b16 %v288
  %v1093 = vunpack.c.l.b16 %v289
  %v1094 = vunpack.c.l.b16 %v290
  %v1095 = vunpack.c.l.b16 %v291
  %v1096 = vpack.c.b16 %v1081, %v1080
  %v1097 = vpack.c.b16 %v1083, %v1082
  %v1098 = vpack.c.b16 %v1085, %v1084
  %v1099 = vpack.c.b16 %v1087, %v1086
  %v1100 = vpack.c.b16 %v1089, %v1088
  %v1101 = vpack.c.b16 %v1091, %v1090
  %v1102 = vpack.c.b16 %v1093, %v1092
  %v1103 = vpack.c.b16 %v1095, %v1094
  %1112 = vmatpush.bf16.msra.mxu0 %v1103
  %1113 = vmatpush.bf16.msra.mxu0 %v1102
  %1114 = vmatpush.bf16.msra.mxu0 %v1101
  %1115 = vmatpush.bf16.msra.mxu0 %v1100
  %1116 = vmatpush.bf16.msra.mxu0 %v1099
  %1117 = vmatpush.bf16.msra.mxu0 %v1098
  %1118 = vmatpush.bf16.msra.mxu0 %v1097
  %1119 = vmatpush.bf16.msra.mxu0 %v1096
  %1120 = vmatmul.bf16.gmra.mxu0 %v808
  %v1121 = vpop.f32.mrf.mxu0
  %v1122 = vadd.f32 %v294, %v1121
  %v1123 = vpop.f32.mrf.mxu0
  %v1124 = vadd.f32 %v294, %v1123
  %1125 = vmatmul.bf16.gmra.mxu0 %v809
  %v1126 = vpop.f32.mrf.mxu0
  %v1127 = vadd.f32 %v294, %v1126
  %v1128 = vpop.f32.mrf.mxu0
  %v1129 = vadd.f32 %v294, %v1128
  %1130 = vmatmul.bf16.gmra.mxu0 %v810
  %v1131 = vpop.f32.mrf.mxu0
  %v1132 = vadd.f32 %v294, %v1131
  %v1133 = vpop.f32.mrf.mxu0
  %v1134 = vadd.f32 %v294, %v1133
  %1135 = vmatmul.bf16.gmra.mxu0 %v811
  %v1136 = vpop.f32.mrf.mxu0
  %v1137 = vadd.f32 %v294, %v1136
  %v1138 = vpop.f32.mrf.mxu0
  %v1139 = vadd.f32 %v294, %v1138
  %1140 = vmatmul.bf16.gmra.mxu0 %v812
  %v1141 = vpop.f32.mrf.mxu0
  %v1142 = vadd.f32 %v294, %v1141
  %v1143 = vpop.f32.mrf.mxu0
  %v1144 = vadd.f32 %v294, %v1143
  %1145 = vmatmul.bf16.gmra.mxu0 %v813
  %v1146 = vpop.f32.mrf.mxu0
  %v1147 = vadd.f32 %v294, %v1146
  %v1148 = vpop.f32.mrf.mxu0
  %v1149 = vadd.f32 %v294, %v1148
  %1150 = vmatmul.bf16.gmra.mxu0 %v814
  %v1151 = vpop.f32.mrf.mxu0
  %v1152 = vadd.f32 %v294, %v1151
  %v1153 = vpop.f32.mrf.mxu0
  %v1154 = vadd.f32 %v294, %v1153
  %1155 = vmatmul.bf16.gmra.mxu0 %v815
  %v1156 = vpop.f32.mrf.mxu0
  %v1157 = vadd.f32 %v294, %v1156
  %v1158 = vpop.f32.mrf.mxu0
  %v1159 = vadd.f32 %v294, %v1158
  %1160 = vmatmul.bf16.gmra.mxu0 %v816
  %v1161 = vpop.f32.mrf.mxu0
  %v1162 = vadd.f32 %v294, %v1161
  %v1163 = vpop.f32.mrf.mxu0
  %v1164 = vadd.f32 %v294, %v1163
  %1165 = vmatmul.bf16.gmra.mxu0 %v817
  %v1166 = vpop.f32.mrf.mxu0
  %v1167 = vadd.f32 %v294, %v1166
  %v1168 = vpop.f32.mrf.mxu0
  %v1169 = vadd.f32 %v294, %v1168
  %1170 = vmatmul.bf16.gmra.mxu0 %v818
  %v1171 = vpop.f32.mrf.mxu0
  %v1172 = vadd.f32 %v294, %v1171
  %v1173 = vpop.f32.mrf.mxu0
  %v1174 = vadd.f32 %v294, %v1173
  %1175 = vmatmul.bf16.gmra.mxu0 %v819
  %v1176 = vpop.f32.mrf.mxu0
  %v1177 = vadd.f32 %v294, %v1176
  %v1178 = vpop.f32.mrf.mxu0
  %v1179 = vadd.f32 %v294, %v1178
  %1180 = vmatmul.bf16.gmra.mxu0 %v820
  %v1181 = vpop.f32.mrf.mxu0
  %v1182 = vadd.f32 %v294, %v1181
  %v1183 = vpop.f32.mrf.mxu0
  %v1184 = vadd.f32 %v294, %v1183
  %1185 = vmatmul.bf16.gmra.mxu0 %v821
  %v1186 = vpop.f32.mrf.mxu0
  %v1187 = vadd.f32 %v294, %v1186
  %v1188 = vpop.f32.mrf.mxu0
  %v1189 = vadd.f32 %v294, %v1188
  %1190 = vmatmul.bf16.gmra.mxu0 %v822
  %v1191 = vpop.f32.mrf.mxu0
  %v1192 = vadd.f32 %v294, %v1191
  %v1193 = vpop.f32.mrf.mxu0
  %v1194 = vadd.f32 %v294, %v1193
  %1195 = vmatmul.bf16.gmra.mxu0 %v823
  %v1196 = vpop.f32.mrf.mxu0
  %v1197 = vadd.f32 %v294, %v1196
  %v1198 = vpop.f32.mrf.mxu0
  %v1199 = vadd.f32 %v294, %v1198
  %1200 = vmatmul.bf16.gmra.mxu0 %v824
  %v1201 = vpop.f32.mrf.mxu0
  %v1202 = vadd.f32 %v294, %v1201
  %v1203 = vpop.f32.mrf.mxu0
  %v1204 = vadd.f32 %v294, %v1203
  %1205 = vmatmul.bf16.gmra.mxu0 %v825
  %v1206 = vpop.f32.mrf.mxu0
  %v1207 = vadd.f32 %v294, %v1206
  %v1208 = vpop.f32.mrf.mxu0
  %v1209 = vadd.f32 %v294, %v1208
  %1210 = vmatmul.bf16.gmra.mxu0 %v826
  %v1211 = vpop.f32.mrf.mxu0
  %v1212 = vadd.f32 %v294, %v1211
  %v1213 = vpop.f32.mrf.mxu0
  %v1214 = vadd.f32 %v294, %v1213
  %1215 = vmatmul.bf16.gmra.mxu0 %v827
  %v1216 = vpop.f32.mrf.mxu0
  %v1217 = vadd.f32 %v294, %v1216
  %v1218 = vpop.f32.mrf.mxu0
  %v1219 = vadd.f32 %v294, %v1218
  %1220 = vmatmul.bf16.gmra.mxu0 %v828
  %v1221 = vpop.f32.mrf.mxu0
  %v1222 = vadd.f32 %v294, %v1221
  %v1223 = vpop.f32.mrf.mxu0
  %v1224 = vadd.f32 %v294, %v1223
  %1225 = vmatmul.bf16.gmra.mxu0 %v829
  %v1226 = vpop.f32.mrf.mxu0
  %v1227 = vadd.f32 %v294, %v1226
  %v1228 = vpop.f32.mrf.mxu0
  %v1229 = vadd.f32 %v294, %v1228
  %1230 = vmatmul.bf16.gmra.mxu0 %v830
  %v1231 = vpop.f32.mrf.mxu0
  %v1232 = vadd.f32 %v294, %v1231
  %v1233 = vpop.f32.mrf.mxu0
  %v1234 = vadd.f32 %v294, %v1233
  %1235 = vmatmul.bf16.gmra.mxu0 %v831
  %v1236 = vpop.f32.mrf.mxu0
  %v1237 = vadd.f32 %v294, %v1236
  %v1238 = vpop.f32.mrf.mxu0
  %v1239 = vadd.f32 %v294, %v1238
  %1240 = vmatmul.bf16.gmra.mxu0 %v832
  %v1241 = vpop.f32.mrf.mxu0
  %v1242 = vadd.f32 %v294, %v1241
  %v1243 = vpop.f32.mrf.mxu0
  %v1244 = vadd.f32 %v294, %v1243
  %1245 = vmatmul.bf16.gmra.mxu0 %v833
  %v1246 = vpop.f32.mrf.mxu0
  %v1247 = vadd.f32 %v294, %v1246
  %v1248 = vpop.f32.mrf.mxu0
  %v1249 = vadd.f32 %v294, %v1248
  %1250 = vmatmul.bf16.gmra.mxu0 %v834
  %v1251 = vpop.f32.mrf.mxu0
  %v1252 = vadd.f32 %v294, %v1251
  %v1253 = vpop.f32.mrf.mxu0
  %v1254 = vadd.f32 %v294, %v1253
  %1255 = vmatmul.bf16.gmra.mxu0 %v835
  %v1256 = vpop.f32.mrf.mxu0
  %v1257 = vadd.f32 %v294, %v1256
  %v1258 = vpop.f32.mrf.mxu0
  %v1259 = vadd.f32 %v294, %v1258
  %1260 = vmatmul.bf16.gmra.mxu0 %v836
  %v1261 = vpop.f32.mrf.mxu0
  %v1262 = vadd.f32 %v294, %v1261
  %v1263 = vpop.f32.mrf.mxu0
  %v1264 = vadd.f32 %v294, %v1263
  %1265 = vmatmul.bf16.gmra.mxu0 %v837
  %v1266 = vpop.f32.mrf.mxu0
  %v1267 = vadd.f32 %v294, %v1266
  %v1268 = vpop.f32.mrf.mxu0
  %v1269 = vadd.f32 %v294, %v1268
  %1270 = vmatmul.bf16.gmra.mxu0 %v838
  %v1271 = vpop.f32.mrf.mxu0
  %v1272 = vadd.f32 %v294, %v1271
  %v1273 = vpop.f32.mrf.mxu0
  %v1274 = vadd.f32 %v294, %v1273
  %1275 = vmatmul.bf16.gmra.mxu0 %v839
  %v1276 = vpop.f32.mrf.mxu0
  %v1277 = vadd.f32 %v294, %v1276
  %v1278 = vpop.f32.mrf.mxu0
  %v1279 = vadd.f32 %v294, %v1278
  %1280 = vmatmul.bf16.gmra.mxu0 %v840
  %v1281 = vpop.f32.mrf.mxu0
  %v1282 = vadd.f32 %v294, %v1281
  %v1283 = vpop.f32.mrf.mxu0
  %v1284 = vadd.f32 %v294, %v1283
  %1285 = vmatmul.bf16.gmra.mxu0 %v841
  %v1286 = vpop.f32.mrf.mxu0
  %v1287 = vadd.f32 %v294, %v1286
  %v1288 = vpop.f32.mrf.mxu0
  %v1289 = vadd.f32 %v294, %v1288
  %1290 = vmatmul.bf16.gmra.mxu0 %v842
  %v1291 = vpop.f32.mrf.mxu0
  %v1292 = vadd.f32 %v294, %v1291
  %v1293 = vpop.f32.mrf.mxu0
  %v1294 = vadd.f32 %v294, %v1293
  %1295 = vmatmul.bf16.gmra.mxu0 %v843
  %v1296 = vpop.f32.mrf.mxu0
  %v1297 = vadd.f32 %v294, %v1296
  %v1298 = vpop.f32.mrf.mxu0
  %v1299 = vadd.f32 %v294, %v1298
  %1300 = vmatmul.bf16.gmra.mxu0 %v844
  %v1301 = vpop.f32.mrf.mxu0
  %v1302 = vadd.f32 %v294, %v1301
  %v1303 = vpop.f32.mrf.mxu0
  %v1304 = vadd.f32 %v294, %v1303
  %1305 = vmatmul.bf16.gmra.mxu0 %v845
  %v1306 = vpop.f32.mrf.mxu0
  %v1307 = vadd.f32 %v294, %v1306
  %v1308 = vpop.f32.mrf.mxu0
  %v1309 = vadd.f32 %v294, %v1308
  %1310 = vmatmul.bf16.gmra.mxu0 %v846
  %v1311 = vpop.f32.mrf.mxu0
  %v1312 = vadd.f32 %v294, %v1311
  %v1313 = vpop.f32.mrf.mxu0
  %v1314 = vadd.f32 %v294, %v1313
  %1315 = vmatmul.bf16.gmra.mxu0 %v847
  %v1316 = vpop.f32.mrf.mxu0
  %v1317 = vadd.f32 %v294, %v1316
  %v1318 = vpop.f32.mrf.mxu0
  %v1319 = vadd.f32 %v294, %v1318
  %1320 = vmatmul.bf16.gmra.mxu0 %v848
  %v1321 = vpop.f32.mrf.mxu0
  %v1322 = vadd.f32 %v294, %v1321
  %v1323 = vpop.f32.mrf.mxu0
  %v1324 = vadd.f32 %v294, %v1323
  %1325 = vmatmul.bf16.gmra.mxu0 %v849
  %v1326 = vpop.f32.mrf.mxu0
  %v1327 = vadd.f32 %v294, %v1326
  %v1328 = vpop.f32.mrf.mxu0
  %v1329 = vadd.f32 %v294, %v1328
  %1330 = vmatmul.bf16.gmra.mxu0 %v850
  %v1331 = vpop.f32.mrf.mxu0
  %v1332 = vadd.f32 %v294, %v1331
  %v1333 = vpop.f32.mrf.mxu0
  %v1334 = vadd.f32 %v294, %v1333
  %1335 = vmatmul.bf16.gmra.mxu0 %v851
  %v1336 = vpop.f32.mrf.mxu0
  %v1337 = vadd.f32 %v294, %v1336
  %v1338 = vpop.f32.mrf.mxu0
  %v1339 = vadd.f32 %v294, %v1338
  %1340 = vmatmul.bf16.gmra.mxu0 %v852
  %v1341 = vpop.f32.mrf.mxu0
  %v1342 = vadd.f32 %v294, %v1341
  %v1343 = vpop.f32.mrf.mxu0
  %v1344 = vadd.f32 %v294, %v1343
  %1345 = vmatmul.bf16.gmra.mxu0 %v853
  %v1346 = vpop.f32.mrf.mxu0
  %v1347 = vadd.f32 %v294, %v1346
  %v1348 = vpop.f32.mrf.mxu0
  %v1349 = vadd.f32 %v294, %v1348
  %1350 = vmatmul.bf16.gmra.mxu0 %v854
  %v1351 = vpop.f32.mrf.mxu0
  %v1352 = vadd.f32 %v294, %v1351
  %v1353 = vpop.f32.mrf.mxu0
  %v1354 = vadd.f32 %v294, %v1353
  %1355 = vmatmul.bf16.gmra.mxu0 %v855
  %v1356 = vpop.f32.mrf.mxu0
  %v1357 = vadd.f32 %v294, %v1356
  %v1358 = vpop.f32.mrf.mxu0
  %v1359 = vadd.f32 %v294, %v1358
  %1360 = vmatmul.bf16.gmra.mxu0 %v856
  %v1361 = vpop.f32.mrf.mxu0
  %v1362 = vadd.f32 %v294, %v1361
  %v1363 = vpop.f32.mrf.mxu0
  %v1364 = vadd.f32 %v294, %v1363
  %1365 = vmatmul.bf16.gmra.mxu0 %v857
  %v1366 = vpop.f32.mrf.mxu0
  %v1367 = vadd.f32 %v294, %v1366
  %v1368 = vpop.f32.mrf.mxu0
  %v1369 = vadd.f32 %v294, %v1368
  %1370 = vmatmul.bf16.gmra.mxu0 %v858
  %v1371 = vpop.f32.mrf.mxu0
  %v1372 = vadd.f32 %v294, %v1371
  %v1373 = vpop.f32.mrf.mxu0
  %v1374 = vadd.f32 %v294, %v1373
  %1375 = vmatmul.bf16.gmra.mxu0 %v859
  %v1376 = vpop.f32.mrf.mxu0
  %v1377 = vadd.f32 %v294, %v1376
  %v1378 = vpop.f32.mrf.mxu0
  %v1379 = vadd.f32 %v294, %v1378
  %1380 = vmatmul.bf16.gmra.mxu0 %v860
  %v1381 = vpop.f32.mrf.mxu0
  %v1382 = vadd.f32 %v294, %v1381
  %v1383 = vpop.f32.mrf.mxu0
  %v1384 = vadd.f32 %v294, %v1383
  %1385 = vmatmul.bf16.gmra.mxu0 %v861
  %v1386 = vpop.f32.mrf.mxu0
  %v1387 = vadd.f32 %v294, %v1386
  %v1388 = vpop.f32.mrf.mxu0
  %v1389 = vadd.f32 %v294, %v1388
  %1390 = vmatmul.bf16.gmra.mxu0 %v862
  %v1391 = vpop.f32.mrf.mxu0
  %v1392 = vadd.f32 %v294, %v1391
  %v1393 = vpop.f32.mrf.mxu0
  %v1394 = vadd.f32 %v294, %v1393
  %1395 = vmatmul.bf16.gmra.mxu0 %v863
  %v1396 = vpop.f32.mrf.mxu0
  %v1397 = vadd.f32 %v294, %v1396
  %v1398 = vpop.f32.mrf.mxu0
  %v1399 = vadd.f32 %v294, %v1398
  %1400 = vmatmul.bf16.gmra.mxu0 %v864
  %v1401 = vpop.f32.mrf.mxu0
  %v1402 = vadd.f32 %v294, %v1401
  %v1403 = vpop.f32.mrf.mxu0
  %v1404 = vadd.f32 %v294, %v1403
  %1405 = vmatmul.bf16.gmra.mxu0 %v865
  %v1406 = vpop.f32.mrf.mxu0
  %v1407 = vadd.f32 %v294, %v1406
  %v1408 = vpop.f32.mrf.mxu0
  %v1409 = vadd.f32 %v294, %v1408
  %1410 = vmatmul.bf16.gmra.mxu0 %v866
  %v1411 = vpop.f32.mrf.mxu0
  %v1412 = vadd.f32 %v294, %v1411
  %v1413 = vpop.f32.mrf.mxu0
  %v1414 = vadd.f32 %v294, %v1413
  %1415 = vmatmul.bf16.gmra.mxu0 %v867
  %v1416 = vpop.f32.mrf.mxu0
  %v1417 = vadd.f32 %v294, %v1416
  %v1418 = vpop.f32.mrf.mxu0
  %v1419 = vadd.f32 %v294, %v1418
  %1420 = vmatmul.bf16.gmra.mxu0 %v868
  %v1421 = vpop.f32.mrf.mxu0
  %v1422 = vadd.f32 %v294, %v1421
  %v1423 = vpop.f32.mrf.mxu0
  %v1424 = vadd.f32 %v294, %v1423
  %1425 = vmatmul.bf16.gmra.mxu0 %v869
  %v1426 = vpop.f32.mrf.mxu0
  %v1427 = vadd.f32 %v294, %v1426
  %v1428 = vpop.f32.mrf.mxu0
  %v1429 = vadd.f32 %v294, %v1428
  %1430 = vmatmul.bf16.gmra.mxu0 %v870
  %v1431 = vpop.f32.mrf.mxu0
  %v1432 = vadd.f32 %v294, %v1431
  %v1433 = vpop.f32.mrf.mxu0
  %v1434 = vadd.f32 %v294, %v1433
  %1435 = vmatmul.bf16.gmra.mxu0 %v871
  %v1436 = vpop.f32.mrf.mxu0
  %v1437 = vadd.f32 %v294, %v1436
  %v1438 = vpop.f32.mrf.mxu0
  %v1439 = vadd.f32 %v294, %v1438
  %1440 = vmatmul.bf16.gmra.mxu0 %v872
  %v1441 = vpop.f32.mrf.mxu0
  %v1442 = vadd.f32 %v294, %v1441
  %v1443 = vpop.f32.mrf.mxu0
  %v1444 = vadd.f32 %v294, %v1443
  %1445 = vmatmul.bf16.gmra.mxu0 %v873
  %v1446 = vpop.f32.mrf.mxu0
  %v1447 = vadd.f32 %v294, %v1446
  %v1448 = vpop.f32.mrf.mxu0
  %v1449 = vadd.f32 %v294, %v1448
  %1450 = vmatmul.bf16.gmra.mxu0 %v874
  %v1451 = vpop.f32.mrf.mxu0
  %v1452 = vadd.f32 %v294, %v1451
  %v1453 = vpop.f32.mrf.mxu0
  %v1454 = vadd.f32 %v294, %v1453
  %1455 = vmatmul.bf16.gmra.mxu0 %v875
  %v1456 = vpop.f32.mrf.mxu0
  %v1457 = vadd.f32 %v294, %v1456
  %v1458 = vpop.f32.mrf.mxu0
  %v1459 = vadd.f32 %v294, %v1458
  %1460 = vmatmul.bf16.gmra.mxu0 %v876
  %v1461 = vpop.f32.mrf.mxu0
  %v1462 = vadd.f32 %v294, %v1461
  %v1463 = vpop.f32.mrf.mxu0
  %v1464 = vadd.f32 %v294, %v1463
  %1465 = vmatmul.bf16.gmra.mxu0 %v877
  %v1466 = vpop.f32.mrf.mxu0
  %v1467 = vadd.f32 %v294, %v1466
  %v1468 = vpop.f32.mrf.mxu0
  %v1469 = vadd.f32 %v294, %v1468
  %1470 = vmatmul.bf16.gmra.mxu0 %v878
  %v1471 = vpop.f32.mrf.mxu0
  %v1472 = vadd.f32 %v294, %v1471
  %v1473 = vpop.f32.mrf.mxu0
  %v1474 = vadd.f32 %v294, %v1473
  %1475 = vmatmul.bf16.gmra.mxu0 %v879
  %v1476 = vpop.f32.mrf.mxu0
  %v1477 = vadd.f32 %v294, %v1476
  %v1478 = vpop.f32.mrf.mxu0
  %v1479 = vadd.f32 %v294, %v1478
  %1480 = vmatmul.bf16.gmra.mxu0 %v880
  %v1481 = vpop.f32.mrf.mxu0
  %v1482 = vadd.f32 %v294, %v1481
  %v1483 = vpop.f32.mrf.mxu0
  %v1484 = vadd.f32 %v294, %v1483
  %1485 = vmatmul.bf16.gmra.mxu0 %v881
  %v1486 = vpop.f32.mrf.mxu0
  %v1487 = vadd.f32 %v294, %v1486
  %v1488 = vpop.f32.mrf.mxu0
  %v1489 = vadd.f32 %v294, %v1488
  %1490 = vmatmul.bf16.gmra.mxu0 %v882
  %v1491 = vpop.f32.mrf.mxu0
  %v1492 = vadd.f32 %v294, %v1491
  %v1493 = vpop.f32.mrf.mxu0
  %v1494 = vadd.f32 %v294, %v1493
  %1495 = vmatmul.bf16.gmra.mxu0 %v883
  %v1496 = vpop.f32.mrf.mxu0
  %v1497 = vadd.f32 %v294, %v1496
  %v1498 = vpop.f32.mrf.mxu0
  %v1499 = vadd.f32 %v294, %v1498
  %1500 = vmatmul.bf16.gmra.mxu0 %v884
  %v1501 = vpop.f32.mrf.mxu0
  %v1502 = vadd.f32 %v294, %v1501
  %v1503 = vpop.f32.mrf.mxu0
  %v1504 = vadd.f32 %v294, %v1503
  %1505 = vmatmul.bf16.gmra.mxu0 %v885
  %v1506 = vpop.f32.mrf.mxu0
  %v1507 = vadd.f32 %v294, %v1506
  %v1508 = vpop.f32.mrf.mxu0
  %v1509 = vadd.f32 %v294, %v1508
  %1510 = vmatmul.bf16.gmra.mxu0 %v886
  %v1511 = vpop.f32.mrf.mxu0
  %v1512 = vadd.f32 %v294, %v1511
  %v1513 = vpop.f32.mrf.mxu0
  %v1514 = vadd.f32 %v294, %v1513
  %1515 = vmatmul.bf16.gmra.mxu0 %v887
  %v1516 = vpop.f32.mrf.mxu0
  %v1517 = vadd.f32 %v294, %v1516
  %v1518 = vpop.f32.mrf.mxu0
  %v1519 = vadd.f32 %v294, %v1518
  %1520 = vmatmul.bf16.gmra.mxu0 %v888
  %v1521 = vpop.f32.mrf.mxu0
  %v1522 = vadd.f32 %v294, %v1521
  %v1523 = vpop.f32.mrf.mxu0
  %v1524 = vadd.f32 %v294, %v1523
  %1525 = vmatmul.bf16.gmra.mxu0 %v889
  %v1526 = vpop.f32.mrf.mxu0
  %v1527 = vadd.f32 %v294, %v1526
  %v1528 = vpop.f32.mrf.mxu0
  %v1529 = vadd.f32 %v294, %v1528
  %1530 = vmatmul.bf16.gmra.mxu0 %v890
  %v1531 = vpop.f32.mrf.mxu0
  %v1532 = vadd.f32 %v294, %v1531
  %v1533 = vpop.f32.mrf.mxu0
  %v1534 = vadd.f32 %v294, %v1533
  %1535 = vmatmul.bf16.gmra.mxu0 %v891
  %v1536 = vpop.f32.mrf.mxu0
  %v1537 = vadd.f32 %v294, %v1536
  %v1538 = vpop.f32.mrf.mxu0
  %v1539 = vadd.f32 %v294, %v1538
  %1540 = vmatmul.bf16.gmra.mxu0 %v892
  %v1541 = vpop.f32.mrf.mxu0
  %v1542 = vadd.f32 %v294, %v1541
  %v1543 = vpop.f32.mrf.mxu0
  %v1544 = vadd.f32 %v294, %v1543
  %1545 = vmatmul.bf16.gmra.mxu0 %v893
  %v1546 = vpop.f32.mrf.mxu0
  %v1547 = vadd.f32 %v294, %v1546
  %v1548 = vpop.f32.mrf.mxu0
  %v1549 = vadd.f32 %v294, %v1548
  %1550 = vmatmul.bf16.gmra.mxu0 %v894
  %v1551 = vpop.f32.mrf.mxu0
  %v1552 = vadd.f32 %v294, %v1551
  %v1553 = vpop.f32.mrf.mxu0
  %v1554 = vadd.f32 %v294, %v1553
  %1555 = vmatmul.bf16.gmra.mxu0 %v895
  %v1556 = vpop.f32.mrf.mxu0
  %v1557 = vadd.f32 %v294, %v1556
  %v1558 = vpop.f32.mrf.mxu0
  %v1559 = vadd.f32 %v294, %v1558
  %1560 = vmatmul.bf16.gmra.mxu0 %v896
  %v1561 = vpop.f32.mrf.mxu0
  %v1562 = vadd.f32 %v294, %v1561
  %v1563 = vpop.f32.mrf.mxu0
  %v1564 = vadd.f32 %v294, %v1563
  %1565 = vmatmul.bf16.gmra.mxu0 %v897
  %v1566 = vpop.f32.mrf.mxu0
  %v1567 = vadd.f32 %v294, %v1566
  %v1568 = vpop.f32.mrf.mxu0
  %v1569 = vadd.f32 %v294, %v1568
  %1570 = vmatmul.bf16.gmra.mxu0 %v898
  %v1571 = vpop.f32.mrf.mxu0
  %v1572 = vadd.f32 %v294, %v1571
  %v1573 = vpop.f32.mrf.mxu0
  %v1574 = vadd.f32 %v294, %v1573
  %1575 = vmatmul.bf16.gmra.mxu0 %v899
  %v1576 = vpop.f32.mrf.mxu0
  %v1577 = vadd.f32 %v294, %v1576
  %v1578 = vpop.f32.mrf.mxu0
  %v1579 = vadd.f32 %v294, %v1578
  %1580 = vmatmul.bf16.gmra.mxu0 %v900
  %v1581 = vpop.f32.mrf.mxu0
  %v1582 = vadd.f32 %v294, %v1581
  %v1583 = vpop.f32.mrf.mxu0
  %v1584 = vadd.f32 %v294, %v1583
  %1585 = vmatmul.bf16.gmra.mxu0 %v901
  %v1586 = vpop.f32.mrf.mxu0
  %v1587 = vadd.f32 %v294, %v1586
  %v1588 = vpop.f32.mrf.mxu0
  %v1589 = vadd.f32 %v294, %v1588
  %1590 = vmatmul.bf16.gmra.mxu0 %v902
  %v1591 = vpop.f32.mrf.mxu0
  %v1592 = vadd.f32 %v294, %v1591
  %v1593 = vpop.f32.mrf.mxu0
  %v1594 = vadd.f32 %v294, %v1593
  %1595 = vmatmul.bf16.gmra.mxu0 %v903
  %v1596 = vpop.f32.mrf.mxu0
  %v1597 = vadd.f32 %v294, %v1596
  %v1598 = vpop.f32.mrf.mxu0
  %v1599 = vadd.f32 %v294, %v1598
  %1600 = vmatmul.bf16.gmra.mxu0 %v904
  %v1601 = vpop.f32.mrf.mxu0
  %v1602 = vadd.f32 %v294, %v1601
  %v1603 = vpop.f32.mrf.mxu0
  %v1604 = vadd.f32 %v294, %v1603
  %1605 = vmatmul.bf16.gmra.mxu0 %v905
  %v1606 = vpop.f32.mrf.mxu0
  %v1607 = vadd.f32 %v294, %v1606
  %v1608 = vpop.f32.mrf.mxu0
  %v1609 = vadd.f32 %v294, %v1608
  %1610 = vmatmul.bf16.gmra.mxu0 %v906
  %v1611 = vpop.f32.mrf.mxu0
  %v1612 = vadd.f32 %v294, %v1611
  %v1613 = vpop.f32.mrf.mxu0
  %v1614 = vadd.f32 %v294, %v1613
  %1615 = vmatmul.bf16.gmra.mxu0 %v907
  %v1616 = vpop.f32.mrf.mxu0
  %v1617 = vadd.f32 %v294, %v1616
  %v1618 = vpop.f32.mrf.mxu0
  %v1619 = vadd.f32 %v294, %v1618
  %1620 = vmatmul.bf16.gmra.mxu0 %v908
  %v1621 = vpop.f32.mrf.mxu0
  %v1622 = vadd.f32 %v294, %v1621
  %v1623 = vpop.f32.mrf.mxu0
  %v1624 = vadd.f32 %v294, %v1623
  %1625 = vmatmul.bf16.gmra.mxu0 %v909
  %v1626 = vpop.f32.mrf.mxu0
  %v1627 = vadd.f32 %v294, %v1626
  %v1628 = vpop.f32.mrf.mxu0
  %v1629 = vadd.f32 %v294, %v1628
  %1630 = vmatmul.bf16.gmra.mxu0 %v910
  %v1631 = vpop.f32.mrf.mxu0
  %v1632 = vadd.f32 %v294, %v1631
  %v1633 = vpop.f32.mrf.mxu0
  %v1634 = vadd.f32 %v294, %v1633
  %1635 = vmatmul.bf16.gmra.mxu0 %v911
  %v1636 = vpop.f32.mrf.mxu0
  %v1637 = vadd.f32 %v294, %v1636
  %v1638 = vpop.f32.mrf.mxu0
  %v1639 = vadd.f32 %v294, %v1638
  %1640 = vmatmul.bf16.gmra.mxu0 %v912
  %v1641 = vpop.f32.mrf.mxu0
  %v1642 = vadd.f32 %v294, %v1641
  %v1643 = vpop.f32.mrf.mxu0
  %v1644 = vadd.f32 %v294, %v1643
  %1645 = vmatmul.bf16.gmra.mxu0 %v913
  %v1646 = vpop.f32.mrf.mxu0
  %v1647 = vadd.f32 %v294, %v1646
  %v1648 = vpop.f32.mrf.mxu0
  %v1649 = vadd.f32 %v294, %v1648
  %1650 = vmatmul.bf16.gmra.mxu0 %v914
  %v1651 = vpop.f32.mrf.mxu0
  %v1652 = vadd.f32 %v294, %v1651
  %v1653 = vpop.f32.mrf.mxu0
  %v1654 = vadd.f32 %v294, %v1653
  %1655 = vmatmul.bf16.gmra.mxu0 %v915
  %v1656 = vpop.f32.mrf.mxu0
  %v1657 = vadd.f32 %v294, %v1656
  %v1658 = vpop.f32.mrf.mxu0
  %v1659 = vadd.f32 %v294, %v1658
  %1660 = vmatmul.bf16.gmra.mxu0 %v916
  %v1661 = vpop.f32.mrf.mxu0
  %v1662 = vadd.f32 %v294, %v1661
  %v1663 = vpop.f32.mrf.mxu0
  %v1664 = vadd.f32 %v294, %v1663
  %1665 = vmatmul.bf16.gmra.mxu0 %v917
  %v1666 = vpop.f32.mrf.mxu0
  %v1667 = vadd.f32 %v294, %v1666
  %v1668 = vpop.f32.mrf.mxu0
  %v1669 = vadd.f32 %v294, %v1668
  %1670 = vmatmul.bf16.gmra.mxu0 %v918
  %v1671 = vpop.f32.mrf.mxu0
  %v1672 = vadd.f32 %v294, %v1671
  %v1673 = vpop.f32.mrf.mxu0
  %v1674 = vadd.f32 %v294, %v1673
  %1675 = vmatmul.bf16.gmra.mxu0 %v919
  %v1676 = vpop.f32.mrf.mxu0
  %v1677 = vadd.f32 %v294, %v1676
  %v1678 = vpop.f32.mrf.mxu0
  %v1679 = vadd.f32 %v294, %v1678
  %1680 = vmatmul.bf16.gmra.mxu0 %v920
  %v1681 = vpop.f32.mrf.mxu0
  %v1682 = vadd.f32 %v294, %v1681
  %v1683 = vpop.f32.mrf.mxu0
  %v1684 = vadd.f32 %v294, %v1683
  %1685 = vmatmul.bf16.gmra.mxu0 %v921
  %v1686 = vpop.f32.mrf.mxu0
  %v1687 = vadd.f32 %v294, %v1686
  %v1688 = vpop.f32.mrf.mxu0
  %v1689 = vadd.f32 %v294, %v1688
  %1690 = vmatmul.bf16.gmra.mxu0 %v922
  %v1691 = vpop.f32.mrf.mxu0
  %v1692 = vadd.f32 %v294, %v1691
  %v1693 = vpop.f32.mrf.mxu0
  %v1694 = vadd.f32 %v294, %v1693
  %1695 = vmatmul.bf16.gmra.mxu0 %v923
  %v1696 = vpop.f32.mrf.mxu0
  %v1697 = vadd.f32 %v294, %v1696
  %v1698 = vpop.f32.mrf.mxu0
  %v1699 = vadd.f32 %v294, %v1698
  %1700 = vmatmul.bf16.gmra.mxu0 %v924
  %v1701 = vpop.f32.mrf.mxu0
  %v1702 = vadd.f32 %v294, %v1701
  %v1703 = vpop.f32.mrf.mxu0
  %v1704 = vadd.f32 %v294, %v1703
  %1705 = vmatmul.bf16.gmra.mxu0 %v925
  %v1706 = vpop.f32.mrf.mxu0
  %v1707 = vadd.f32 %v294, %v1706
  %v1708 = vpop.f32.mrf.mxu0
  %v1709 = vadd.f32 %v294, %v1708
  %1710 = vmatmul.bf16.gmra.mxu0 %v926
  %v1711 = vpop.f32.mrf.mxu0
  %v1712 = vadd.f32 %v294, %v1711
  %v1713 = vpop.f32.mrf.mxu0
  %v1714 = vadd.f32 %v294, %v1713
  %1715 = vmatmul.bf16.gmra.mxu0 %v927
  %v1716 = vpop.f32.mrf.mxu0
  %v1717 = vadd.f32 %v294, %v1716
  %v1718 = vpop.f32.mrf.mxu0
  %v1719 = vadd.f32 %v294, %v1718
  %1720 = vmatmul.bf16.gmra.mxu0 %v928
  %v1721 = vpop.f32.mrf.mxu0
  %v1722 = vadd.f32 %v294, %v1721
  %v1723 = vpop.f32.mrf.mxu0
  %v1724 = vadd.f32 %v294, %v1723
  %1725 = vmatmul.bf16.gmra.mxu0 %v929
  %v1726 = vpop.f32.mrf.mxu0
  %v1727 = vadd.f32 %v294, %v1726
  %v1728 = vpop.f32.mrf.mxu0
  %v1729 = vadd.f32 %v294, %v1728
  %1730 = vmatmul.bf16.gmra.mxu0 %v930
  %v1731 = vpop.f32.mrf.mxu0
  %v1732 = vadd.f32 %v294, %v1731
  %v1733 = vpop.f32.mrf.mxu0
  %v1734 = vadd.f32 %v294, %v1733
  %1735 = vmatmul.bf16.gmra.mxu0 %v931
  %v1736 = vpop.f32.mrf.mxu0
  %v1737 = vadd.f32 %v294, %v1736
  %v1738 = vpop.f32.mrf.mxu0
  %v1739 = vadd.f32 %v294, %v1738
  %1740 = vmatmul.bf16.gmra.mxu0 %v932
  %v1741 = vpop.f32.mrf.mxu0
  %v1742 = vadd.f32 %v294, %v1741
  %v1743 = vpop.f32.mrf.mxu0
  %v1744 = vadd.f32 %v294, %v1743
  %1745 = vmatmul.bf16.gmra.mxu0 %v933
  %v1746 = vpop.f32.mrf.mxu0
  %v1747 = vadd.f32 %v294, %v1746
  %v1748 = vpop.f32.mrf.mxu0
  %v1749 = vadd.f32 %v294, %v1748
  %1750 = vmatmul.bf16.gmra.mxu0 %v934
  %v1751 = vpop.f32.mrf.mxu0
  %v1752 = vadd.f32 %v294, %v1751
  %v1753 = vpop.f32.mrf.mxu0
  %v1754 = vadd.f32 %v294, %v1753
  %1755 = vmatmul.bf16.gmra.mxu0 %v935
  %v1756 = vpop.f32.mrf.mxu0
  %v1757 = vadd.f32 %v294, %v1756
  %v1758 = vpop.f32.mrf.mxu0
  %v1759 = vadd.f32 %v294, %v1758
  %1760 = vdwg.mxu0
  %vm1761 = vcmask 64512
  %v1762 = vsel %vm1761, %v1122, 0.0
  %v1763 = vsel %vm1761, %v1124, 0.0
  %v1764 = vadd.f32 %v1762, %v1763
  %v1765 = vsel %vm1761, %v1127, 0.0
  %v1766 = vadd.f32 %v1764, %v1765
  %v1767 = vsel %vm1761, %v1129, 0.0
  %v1768 = vadd.f32 %v1766, %v1767
  %v1769 = vsel %vm1761, %v1132, 0.0
  %v1770 = vadd.f32 %v1768, %v1769
  %v1771 = vsel %vm1761, %v1134, 0.0
  %v1772 = vadd.f32 %v1770, %v1771
  %v1773 = vsel %vm1761, %v1137, 0.0
  %v1774 = vadd.f32 %v1772, %v1773
  %v1775 = vsel %vm1761, %v1139, 0.0
  %v1776 = vadd.f32 %v1774, %v1775
  %v1777 = vsel %vm1761, %v1142, 0.0
  %v1778 = vadd.f32 %v1776, %v1777
  %v1779 = vsel %vm1761, %v1144, 0.0
  %v1780 = vadd.f32 %v1778, %v1779
  %v1781 = vsel %vm1761, %v1147, 0.0
  %v1782 = vadd.f32 %v1780, %v1781
  %v1783 = vsel %vm1761, %v1149, 0.0
  %v1784 = vadd.f32 %v1782, %v1783
  %v1785 = vsel %vm1761, %v1152, 0.0
  %v1786 = vadd.f32 %v1784, %v1785
  %v1787 = vsel %vm1761, %v1154, 0.0
  %v1788 = vadd.f32 %v1786, %v1787
  %v1789 = vsel %vm1761, %v1157, 0.0
  %v1790 = vadd.f32 %v1788, %v1789
  %v1791 = vsel %vm1761, %v1159, 0.0
  %v1792 = vadd.f32 %v1790, %v1791
  %v1793 = vsel %vm1761, %v1162, 0.0
  %v1794 = vadd.f32 %v1792, %v1793
  %v1795 = vsel %vm1761, %v1164, 0.0
  %v1796 = vadd.f32 %v1794, %v1795
  %v1797 = vsel %vm1761, %v1167, 0.0
  %v1798 = vadd.f32 %v1796, %v1797
  %v1799 = vsel %vm1761, %v1169, 0.0
  %v1800 = vadd.f32 %v1798, %v1799
  %v1801 = vsel %vm1761, %v1172, 0.0
  %v1802 = vadd.f32 %v1800, %v1801
  %v1803 = vsel %vm1761, %v1174, 0.0
  %v1804 = vadd.f32 %v1802, %v1803
  %v1805 = vsel %vm1761, %v1177, 0.0
  %v1806 = vadd.f32 %v1804, %v1805
  %v1807 = vsel %vm1761, %v1179, 0.0
  %v1808 = vadd.f32 %v1806, %v1807
  %v1809 = vsel %vm1761, %v1182, 0.0
  %v1810 = vadd.f32 %v1808, %v1809
  %v1811 = vsel %vm1761, %v1184, 0.0
  %v1812 = vadd.f32 %v1810, %v1811
  %v1813 = vsel %vm1761, %v1187, 0.0
  %v1814 = vadd.f32 %v1812, %v1813
  %v1815 = vsel %vm1761, %v1189, 0.0
  %v1816 = vadd.f32 %v1814, %v1815
  %v1817 = vsel %vm1761, %v1192, 0.0
  %v1818 = vadd.f32 %v1816, %v1817
  %v1819 = vsel %vm1761, %v1194, 0.0
  %v1820 = vadd.f32 %v1818, %v1819
  %v1821 = vsel %vm1761, %v1197, 0.0
  %v1822 = vadd.f32 %v1820, %v1821
  %v1823 = vsel %vm1761, %v1199, 0.0
  %v1824 = vadd.f32 %v1822, %v1823
  %v1825 = vsel %vm1761, %v1202, 0.0
  %v1826 = vadd.f32 %v1824, %v1825
  %v1827 = vsel %vm1761, %v1204, 0.0
  %v1828 = vadd.f32 %v1826, %v1827
  %v1829 = vsel %vm1761, %v1207, 0.0
  %v1830 = vadd.f32 %v1828, %v1829
  %v1831 = vsel %vm1761, %v1209, 0.0
  %v1832 = vadd.f32 %v1830, %v1831
  %v1833 = vsel %vm1761, %v1212, 0.0
  %v1834 = vadd.f32 %v1832, %v1833
  %v1835 = vsel %vm1761, %v1214, 0.0
  %v1836 = vadd.f32 %v1834, %v1835
  %v1837 = vsel %vm1761, %v1217, 0.0
  %v1838 = vadd.f32 %v1836, %v1837
  %v1839 = vsel %vm1761, %v1219, 0.0
  %v1840 = vadd.f32 %v1838, %v1839
  %v1841 = vsel %vm1761, %v1222, 0.0
  %v1842 = vadd.f32 %v1840, %v1841
  %v1843 = vsel %vm1761, %v1224, 0.0
  %v1844 = vadd.f32 %v1842, %v1843
  %v1845 = vsel %vm1761, %v1227, 0.0
  %v1846 = vadd.f32 %v1844, %v1845
  %v1847 = vsel %vm1761, %v1229, 0.0
  %v1848 = vadd.f32 %v1846, %v1847
  %v1849 = vsel %vm1761, %v1232, 0.0
  %v1850 = vadd.f32 %v1848, %v1849
  %v1851 = vsel %vm1761, %v1234, 0.0
  %v1852 = vadd.f32 %v1850, %v1851
  %v1853 = vsel %vm1761, %v1237, 0.0
  %v1854 = vadd.f32 %v1852, %v1853
  %v1855 = vsel %vm1761, %v1239, 0.0
  %v1856 = vadd.f32 %v1854, %v1855
  %v1857 = vsel %vm1761, %v1242, 0.0
  %v1858 = vadd.f32 %v1856, %v1857
  %v1859 = vsel %vm1761, %v1244, 0.0
  %v1860 = vadd.f32 %v1858, %v1859
  %v1861 = vsel %vm1761, %v1247, 0.0
  %v1862 = vadd.f32 %v1860, %v1861
  %v1863 = vsel %vm1761, %v1249, 0.0
  %v1864 = vadd.f32 %v1862, %v1863
  %v1865 = vsel %vm1761, %v1252, 0.0
  %v1866 = vadd.f32 %v1864, %v1865
  %v1867 = vsel %vm1761, %v1254, 0.0
  %v1868 = vadd.f32 %v1866, %v1867
  %v1869 = vsel %vm1761, %v1257, 0.0
  %v1870 = vadd.f32 %v1868, %v1869
  %v1871 = vsel %vm1761, %v1259, 0.0
  %v1872 = vadd.f32 %v1870, %v1871
  %v1873 = vsel %vm1761, %v1262, 0.0
  %v1874 = vadd.f32 %v1872, %v1873
  %v1875 = vsel %vm1761, %v1264, 0.0
  %v1876 = vadd.f32 %v1874, %v1875
  %v1877 = vsel %vm1761, %v1267, 0.0
  %v1878 = vadd.f32 %v1876, %v1877
  %v1879 = vsel %vm1761, %v1269, 0.0
  %v1880 = vadd.f32 %v1878, %v1879
  %v1881 = vsel %vm1761, %v1272, 0.0
  %v1882 = vadd.f32 %v1880, %v1881
  %v1883 = vsel %vm1761, %v1274, 0.0
  %v1884 = vadd.f32 %v1882, %v1883
  %v1885 = vsel %vm1761, %v1277, 0.0
  %v1886 = vadd.f32 %v1884, %v1885
  %v1887 = vsel %vm1761, %v1279, 0.0
  %v1888 = vadd.f32 %v1886, %v1887
  %v1889 = vsel %vm1761, %v1282, 0.0
  %v1890 = vadd.f32 %v1888, %v1889
  %v1891 = vsel %vm1761, %v1284, 0.0
  %v1892 = vadd.f32 %v1890, %v1891
  %v1893 = vsel %vm1761, %v1287, 0.0
  %v1894 = vadd.f32 %v1892, %v1893
  %v1895 = vsel %vm1761, %v1289, 0.0
  %v1896 = vadd.f32 %v1894, %v1895
  %v1897 = vsel %vm1761, %v1292, 0.0
  %v1898 = vadd.f32 %v1896, %v1897
  %v1899 = vsel %vm1761, %v1294, 0.0
  %v1900 = vadd.f32 %v1898, %v1899
  %v1901 = vsel %vm1761, %v1297, 0.0
  %v1902 = vadd.f32 %v1900, %v1901
  %v1903 = vsel %vm1761, %v1299, 0.0
  %v1904 = vadd.f32 %v1902, %v1903
  %v1905 = vsel %vm1761, %v1302, 0.0
  %v1906 = vadd.f32 %v1904, %v1905
  %v1907 = vsel %vm1761, %v1304, 0.0
  %v1908 = vadd.f32 %v1906, %v1907
  %v1909 = vsel %vm1761, %v1307, 0.0
  %v1910 = vadd.f32 %v1908, %v1909
  %v1911 = vsel %vm1761, %v1309, 0.0
  %v1912 = vadd.f32 %v1910, %v1911
  %v1913 = vsel %vm1761, %v1312, 0.0
  %v1914 = vadd.f32 %v1912, %v1913
  %v1915 = vsel %vm1761, %v1314, 0.0
  %v1916 = vadd.f32 %v1914, %v1915
  %v1917 = vsel %vm1761, %v1317, 0.0
  %v1918 = vadd.f32 %v1916, %v1917
  %v1919 = vsel %vm1761, %v1319, 0.0
  %v1920 = vadd.f32 %v1918, %v1919
  %v1921 = vsel %vm1761, %v1322, 0.0
  %v1922 = vadd.f32 %v1920, %v1921
  %v1923 = vsel %vm1761, %v1324, 0.0
  %v1924 = vadd.f32 %v1922, %v1923
  %v1925 = vsel %vm1761, %v1327, 0.0
  %v1926 = vadd.f32 %v1924, %v1925
  %v1927 = vsel %vm1761, %v1329, 0.0
  %v1928 = vadd.f32 %v1926, %v1927
  %v1929 = vsel %vm1761, %v1332, 0.0
  %v1930 = vadd.f32 %v1928, %v1929
  %v1931 = vsel %vm1761, %v1334, 0.0
  %v1932 = vadd.f32 %v1930, %v1931
  %v1933 = vsel %vm1761, %v1337, 0.0
  %v1934 = vadd.f32 %v1932, %v1933
  %v1935 = vsel %vm1761, %v1339, 0.0
  %v1936 = vadd.f32 %v1934, %v1935
  %v1937 = vsel %vm1761, %v1342, 0.0
  %v1938 = vadd.f32 %v1936, %v1937
  %v1939 = vsel %vm1761, %v1344, 0.0
  %v1940 = vadd.f32 %v1938, %v1939
  %v1941 = vsel %vm1761, %v1347, 0.0
  %v1942 = vadd.f32 %v1940, %v1941
  %v1943 = vsel %vm1761, %v1349, 0.0
  %v1944 = vadd.f32 %v1942, %v1943
  %v1945 = vsel %vm1761, %v1352, 0.0
  %v1946 = vadd.f32 %v1944, %v1945
  %v1947 = vsel %vm1761, %v1354, 0.0
  %v1948 = vadd.f32 %v1946, %v1947
  %v1949 = vsel %vm1761, %v1357, 0.0
  %v1950 = vadd.f32 %v1948, %v1949
  %v1951 = vsel %vm1761, %v1359, 0.0
  %v1952 = vadd.f32 %v1950, %v1951
  %v1953 = vsel %vm1761, %v1362, 0.0
  %v1954 = vadd.f32 %v1952, %v1953
  %v1955 = vsel %vm1761, %v1364, 0.0
  %v1956 = vadd.f32 %v1954, %v1955
  %v1957 = vsel %vm1761, %v1367, 0.0
  %v1958 = vadd.f32 %v1956, %v1957
  %v1959 = vsel %vm1761, %v1369, 0.0
  %v1960 = vadd.f32 %v1958, %v1959
  %v1961 = vsel %vm1761, %v1372, 0.0
  %v1962 = vadd.f32 %v1960, %v1961
  %v1963 = vsel %vm1761, %v1374, 0.0
  %v1964 = vadd.f32 %v1962, %v1963
  %v1965 = vsel %vm1761, %v1377, 0.0
  %v1966 = vadd.f32 %v1964, %v1965
  %v1967 = vsel %vm1761, %v1379, 0.0
  %v1968 = vadd.f32 %v1966, %v1967
  %v1969 = vsel %vm1761, %v1382, 0.0
  %v1970 = vadd.f32 %v1968, %v1969
  %v1971 = vsel %vm1761, %v1384, 0.0
  %v1972 = vadd.f32 %v1970, %v1971
  %v1973 = vsel %vm1761, %v1387, 0.0
  %v1974 = vadd.f32 %v1972, %v1973
  %v1975 = vsel %vm1761, %v1389, 0.0
  %v1976 = vadd.f32 %v1974, %v1975
  %v1977 = vsel %vm1761, %v1392, 0.0
  %v1978 = vadd.f32 %v1976, %v1977
  %v1979 = vsel %vm1761, %v1394, 0.0
  %v1980 = vadd.f32 %v1978, %v1979
  %v1981 = vsel %vm1761, %v1397, 0.0
  %v1982 = vadd.f32 %v1980, %v1981
  %v1983 = vsel %vm1761, %v1399, 0.0
  %v1984 = vadd.f32 %v1982, %v1983
  %v1985 = vsel %vm1761, %v1402, 0.0
  %v1986 = vadd.f32 %v1984, %v1985
  %v1987 = vsel %vm1761, %v1404, 0.0
  %v1988 = vadd.f32 %v1986, %v1987
  %v1989 = vsel %vm1761, %v1407, 0.0
  %v1990 = vadd.f32 %v1988, %v1989
  %v1991 = vsel %vm1761, %v1409, 0.0
  %v1992 = vadd.f32 %v1990, %v1991
  %v1993 = vsel %vm1761, %v1412, 0.0
  %v1994 = vadd.f32 %v1992, %v1993
  %v1995 = vsel %vm1761, %v1414, 0.0
  %v1996 = vadd.f32 %v1994, %v1995
  %v1997 = vsel %vm1761, %v1417, 0.0
  %v1998 = vadd.f32 %v1996, %v1997
  %v1999 = vsel %vm1761, %v1419, 0.0
  %v2000 = vadd.f32 %v1998, %v1999
  %v2001 = vsel %vm1761, %v1422, 0.0
  %v2002 = vadd.f32 %v2000, %v2001
  %v2003 = vsel %vm1761, %v1424, 0.0
  %v2004 = vadd.f32 %v2002, %v2003
  %v2005 = vsel %vm1761, %v1427, 0.0
  %v2006 = vadd.f32 %v2004, %v2005
  %v2007 = vsel %vm1761, %v1429, 0.0
  %v2008 = vadd.f32 %v2006, %v2007
  %v2009 = vsel %vm1761, %v1432, 0.0
  %v2010 = vadd.f32 %v2008, %v2009
  %v2011 = vsel %vm1761, %v1434, 0.0
  %v2012 = vadd.f32 %v2010, %v2011
  %v2013 = vsel %vm1761, %v1437, 0.0
  %v2014 = vadd.f32 %v2012, %v2013
  %v2015 = vsel %vm1761, %v1439, 0.0
  %v2016 = vadd.f32 %v2014, %v2015
  %v2017 = vsel %vm1761, %v1442, 0.0
  %v2018 = vadd.f32 %v2016, %v2017
  %v2019 = vsel %vm1761, %v1444, 0.0
  %v2020 = vadd.f32 %v2018, %v2019
  %v2021 = vsel %vm1761, %v1447, 0.0
  %v2022 = vadd.f32 %v2020, %v2021
  %v2023 = vsel %vm1761, %v1449, 0.0
  %v2024 = vadd.f32 %v2022, %v2023
  %v2025 = vsel %vm1761, %v1452, 0.0
  %v2026 = vadd.f32 %v2024, %v2025
  %v2027 = vsel %vm1761, %v1454, 0.0
  %v2028 = vadd.f32 %v2026, %v2027
  %v2029 = vsel %vm1761, %v1457, 0.0
  %v2030 = vadd.f32 %v2028, %v2029
  %v2031 = vsel %vm1761, %v1459, 0.0
  %v2032 = vadd.f32 %v2030, %v2031
  %v2033 = vsel %vm1761, %v1462, 0.0
  %v2034 = vadd.f32 %v2032, %v2033
  %v2035 = vsel %vm1761, %v1464, 0.0
  %v2036 = vadd.f32 %v2034, %v2035
  %v2037 = vsel %vm1761, %v1467, 0.0
  %v2038 = vadd.f32 %v2036, %v2037
  %v2039 = vsel %vm1761, %v1469, 0.0
  %v2040 = vadd.f32 %v2038, %v2039
  %v2041 = vsel %vm1761, %v1472, 0.0
  %v2042 = vadd.f32 %v2040, %v2041
  %v2043 = vsel %vm1761, %v1474, 0.0
  %v2044 = vadd.f32 %v2042, %v2043
  %v2045 = vsel %vm1761, %v1477, 0.0
  %v2046 = vadd.f32 %v2044, %v2045
  %v2047 = vsel %vm1761, %v1479, 0.0
  %v2048 = vadd.f32 %v2046, %v2047
  %v2049 = vsel %vm1761, %v1482, 0.0
  %v2050 = vadd.f32 %v2048, %v2049
  %v2051 = vsel %vm1761, %v1484, 0.0
  %v2052 = vadd.f32 %v2050, %v2051
  %v2053 = vsel %vm1761, %v1487, 0.0
  %v2054 = vadd.f32 %v2052, %v2053
  %v2055 = vsel %vm1761, %v1489, 0.0
  %v2056 = vadd.f32 %v2054, %v2055
  %v2057 = vsel %vm1761, %v1492, 0.0
  %v2058 = vadd.f32 %v2056, %v2057
  %v2059 = vsel %vm1761, %v1494, 0.0
  %v2060 = vadd.f32 %v2058, %v2059
  %v2061 = vsel %vm1761, %v1497, 0.0
  %v2062 = vadd.f32 %v2060, %v2061
  %v2063 = vsel %vm1761, %v1499, 0.0
  %v2064 = vadd.f32 %v2062, %v2063
  %v2065 = vsel %vm1761, %v1502, 0.0
  %v2066 = vadd.f32 %v2064, %v2065
  %v2067 = vsel %vm1761, %v1504, 0.0
  %v2068 = vadd.f32 %v2066, %v2067
  %v2069 = vsel %vm1761, %v1507, 0.0
  %v2070 = vadd.f32 %v2068, %v2069
  %v2071 = vsel %vm1761, %v1509, 0.0
  %v2072 = vadd.f32 %v2070, %v2071
  %v2073 = vsel %vm1761, %v1512, 0.0
  %v2074 = vadd.f32 %v2072, %v2073
  %v2075 = vsel %vm1761, %v1514, 0.0
  %v2076 = vadd.f32 %v2074, %v2075
  %v2077 = vsel %vm1761, %v1517, 0.0
  %v2078 = vadd.f32 %v2076, %v2077
  %v2079 = vsel %vm1761, %v1519, 0.0
  %v2080 = vadd.f32 %v2078, %v2079
  %v2081 = vsel %vm1761, %v1522, 0.0
  %v2082 = vadd.f32 %v2080, %v2081
  %v2083 = vsel %vm1761, %v1524, 0.0
  %v2084 = vadd.f32 %v2082, %v2083
  %v2085 = vsel %vm1761, %v1527, 0.0
  %v2086 = vadd.f32 %v2084, %v2085
  %v2087 = vsel %vm1761, %v1529, 0.0
  %v2088 = vadd.f32 %v2086, %v2087
  %v2089 = vsel %vm1761, %v1532, 0.0
  %v2090 = vadd.f32 %v2088, %v2089
  %v2091 = vsel %vm1761, %v1534, 0.0
  %v2092 = vadd.f32 %v2090, %v2091
  %v2093 = vsel %vm1761, %v1537, 0.0
  %v2094 = vadd.f32 %v2092, %v2093
  %v2095 = vsel %vm1761, %v1539, 0.0
  %v2096 = vadd.f32 %v2094, %v2095
  %v2097 = vsel %vm1761, %v1542, 0.0
  %v2098 = vadd.f32 %v2096, %v2097
  %v2099 = vsel %vm1761, %v1544, 0.0
  %v2100 = vadd.f32 %v2098, %v2099
  %v2101 = vsel %vm1761, %v1547, 0.0
  %v2102 = vadd.f32 %v2100, %v2101
  %v2103 = vsel %vm1761, %v1549, 0.0
  %v2104 = vadd.f32 %v2102, %v2103
  %v2105 = vsel %vm1761, %v1552, 0.0
  %v2106 = vadd.f32 %v2104, %v2105
  %v2107 = vsel %vm1761, %v1554, 0.0
  %v2108 = vadd.f32 %v2106, %v2107
  %v2109 = vsel %vm1761, %v1557, 0.0
  %v2110 = vadd.f32 %v2108, %v2109
  %v2111 = vsel %vm1761, %v1559, 0.0
  %v2112 = vadd.f32 %v2110, %v2111
  %v2113 = vsel %vm1761, %v1562, 0.0
  %v2114 = vadd.f32 %v2112, %v2113
  %v2115 = vsel %vm1761, %v1564, 0.0
  %v2116 = vadd.f32 %v2114, %v2115
  %v2117 = vsel %vm1761, %v1567, 0.0
  %v2118 = vadd.f32 %v2116, %v2117
  %v2119 = vsel %vm1761, %v1569, 0.0
  %v2120 = vadd.f32 %v2118, %v2119
  %v2121 = vsel %vm1761, %v1572, 0.0
  %v2122 = vadd.f32 %v2120, %v2121
  %v2123 = vsel %vm1761, %v1574, 0.0
  %v2124 = vadd.f32 %v2122, %v2123
  %v2125 = vsel %vm1761, %v1577, 0.0
  %v2126 = vadd.f32 %v2124, %v2125
  %v2127 = vsel %vm1761, %v1579, 0.0
  %v2128 = vadd.f32 %v2126, %v2127
  %v2129 = vsel %vm1761, %v1582, 0.0
  %v2130 = vadd.f32 %v2128, %v2129
  %v2131 = vsel %vm1761, %v1584, 0.0
  %v2132 = vadd.f32 %v2130, %v2131
  %v2133 = vsel %vm1761, %v1587, 0.0
  %v2134 = vadd.f32 %v2132, %v2133
  %v2135 = vsel %vm1761, %v1589, 0.0
  %v2136 = vadd.f32 %v2134, %v2135
  %v2137 = vsel %vm1761, %v1592, 0.0
  %v2138 = vadd.f32 %v2136, %v2137
  %v2139 = vsel %vm1761, %v1594, 0.0
  %v2140 = vadd.f32 %v2138, %v2139
  %v2141 = vsel %vm1761, %v1597, 0.0
  %v2142 = vadd.f32 %v2140, %v2141
  %v2143 = vsel %vm1761, %v1599, 0.0
  %v2144 = vadd.f32 %v2142, %v2143
  %v2145 = vsel %vm1761, %v1602, 0.0
  %v2146 = vadd.f32 %v2144, %v2145
  %v2147 = vsel %vm1761, %v1604, 0.0
  %v2148 = vadd.f32 %v2146, %v2147
  %v2149 = vsel %vm1761, %v1607, 0.0
  %v2150 = vadd.f32 %v2148, %v2149
  %v2151 = vsel %vm1761, %v1609, 0.0
  %v2152 = vadd.f32 %v2150, %v2151
  %v2153 = vsel %vm1761, %v1612, 0.0
  %v2154 = vadd.f32 %v2152, %v2153
  %v2155 = vsel %vm1761, %v1614, 0.0
  %v2156 = vadd.f32 %v2154, %v2155
  %v2157 = vsel %vm1761, %v1617, 0.0
  %v2158 = vadd.f32 %v2156, %v2157
  %v2159 = vsel %vm1761, %v1619, 0.0
  %v2160 = vadd.f32 %v2158, %v2159
  %v2161 = vsel %vm1761, %v1622, 0.0
  %v2162 = vadd.f32 %v2160, %v2161
  %v2163 = vsel %vm1761, %v1624, 0.0
  %v2164 = vadd.f32 %v2162, %v2163
  %v2165 = vsel %vm1761, %v1627, 0.0
  %v2166 = vadd.f32 %v2164, %v2165
  %v2167 = vsel %vm1761, %v1629, 0.0
  %v2168 = vadd.f32 %v2166, %v2167
  %v2169 = vsel %vm1761, %v1632, 0.0
  %v2170 = vadd.f32 %v2168, %v2169
  %v2171 = vsel %vm1761, %v1634, 0.0
  %v2172 = vadd.f32 %v2170, %v2171
  %v2173 = vsel %vm1761, %v1637, 0.0
  %v2174 = vadd.f32 %v2172, %v2173
  %v2175 = vsel %vm1761, %v1639, 0.0
  %v2176 = vadd.f32 %v2174, %v2175
  %v2177 = vsel %vm1761, %v1642, 0.0
  %v2178 = vadd.f32 %v2176, %v2177
  %v2179 = vsel %vm1761, %v1644, 0.0
  %v2180 = vadd.f32 %v2178, %v2179
  %v2181 = vsel %vm1761, %v1647, 0.0
  %v2182 = vadd.f32 %v2180, %v2181
  %v2183 = vsel %vm1761, %v1649, 0.0
  %v2184 = vadd.f32 %v2182, %v2183
  %v2185 = vsel %vm1761, %v1652, 0.0
  %v2186 = vadd.f32 %v2184, %v2185
  %v2187 = vsel %vm1761, %v1654, 0.0
  %v2188 = vadd.f32 %v2186, %v2187
  %v2189 = vsel %vm1761, %v1657, 0.0
  %v2190 = vadd.f32 %v2188, %v2189
  %v2191 = vsel %vm1761, %v1659, 0.0
  %v2192 = vadd.f32 %v2190, %v2191
  %v2193 = vsel %vm1761, %v1662, 0.0
  %v2194 = vadd.f32 %v2192, %v2193
  %v2195 = vsel %vm1761, %v1664, 0.0
  %v2196 = vadd.f32 %v2194, %v2195
  %v2197 = vsel %vm1761, %v1667, 0.0
  %v2198 = vadd.f32 %v2196, %v2197
  %v2199 = vsel %vm1761, %v1669, 0.0
  %v2200 = vadd.f32 %v2198, %v2199
  %v2201 = vsel %vm1761, %v1672, 0.0
  %v2202 = vadd.f32 %v2200, %v2201
  %v2203 = vsel %vm1761, %v1674, 0.0
  %v2204 = vadd.f32 %v2202, %v2203
  %v2205 = vsel %vm1761, %v1677, 0.0
  %v2206 = vadd.f32 %v2204, %v2205
  %v2207 = vsel %vm1761, %v1679, 0.0
  %v2208 = vadd.f32 %v2206, %v2207
  %v2209 = vsel %vm1761, %v1682, 0.0
  %v2210 = vadd.f32 %v2208, %v2209
  %v2211 = vsel %vm1761, %v1684, 0.0
  %v2212 = vadd.f32 %v2210, %v2211
  %v2213 = vsel %vm1761, %v1687, 0.0
  %v2214 = vadd.f32 %v2212, %v2213
  %v2215 = vsel %vm1761, %v1689, 0.0
  %v2216 = vadd.f32 %v2214, %v2215
  %v2217 = vsel %vm1761, %v1692, 0.0
  %v2218 = vadd.f32 %v2216, %v2217
  %v2219 = vsel %vm1761, %v1694, 0.0
  %v2220 = vadd.f32 %v2218, %v2219
  %v2221 = vsel %vm1761, %v1697, 0.0
  %v2222 = vadd.f32 %v2220, %v2221
  %v2223 = vsel %vm1761, %v1699, 0.0
  %v2224 = vadd.f32 %v2222, %v2223
  %v2225 = vsel %vm1761, %v1702, 0.0
  %v2226 = vadd.f32 %v2224, %v2225
  %v2227 = vsel %vm1761, %v1704, 0.0
  %v2228 = vadd.f32 %v2226, %v2227
  %v2229 = vsel %vm1761, %v1707, 0.0
  %v2230 = vadd.f32 %v2228, %v2229
  %v2231 = vsel %vm1761, %v1709, 0.0
  %v2232 = vadd.f32 %v2230, %v2231
  %v2233 = vsel %vm1761, %v1712, 0.0
  %v2234 = vadd.f32 %v2232, %v2233
  %v2235 = vsel %vm1761, %v1714, 0.0
  %v2236 = vadd.f32 %v2234, %v2235
  %v2237 = vsel %vm1761, %v1717, 0.0
  %v2238 = vadd.f32 %v2236, %v2237
  %v2239 = vsel %vm1761, %v1719, 0.0
  %v2240 = vadd.f32 %v2238, %v2239
  %v2241 = vsel %vm1761, %v1722, 0.0
  %v2242 = vadd.f32 %v2240, %v2241
  %v2243 = vsel %vm1761, %v1724, 0.0
  %v2244 = vadd.f32 %v2242, %v2243
  %v2245 = vsel %vm1761, %v1727, 0.0
  %v2246 = vadd.f32 %v2244, %v2245
  %v2247 = vsel %vm1761, %v1729, 0.0
  %v2248 = vadd.f32 %v2246, %v2247
  %v2249 = vsel %vm1761, %v1732, 0.0
  %v2250 = vadd.f32 %v2248, %v2249
  %v2251 = vsel %vm1761, %v1734, 0.0
  %v2252 = vadd.f32 %v2250, %v2251
  %v2253 = vsel %vm1761, %v1737, 0.0
  %v2254 = vadd.f32 %v2252, %v2253
  %v2255 = vsel %vm1761, %v1739, 0.0
  %v2256 = vadd.f32 %v2254, %v2255
  %v2257 = vsel %vm1761, %v1742, 0.0
  %v2258 = vadd.f32 %v2256, %v2257
  %v2259 = vsel %vm1761, %v1744, 0.0
  %v2260 = vadd.f32 %v2258, %v2259
  %v2261 = vsel %vm1761, %v1747, 0.0
  %v2262 = vadd.f32 %v2260, %v2261
  %v2263 = vsel %vm1761, %v1749, 0.0
  %v2264 = vadd.f32 %v2262, %v2263
  %v2265 = vsel %vm1761, %v1752, 0.0
  %v2266 = vadd.f32 %v2264, %v2265
  %v2267 = vsel %vm1761, %v1754, 0.0
  %v2268 = vadd.f32 %v2266, %v2267
  %v2269 = vsel %vm1761, %v1757, 0.0
  %v2270 = vadd.f32 %v2268, %v2269
  %v2271 = vsel %vm1761, %v1759, 0.0
  %v2272 = vadd.f32 %v2270, %v2271
  %v2273 = vrot.slane %v2272, 4
  %v2274 = vadd.f32 %v2272, %v2273
  %v2275 = vrot.slane %v2274, 2
  %v2276 = vadd.f32 %v2274, %v2275
  %v2277 = vrot.slane %v2276, 1
  %v2278 = vadd.f32 %v2276, %v2277
  %v2279 = vrcp.pop 2048.0
  %v2280 = vmul.f32 2048.0, %v2279
  %v2281 = vsub.f32 1.0, %v2280
  %v2282 = vmul.f32 %v2279, %v2281
  %v2283 = vadd.f32 %v2279, %v2282
  %vm2284 = vweird.f32 %v2279
  %v2285 = vsel %vm2284, %v2279, %v2283
  %v2286 = vmul.f32 %v2278, %v2285
  %v2287 = vsub.f32 %v1122, %v2286
  %v2288 = vsub.f32 %v1124, %v2286
  %v2289 = vsub.f32 %v1127, %v2286
  %v2290 = vsub.f32 %v1129, %v2286
  %v2291 = vsub.f32 %v1132, %v2286
  %v2292 = vsub.f32 %v1134, %v2286
  %v2293 = vsub.f32 %v1137, %v2286
  %v2294 = vsub.f32 %v1139, %v2286
  %v2295 = vsub.f32 %v1142, %v2286
  %v2296 = vsub.f32 %v1144, %v2286
  %v2297 = vsub.f32 %v1147, %v2286
  %v2298 = vsub.f32 %v1149, %v2286
  %v2299 = vsub.f32 %v1152, %v2286
  %v2300 = vsub.f32 %v1154, %v2286
  %v2301 = vsub.f32 %v1157, %v2286
  %v2302 = vsub.f32 %v1159, %v2286
  %v2303 = vsub.f32 %v1162, %v2286
  %v2304 = vsub.f32 %v1164, %v2286
  %v2305 = vsub.f32 %v1167, %v2286
  %v2306 = vsub.f32 %v1169, %v2286
  %v2307 = vsub.f32 %v1172, %v2286
  %v2308 = vsub.f32 %v1174, %v2286
  %v2309 = vsub.f32 %v1177, %v2286
  %v2310 = vsub.f32 %v1179, %v2286
  %v2311 = vsub.f32 %v1182, %v2286
  %v2312 = vsub.f32 %v1184, %v2286
  %v2313 = vsub.f32 %v1187, %v2286
  %v2314 = vsub.f32 %v1189, %v2286
  %v2315 = vsub.f32 %v1192, %v2286
  %v2316 = vsub.f32 %v1194, %v2286
  %v2317 = vsub.f32 %v1197, %v2286
  %v2318 = vsub.f32 %v1199, %v2286
  %v2319 = vsub.f32 %v1202, %v2286
  %v2320 = vsub.f32 %v1204, %v2286
  %v2321 = vsub.f32 %v1207, %v2286
  %v2322 = vsub.f32 %v1209, %v2286
  %v2323 = vsub.f32 %v1212, %v2286
  %v2324 = vsub.f32 %v1214, %v2286
  %v2325 = vsub.f32 %v1217, %v2286
  %v2326 = vsub.f32 %v1219, %v2286
  %v2327 = vsub.f32 %v1222, %v2286
  %v2328 = vsub.f32 %v1224, %v2286
  %v2329 = vsub.f32 %v1227, %v2286
  %v2330 = vsub.f32 %v1229, %v2286
  %v2331 = vsub.f32 %v1232, %v2286
  %v2332 = vsub.f32 %v1234, %v2286
  %v2333 = vsub.f32 %v1237, %v2286
  %v2334 = vsub.f32 %v1239, %v2286
  %v2335 = vsub.f32 %v1242, %v2286
  %v2336 = vsub.f32 %v1244, %v2286
  %v2337 = vsub.f32 %v1247, %v2286
  %v2338 = vsub.f32 %v1249, %v2286
  %v2339 = vsub.f32 %v1252, %v2286
  %v2340 = vsub.f32 %v1254, %v2286
  %v2341 = vsub.f32 %v1257, %v2286
  %v2342 = vsub.f32 %v1259, %v2286
  %v2343 = vsub.f32 %v1262, %v2286
  %v2344 = vsub.f32 %v1264, %v2286
  %v2345 = vsub.f32 %v1267, %v2286
  %v2346 = vsub.f32 %v1269, %v2286
  %v2347 = vsub.f32 %v1272, %v2286
  %v2348 = vsub.f32 %v1274, %v2286
  %v2349 = vsub.f32 %v1277, %v2286
  %v2350 = vsub.f32 %v1279, %v2286
  %v2351 = vsub.f32 %v1282, %v2286
  %v2352 = vsub.f32 %v1284, %v2286
  %v2353 = vsub.f32 %v1287, %v2286
  %v2354 = vsub.f32 %v1289, %v2286
  %v2355 = vsub.f32 %v1292, %v2286
  %v2356 = vsub.f32 %v1294, %v2286
  %v2357 = vsub.f32 %v1297, %v2286
  %v2358 = vsub.f32 %v1299, %v2286
  %v2359 = vsub.f32 %v1302, %v2286
  %v2360 = vsub.f32 %v1304, %v2286
  %v2361 = vsub.f32 %v1307, %v2286
  %v2362 = vsub.f32 %v1309, %v2286
  %v2363 = vsub.f32 %v1312, %v2286
  %v2364 = vsub.f32 %v1314, %v2286
  %v2365 = vsub.f32 %v1317, %v2286
  %v2366 = vsub.f32 %v1319, %v2286
  %v2367 = vsub.f32 %v1322, %v2286
  %v2368 = vsub.f32 %v1324, %v2286
  %v2369 = vsub.f32 %v1327, %v2286
  %v2370 = vsub.f32 %v1329, %v2286
  %v2371 = vsub.f32 %v1332, %v2286
  %v2372 = vsub.f32 %v1334, %v2286
  %v2373 = vsub.f32 %v1337, %v2286
  %v2374 = vsub.f32 %v1339, %v2286
  %v2375 = vsub.f32 %v1342, %v2286
  %v2376 = vsub.f32 %v1344, %v2286
  %v2377 = vsub.f32 %v1347, %v2286
  %v2378 = vsub.f32 %v1349, %v2286
  %v2379 = vsub.f32 %v1352, %v2286
  %v2380 = vsub.f32 %v1354, %v2286
  %v2381 = vsub.f32 %v1357, %v2286
  %v2382 = vsub.f32 %v1359, %v2286
  %v2383 = vsub.f32 %v1362, %v2286
  %v2384 = vsub.f32 %v1364, %v2286
  %v2385 = vsub.f32 %v1367, %v2286
  %v2386 = vsub.f32 %v1369, %v2286
  %v2387 = vsub.f32 %v1372, %v2286
  %v2388 = vsub.f32 %v1374, %v2286
  %v2389 = vsub.f32 %v1377, %v2286
  %v2390 = vsub.f32 %v1379, %v2286
  %v2391 = vsub.f32 %v1382, %v2286
  %v2392 = vsub.f32 %v1384, %v2286
  %v2393 = vsub.f32 %v1387, %v2286
  %v2394 = vsub.f32 %v1389, %v2286
  %v2395 = vsub.f32 %v1392, %v2286
  %v2396 = vsub.f32 %v1394, %v2286
  %v2397 = vsub.f32 %v1397, %v2286
  %v2398 = vsub.f32 %v1399, %v2286
  %v2399 = vsub.f32 %v1402, %v2286
  %v2400 = vsub.f32 %v1404, %v2286
  %v2401 = vsub.f32 %v1407, %v2286
  %v2402 = vsub.f32 %v1409, %v2286
  %v2403 = vsub.f32 %v1412, %v2286
  %v2404 = vsub.f32 %v1414, %v2286
  %v2405 = vsub.f32 %v1417, %v2286
  %v2406 = vsub.f32 %v1419, %v2286
  %v2407 = vsub.f32 %v1422, %v2286
  %v2408 = vsub.f32 %v1424, %v2286
  %v2409 = vsub.f32 %v1427, %v2286
  %v2410 = vsub.f32 %v1429, %v2286
  %v2411 = vsub.f32 %v1432, %v2286
  %v2412 = vsub.f32 %v1434, %v2286
  %v2413 = vsub.f32 %v1437, %v2286
  %v2414 = vsub.f32 %v1439, %v2286
  %v2415 = vsub.f32 %v1442, %v2286
  %v2416 = vsub.f32 %v1444, %v2286
  %v2417 = vsub.f32 %v1447, %v2286
  %v2418 = vsub.f32 %v1449, %v2286
  %v2419 = vsub.f32 %v1452, %v2286
  %v2420 = vsub.f32 %v1454, %v2286
  %v2421 = vsub.f32 %v1457, %v2286
  %v2422 = vsub.f32 %v1459, %v2286
  %v2423 = vsub.f32 %v1462, %v2286
  %v2424 = vsub.f32 %v1464, %v2286
  %v2425 = vsub.f32 %v1467, %v2286
  %v2426 = vsub.f32 %v1469, %v2286
  %v2427 = vsub.f32 %v1472, %v2286
  %v2428 = vsub.f32 %v1474, %v2286
  %v2429 = vsub.f32 %v1477, %v2286
  %v2430 = vsub.f32 %v1479, %v2286
  %v2431 = vsub.f32 %v1482, %v2286
  %v2432 = vsub.f32 %v1484, %v2286
  %v2433 = vsub.f32 %v1487, %v2286
  %v2434 = vsub.f32 %v1489, %v2286
  %v2435 = vsub.f32 %v1492, %v2286
  %v2436 = vsub.f32 %v1494, %v2286
  %v2437 = vsub.f32 %v1497, %v2286
  %v2438 = vsub.f32 %v1499, %v2286
  %v2439 = vsub.f32 %v1502, %v2286
  %v2440 = vsub.f32 %v1504, %v2286
  %v2441 = vsub.f32 %v1507, %v2286
  %v2442 = vsub.f32 %v1509, %v2286
  %v2443 = vsub.f32 %v1512, %v2286
  %v2444 = vsub.f32 %v1514, %v2286
  %v2445 = vsub.f32 %v1517, %v2286
  %v2446 = vsub.f32 %v1519, %v2286
  %v2447 = vsub.f32 %v1522, %v2286
  %v2448 = vsub.f32 %v1524, %v2286
  %v2449 = vsub.f32 %v1527, %v2286
  %v2450 = vsub.f32 %v1529, %v2286
  %v2451 = vsub.f32 %v1532, %v2286
  %v2452 = vsub.f32 %v1534, %v2286
  %v2453 = vsub.f32 %v1537, %v2286
  %v2454 = vsub.f32 %v1539, %v2286
  %v2455 = vsub.f32 %v1542, %v2286
  %v2456 = vsub.f32 %v1544, %v2286
  %v2457 = vsub.f32 %v1547, %v2286
  %v2458 = vsub.f32 %v1549, %v2286
  %v2459 = vsub.f32 %v1552, %v2286
  %v2460 = vsub.f32 %v1554, %v2286
  %v2461 = vsub.f32 %v1557, %v2286
  %v2462 = vsub.f32 %v1559, %v2286
  %v2463 = vsub.f32 %v1562, %v2286
  %v2464 = vsub.f32 %v1564, %v2286
  %v2465 = vsub.f32 %v1567, %v2286
  %v2466 = vsub.f32 %v1569, %v2286
  %v2467 = vsub.f32 %v1572, %v2286
  %v2468 = vsub.f32 %v1574, %v2286
  %v2469 = vsub.f32 %v1577, %v2286
  %v2470 = vsub.f32 %v1579, %v2286
  %v2471 = vsub.f32 %v1582, %v2286
  %v2472 = vsub.f32 %v1584, %v2286
  %v2473 = vsub.f32 %v1587, %v2286
  %v2474 = vsub.f32 %v1589, %v2286
  %v2475 = vsub.f32 %v1592, %v2286
  %v2476 = vsub.f32 %v1594, %v2286
  %v2477 = vsub.f32 %v1597, %v2286
  %v2478 = vsub.f32 %v1599, %v2286
  %v2479 = vsub.f32 %v1602, %v2286
  %v2480 = vsub.f32 %v1604, %v2286
  %v2481 = vsub.f32 %v1607, %v2286
  %v2482 = vsub.f32 %v1609, %v2286
  %v2483 = vsub.f32 %v1612, %v2286
  %v2484 = vsub.f32 %v1614, %v2286
  %v2485 = vsub.f32 %v1617, %v2286
  %v2486 = vsub.f32 %v1619, %v2286
  %v2487 = vsub.f32 %v1622, %v2286
  %v2488 = vsub.f32 %v1624, %v2286
  %v2489 = vsub.f32 %v1627, %v2286
  %v2490 = vsub.f32 %v1629, %v2286
  %v2491 = vsub.f32 %v1632, %v2286
  %v2492 = vsub.f32 %v1634, %v2286
  %v2493 = vsub.f32 %v1637, %v2286
  %v2494 = vsub.f32 %v1639, %v2286
  %v2495 = vsub.f32 %v1642, %v2286
  %v2496 = vsub.f32 %v1644, %v2286
  %v2497 = vsub.f32 %v1647, %v2286
  %v2498 = vsub.f32 %v1649, %v2286
  %v2499 = vsub.f32 %v1652, %v2286
  %v2500 = vsub.f32 %v1654, %v2286
  %v2501 = vsub.f32 %v1657, %v2286
  %v2502 = vsub.f32 %v1659, %v2286
  %v2503 = vsub.f32 %v1662, %v2286
  %v2504 = vsub.f32 %v1664, %v2286
  %v2505 = vsub.f32 %v1667, %v2286
  %v2506 = vsub.f32 %v1669, %v2286
  %v2507 = vsub.f32 %v1672, %v2286
  %v2508 = vsub.f32 %v1674, %v2286
  %v2509 = vsub.f32 %v1677, %v2286
  %v2510 = vsub.f32 %v1679, %v2286
  %v2511 = vsub.f32 %v1682, %v2286
  %v2512 = vsub.f32 %v1684, %v2286
  %v2513 = vsub.f32 %v1687, %v2286
  %v2514 = vsub.f32 %v1689, %v2286
  %v2515 = vsub.f32 %v1692, %v2286
  %v2516 = vsub.f32 %v1694, %v2286
  %v2517 = vsub.f32 %v1697, %v2286
  %v2518 = vsub.f32 %v1699, %v2286
  %v2519 = vsub.f32 %v1702, %v2286
  %v2520 = vsub.f32 %v1704, %v2286
  %v2521 = vsub.f32 %v1707, %v2286
  %v2522 = vsub.f32 %v1709, %v2286
  %v2523 = vsub.f32 %v1712, %v2286
  %v2524 = vsub.f32 %v1714, %v2286
  %v2525 = vsub.f32 %v1717, %v2286
  %v2526 = vsub.f32 %v1719, %v2286
  %v2527 = vsub.f32 %v1722, %v2286
  %v2528 = vsub.f32 %v1724, %v2286
  %v2529 = vsub.f32 %v1727, %v2286
  %v2530 = vsub.f32 %v1729, %v2286
  %v2531 = vsub.f32 %v1732, %v2286
  %v2532 = vsub.f32 %v1734, %v2286
  %v2533 = vsub.f32 %v1737, %v2286
  %v2534 = vsub.f32 %v1739, %v2286
  %v2535 = vsub.f32 %v1742, %v2286
  %v2536 = vsub.f32 %v1744, %v2286
  %v2537 = vsub.f32 %v1747, %v2286
  %v2538 = vsub.f32 %v1749, %v2286
  %v2539 = vsub.f32 %v1752, %v2286
  %v2540 = vsub.f32 %v1754, %v2286
  %v2541 = vsub.f32 %v1757, %v2286
  %v2542 = vsub.f32 %v1759, %v2286
  %v2543 = vmul.f32 %v2287, %v2287
  %v2544 = vmul.f32 %v2288, %v2288
  %v2545 = vmul.f32 %v2289, %v2289
  %v2546 = vmul.f32 %v2290, %v2290
  %v2547 = vmul.f32 %v2291, %v2291
  %v2548 = vmul.f32 %v2292, %v2292
  %v2549 = vmul.f32 %v2293, %v2293
  %v2550 = vmul.f32 %v2294, %v2294
  %v2551 = vmul.f32 %v2295, %v2295
  %v2552 = vmul.f32 %v2296, %v2296
  %v2553 = vmul.f32 %v2297, %v2297
  %v2554 = vmul.f32 %v2298, %v2298
  %v2555 = vmul.f32 %v2299, %v2299
  %v2556 = vmul.f32 %v2300, %v2300
  %v2557 = vmul.f32 %v2301, %v2301
  %v2558 = vmul.f32 %v2302, %v2302
  %v2559 = vmul.f32 %v2303, %v2303
  %v2560 = vmul.f32 %v2304, %v2304
  %v2561 = vmul.f32 %v2305, %v2305
  %v2562 = vmul.f32 %v2306, %v2306
  %v2563 = vmul.f32 %v2307, %v2307
  %v2564 = vmul.f32 %v2308, %v2308
  %v2565 = vmul.f32 %v2309, %v2309
  %v2566 = vmul.f32 %v2310, %v2310
  %v2567 = vmul.f32 %v2311, %v2311
  %v2568 = vmul.f32 %v2312, %v2312
  %v2569 = vmul.f32 %v2313, %v2313
  %v2570 = vmul.f32 %v2314, %v2314
  %v2571 = vmul.f32 %v2315, %v2315
  %v2572 = vmul.f32 %v2316, %v2316
  %v2573 = vmul.f32 %v2317, %v2317
  %v2574 = vmul.f32 %v2318, %v2318
  %v2575 = vmul.f32 %v2319, %v2319
  %v2576 = vmul.f32 %v2320, %v2320
  %v2577 = vmul.f32 %v2321, %v2321
  %v2578 = vmul.f32 %v2322, %v2322
  %v2579 = vmul.f32 %v2323, %v2323
  %v2580 = vmul.f32 %v2324, %v2324
  %v2581 = vmul.f32 %v2325, %v2325
  %v2582 = vmul.f32 %v2326, %v2326
  %v2583 = vmul.f32 %v2327, %v2327
  %v2584 = vmul.f32 %v2328, %v2328
  %v2585 = vmul.f32 %v2329, %v2329
  %v2586 = vmul.f32 %v2330, %v2330
  %v2587 = vmul.f32 %v2331, %v2331
  %v2588 = vmul.f32 %v2332, %v2332
  %v2589 = vmul.f32 %v2333, %v2333
  %v2590 = vmul.f32 %v2334, %v2334
  %v2591 = vmul.f32 %v2335, %v2335
  %v2592 = vmul.f32 %v2336, %v2336
  %v2593 = vmul.f32 %v2337, %v2337
  %v2594 = vmul.f32 %v2338, %v2338
  %v2595 = vmul.f32 %v2339, %v2339
  %v2596 = vmul.f32 %v2340, %v2340
  %v2597 = vmul.f32 %v2341, %v2341
  %v2598 = vmul.f32 %v2342, %v2342
  %v2599 = vmul.f32 %v2343, %v2343
  %v2600 = vmul.f32 %v2344, %v2344
  %v2601 = vmul.f32 %v2345, %v2345
  %v2602 = vmul.f32 %v2346, %v2346
  %v2603 = vmul.f32 %v2347, %v2347
  %v2604 = vmul.f32 %v2348, %v2348
  %v2605 = vmul.f32 %v2349, %v2349
  %v2606 = vmul.f32 %v2350, %v2350
  %v2607 = vmul.f32 %v2351, %v2351
  %v2608 = vmul.f32 %v2352, %v2352
  %v2609 = vmul.f32 %v2353, %v2353
  %v2610 = vmul.f32 %v2354, %v2354
  %v2611 = vmul.f32 %v2355, %v2355
  %v2612 = vmul.f32 %v2356, %v2356
  %v2613 = vmul.f32 %v2357, %v2357
  %v2614 = vmul.f32 %v2358, %v2358
  %v2615 = vmul.f32 %v2359, %v2359
  %v2616 = vmul.f32 %v2360, %v2360
  %v2617 = vmul.f32 %v2361, %v2361
  %v2618 = vmul.f32 %v2362, %v2362
  %v2619 = vmul.f32 %v2363, %v2363
  %v2620 = vmul.f32 %v2364, %v2364
  %v2621 = vmul.f32 %v2365, %v2365
  %v2622 = vmul.f32 %v2366, %v2366
  %v2623 = vmul.f32 %v2367, %v2367
  %v2624 = vmul.f32 %v2368, %v2368
  %v2625 = vmul.f32 %v2369, %v2369
  %v2626 = vmul.f32 %v2370, %v2370
  %v2627 = vmul.f32 %v2371, %v2371
  %v2628 = vmul.f32 %v2372, %v2372
  %v2629 = vmul.f32 %v2373, %v2373
  %v2630 = vmul.f32 %v2374, %v2374
  %v2631 = vmul.f32 %v2375, %v2375
  %v2632 = vmul.f32 %v2376, %v2376
  %v2633 = vmul.f32 %v2377, %v2377
  %v2634 = vmul.f32 %v2378, %v2378
  %v2635 = vmul.f32 %v2379, %v2379
  %v2636 = vmul.f32 %v2380, %v2380
  %v2637 = vmul.f32 %v2381, %v2381
  %v2638 = vmul.f32 %v2382, %v2382
  %v2639 = vmul.f32 %v2383, %v2383
  %v2640 = vmul.f32 %v2384, %v2384
  %v2641 = vmul.f32 %v2385, %v2385
  %v2642 = vmul.f32 %v2386, %v2386
  %v2643 = vmul.f32 %v2387, %v2387
  %v2644 = vmul.f32 %v2388, %v2388
  %v2645 = vmul.f32 %v2389, %v2389
  %v2646 = vmul.f32 %v2390, %v2390
  %v2647 = vmul.f32 %v2391, %v2391
  %v2648 = vmul.f32 %v2392, %v2392
  %v2649 = vmul.f32 %v2393, %v2393
  %v2650 = vmul.f32 %v2394, %v2394
  %v2651 = vmul.f32 %v2395, %v2395
  %v2652 = vmul.f32 %v2396, %v2396
  %v2653 = vmul.f32 %v2397, %v2397
  %v2654 = vmul.f32 %v2398, %v2398
  %v2655 = vmul.f32 %v2399, %v2399
  %v2656 = vmul.f32 %v2400, %v2400
  %v2657 = vmul.f32 %v2401, %v2401
  %v2658 = vmul.f32 %v2402, %v2402
  %v2659 = vmul.f32 %v2403, %v2403
  %v2660 = vmul.f32 %v2404, %v2404
  %v2661 = vmul.f32 %v2405, %v2405
  %v2662 = vmul.f32 %v2406, %v2406
  %v2663 = vmul.f32 %v2407, %v2407
  %v2664 = vmul.f32 %v2408, %v2408
  %v2665 = vmul.f32 %v2409, %v2409
  %v2666 = vmul.f32 %v2410, %v2410
  %v2667 = vmul.f32 %v2411, %v2411
  %v2668 = vmul.f32 %v2412, %v2412
  %v2669 = vmul.f32 %v2413, %v2413
  %v2670 = vmul.f32 %v2414, %v2414
  %v2671 = vmul.f32 %v2415, %v2415
  %v2672 = vmul.f32 %v2416, %v2416
  %v2673 = vmul.f32 %v2417, %v2417
  %v2674 = vmul.f32 %v2418, %v2418
  %v2675 = vmul.f32 %v2419, %v2419
  %v2676 = vmul.f32 %v2420, %v2420
  %v2677 = vmul.f32 %v2421, %v2421
  %v2678 = vmul.f32 %v2422, %v2422
  %v2679 = vmul.f32 %v2423, %v2423
  %v2680 = vmul.f32 %v2424, %v2424
  %v2681 = vmul.f32 %v2425, %v2425
  %v2682 = vmul.f32 %v2426, %v2426
  %v2683 = vmul.f32 %v2427, %v2427
  %v2684 = vmul.f32 %v2428, %v2428
  %v2685 = vmul.f32 %v2429, %v2429
  %v2686 = vmul.f32 %v2430, %v2430
  %v2687 = vmul.f32 %v2431, %v2431
  %v2688 = vmul.f32 %v2432, %v2432
  %v2689 = vmul.f32 %v2433, %v2433
  %v2690 = vmul.f32 %v2434, %v2434
  %v2691 = vmul.f32 %v2435, %v2435
  %v2692 = vmul.f32 %v2436, %v2436
  %v2693 = vmul.f32 %v2437, %v2437
  %v2694 = vmul.f32 %v2438, %v2438
  %v2695 = vmul.f32 %v2439, %v2439
  %v2696 = vmul.f32 %v2440, %v2440
  %v2697 = vmul.f32 %v2441, %v2441
  %v2698 = vmul.f32 %v2442, %v2442
  %v2699 = vmul.f32 %v2443, %v2443
  %v2700 = vmul.f32 %v2444, %v2444
  %v2701 = vmul.f32 %v2445, %v2445
  %v2702 = vmul.f32 %v2446, %v2446
  %v2703 = vmul.f32 %v2447, %v2447
  %v2704 = vmul.f32 %v2448, %v2448
  %v2705 = vmul.f32 %v2449, %v2449
  %v2706 = vmul.f32 %v2450, %v2450
  %v2707 = vmul.f32 %v2451, %v2451
  %v2708 = vmul.f32 %v2452, %v2452
  %v2709 = vmul.f32 %v2453, %v2453
  %v2710 = vmul.f32 %v2454, %v2454
  %v2711 = vmul.f32 %v2455, %v2455
  %v2712 = vmul.f32 %v2456, %v2456
  %v2713 = vmul.f32 %v2457, %v2457
  %v2714 = vmul.f32 %v2458, %v2458
  %v2715 = vmul.f32 %v2459, %v2459
  %v2716 = vmul.f32 %v2460, %v2460
  %v2717 = vmul.f32 %v2461, %v2461
  %v2718 = vmul.f32 %v2462, %v2462
  %v2719 = vmul.f32 %v2463, %v2463
  %v2720 = vmul.f32 %v2464, %v2464
  %v2721 = vmul.f32 %v2465, %v2465
  %v2722 = vmul.f32 %v2466, %v2466
  %v2723 = vmul.f32 %v2467, %v2467
  %v2724 = vmul.f32 %v2468, %v2468
  %v2725 = vmul.f32 %v2469, %v2469
  %v2726 = vmul.f32 %v2470, %v2470
  %v2727 = vmul.f32 %v2471, %v2471
  %v2728 = vmul.f32 %v2472, %v2472
  %v2729 = vmul.f32 %v2473, %v2473
  %v2730 = vmul.f32 %v2474, %v2474
  %v2731 = vmul.f32 %v2475, %v2475
  %v2732 = vmul.f32 %v2476, %v2476
  %v2733 = vmul.f32 %v2477, %v2477
  %v2734 = vmul.f32 %v2478, %v2478
  %v2735 = vmul.f32 %v2479, %v2479
  %v2736 = vmul.f32 %v2480, %v2480
  %v2737 = vmul.f32 %v2481, %v2481
  %v2738 = vmul.f32 %v2482, %v2482
  %v2739 = vmul.f32 %v2483, %v2483
  %v2740 = vmul.f32 %v2484, %v2484
  %v2741 = vmul.f32 %v2485, %v2485
  %v2742 = vmul.f32 %v2486, %v2486
  %v2743 = vmul.f32 %v2487, %v2487
  %v2744 = vmul.f32 %v2488, %v2488
  %v2745 = vmul.f32 %v2489, %v2489
  %v2746 = vmul.f32 %v2490, %v2490
  %v2747 = vmul.f32 %v2491, %v2491
  %v2748 = vmul.f32 %v2492, %v2492
  %v2749 = vmul.f32 %v2493, %v2493
  %v2750 = vmul.f32 %v2494, %v2494
  %v2751 = vmul.f32 %v2495, %v2495
  %v2752 = vmul.f32 %v2496, %v2496
  %v2753 = vmul.f32 %v2497, %v2497
  %v2754 = vmul.f32 %v2498, %v2498
  %v2755 = vmul.f32 %v2499, %v2499
  %v2756 = vmul.f32 %v2500, %v2500
  %v2757 = vmul.f32 %v2501, %v2501
  %v2758 = vmul.f32 %v2502, %v2502
  %v2759 = vmul.f32 %v2503, %v2503
  %v2760 = vmul.f32 %v2504, %v2504
  %v2761 = vmul.f32 %v2505, %v2505
  %v2762 = vmul.f32 %v2506, %v2506
  %v2763 = vmul.f32 %v2507, %v2507
  %v2764 = vmul.f32 %v2508, %v2508
  %v2765 = vmul.f32 %v2509, %v2509
  %v2766 = vmul.f32 %v2510, %v2510
  %v2767 = vmul.f32 %v2511, %v2511
  %v2768 = vmul.f32 %v2512, %v2512
  %v2769 = vmul.f32 %v2513, %v2513
  %v2770 = vmul.f32 %v2514, %v2514
  %v2771 = vmul.f32 %v2515, %v2515
  %v2772 = vmul.f32 %v2516, %v2516
  %v2773 = vmul.f32 %v2517, %v2517
  %v2774 = vmul.f32 %v2518, %v2518
  %v2775 = vmul.f32 %v2519, %v2519
  %v2776 = vmul.f32 %v2520, %v2520
  %v2777 = vmul.f32 %v2521, %v2521
  %v2778 = vmul.f32 %v2522, %v2522
  %v2779 = vmul.f32 %v2523, %v2523
  %v2780 = vmul.f32 %v2524, %v2524
  %v2781 = vmul.f32 %v2525, %v2525
  %v2782 = vmul.f32 %v2526, %v2526
  %v2783 = vmul.f32 %v2527, %v2527
  %v2784 = vmul.f32 %v2528, %v2528
  %v2785 = vmul.f32 %v2529, %v2529
  %v2786 = vmul.f32 %v2530, %v2530
  %v2787 = vmul.f32 %v2531, %v2531
  %v2788 = vmul.f32 %v2532, %v2532
  %v2789 = vmul.f32 %v2533, %v2533
  %v2790 = vmul.f32 %v2534, %v2534
  %v2791 = vmul.f32 %v2535, %v2535
  %v2792 = vmul.f32 %v2536, %v2536
  %v2793 = vmul.f32 %v2537, %v2537
  %v2794 = vmul.f32 %v2538, %v2538
  %v2795 = vmul.f32 %v2539, %v2539
  %v2796 = vmul.f32 %v2540, %v2540
  %v2797 = vmul.f32 %v2541, %v2541
  %v2798 = vmul.f32 %v2542, %v2542
  %v2799 = vsel %vm1761, %v2543, 0.0
  %v2800 = vsel %vm1761, %v2544, 0.0
  %v2801 = vadd.f32 %v2799, %v2800
  %v2802 = vsel %vm1761, %v2545, 0.0
  %v2803 = vadd.f32 %v2801, %v2802
  %v2804 = vsel %vm1761, %v2546, 0.0
  %v2805 = vadd.f32 %v2803, %v2804
  %v2806 = vsel %vm1761, %v2547, 0.0
  %v2807 = vadd.f32 %v2805, %v2806
  %v2808 = vsel %vm1761, %v2548, 0.0
  %v2809 = vadd.f32 %v2807, %v2808
  %v2810 = vsel %vm1761, %v2549, 0.0
  %v2811 = vadd.f32 %v2809, %v2810
  %v2812 = vsel %vm1761, %v2550, 0.0
  %v2813 = vadd.f32 %v2811, %v2812
  %v2814 = vsel %vm1761, %v2551, 0.0
  %v2815 = vadd.f32 %v2813, %v2814
  %v2816 = vsel %vm1761, %v2552, 0.0
  %v2817 = vadd.f32 %v2815, %v2816
  %v2818 = vsel %vm1761, %v2553, 0.0
  %v2819 = vadd.f32 %v2817, %v2818
  %v2820 = vsel %vm1761, %v2554, 0.0
  %v2821 = vadd.f32 %v2819, %v2820
  %v2822 = vsel %vm1761, %v2555, 0.0
  %v2823 = vadd.f32 %v2821, %v2822
  %v2824 = vsel %vm1761, %v2556, 0.0
  %v2825 = vadd.f32 %v2823, %v2824
  %v2826 = vsel %vm1761, %v2557, 0.0
  %v2827 = vadd.f32 %v2825, %v2826
  %v2828 = vsel %vm1761, %v2558, 0.0
  %v2829 = vadd.f32 %v2827, %v2828
  %v2830 = vsel %vm1761, %v2559, 0.0
  %v2831 = vadd.f32 %v2829, %v2830
  %v2832 = vsel %vm1761, %v2560, 0.0
  %v2833 = vadd.f32 %v2831, %v2832
  %v2834 = vsel %vm1761, %v2561, 0.0
  %v2835 = vadd.f32 %v2833, %v2834
  %v2836 = vsel %vm1761, %v2562, 0.0
  %v2837 = vadd.f32 %v2835, %v2836
  %v2838 = vsel %vm1761, %v2563, 0.0
  %v2839 = vadd.f32 %v2837, %v2838
  %v2840 = vsel %vm1761, %v2564, 0.0
  %v2841 = vadd.f32 %v2839, %v2840
  %v2842 = vsel %vm1761, %v2565, 0.0
  %v2843 = vadd.f32 %v2841, %v2842
  %v2844 = vsel %vm1761, %v2566, 0.0
  %v2845 = vadd.f32 %v2843, %v2844
  %v2846 = vsel %vm1761, %v2567, 0.0
  %v2847 = vadd.f32 %v2845, %v2846
  %v2848 = vsel %vm1761, %v2568, 0.0
  %v2849 = vadd.f32 %v2847, %v2848
  %v2850 = vsel %vm1761, %v2569, 0.0
  %v2851 = vadd.f32 %v2849, %v2850
  %v2852 = vsel %vm1761, %v2570, 0.0
  %v2853 = vadd.f32 %v2851, %v2852
  %v2854 = vsel %vm1761, %v2571, 0.0
  %v2855 = vadd.f32 %v2853, %v2854
  %v2856 = vsel %vm1761, %v2572, 0.0
  %v2857 = vadd.f32 %v2855, %v2856
  %v2858 = vsel %vm1761, %v2573, 0.0
  %v2859 = vadd.f32 %v2857, %v2858
  %v2860 = vsel %vm1761, %v2574, 0.0
  %v2861 = vadd.f32 %v2859, %v2860
  %v2862 = vsel %vm1761, %v2575, 0.0
  %v2863 = vadd.f32 %v2861, %v2862
  %v2864 = vsel %vm1761, %v2576, 0.0
  %v2865 = vadd.f32 %v2863, %v2864
  %v2866 = vsel %vm1761, %v2577, 0.0
  %v2867 = vadd.f32 %v2865, %v2866
  %v2868 = vsel %vm1761, %v2578, 0.0
  %v2869 = vadd.f32 %v2867, %v2868
  %v2870 = vsel %vm1761, %v2579, 0.0
  %v2871 = vadd.f32 %v2869, %v2870
  %v2872 = vsel %vm1761, %v2580, 0.0
  %v2873 = vadd.f32 %v2871, %v2872
  %v2874 = vsel %vm1761, %v2581, 0.0
  %v2875 = vadd.f32 %v2873, %v2874
  %v2876 = vsel %vm1761, %v2582, 0.0
  %v2877 = vadd.f32 %v2875, %v2876
  %v2878 = vsel %vm1761, %v2583, 0.0
  %v2879 = vadd.f32 %v2877, %v2878
  %v2880 = vsel %vm1761, %v2584, 0.0
  %v2881 = vadd.f32 %v2879, %v2880
  %v2882 = vsel %vm1761, %v2585, 0.0
  %v2883 = vadd.f32 %v2881, %v2882
  %v2884 = vsel %vm1761, %v2586, 0.0
  %v2885 = vadd.f32 %v2883, %v2884
  %v2886 = vsel %vm1761, %v2587, 0.0
  %v2887 = vadd.f32 %v2885, %v2886
  %v2888 = vsel %vm1761, %v2588, 0.0
  %v2889 = vadd.f32 %v2887, %v2888
  %v2890 = vsel %vm1761, %v2589, 0.0
  %v2891 = vadd.f32 %v2889, %v2890
  %v2892 = vsel %vm1761, %v2590, 0.0
  %v2893 = vadd.f32 %v2891, %v2892
  %v2894 = vsel %vm1761, %v2591, 0.0
  %v2895 = vadd.f32 %v2893, %v2894
  %v2896 = vsel %vm1761, %v2592, 0.0
  %v2897 = vadd.f32 %v2895, %v2896
  %v2898 = vsel %vm1761, %v2593, 0.0
  %v2899 = vadd.f32 %v2897, %v2898
  %v2900 = vsel %vm1761, %v2594, 0.0
  %v2901 = vadd.f32 %v2899, %v2900
  %v2902 = vsel %vm1761, %v2595, 0.0
  %v2903 = vadd.f32 %v2901, %v2902
  %v2904 = vsel %vm1761, %v2596, 0.0
  %v2905 = vadd.f32 %v2903, %v2904
  %v2906 = vsel %vm1761, %v2597, 0.0
  %v2907 = vadd.f32 %v2905, %v2906
  %v2908 = vsel %vm1761, %v2598, 0.0
  %v2909 = vadd.f32 %v2907, %v2908
  %v2910 = vsel %vm1761, %v2599, 0.0
  %v2911 = vadd.f32 %v2909, %v2910
  %v2912 = vsel %vm1761, %v2600, 0.0
  %v2913 = vadd.f32 %v2911, %v2912
  %v2914 = vsel %vm1761, %v2601, 0.0
  %v2915 = vadd.f32 %v2913, %v2914
  %v2916 = vsel %vm1761, %v2602, 0.0
  %v2917 = vadd.f32 %v2915, %v2916
  %v2918 = vsel %vm1761, %v2603, 0.0
  %v2919 = vadd.f32 %v2917, %v2918
  %v2920 = vsel %vm1761, %v2604, 0.0
  %v2921 = vadd.f32 %v2919, %v2920
  %v2922 = vsel %vm1761, %v2605, 0.0
  %v2923 = vadd.f32 %v2921, %v2922
  %v2924 = vsel %vm1761, %v2606, 0.0
  %v2925 = vadd.f32 %v2923, %v2924
  %v2926 = vsel %vm1761, %v2607, 0.0
  %v2927 = vadd.f32 %v2925, %v2926
  %v2928 = vsel %vm1761, %v2608, 0.0
  %v2929 = vadd.f32 %v2927, %v2928
  %v2930 = vsel %vm1761, %v2609, 0.0
  %v2931 = vadd.f32 %v2929, %v2930
  %v2932 = vsel %vm1761, %v2610, 0.0
  %v2933 = vadd.f32 %v2931, %v2932
  %v2934 = vsel %vm1761, %v2611, 0.0
  %v2935 = vadd.f32 %v2933, %v2934
  %v2936 = vsel %vm1761, %v2612, 0.0
  %v2937 = vadd.f32 %v2935, %v2936
  %v2938 = vsel %vm1761, %v2613, 0.0
  %v2939 = vadd.f32 %v2937, %v2938
  %v2940 = vsel %vm1761, %v2614, 0.0
  %v2941 = vadd.f32 %v2939, %v2940
  %v2942 = vsel %vm1761, %v2615, 0.0
  %v2943 = vadd.f32 %v2941, %v2942
  %v2944 = vsel %vm1761, %v2616, 0.0
  %v2945 = vadd.f32 %v2943, %v2944
  %v2946 = vsel %vm1761, %v2617, 0.0
  %v2947 = vadd.f32 %v2945, %v2946
  %v2948 = vsel %vm1761, %v2618, 0.0
  %v2949 = vadd.f32 %v2947, %v2948
  %v2950 = vsel %vm1761, %v2619, 0.0
  %v2951 = vadd.f32 %v2949, %v2950
  %v2952 = vsel %vm1761, %v2620, 0.0
  %v2953 = vadd.f32 %v2951, %v2952
  %v2954 = vsel %vm1761, %v2621, 0.0
  %v2955 = vadd.f32 %v2953, %v2954
  %v2956 = vsel %vm1761, %v2622, 0.0
  %v2957 = vadd.f32 %v2955, %v2956
  %v2958 = vsel %vm1761, %v2623, 0.0
  %v2959 = vadd.f32 %v2957, %v2958
  %v2960 = vsel %vm1761, %v2624, 0.0
  %v2961 = vadd.f32 %v2959, %v2960
  %v2962 = vsel %vm1761, %v2625, 0.0
  %v2963 = vadd.f32 %v2961, %v2962
  %v2964 = vsel %vm1761, %v2626, 0.0
  %v2965 = vadd.f32 %v2963, %v2964
  %v2966 = vsel %vm1761, %v2627, 0.0
  %v2967 = vadd.f32 %v2965, %v2966
  %v2968 = vsel %vm1761, %v2628, 0.0
  %v2969 = vadd.f32 %v2967, %v2968
  %v2970 = vsel %vm1761, %v2629, 0.0
  %v2971 = vadd.f32 %v2969, %v2970
  %v2972 = vsel %vm1761, %v2630, 0.0
  %v2973 = vadd.f32 %v2971, %v2972
  %v2974 = vsel %vm1761, %v2631, 0.0
  %v2975 = vadd.f32 %v2973, %v2974
  %v2976 = vsel %vm1761, %v2632, 0.0
  %v2977 = vadd.f32 %v2975, %v2976
  %v2978 = vsel %vm1761, %v2633, 0.0
  %v2979 = vadd.f32 %v2977, %v2978
  %v2980 = vsel %vm1761, %v2634, 0.0
  %v2981 = vadd.f32 %v2979, %v2980
  %v2982 = vsel %vm1761, %v2635, 0.0
  %v2983 = vadd.f32 %v2981, %v2982
  %v2984 = vsel %vm1761, %v2636, 0.0
  %v2985 = vadd.f32 %v2983, %v2984
  %v2986 = vsel %vm1761, %v2637, 0.0
  %v2987 = vadd.f32 %v2985, %v2986
  %v2988 = vsel %vm1761, %v2638, 0.0
  %v2989 = vadd.f32 %v2987, %v2988
  %v2990 = vsel %vm1761, %v2639, 0.0
  %v2991 = vadd.f32 %v2989, %v2990
  %v2992 = vsel %vm1761, %v2640, 0.0
  %v2993 = vadd.f32 %v2991, %v2992
  %v2994 = vsel %vm1761, %v2641, 0.0
  %v2995 = vadd.f32 %v2993, %v2994
  %v2996 = vsel %vm1761, %v2642, 0.0
  %v2997 = vadd.f32 %v2995, %v2996
  %v2998 = vsel %vm1761, %v2643, 0.0
  %v2999 = vadd.f32 %v2997, %v2998
  %v3000 = vsel %vm1761, %v2644, 0.0
  %v3001 = vadd.f32 %v2999, %v3000
  %v3002 = vsel %vm1761, %v2645, 0.0
  %v3003 = vadd.f32 %v3001, %v3002
  %v3004 = vsel %vm1761, %v2646, 0.0
  %v3005 = vadd.f32 %v3003, %v3004
  %v3006 = vsel %vm1761, %v2647, 0.0
  %v3007 = vadd.f32 %v3005, %v3006
  %v3008 = vsel %vm1761, %v2648, 0.0
  %v3009 = vadd.f32 %v3007, %v3008
  %v3010 = vsel %vm1761, %v2649, 0.0
  %v3011 = vadd.f32 %v3009, %v3010
  %v3012 = vsel %vm1761, %v2650, 0.0
  %v3013 = vadd.f32 %v3011, %v3012
  %v3014 = vsel %vm1761, %v2651, 0.0
  %v3015 = vadd.f32 %v3013, %v3014
  %v3016 = vsel %vm1761, %v2652, 0.0
  %v3017 = vadd.f32 %v3015, %v3016
  %v3018 = vsel %vm1761, %v2653, 0.0
  %v3019 = vadd.f32 %v3017, %v3018
  %v3020 = vsel %vm1761, %v2654, 0.0
  %v3021 = vadd.f32 %v3019, %v3020
  %v3022 = vsel %vm1761, %v2655, 0.0
  %v3023 = vadd.f32 %v3021, %v3022
  %v3024 = vsel %vm1761, %v2656, 0.0
  %v3025 = vadd.f32 %v3023, %v3024
  %v3026 = vsel %vm1761, %v2657, 0.0
  %v3027 = vadd.f32 %v3025, %v3026
  %v3028 = vsel %vm1761, %v2658, 0.0
  %v3029 = vadd.f32 %v3027, %v3028
  %v3030 = vsel %vm1761, %v2659, 0.0
  %v3031 = vadd.f32 %v3029, %v3030
  %v3032 = vsel %vm1761, %v2660, 0.0
  %v3033 = vadd.f32 %v3031, %v3032
  %v3034 = vsel %vm1761, %v2661, 0.0
  %v3035 = vadd.f32 %v3033, %v3034
  %v3036 = vsel %vm1761, %v2662, 0.0
  %v3037 = vadd.f32 %v3035, %v3036
  %v3038 = vsel %vm1761, %v2663, 0.0
  %v3039 = vadd.f32 %v3037, %v3038
  %v3040 = vsel %vm1761, %v2664, 0.0
  %v3041 = vadd.f32 %v3039, %v3040
  %v3042 = vsel %vm1761, %v2665, 0.0
  %v3043 = vadd.f32 %v3041, %v3042
  %v3044 = vsel %vm1761, %v2666, 0.0
  %v3045 = vadd.f32 %v3043, %v3044
  %v3046 = vsel %vm1761, %v2667, 0.0
  %v3047 = vadd.f32 %v3045, %v3046
  %v3048 = vsel %vm1761, %v2668, 0.0
  %v3049 = vadd.f32 %v3047, %v3048
  %v3050 = vsel %vm1761, %v2669, 0.0
  %v3051 = vadd.f32 %v3049, %v3050
  %v3052 = vsel %vm1761, %v2670, 0.0
  %v3053 = vadd.f32 %v3051, %v3052
  %v3054 = vsel %vm1761, %v2671, 0.0
  %v3055 = vadd.f32 %v3053, %v3054
  %v3056 = vsel %vm1761, %v2672, 0.0
  %v3057 = vadd.f32 %v3055, %v3056
  %v3058 = vsel %vm1761, %v2673, 0.0
  %v3059 = vadd.f32 %v3057, %v3058
  %v3060 = vsel %vm1761, %v2674, 0.0
  %v3061 = vadd.f32 %v3059, %v3060
  %v3062 = vsel %vm1761, %v2675, 0.0
  %v3063 = vadd.f32 %v3061, %v3062
  %v3064 = vsel %vm1761, %v2676, 0.0
  %v3065 = vadd.f32 %v3063, %v3064
  %v3066 = vsel %vm1761, %v2677, 0.0
  %v3067 = vadd.f32 %v3065, %v3066
  %v3068 = vsel %vm1761, %v2678, 0.0
  %v3069 = vadd.f32 %v3067, %v3068
  %v3070 = vsel %vm1761, %v2679, 0.0
  %v3071 = vadd.f32 %v3069, %v3070
  %v3072 = vsel %vm1761, %v2680, 0.0
  %v3073 = vadd.f32 %v3071, %v3072
  %v3074 = vsel %vm1761, %v2681, 0.0
  %v3075 = vadd.f32 %v3073, %v3074
  %v3076 = vsel %vm1761, %v2682, 0.0
  %v3077 = vadd.f32 %v3075, %v3076
  %v3078 = vsel %vm1761, %v2683, 0.0
  %v3079 = vadd.f32 %v3077, %v3078
  %v3080 = vsel %vm1761, %v2684, 0.0
  %v3081 = vadd.f32 %v3079, %v3080
  %v3082 = vsel %vm1761, %v2685, 0.0
  %v3083 = vadd.f32 %v3081, %v3082
  %v3084 = vsel %vm1761, %v2686, 0.0
  %v3085 = vadd.f32 %v3083, %v3084
  %v3086 = vsel %vm1761, %v2687, 0.0
  %v3087 = vadd.f32 %v3085, %v3086
  %v3088 = vsel %vm1761, %v2688, 0.0
  %v3089 = vadd.f32 %v3087, %v3088
  %v3090 = vsel %vm1761, %v2689, 0.0
  %v3091 = vadd.f32 %v3089, %v3090
  %v3092 = vsel %vm1761, %v2690, 0.0
  %v3093 = vadd.f32 %v3091, %v3092
  %v3094 = vsel %vm1761, %v2691, 0.0
  %v3095 = vadd.f32 %v3093, %v3094
  %v3096 = vsel %vm1761, %v2692, 0.0
  %v3097 = vadd.f32 %v3095, %v3096
  %v3098 = vsel %vm1761, %v2693, 0.0
  %v3099 = vadd.f32 %v3097, %v3098
  %v3100 = vsel %vm1761, %v2694, 0.0
  %v3101 = vadd.f32 %v3099, %v3100
  %v3102 = vsel %vm1761, %v2695, 0.0
  %v3103 = vadd.f32 %v3101, %v3102
  %v3104 = vsel %vm1761, %v2696, 0.0
  %v3105 = vadd.f32 %v3103, %v3104
  %v3106 = vsel %vm1761, %v2697, 0.0
  %v3107 = vadd.f32 %v3105, %v3106
  %v3108 = vsel %vm1761, %v2698, 0.0
  %v3109 = vadd.f32 %v3107, %v3108
  %v3110 = vsel %vm1761, %v2699, 0.0
  %v3111 = vadd.f32 %v3109, %v3110
  %v3112 = vsel %vm1761, %v2700, 0.0
  %v3113 = vadd.f32 %v3111, %v3112
  %v3114 = vsel %vm1761, %v2701, 0.0
  %v3115 = vadd.f32 %v3113, %v3114
  %v3116 = vsel %vm1761, %v2702, 0.0
  %v3117 = vadd.f32 %v3115, %v3116
  %v3118 = vsel %vm1761, %v2703, 0.0
  %v3119 = vadd.f32 %v3117, %v3118
  %v3120 = vsel %vm1761, %v2704, 0.0
  %v3121 = vadd.f32 %v3119, %v3120
  %v3122 = vsel %vm1761, %v2705, 0.0
  %v3123 = vadd.f32 %v3121, %v3122
  %v3124 = vsel %vm1761, %v2706, 0.0
  %v3125 = vadd.f32 %v3123, %v3124
  %v3126 = vsel %vm1761, %v2707, 0.0
  %v3127 = vadd.f32 %v3125, %v3126
  %v3128 = vsel %vm1761, %v2708, 0.0
  %v3129 = vadd.f32 %v3127, %v3128
  %v3130 = vsel %vm1761, %v2709, 0.0
  %v3131 = vadd.f32 %v3129, %v3130
  %v3132 = vsel %vm1761, %v2710, 0.0
  %v3133 = vadd.f32 %v3131, %v3132
  %v3134 = vsel %vm1761, %v2711, 0.0
  %v3135 = vadd.f32 %v3133, %v3134
  %v3136 = vsel %vm1761, %v2712, 0.0
  %v3137 = vadd.f32 %v3135, %v3136
  %v3138 = vsel %vm1761, %v2713, 0.0
  %v3139 = vadd.f32 %v3137, %v3138
  %v3140 = vsel %vm1761, %v2714, 0.0
  %v3141 = vadd.f32 %v3139, %v3140
  %v3142 = vsel %vm1761, %v2715, 0.0
  %v3143 = vadd.f32 %v3141, %v3142
  %v3144 = vsel %vm1761, %v2716, 0.0
  %v3145 = vadd.f32 %v3143, %v3144
  %v3146 = vsel %vm1761, %v2717, 0.0
  %v3147 = vadd.f32 %v3145, %v3146
  %v3148 = vsel %vm1761, %v2718, 0.0
  %v3149 = vadd.f32 %v3147, %v3148
  %v3150 = vsel %vm1761, %v2719, 0.0
  %v3151 = vadd.f32 %v3149, %v3150
  %v3152 = vsel %vm1761, %v2720, 0.0
  %v3153 = vadd.f32 %v3151, %v3152
  %v3154 = vsel %vm1761, %v2721, 0.0
  %v3155 = vadd.f32 %v3153, %v3154
  %v3156 = vsel %vm1761, %v2722, 0.0
  %v3157 = vadd.f32 %v3155, %v3156
  %v3158 = vsel %vm1761, %v2723, 0.0
  %v3159 = vadd.f32 %v3157, %v3158
  %v3160 = vsel %vm1761, %v2724, 0.0
  %v3161 = vadd.f32 %v3159, %v3160
  %v3162 = vsel %vm1761, %v2725, 0.0
  %v3163 = vadd.f32 %v3161, %v3162
  %v3164 = vsel %vm1761, %v2726, 0.0
  %v3165 = vadd.f32 %v3163, %v3164
  %v3166 = vsel %vm1761, %v2727, 0.0
  %v3167 = vadd.f32 %v3165, %v3166
  %v3168 = vsel %vm1761, %v2728, 0.0
  %v3169 = vadd.f32 %v3167, %v3168
  %v3170 = vsel %vm1761, %v2729, 0.0
  %v3171 = vadd.f32 %v3169, %v3170
  %v3172 = vsel %vm1761, %v2730, 0.0
  %v3173 = vadd.f32 %v3171, %v3172
  %v3174 = vsel %vm1761, %v2731, 0.0
  %v3175 = vadd.f32 %v3173, %v3174
  %v3176 = vsel %vm1761, %v2732, 0.0
  %v3177 = vadd.f32 %v3175, %v3176
  %v3178 = vsel %vm1761, %v2733, 0.0
  %v3179 = vadd.f32 %v3177, %v3178
  %v3180 = vsel %vm1761, %v2734, 0.0
  %v3181 = vadd.f32 %v3179, %v3180
  %v3182 = vsel %vm1761, %v2735, 0.0
  %v3183 = vadd.f32 %v3181, %v3182
  %v3184 = vsel %vm1761, %v2736, 0.0
  %v3185 = vadd.f32 %v3183, %v3184
  %v3186 = vsel %vm1761, %v2737, 0.0
  %v3187 = vadd.f32 %v3185, %v3186
  %v3188 = vsel %vm1761, %v2738, 0.0
  %v3189 = vadd.f32 %v3187, %v3188
  %v3190 = vsel %vm1761, %v2739, 0.0
  %v3191 = vadd.f32 %v3189, %v3190
  %v3192 = vsel %vm1761, %v2740, 0.0
  %v3193 = vadd.f32 %v3191, %v3192
  %v3194 = vsel %vm1761, %v2741, 0.0
  %v3195 = vadd.f32 %v3193, %v3194
  %v3196 = vsel %vm1761, %v2742, 0.0
  %v3197 = vadd.f32 %v3195, %v3196
  %v3198 = vsel %vm1761, %v2743, 0.0
  %v3199 = vadd.f32 %v3197, %v3198
  %v3200 = vsel %vm1761, %v2744, 0.0
  %v3201 = vadd.f32 %v3199, %v3200
  %v3202 = vsel %vm1761, %v2745, 0.0
  %v3203 = vadd.f32 %v3201, %v3202
  %v3204 = vsel %vm1761, %v2746, 0.0
  %v3205 = vadd.f32 %v3203, %v3204
  %v3206 = vsel %vm1761, %v2747, 0.0
  %v3207 = vadd.f32 %v3205, %v3206
  %v3208 = vsel %vm1761, %v2748, 0.0
  %v3209 = vadd.f32 %v3207, %v3208
  %v3210 = vsel %vm1761, %v2749, 0.0
  %v3211 = vadd.f32 %v3209, %v3210
  %v3212 = vsel %vm1761, %v2750, 0.0
  %v3213 = vadd.f32 %v3211, %v3212
  %v3214 = vsel %vm1761, %v2751, 0.0
  %v3215 = vadd.f32 %v3213, %v3214
  %v3216 = vsel %vm1761, %v2752, 0.0
  %v3217 = vadd.f32 %v3215, %v3216
  %v3218 = vsel %vm1761, %v2753, 0.0
  %v3219 = vadd.f32 %v3217, %v3218
  %v3220 = vsel %vm1761, %v2754, 0.0
  %v3221 = vadd.f32 %v3219, %v3220
  %v3222 = vsel %vm1761, %v2755, 0.0
  %v3223 = vadd.f32 %v3221, %v3222
  %v3224 = vsel %vm1761, %v2756, 0.0
  %v3225 = vadd.f32 %v3223, %v3224
  %v3226 = vsel %vm1761, %v2757, 0.0
  %v3227 = vadd.f32 %v3225, %v3226
  %v3228 = vsel %vm1761, %v2758, 0.0
  %v3229 = vadd.f32 %v3227, %v3228
  %v3230 = vsel %vm1761, %v2759, 0.0
  %v3231 = vadd.f32 %v3229, %v3230
  %v3232 = vsel %vm1761, %v2760, 0.0
  %v3233 = vadd.f32 %v3231, %v3232
  %v3234 = vsel %vm1761, %v2761, 0.0
  %v3235 = vadd.f32 %v3233, %v3234
  %v3236 = vsel %vm1761, %v2762, 0.0
  %v3237 = vadd.f32 %v3235, %v3236
  %v3238 = vsel %vm1761, %v2763, 0.0
  %v3239 = vadd.f32 %v3237, %v3238
  %v3240 = vsel %vm1761, %v2764, 0.0
  %v3241 = vadd.f32 %v3239, %v3240
  %v3242 = vsel %vm1761, %v2765, 0.0
  %v3243 = vadd.f32 %v3241, %v3242
  %v3244 = vsel %vm1761, %v2766, 0.0
  %v3245 = vadd.f32 %v3243, %v3244
  %v3246 = vsel %vm1761, %v2767, 0.0
  %v3247 = vadd.f32 %v3245, %v3246
  %v3248 = vsel %vm1761, %v2768, 0.0
  %v3249 = vadd.f32 %v3247, %v3248
  %v3250 = vsel %vm1761, %v2769, 0.0
  %v3251 = vadd.f32 %v3249, %v3250
  %v3252 = vsel %vm1761, %v2770, 0.0
  %v3253 = vadd.f32 %v3251, %v3252
  %v3254 = vsel %vm1761, %v2771, 0.0
  %v3255 = vadd.f32 %v3253, %v3254
  %v3256 = vsel %vm1761, %v2772, 0.0
  %v3257 = vadd.f32 %v3255, %v3256
  %v3258 = vsel %vm1761, %v2773, 0.0
  %v3259 = vadd.f32 %v3257, %v3258
  %v3260 = vsel %vm1761, %v2774, 0.0
  %v3261 = vadd.f32 %v3259, %v3260
  %v3262 = vsel %vm1761, %v2775, 0.0
  %v3263 = vadd.f32 %v3261, %v3262
  %v3264 = vsel %vm1761, %v2776, 0.0
  %v3265 = vadd.f32 %v3263, %v3264
  %v3266 = vsel %vm1761, %v2777, 0.0
  %v3267 = vadd.f32 %v3265, %v3266
  %v3268 = vsel %vm1761, %v2778, 0.0
  %v3269 = vadd.f32 %v3267, %v3268
  %v3270 = vsel %vm1761, %v2779, 0.0
  %v3271 = vadd.f32 %v3269, %v3270
  %v3272 = vsel %vm1761, %v2780, 0.0
  %v3273 = vadd.f32 %v3271, %v3272
  %v3274 = vsel %vm1761, %v2781, 0.0
  %v3275 = vadd.f32 %v3273, %v3274
  %v3276 = vsel %vm1761, %v2782, 0.0
  %v3277 = vadd.f32 %v3275, %v3276
  %v3278 = vsel %vm1761, %v2783, 0.0
  %v3279 = vadd.f32 %v3277, %v3278
  %v3280 = vsel %vm1761, %v2784, 0.0
  %v3281 = vadd.f32 %v3279, %v3280
  %v3282 = vsel %vm1761, %v2785, 0.0
  %v3283 = vadd.f32 %v3281, %v3282
  %v3284 = vsel %vm1761, %v2786, 0.0
  %v3285 = vadd.f32 %v3283, %v3284
  %v3286 = vsel %vm1761, %v2787, 0.0
  %v3287 = vadd.f32 %v3285, %v3286
  %v3288 = vsel %vm1761, %v2788, 0.0
  %v3289 = vadd.f32 %v3287, %v3288
  %v3290 = vsel %vm1761, %v2789, 0.0
  %v3291 = vadd.f32 %v3289, %v3290
  %v3292 = vsel %vm1761, %v2790, 0.0
  %v3293 = vadd.f32 %v3291, %v3292
  %v3294 = vsel %vm1761, %v2791, 0.0
  %v3295 = vadd.f32 %v3293, %v3294
  %v3296 = vsel %vm1761, %v2792, 0.0
  %v3297 = vadd.f32 %v3295, %v3296
  %v3298 = vsel %vm1761, %v2793, 0.0
  %v3299 = vadd.f32 %v3297, %v3298
  %v3300 = vsel %vm1761, %v2794, 0.0
  %v3301 = vadd.f32 %v3299, %v3300
  %v3302 = vsel %vm1761, %v2795, 0.0
  %v3303 = vadd.f32 %v3301, %v3302
  %v3304 = vsel %vm1761, %v2796, 0.0
  %v3305 = vadd.f32 %v3303, %v3304
  %v3306 = vsel %vm1761, %v2797, 0.0
  %v3307 = vadd.f32 %v3305, %v3306
  %v3308 = vsel %vm1761, %v2798, 0.0
  %v3309 = vadd.f32 %v3307, %v3308
  %v3310 = vrot.slane %v3309, 4
  %v3311 = vadd.f32 %v3309, %v3310
  %v3312 = vrot.slane %v3311, 2
  %v3313 = vadd.f32 %v3311, %v3312
  %v3314 = vrot.slane %v3313, 1
  %v3315 = vadd.f32 %v3313, %v3314
  %v3316 = vmul.f32 %v3315, %v2285
  %v3317 = vld [vmem:[%s3] sm:$0x1]
  %v3318 = vadd.f32 %v3316, 1e-05
  %v3319 = vrsqrt.pop %v3318
  %v3320 = vmul.f32 %v3319, %v3318
  %v3321 = vmul.f32 %v3320, %v3319
  %v3322 = vmul.f32 0.5, %v3321
  %v3323 = vsub.f32 1.5, %v3322
  %v3324 = vmul.f32 %v3319, %v3323
  %vm3325 = vweird.f32 %v3318
  %vm3326 = vweird.f32 %v3319
  %vm3327 = vmor %vm3325, %vm3326
  %v3328 = vsel %vm3327, %v3319, %v3324
  %v3329 = vmul.f32 %v3317, %v3328
  %v3330 = vld [vmem:[%s4] sm:$0x1]
  %v3331 = vmul.f32 %v2286, %v3329
  %v3332 = vsub.f32 %v3330, %v3331
  %v3334 = vperm.slane %v3329, 0
  %v3336 = vmul.f32 %v1122, %v3334
  %v3337 = vmul.f32 %v1124, %v3334
  %v3338 = vmul.f32 %v1127, %v3334
  %v3339 = vmul.f32 %v1129, %v3334
  %v3340 = vmul.f32 %v1132, %v3334
  %v3341 = vmul.f32 %v1134, %v3334
  %v3342 = vmul.f32 %v1137, %v3334
  %v3343 = vmul.f32 %v1139, %v3334
  %v3344 = vmul.f32 %v1142, %v3334
  %v3345 = vmul.f32 %v1144, %v3334
  %v3346 = vmul.f32 %v1147, %v3334
  %v3347 = vmul.f32 %v1149, %v3334
  %v3348 = vmul.f32 %v1152, %v3334
  %v3349 = vmul.f32 %v1154, %v3334
  %v3350 = vmul.f32 %v1157, %v3334
  %v3351 = vmul.f32 %v1159, %v3334
  %v3352 = vmul.f32 %v1162, %v3334
  %v3353 = vmul.f32 %v1164, %v3334
  %v3354 = vmul.f32 %v1167, %v3334
  %v3355 = vmul.f32 %v1169, %v3334
  %v3356 = vmul.f32 %v1172, %v3334
  %v3357 = vmul.f32 %v1174, %v3334
  %v3358 = vmul.f32 %v1177, %v3334
  %v3359 = vmul.f32 %v1179, %v3334
  %v3360 = vmul.f32 %v1182, %v3334
  %v3361 = vmul.f32 %v1184, %v3334
  %v3362 = vmul.f32 %v1187, %v3334
  %v3363 = vmul.f32 %v1189, %v3334
  %v3364 = vmul.f32 %v1192, %v3334
  %v3365 = vmul.f32 %v1194, %v3334
  %v3366 = vmul.f32 %v1197, %v3334
  %v3367 = vmul.f32 %v1199, %v3334
  %v3368 = vmul.f32 %v1202, %v3334
  %v3369 = vmul.f32 %v1204, %v3334
  %v3370 = vmul.f32 %v1207, %v3334
  %v3371 = vmul.f32 %v1209, %v3334
  %v3372 = vmul.f32 %v1212, %v3334
  %v3373 = vmul.f32 %v1214, %v3334
  %v3374 = vmul.f32 %v1217, %v3334
  %v3375 = vmul.f32 %v1219, %v3334
  %v3376 = vmul.f32 %v1222, %v3334
  %v3377 = vmul.f32 %v1224, %v3334
  %v3378 = vmul.f32 %v1227, %v3334
  %v3379 = vmul.f32 %v1229, %v3334
  %v3380 = vmul.f32 %v1232, %v3334
  %v3381 = vmul.f32 %v1234, %v3334
  %v3382 = vmul.f32 %v1237, %v3334
  %v3383 = vmul.f32 %v1239, %v3334
  %v3384 = vmul.f32 %v1242, %v3334
  %v3385 = vmul.f32 %v1244, %v3334
  %v3386 = vmul.f32 %v1247, %v3334
  %v3387 = vmul.f32 %v1249, %v3334
  %v3388 = vmul.f32 %v1252, %v3334
  %v3389 = vmul.f32 %v1254, %v3334
  %v3390 = vmul.f32 %v1257, %v3334
  %v3391 = vmul.f32 %v1259, %v3334
  %v3392 = vmul.f32 %v1262, %v3334
  %v3393 = vmul.f32 %v1264, %v3334
  %v3394 = vmul.f32 %v1267, %v3334
  %v3395 = vmul.f32 %v1269, %v3334
  %v3396 = vmul.f32 %v1272, %v3334
  %v3397 = vmul.f32 %v1274, %v3334
  %v3398 = vmul.f32 %v1277, %v3334
  %v3399 = vmul.f32 %v1279, %v3334
  %v3400 = vmul.f32 %v1282, %v3334
  %v3401 = vmul.f32 %v1284, %v3334
  %v3402 = vmul.f32 %v1287, %v3334
  %v3403 = vmul.f32 %v1289, %v3334
  %v3404 = vmul.f32 %v1292, %v3334
  %v3405 = vmul.f32 %v1294, %v3334
  %v3406 = vmul.f32 %v1297, %v3334
  %v3407 = vmul.f32 %v1299, %v3334
  %v3408 = vmul.f32 %v1302, %v3334
  %v3409 = vmul.f32 %v1304, %v3334
  %v3410 = vmul.f32 %v1307, %v3334
  %v3411 = vmul.f32 %v1309, %v3334
  %v3412 = vmul.f32 %v1312, %v3334
  %v3413 = vmul.f32 %v1314, %v3334
  %v3414 = vmul.f32 %v1317, %v3334
  %v3415 = vmul.f32 %v1319, %v3334
  %v3416 = vmul.f32 %v1322, %v3334
  %v3417 = vmul.f32 %v1324, %v3334
  %v3418 = vmul.f32 %v1327, %v3334
  %v3419 = vmul.f32 %v1329, %v3334
  %v3420 = vmul.f32 %v1332, %v3334
  %v3421 = vmul.f32 %v1334, %v3334
  %v3422 = vmul.f32 %v1337, %v3334
  %v3423 = vmul.f32 %v1339, %v3334
  %v3424 = vmul.f32 %v1342, %v3334
  %v3425 = vmul.f32 %v1344, %v3334
  %v3426 = vmul.f32 %v1347, %v3334
  %v3427 = vmul.f32 %v1349, %v3334
  %v3428 = vmul.f32 %v1352, %v3334
  %v3429 = vmul.f32 %v1354, %v3334
  %v3430 = vmul.f32 %v1357, %v3334
  %v3431 = vmul.f32 %v1359, %v3334
  %v3432 = vmul.f32 %v1362, %v3334
  %v3433 = vmul.f32 %v1364, %v3334
  %v3434 = vmul.f32 %v1367, %v3334
  %v3435 = vmul.f32 %v1369, %v3334
  %v3436 = vmul.f32 %v1372, %v3334
  %v3437 = vmul.f32 %v1374, %v3334
  %v3438 = vmul.f32 %v1377, %v3334
  %v3439 = vmul.f32 %v1379, %v3334
  %v3440 = vmul.f32 %v1382, %v3334
  %v3441 = vmul.f32 %v1384, %v3334
  %v3442 = vmul.f32 %v1387, %v3334
  %v3443 = vmul.f32 %v1389, %v3334
  %v3444 = vmul.f32 %v1392, %v3334
  %v3445 = vmul.f32 %v1394, %v3334
  %v3446 = vmul.f32 %v1397, %v3334
  %v3447 = vmul.f32 %v1399, %v3334
  %v3448 = vmul.f32 %v1402, %v3334
  %v3449 = vmul.f32 %v1404, %v3334
  %v3450 = vmul.f32 %v1407, %v3334
  %v3451 = vmul.f32 %v1409, %v3334
  %v3452 = vmul.f32 %v1412, %v3334
  %v3453 = vmul.f32 %v1414, %v3334
  %v3454 = vmul.f32 %v1417, %v3334
  %v3455 = vmul.f32 %v1419, %v3334
  %v3456 = vmul.f32 %v1422, %v3334
  %v3457 = vmul.f32 %v1424, %v3334
  %v3458 = vmul.f32 %v1427, %v3334
  %v3459 = vmul.f32 %v1429, %v3334
  %v3460 = vmul.f32 %v1432, %v3334
  %v3461 = vmul.f32 %v1434, %v3334
  %v3462 = vmul.f32 %v1437, %v3334
  %v3463 = vmul.f32 %v1439, %v3334
  %v3464 = vmul.f32 %v1442, %v3334
  %v3465 = vmul.f32 %v1444, %v3334
  %v3466 = vmul.f32 %v1447, %v3334
  %v3467 = vmul.f32 %v1449, %v3334
  %v3468 = vmul.f32 %v1452, %v3334
  %v3469 = vmul.f32 %v1454, %v3334
  %v3470 = vmul.f32 %v1457, %v3334
  %v3471 = vmul.f32 %v1459, %v3334
  %v3472 = vmul.f32 %v1462, %v3334
  %v3473 = vmul.f32 %v1464, %v3334
  %v3474 = vmul.f32 %v1467, %v3334
  %v3475 = vmul.f32 %v1469, %v3334
  %v3476 = vmul.f32 %v1472, %v3334
  %v3477 = vmul.f32 %v1474, %v3334
  %v3478 = vmul.f32 %v1477, %v3334
  %v3479 = vmul.f32 %v1479, %v3334
  %v3480 = vmul.f32 %v1482, %v3334
  %v3481 = vmul.f32 %v1484, %v3334
  %v3482 = vmul.f32 %v1487, %v3334
  %v3483 = vmul.f32 %v1489, %v3334
  %v3484 = vmul.f32 %v1492, %v3334
  %v3485 = vmul.f32 %v1494, %v3334
  %v3486 = vmul.f32 %v1497, %v3334
  %v3487 = vmul.f32 %v1499, %v3334
  %v3488 = vmul.f32 %v1502, %v3334
  %v3489 = vmul.f32 %v1504, %v3334
  %v3490 = vmul.f32 %v1507, %v3334
  %v3491 = vmul.f32 %v1509, %v3334
  %v3492 = vmul.f32 %v1512, %v3334
  %v3493 = vmul.f32 %v1514, %v3334
  %v3494 = vmul.f32 %v1517, %v3334
  %v3495 = vmul.f32 %v1519, %v3334
  %v3496 = vmul.f32 %v1522, %v3334
  %v3497 = vmul.f32 %v1524, %v3334
  %v3498 = vmul.f32 %v1527, %v3334
  %v3499 = vmul.f32 %v1529, %v3334
  %v3500 = vmul.f32 %v1532, %v3334
  %v3501 = vmul.f32 %v1534, %v3334
  %v3502 = vmul.f32 %v1537, %v3334
  %v3503 = vmul.f32 %v1539, %v3334
  %v3504 = vmul.f32 %v1542, %v3334
  %v3505 = vmul.f32 %v1544, %v3334
  %v3506 = vmul.f32 %v1547, %v3334
  %v3507 = vmul.f32 %v1549, %v3334
  %v3508 = vmul.f32 %v1552, %v3334
  %v3509 = vmul.f32 %v1554, %v3334
  %v3510 = vmul.f32 %v1557, %v3334
  %v3511 = vmul.f32 %v1559, %v3334
  %v3512 = vmul.f32 %v1562, %v3334
  %v3513 = vmul.f32 %v1564, %v3334
  %v3514 = vmul.f32 %v1567, %v3334
  %v3515 = vmul.f32 %v1569, %v3334
  %v3516 = vmul.f32 %v1572, %v3334
  %v3517 = vmul.f32 %v1574, %v3334
  %v3518 = vmul.f32 %v1577, %v3334
  %v3519 = vmul.f32 %v1579, %v3334
  %v3520 = vmul.f32 %v1582, %v3334
  %v3521 = vmul.f32 %v1584, %v3334
  %v3522 = vmul.f32 %v1587, %v3334
  %v3523 = vmul.f32 %v1589, %v3334
  %v3524 = vmul.f32 %v1592, %v3334
  %v3525 = vmul.f32 %v1594, %v3334
  %v3526 = vmul.f32 %v1597, %v3334
  %v3527 = vmul.f32 %v1599, %v3334
  %v3528 = vmul.f32 %v1602, %v3334
  %v3529 = vmul.f32 %v1604, %v3334
  %v3530 = vmul.f32 %v1607, %v3334
  %v3531 = vmul.f32 %v1609, %v3334
  %v3532 = vmul.f32 %v1612, %v3334
  %v3533 = vmul.f32 %v1614, %v3334
  %v3534 = vmul.f32 %v1617, %v3334
  %v3535 = vmul.f32 %v1619, %v3334
  %v3536 = vmul.f32 %v1622, %v3334
  %v3537 = vmul.f32 %v1624, %v3334
  %v3538 = vmul.f32 %v1627, %v3334
  %v3539 = vmul.f32 %v1629, %v3334
  %v3540 = vmul.f32 %v1632, %v3334
  %v3541 = vmul.f32 %v1634, %v3334
  %v3542 = vmul.f32 %v1637, %v3334
  %v3543 = vmul.f32 %v1639, %v3334
  %v3544 = vmul.f32 %v1642, %v3334
  %v3545 = vmul.f32 %v1644, %v3334
  %v3546 = vmul.f32 %v1647, %v3334
  %v3547 = vmul.f32 %v1649, %v3334
  %v3548 = vmul.f32 %v1652, %v3334
  %v3549 = vmul.f32 %v1654, %v3334
  %v3550 = vmul.f32 %v1657, %v3334
  %v3551 = vmul.f32 %v1659, %v3334
  %v3552 = vmul.f32 %v1662, %v3334
  %v3553 = vmul.f32 %v1664, %v3334
  %v3554 = vmul.f32 %v1667, %v3334
  %v3555 = vmul.f32 %v1669, %v3334
  %v3556 = vmul.f32 %v1672, %v3334
  %v3557 = vmul.f32 %v1674, %v3334
  %v3558 = vmul.f32 %v1677, %v3334
  %v3559 = vmul.f32 %v1679, %v3334
  %v3560 = vmul.f32 %v1682, %v3334
  %v3561 = vmul.f32 %v1684, %v3334
  %v3562 = vmul.f32 %v1687, %v3334
  %v3563 = vmul.f32 %v1689, %v3334
  %v3564 = vmul.f32 %v1692, %v3334
  %v3565 = vmul.f32 %v1694, %v3334
  %v3566 = vmul.f32 %v1697, %v3334
  %v3567 = vmul.f32 %v1699, %v3334
  %v3568 = vmul.f32 %v1702, %v3334
  %v3569 = vmul.f32 %v1704, %v3334
  %v3570 = vmul.f32 %v1707, %v3334
  %v3571 = vmul.f32 %v1709, %v3334
  %v3572 = vmul.f32 %v1712, %v3334
  %v3573 = vmul.f32 %v1714, %v3334
  %v3574 = vmul.f32 %v1717, %v3334
  %v3575 = vmul.f32 %v1719, %v3334
  %v3576 = vmul.f32 %v1722, %v3334
  %v3577 = vmul.f32 %v1724, %v3334
  %v3578 = vmul.f32 %v1727, %v3334
  %v3579 = vmul.f32 %v1729, %v3334
  %v3580 = vmul.f32 %v1732, %v3334
  %v3581 = vmul.f32 %v1734, %v3334
  %v3582 = vmul.f32 %v1737, %v3334
  %v3583 = vmul.f32 %v1739, %v3334
  %v3584 = vmul.f32 %v1742, %v3334
  %v3585 = vmul.f32 %v1744, %v3334
  %v3586 = vmul.f32 %v1747, %v3334
  %v3587 = vmul.f32 %v1749, %v3334
  %v3588 = vmul.f32 %v1752, %v3334
  %v3589 = vmul.f32 %v1754, %v3334
  %v3590 = vmul.f32 %v1757, %v3334
  %v3591 = vmul.f32 %v1759, %v3334
  %v3593 = vperm.slane %v3332, 0
  %v3595 = vadd.f32 %v3336, %v3593
  %v3596 = vadd.f32 %v3337, %v3593
  %v3597 = vadd.f32 %v3338, %v3593
  %v3598 = vadd.f32 %v3339, %v3593
  %v3599 = vadd.f32 %v3340, %v3593
  %v3600 = vadd.f32 %v3341, %v3593
  %v3601 = vadd.f32 %v3342, %v3593
  %v3602 = vadd.f32 %v3343, %v3593
  %v3603 = vadd.f32 %v3344, %v3593
  %v3604 = vadd.f32 %v3345, %v3593
  %v3605 = vadd.f32 %v3346, %v3593
  %v3606 = vadd.f32 %v3347, %v3593
  %v3607 = vadd.f32 %v3348, %v3593
  %v3608 = vadd.f32 %v3349, %v3593
  %v3609 = vadd.f32 %v3350, %v3593
  %v3610 = vadd.f32 %v3351, %v3593
  %v3611 = vadd.f32 %v3352, %v3593
  %v3612 = vadd.f32 %v3353, %v3593
  %v3613 = vadd.f32 %v3354, %v3593
  %v3614 = vadd.f32 %v3355, %v3593
  %v3615 = vadd.f32 %v3356, %v3593
  %v3616 = vadd.f32 %v3357, %v3593
  %v3617 = vadd.f32 %v3358, %v3593
  %v3618 = vadd.f32 %v3359, %v3593
  %v3619 = vadd.f32 %v3360, %v3593
  %v3620 = vadd.f32 %v3361, %v3593
  %v3621 = vadd.f32 %v3362, %v3593
  %v3622 = vadd.f32 %v3363, %v3593
  %v3623 = vadd.f32 %v3364, %v3593
  %v3624 = vadd.f32 %v3365, %v3593
  %v3625 = vadd.f32 %v3366, %v3593
  %v3626 = vadd.f32 %v3367, %v3593
  %v3627 = vadd.f32 %v3368, %v3593
  %v3628 = vadd.f32 %v3369, %v3593
  %v3629 = vadd.f32 %v3370, %v3593
  %v3630 = vadd.f32 %v3371, %v3593
  %v3631 = vadd.f32 %v3372, %v3593
  %v3632 = vadd.f32 %v3373, %v3593
  %v3633 = vadd.f32 %v3374, %v3593
  %v3634 = vadd.f32 %v3375, %v3593
  %v3635 = vadd.f32 %v3376, %v3593
  %v3636 = vadd.f32 %v3377, %v3593
  %v3637 = vadd.f32 %v3378, %v3593
  %v3638 = vadd.f32 %v3379, %v3593
  %v3639 = vadd.f32 %v3380, %v3593
  %v3640 = vadd.f32 %v3381, %v3593
  %v3641 = vadd.f32 %v3382, %v3593
  %v3642 = vadd.f32 %v3383, %v3593
  %v3643 = vadd.f32 %v3384, %v3593
  %v3644 = vadd.f32 %v3385, %v3593
  %v3645 = vadd.f32 %v3386, %v3593
  %v3646 = vadd.f32 %v3387, %v3593
  %v3647 = vadd.f32 %v3388, %v3593
  %v3648 = vadd.f32 %v3389, %v3593
  %v3649 = vadd.f32 %v3390, %v3593
  %v3650 = vadd.f32 %v3391, %v3593
  %v3651 = vadd.f32 %v3392, %v3593
  %v3652 = vadd.f32 %v3393, %v3593
  %v3653 = vadd.f32 %v3394, %v3593
  %v3654 = vadd.f32 %v3395, %v3593
  %v3655 = vadd.f32 %v3396, %v3593
  %v3656 = vadd.f32 %v3397, %v3593
  %v3657 = vadd.f32 %v3398, %v3593
  %v3658 = vadd.f32 %v3399, %v3593
  %v3659 = vadd.f32 %v3400, %v3593
  %v3660 = vadd.f32 %v3401, %v3593
  %v3661 = vadd.f32 %v3402, %v3593
  %v3662 = vadd.f32 %v3403, %v3593
  %v3663 = vadd.f32 %v3404, %v3593
  %v3664 = vadd.f32 %v3405, %v3593
  %v3665 = vadd.f32 %v3406, %v3593
  %v3666 = vadd.f32 %v3407, %v3593
  %v3667 = vadd.f32 %v3408, %v3593
  %v3668 = vadd.f32 %v3409, %v3593
  %v3669 = vadd.f32 %v3410, %v3593
  %v3670 = vadd.f32 %v3411, %v3593
  %v3671 = vadd.f32 %v3412, %v3593
  %v3672 = vadd.f32 %v3413, %v3593
  %v3673 = vadd.f32 %v3414, %v3593
  %v3674 = vadd.f32 %v3415, %v3593
  %v3675 = vadd.f32 %v3416, %v3593
  %v3676 = vadd.f32 %v3417, %v3593
  %v3677 = vadd.f32 %v3418, %v3593
  %v3678 = vadd.f32 %v3419, %v3593
  %v3679 = vadd.f32 %v3420, %v3593
  %v3680 = vadd.f32 %v3421, %v3593
  %v3681 = vadd.f32 %v3422, %v3593
  %v3682 = vadd.f32 %v3423, %v3593
  %v3683 = vadd.f32 %v3424, %v3593
  %v3684 = vadd.f32 %v3425, %v3593
  %v3685 = vadd.f32 %v3426, %v3593
  %v3686 = vadd.f32 %v3427, %v3593
  %v3687 = vadd.f32 %v3428, %v3593
  %v3688 = vadd.f32 %v3429, %v3593
  %v3689 = vadd.f32 %v3430, %v3593
  %v3690 = vadd.f32 %v3431, %v3593
  %v3691 = vadd.f32 %v3432, %v3593
  %v3692 = vadd.f32 %v3433, %v3593
  %v3693 = vadd.f32 %v3434, %v3593
  %v3694 = vadd.f32 %v3435, %v3593
  %v3695 = vadd.f32 %v3436, %v3593
  %v3696 = vadd.f32 %v3437, %v3593
  %v3697 = vadd.f32 %v3438, %v3593
  %v3698 = vadd.f32 %v3439, %v3593
  %v3699 = vadd.f32 %v3440, %v3593
  %v3700 = vadd.f32 %v3441, %v3593
  %v3701 = vadd.f32 %v3442, %v3593
  %v3702 = vadd.f32 %v3443, %v3593
  %v3703 = vadd.f32 %v3444, %v3593
  %v3704 = vadd.f32 %v3445, %v3593
  %v3705 = vadd.f32 %v3446, %v3593
  %v3706 = vadd.f32 %v3447, %v3593
  %v3707 = vadd.f32 %v3448, %v3593
  %v3708 = vadd.f32 %v3449, %v3593
  %v3709 = vadd.f32 %v3450, %v3593
  %v3710 = vadd.f32 %v3451, %v3593
  %v3711 = vadd.f32 %v3452, %v3593
  %v3712 = vadd.f32 %v3453, %v3593
  %v3713 = vadd.f32 %v3454, %v3593
  %v3714 = vadd.f32 %v3455, %v3593
  %v3715 = vadd.f32 %v3456, %v3593
  %v3716 = vadd.f32 %v3457, %v3593
  %v3717 = vadd.f32 %v3458, %v3593
  %v3718 = vadd.f32 %v3459, %v3593
  %v3719 = vadd.f32 %v3460, %v3593
  %v3720 = vadd.f32 %v3461, %v3593
  %v3721 = vadd.f32 %v3462, %v3593
  %v3722 = vadd.f32 %v3463, %v3593
  %v3723 = vadd.f32 %v3464, %v3593
  %v3724 = vadd.f32 %v3465, %v3593
  %v3725 = vadd.f32 %v3466, %v3593
  %v3726 = vadd.f32 %v3467, %v3593
  %v3727 = vadd.f32 %v3468, %v3593
  %v3728 = vadd.f32 %v3469, %v3593
  %v3729 = vadd.f32 %v3470, %v3593
  %v3730 = vadd.f32 %v3471, %v3593
  %v3731 = vadd.f32 %v3472, %v3593
  %v3732 = vadd.f32 %v3473, %v3593
  %v3733 = vadd.f32 %v3474, %v3593
  %v3734 = vadd.f32 %v3475, %v3593
  %v3735 = vadd.f32 %v3476, %v3593
  %v3736 = vadd.f32 %v3477, %v3593
  %v3737 = vadd.f32 %v3478, %v3593
  %v3738 = vadd.f32 %v3479, %v3593
  %v3739 = vadd.f32 %v3480, %v3593
  %v3740 = vadd.f32 %v3481, %v3593
  %v3741 = vadd.f32 %v3482, %v3593
  %v3742 = vadd.f32 %v3483, %v3593
  %v3743 = vadd.f32 %v3484, %v3593
  %v3744 = vadd.f32 %v3485, %v3593
  %v3745 = vadd.f32 %v3486, %v3593
  %v3746 = vadd.f32 %v3487, %v3593
  %v3747 = vadd.f32 %v3488, %v3593
  %v3748 = vadd.f32 %v3489, %v3593
  %v3749 = vadd.f32 %v3490, %v3593
  %v3750 = vadd.f32 %v3491, %v3593
  %v3751 = vadd.f32 %v3492, %v3593
  %v3752 = vadd.f32 %v3493, %v3593
  %v3753 = vadd.f32 %v3494, %v3593
  %v3754 = vadd.f32 %v3495, %v3593
  %v3755 = vadd.f32 %v3496, %v3593
  %v3756 = vadd.f32 %v3497, %v3593
  %v3757 = vadd.f32 %v3498, %v3593
  %v3758 = vadd.f32 %v3499, %v3593
  %v3759 = vadd.f32 %v3500, %v3593
  %v3760 = vadd.f32 %v3501, %v3593
  %v3761 = vadd.f32 %v3502, %v3593
  %v3762 = vadd.f32 %v3503, %v3593
  %v3763 = vadd.f32 %v3504, %v3593
  %v3764 = vadd.f32 %v3505, %v3593
  %v3765 = vadd.f32 %v3506, %v3593
  %v3766 = vadd.f32 %v3507, %v3593
  %v3767 = vadd.f32 %v3508, %v3593
  %v3768 = vadd.f32 %v3509, %v3593
  %v3769 = vadd.f32 %v3510, %v3593
  %v3770 = vadd.f32 %v3511, %v3593
  %v3771 = vadd.f32 %v3512, %v3593
  %v3772 = vadd.f32 %v3513, %v3593
  %v3773 = vadd.f32 %v3514, %v3593
  %v3774 = vadd.f32 %v3515, %v3593
  %v3775 = vadd.f32 %v3516, %v3593
  %v3776 = vadd.f32 %v3517, %v3593
  %v3777 = vadd.f32 %v3518, %v3593
  %v3778 = vadd.f32 %v3519, %v3593
  %v3779 = vadd.f32 %v3520, %v3593
  %v3780 = vadd.f32 %v3521, %v3593
  %v3781 = vadd.f32 %v3522, %v3593
  %v3782 = vadd.f32 %v3523, %v3593
  %v3783 = vadd.f32 %v3524, %v3593
  %v3784 = vadd.f32 %v3525, %v3593
  %v3785 = vadd.f32 %v3526, %v3593
  %v3786 = vadd.f32 %v3527, %v3593
  %v3787 = vadd.f32 %v3528, %v3593
  %v3788 = vadd.f32 %v3529, %v3593
  %v3789 = vadd.f32 %v3530, %v3593
  %v3790 = vadd.f32 %v3531, %v3593
  %v3791 = vadd.f32 %v3532, %v3593
  %v3792 = vadd.f32 %v3533, %v3593
  %v3793 = vadd.f32 %v3534, %v3593
  %v3794 = vadd.f32 %v3535, %v3593
  %v3795 = vadd.f32 %v3536, %v3593
  %v3796 = vadd.f32 %v3537, %v3593
  %v3797 = vadd.f32 %v3538, %v3593
  %v3798 = vadd.f32 %v3539, %v3593
  %v3799 = vadd.f32 %v3540, %v3593
  %v3800 = vadd.f32 %v3541, %v3593
  %v3801 = vadd.f32 %v3542, %v3593
  %v3802 = vadd.f32 %v3543, %v3593
  %v3803 = vadd.f32 %v3544, %v3593
  %v3804 = vadd.f32 %v3545, %v3593
  %v3805 = vadd.f32 %v3546, %v3593
  %v3806 = vadd.f32 %v3547, %v3593
  %v3807 = vadd.f32 %v3548, %v3593
  %v3808 = vadd.f32 %v3549, %v3593
  %v3809 = vadd.f32 %v3550, %v3593
  %v3810 = vadd.f32 %v3551, %v3593
  %v3811 = vadd.f32 %v3552, %v3593
  %v3812 = vadd.f32 %v3553, %v3593
  %v3813 = vadd.f32 %v3554, %v3593
  %v3814 = vadd.f32 %v3555, %v3593
  %v3815 = vadd.f32 %v3556, %v3593
  %v3816 = vadd.f32 %v3557, %v3593
  %v3817 = vadd.f32 %v3558, %v3593
  %v3818 = vadd.f32 %v3559, %v3593
  %v3819 = vadd.f32 %v3560, %v3593
  %v3820 = vadd.f32 %v3561, %v3593
  %v3821 = vadd.f32 %v3562, %v3593
  %v3822 = vadd.f32 %v3563, %v3593
  %v3823 = vadd.f32 %v3564, %v3593
  %v3824 = vadd.f32 %v3565, %v3593
  %v3825 = vadd.f32 %v3566, %v3593
  %v3826 = vadd.f32 %v3567, %v3593
  %v3827 = vadd.f32 %v3568, %v3593
  %v3828 = vadd.f32 %v3569, %v3593
  %v3829 = vadd.f32 %v3570, %v3593
  %v3830 = vadd.f32 %v3571, %v3593
  %v3831 = vadd.f32 %v3572, %v3593
  %v3832 = vadd.f32 %v3573, %v3593
  %v3833 = vadd.f32 %v3574, %v3593
  %v3834 = vadd.f32 %v3575, %v3593
  %v3835 = vadd.f32 %v3576, %v3593
  %v3836 = vadd.f32 %v3577, %v3593
  %v3837 = vadd.f32 %v3578, %v3593
  %v3838 = vadd.f32 %v3579, %v3593
  %v3839 = vadd.f32 %v3580, %v3593
  %v3840 = vadd.f32 %v3581, %v3593
  %v3841 = vadd.f32 %v3582, %v3593
  %v3842 = vadd.f32 %v3583, %v3593
  %v3843 = vadd.f32 %v3584, %v3593
  %v3844 = vadd.f32 %v3585, %v3593
  %v3845 = vadd.f32 %v3586, %v3593
  %v3846 = vadd.f32 %v3587, %v3593
  %v3847 = vadd.f32 %v3588, %v3593
  %v3848 = vadd.f32 %v3589, %v3593
  %v3849 = vadd.f32 %v3590, %v3593
  %v3850 = vadd.f32 %v3591, %v3593
  %vm3851 = vcmp.ge.f32.partialorder %v3595, 0.0
  %vm3852 = vcmp.ge.f32.partialorder %v3596, 0.0
  %vm3853 = vcmp.ge.f32.partialorder %v3597, 0.0
  %vm3854 = vcmp.ge.f32.partialorder %v3598, 0.0
  %vm3855 = vcmp.ge.f32.partialorder %v3599, 0.0
  %vm3856 = vcmp.ge.f32.partialorder %v3600, 0.0
  %vm3857 = vcmp.ge.f32.partialorder %v3601, 0.0
  %vm3858 = vcmp.ge.f32.partialorder %v3602, 0.0
  %vm3859 = vcmp.ge.f32.partialorder %v3603, 0.0
  %vm3860 = vcmp.ge.f32.partialorder %v3604, 0.0
  %vm3861 = vcmp.ge.f32.partialorder %v3605, 0.0
  %vm3862 = vcmp.ge.f32.partialorder %v3606, 0.0
  %vm3863 = vcmp.ge.f32.partialorder %v3607, 0.0
  %vm3864 = vcmp.ge.f32.partialorder %v3608, 0.0
  %vm3865 = vcmp.ge.f32.partialorder %v3609, 0.0
  %vm3866 = vcmp.ge.f32.partialorder %v3610, 0.0
  %vm3867 = vcmp.ge.f32.partialorder %v3611, 0.0
  %vm3868 = vcmp.ge.f32.partialorder %v3612, 0.0
  %vm3869 = vcmp.ge.f32.partialorder %v3613, 0.0
  %vm3870 = vcmp.ge.f32.partialorder %v3614, 0.0
  %vm3871 = vcmp.ge.f32.partialorder %v3615, 0.0
  %vm3872 = vcmp.ge.f32.partialorder %v3616, 0.0
  %vm3873 = vcmp.ge.f32.partialorder %v3617, 0.0
  %vm3874 = vcmp.ge.f32.partialorder %v3618, 0.0
  %vm3875 = vcmp.ge.f32.partialorder %v3619, 0.0
  %vm3876 = vcmp.ge.f32.partialorder %v3620, 0.0
  %vm3877 = vcmp.ge.f32.partialorder %v3621, 0.0
  %vm3878 = vcmp.ge.f32.partialorder %v3622, 0.0
  %vm3879 = vcmp.ge.f32.partialorder %v3623, 0.0
  %vm3880 = vcmp.ge.f32.partialorder %v3624, 0.0
  %vm3881 = vcmp.ge.f32.partialorder %v3625, 0.0
  %vm3882 = vcmp.ge.f32.partialorder %v3626, 0.0
  %vm3883 = vcmp.ge.f32.partialorder %v3627, 0.0
  %vm3884 = vcmp.ge.f32.partialorder %v3628, 0.0
  %vm3885 = vcmp.ge.f32.partialorder %v3629, 0.0
  %vm3886 = vcmp.ge.f32.partialorder %v3630, 0.0
  %vm3887 = vcmp.ge.f32.partialorder %v3631, 0.0
  %vm3888 = vcmp.ge.f32.partialorder %v3632, 0.0
  %vm3889 = vcmp.ge.f32.partialorder %v3633, 0.0
  %vm3890 = vcmp.ge.f32.partialorder %v3634, 0.0
  %vm3891 = vcmp.ge.f32.partialorder %v3635, 0.0
  %vm3892 = vcmp.ge.f32.partialorder %v3636, 0.0
  %vm3893 = vcmp.ge.f32.partialorder %v3637, 0.0
  %vm3894 = vcmp.ge.f32.partialorder %v3638, 0.0
  %vm3895 = vcmp.ge.f32.partialorder %v3639, 0.0
  %vm3896 = vcmp.ge.f32.partialorder %v3640, 0.0
  %vm3897 = vcmp.ge.f32.partialorder %v3641, 0.0
  %vm3898 = vcmp.ge.f32.partialorder %v3642, 0.0
  %vm3899 = vcmp.ge.f32.partialorder %v3643, 0.0
  %vm3900 = vcmp.ge.f32.partialorder %v3644, 0.0
  %vm3901 = vcmp.ge.f32.partialorder %v3645, 0.0
  %vm3902 = vcmp.ge.f32.partialorder %v3646, 0.0
  %vm3903 = vcmp.ge.f32.partialorder %v3647, 0.0
  %vm3904 = vcmp.ge.f32.partialorder %v3648, 0.0
  %vm3905 = vcmp.ge.f32.partialorder %v3649, 0.0
  %vm3906 = vcmp.ge.f32.partialorder %v3650, 0.0
  %vm3907 = vcmp.ge.f32.partialorder %v3651, 0.0
  %vm3908 = vcmp.ge.f32.partialorder %v3652, 0.0
  %vm3909 = vcmp.ge.f32.partialorder %v3653, 0.0
  %vm3910 = vcmp.ge.f32.partialorder %v3654, 0.0
  %vm3911 = vcmp.ge.f32.partialorder %v3655, 0.0
  %vm3912 = vcmp.ge.f32.partialorder %v3656, 0.0
  %vm3913 = vcmp.ge.f32.partialorder %v3657, 0.0
  %vm3914 = vcmp.ge.f32.partialorder %v3658, 0.0
  %vm3915 = vcmp.ge.f32.partialorder %v3659, 0.0
  %vm3916 = vcmp.ge.f32.partialorder %v3660, 0.0
  %vm3917 = vcmp.ge.f32.partialorder %v3661, 0.0
  %vm3918 = vcmp.ge.f32.partialorder %v3662, 0.0
  %vm3919 = vcmp.ge.f32.partialorder %v3663, 0.0
  %vm3920 = vcmp.ge.f32.partialorder %v3664, 0.0
  %vm3921 = vcmp.ge.f32.partialorder %v3665, 0.0
  %vm3922 = vcmp.ge.f32.partialorder %v3666, 0.0
  %vm3923 = vcmp.ge.f32.partialorder %v3667, 0.0
  %vm3924 = vcmp.ge.f32.partialorder %v3668, 0.0
  %vm3925 = vcmp.ge.f32.partialorder %v3669, 0.0
  %vm3926 = vcmp.ge.f32.partialorder %v3670, 0.0
  %vm3927 = vcmp.ge.f32.partialorder %v3671, 0.0
  %vm3928 = vcmp.ge.f32.partialorder %v3672, 0.0
  %vm3929 = vcmp.ge.f32.partialorder %v3673, 0.0
  %vm3930 = vcmp.ge.f32.partialorder %v3674, 0.0
  %vm3931 = vcmp.ge.f32.partialorder %v3675, 0.0
  %vm3932 = vcmp.ge.f32.partialorder %v3676, 0.0
  %vm3933 = vcmp.ge.f32.partialorder %v3677, 0.0
  %vm3934 = vcmp.ge.f32.partialorder %v3678, 0.0
  %vm3935 = vcmp.ge.f32.partialorder %v3679, 0.0
  %vm3936 = vcmp.ge.f32.partialorder %v3680, 0.0
  %vm3937 = vcmp.ge.f32.partialorder %v3681, 0.0
  %vm3938 = vcmp.ge.f32.partialorder %v3682, 0.0
  %vm3939 = vcmp.ge.f32.partialorder %v3683, 0.0
  %vm3940 = vcmp.ge.f32.partialorder %v3684, 0.0
  %vm3941 = vcmp.ge.f32.partialorder %v3685, 0.0
  %vm3942 = vcmp.ge.f32.partialorder %v3686, 0.0
  %vm3943 = vcmp.ge.f32.partialorder %v3687, 0.0
  %vm3944 = vcmp.ge.f32.partialorder %v3688, 0.0
  %vm3945 = vcmp.ge.f32.partialorder %v3689, 0.0
  %vm3946 = vcmp.ge.f32.partialorder %v3690, 0.0
  %vm3947 = vcmp.ge.f32.partialorder %v3691, 0.0
  %vm3948 = vcmp.ge.f32.partialorder %v3692, 0.0
  %vm3949 = vcmp.ge.f32.partialorder %v3693, 0.0
  %vm3950 = vcmp.ge.f32.partialorder %v3694, 0.0
  %vm3951 = vcmp.ge.f32.partialorder %v3695, 0.0
  %vm3952 = vcmp.ge.f32.partialorder %v3696, 0.0
  %vm3953 = vcmp.ge.f32.partialorder %v3697, 0.0
  %vm3954 = vcmp.ge.f32.partialorder %v3698, 0.0
  %vm3955 = vcmp.ge.f32.partialorder %v3699, 0.0
  %vm3956 = vcmp.ge.f32.partialorder %v3700, 0.0
  %vm3957 = vcmp.ge.f32.partialorder %v3701, 0.0
  %vm3958 = vcmp.ge.f32.partialorder %v3702, 0.0
  %vm3959 = vcmp.ge.f32.partialorder %v3703, 0.0
  %vm3960 = vcmp.ge.f32.partialorder %v3704, 0.0
  %vm3961 = vcmp.ge.f32.partialorder %v3705, 0.0
  %vm3962 = vcmp.ge.f32.partialorder %v3706, 0.0
  %vm3963 = vcmp.ge.f32.partialorder %v3707, 0.0
  %vm3964 = vcmp.ge.f32.partialorder %v3708, 0.0
  %vm3965 = vcmp.ge.f32.partialorder %v3709, 0.0
  %vm3966 = vcmp.ge.f32.partialorder %v3710, 0.0
  %vm3967 = vcmp.ge.f32.partialorder %v3711, 0.0
  %vm3968 = vcmp.ge.f32.partialorder %v3712, 0.0
  %vm3969 = vcmp.ge.f32.partialorder %v3713, 0.0
  %vm3970 = vcmp.ge.f32.partialorder %v3714, 0.0
  %vm3971 = vcmp.ge.f32.partialorder %v3715, 0.0
  %vm3972 = vcmp.ge.f32.partialorder %v3716, 0.0
  %vm3973 = vcmp.ge.f32.partialorder %v3717, 0.0
  %vm3974 = vcmp.ge.f32.partialorder %v3718, 0.0
  %vm3975 = vcmp.ge.f32.partialorder %v3719, 0.0
  %vm3976 = vcmp.ge.f32.partialorder %v3720, 0.0
  %vm3977 = vcmp.ge.f32.partialorder %v3721, 0.0
  %vm3978 = vcmp.ge.f32.partialorder %v3722, 0.0
  %vm3979 = vcmp.ge.f32.partialorder %v3723, 0.0
  %vm3980 = vcmp.ge.f32.partialorder %v3724, 0.0
  %vm3981 = vcmp.ge.f32.partialorder %v3725, 0.0
  %vm3982 = vcmp.ge.f32.partialorder %v3726, 0.0
  %vm3983 = vcmp.ge.f32.partialorder %v3727, 0.0
  %vm3984 = vcmp.ge.f32.partialorder %v3728, 0.0
  %vm3985 = vcmp.ge.f32.partialorder %v3729, 0.0
  %vm3986 = vcmp.ge.f32.partialorder %v3730, 0.0
  %vm3987 = vcmp.ge.f32.partialorder %v3731, 0.0
  %vm3988 = vcmp.ge.f32.partialorder %v3732, 0.0
  %vm3989 = vcmp.ge.f32.partialorder %v3733, 0.0
  %vm3990 = vcmp.ge.f32.partialorder %v3734, 0.0
  %vm3991 = vcmp.ge.f32.partialorder %v3735, 0.0
  %vm3992 = vcmp.ge.f32.partialorder %v3736, 0.0
  %vm3993 = vcmp.ge.f32.partialorder %v3737, 0.0
  %vm3994 = vcmp.ge.f32.partialorder %v3738, 0.0
  %vm3995 = vcmp.ge.f32.partialorder %v3739, 0.0
  %vm3996 = vcmp.ge.f32.partialorder %v3740, 0.0
  %vm3997 = vcmp.ge.f32.partialorder %v3741, 0.0
  %vm3998 = vcmp.ge.f32.partialorder %v3742, 0.0
  %vm3999 = vcmp.ge.f32.partialorder %v3743, 0.0
  %vm4000 = vcmp.ge.f32.partialorder %v3744, 0.0
  %vm4001 = vcmp.ge.f32.partialorder %v3745, 0.0
  %vm4002 = vcmp.ge.f32.partialorder %v3746, 0.0
  %vm4003 = vcmp.ge.f32.partialorder %v3747, 0.0
  %vm4004 = vcmp.ge.f32.partialorder %v3748, 0.0
  %vm4005 = vcmp.ge.f32.partialorder %v3749, 0.0
  %vm4006 = vcmp.ge.f32.partialorder %v3750, 0.0
  %vm4007 = vcmp.ge.f32.partialorder %v3751, 0.0
  %vm4008 = vcmp.ge.f32.partialorder %v3752, 0.0
  %vm4009 = vcmp.ge.f32.partialorder %v3753, 0.0
  %vm4010 = vcmp.ge.f32.partialorder %v3754, 0.0
  %vm4011 = vcmp.ge.f32.partialorder %v3755, 0.0
  %vm4012 = vcmp.ge.f32.partialorder %v3756, 0.0
  %vm4013 = vcmp.ge.f32.partialorder %v3757, 0.0
  %vm4014 = vcmp.ge.f32.partialorder %v3758, 0.0
  %vm4015 = vcmp.ge.f32.partialorder %v3759, 0.0
  %vm4016 = vcmp.ge.f32.partialorder %v3760, 0.0
  %vm4017 = vcmp.ge.f32.partialorder %v3761, 0.0
  %vm4018 = vcmp.ge.f32.partialorder %v3762, 0.0
  %vm4019 = vcmp.ge.f32.partialorder %v3763, 0.0
  %vm4020 = vcmp.ge.f32.partialorder %v3764, 0.0
  %vm4021 = vcmp.ge.f32.partialorder %v3765, 0.0
  %vm4022 = vcmp.ge.f32.partialorder %v3766, 0.0
  %vm4023 = vcmp.ge.f32.partialorder %v3767, 0.0
  %vm4024 = vcmp.ge.f32.partialorder %v3768, 0.0
  %vm4025 = vcmp.ge.f32.partialorder %v3769, 0.0
  %vm4026 = vcmp.ge.f32.partialorder %v3770, 0.0
  %vm4027 = vcmp.ge.f32.partialorder %v3771, 0.0
  %vm4028 = vcmp.ge.f32.partialorder %v3772, 0.0
  %vm4029 = vcmp.ge.f32.partialorder %v3773, 0.0
  %vm4030 = vcmp.ge.f32.partialorder %v3774, 0.0
  %vm4031 = vcmp.ge.f32.partialorder %v3775, 0.0
  %vm4032 = vcmp.ge.f32.partialorder %v3776, 0.0
  %vm4033 = vcmp.ge.f32.partialorder %v3777, 0.0
  %vm4034 = vcmp.ge.f32.partialorder %v3778, 0.0
  %vm4035 = vcmp.ge.f32.partialorder %v3779, 0.0
  %vm4036 = vcmp.ge.f32.partialorder %v3780, 0.0
  %vm4037 = vcmp.ge.f32.partialorder %v3781, 0.0
  %vm4038 = vcmp.ge.f32.partialorder %v3782, 0.0
  %vm4039 = vcmp.ge.f32.partialorder %v3783, 0.0
  %vm4040 = vcmp.ge.f32.partialorder %v3784, 0.0
  %vm4041 = vcmp.ge.f32.partialorder %v3785, 0.0
  %vm4042 = vcmp.ge.f32.partialorder %v3786, 0.0
  %vm4043 = vcmp.ge.f32.partialorder %v3787, 0.0
  %vm4044 = vcmp.ge.f32.partialorder %v3788, 0.0
  %vm4045 = vcmp.ge.f32.partialorder %v3789, 0.0
  %vm4046 = vcmp.ge.f32.partialorder %v3790, 0.0
  %vm4047 = vcmp.ge.f32.partialorder %v3791, 0.0
  %vm4048 = vcmp.ge.f32.partialorder %v3792, 0.0
  %vm4049 = vcmp.ge.f32.partialorder %v3793, 0.0
  %vm4050 = vcmp.ge.f32.partialorder %v3794, 0.0
  %vm4051 = vcmp.ge.f32.partialorder %v3795, 0.0
  %vm4052 = vcmp.ge.f32.partialorder %v3796, 0.0
  %vm4053 = vcmp.ge.f32.partialorder %v3797, 0.0
  %vm4054 = vcmp.ge.f32.partialorder %v3798, 0.0
  %vm4055 = vcmp.ge.f32.partialorder %v3799, 0.0
  %vm4056 = vcmp.ge.f32.partialorder %v3800, 0.0
  %vm4057 = vcmp.ge.f32.partialorder %v3801, 0.0
  %vm4058 = vcmp.ge.f32.partialorder %v3802, 0.0
  %vm4059 = vcmp.ge.f32.partialorder %v3803, 0.0
  %vm4060 = vcmp.ge.f32.partialorder %v3804, 0.0
  %vm4061 = vcmp.ge.f32.partialorder %v3805, 0.0
  %vm4062 = vcmp.ge.f32.partialorder %v3806, 0.0
  %vm4063 = vcmp.ge.f32.partialorder %v3807, 0.0
  %vm4064 = vcmp.ge.f32.partialorder %v3808, 0.0
  %vm4065 = vcmp.ge.f32.partialorder %v3809, 0.0
  %vm4066 = vcmp.ge.f32.partialorder %v3810, 0.0
  %vm4067 = vcmp.ge.f32.partialorder %v3811, 0.0
  %vm4068 = vcmp.ge.f32.partialorder %v3812, 0.0
  %vm4069 = vcmp.ge.f32.partialorder %v3813, 0.0
  %vm4070 = vcmp.ge.f32.partialorder %v3814, 0.0
  %vm4071 = vcmp.ge.f32.partialorder %v3815, 0.0
  %vm4072 = vcmp.ge.f32.partialorder %v3816, 0.0
  %vm4073 = vcmp.ge.f32.partialorder %v3817, 0.0
  %vm4074 = vcmp.ge.f32.partialorder %v3818, 0.0
  %vm4075 = vcmp.ge.f32.partialorder %v3819, 0.0
  %vm4076 = vcmp.ge.f32.partialorder %v3820, 0.0
  %vm4077 = vcmp.ge.f32.partialorder %v3821, 0.0
  %vm4078 = vcmp.ge.f32.partialorder %v3822, 0.0
  %vm4079 = vcmp.ge.f32.partialorder %v3823, 0.0
  %vm4080 = vcmp.ge.f32.partialorder %v3824, 0.0
  %vm4081 = vcmp.ge.f32.partialorder %v3825, 0.0
  %vm4082 = vcmp.ge.f32.partialorder %v3826, 0.0
  %vm4083 = vcmp.ge.f32.partialorder %v3827, 0.0
  %vm4084 = vcmp.ge.f32.partialorder %v3828, 0.0
  %vm4085 = vcmp.ge.f32.partialorder %v3829, 0.0
  %vm4086 = vcmp.ge.f32.partialorder %v3830, 0.0
  %vm4087 = vcmp.ge.f32.partialorder %v3831, 0.0
  %vm4088 = vcmp.ge.f32.partialorder %v3832, 0.0
  %vm4089 = vcmp.ge.f32.partialorder %v3833, 0.0
  %vm4090 = vcmp.ge.f32.partialorder %v3834, 0.0
  %vm4091 = vcmp.ge.f32.partialorder %v3835, 0.0
  %vm4092 = vcmp.ge.f32.partialorder %v3836, 0.0
  %vm4093 = vcmp.ge.f32.partialorder %v3837, 0.0
  %vm4094 = vcmp.ge.f32.partialorder %v3838, 0.0
  %vm4095 = vcmp.ge.f32.partialorder %v3839, 0.0
  %vm4096 = vcmp.ge.f32.partialorder %v3840, 0.0
  %vm4097 = vcmp.ge.f32.partialorder %v3841, 0.0
  %vm4098 = vcmp.ge.f32.partialorder %v3842, 0.0
  %vm4099 = vcmp.ge.f32.partialorder %v3843, 0.0
  %vm4100 = vcmp.ge.f32.partialorder %v3844, 0.0
  %vm4101 = vcmp.ge.f32.partialorder %v3845, 0.0
  %vm4102 = vcmp.ge.f32.partialorder %v3846, 0.0
  %vm4103 = vcmp.ge.f32.partialorder %v3847, 0.0
  %vm4104 = vcmp.ge.f32.partialorder %v3848, 0.0
  %vm4105 = vcmp.ge.f32.partialorder %v3849, 0.0
  %vm4106 = vcmp.ge.f32.partialorder %v3850, 0.0
  %v4107 = vmul.f32 %v3595, 0.01
  %v4108 = vmul.f32 %v3596, 0.01
  %v4109 = vmul.f32 %v3597, 0.01
  %v4110 = vmul.f32 %v3598, 0.01
  %v4111 = vmul.f32 %v3599, 0.01
  %v4112 = vmul.f32 %v3600, 0.01
  %v4113 = vmul.f32 %v3601, 0.01
  %v4114 = vmul.f32 %v3602, 0.01
  %v4115 = vmul.f32 %v3603, 0.01
  %v4116 = vmul.f32 %v3604, 0.01
  %v4117 = vmul.f32 %v3605, 0.01
  %v4118 = vmul.f32 %v3606, 0.01
  %v4119 = vmul.f32 %v3607, 0.01
  %v4120 = vmul.f32 %v3608, 0.01
  %v4121 = vmul.f32 %v3609, 0.01
  %v4122 = vmul.f32 %v3610, 0.01
  %v4123 = vmul.f32 %v3611, 0.01
  %v4124 = vmul.f32 %v3612, 0.01
  %v4125 = vmul.f32 %v3613, 0.01
  %v4126 = vmul.f32 %v3614, 0.01
  %v4127 = vmul.f32 %v3615, 0.01
  %v4128 = vmul.f32 %v3616, 0.01
  %v4129 = vmul.f32 %v3617, 0.01
  %v4130 = vmul.f32 %v3618, 0.01
  %v4131 = vmul.f32 %v3619, 0.01
  %v4132 = vmul.f32 %v3620, 0.01
  %v4133 = vmul.f32 %v3621, 0.01
  %v4134 = vmul.f32 %v3622, 0.01
  %v4135 = vmul.f32 %v3623, 0.01
  %v4136 = vmul.f32 %v3624, 0.01
  %v4137 = vmul.f32 %v3625, 0.01
  %v4138 = vmul.f32 %v3626, 0.01
  %v4139 = vmul.f32 %v3627, 0.01
  %v4140 = vmul.f32 %v3628, 0.01
  %v4141 = vmul.f32 %v3629, 0.01
  %v4142 = vmul.f32 %v3630, 0.01
  %v4143 = vmul.f32 %v3631, 0.01
  %v4144 = vmul.f32 %v3632, 0.01
  %v4145 = vmul.f32 %v3633, 0.01
  %v4146 = vmul.f32 %v3634, 0.01
  %v4147 = vmul.f32 %v3635, 0.01
  %v4148 = vmul.f32 %v3636, 0.01
  %v4149 = vmul.f32 %v3637, 0.01
  %v4150 = vmul.f32 %v3638, 0.01
  %v4151 = vmul.f32 %v3639, 0.01
  %v4152 = vmul.f32 %v3640, 0.01
  %v4153 = vmul.f32 %v3641, 0.01
  %v4154 = vmul.f32 %v3642, 0.01
  %v4155 = vmul.f32 %v3643, 0.01
  %v4156 = vmul.f32 %v3644, 0.01
  %v4157 = vmul.f32 %v3645, 0.01
  %v4158 = vmul.f32 %v3646, 0.01
  %v4159 = vmul.f32 %v3647, 0.01
  %v4160 = vmul.f32 %v3648, 0.01
  %v4161 = vmul.f32 %v3649, 0.01
  %v4162 = vmul.f32 %v3650, 0.01
  %v4163 = vmul.f32 %v3651, 0.01
  %v4164 = vmul.f32 %v3652, 0.01
  %v4165 = vmul.f32 %v3653, 0.01
  %v4166 = vmul.f32 %v3654, 0.01
  %v4167 = vmul.f32 %v3655, 0.01
  %v4168 = vmul.f32 %v3656, 0.01
  %v4169 = vmul.f32 %v3657, 0.01
  %v4170 = vmul.f32 %v3658, 0.01
  %v4171 = vmul.f32 %v3659, 0.01
  %v4172 = vmul.f32 %v3660, 0.01
  %v4173 = vmul.f32 %v3661, 0.01
  %v4174 = vmul.f32 %v3662, 0.01
  %v4175 = vmul.f32 %v3663, 0.01
  %v4176 = vmul.f32 %v3664, 0.01
  %v4177 = vmul.f32 %v3665, 0.01
  %v4178 = vmul.f32 %v3666, 0.01
  %v4179 = vmul.f32 %v3667, 0.01
  %v4180 = vmul.f32 %v3668, 0.01
  %v4181 = vmul.f32 %v3669, 0.01
  %v4182 = vmul.f32 %v3670, 0.01
  %v4183 = vmul.f32 %v3671, 0.01
  %v4184 = vmul.f32 %v3672, 0.01
  %v4185 = vmul.f32 %v3673, 0.01
  %v4186 = vmul.f32 %v3674, 0.01
  %v4187 = vmul.f32 %v3675, 0.01
  %v4188 = vmul.f32 %v3676, 0.01
  %v4189 = vmul.f32 %v3677, 0.01
  %v4190 = vmul.f32 %v3678, 0.01
  %v4191 = vmul.f32 %v3679, 0.01
  %v4192 = vmul.f32 %v3680, 0.01
  %v4193 = vmul.f32 %v3681, 0.01
  %v4194 = vmul.f32 %v3682, 0.01
  %v4195 = vmul.f32 %v3683, 0.01
  %v4196 = vmul.f32 %v3684, 0.01
  %v4197 = vmul.f32 %v3685, 0.01
  %v4198 = vmul.f32 %v3686, 0.01
  %v4199 = vmul.f32 %v3687, 0.01
  %v4200 = vmul.f32 %v3688, 0.01
  %v4201 = vmul.f32 %v3689, 0.01
  %v4202 = vmul.f32 %v3690, 0.01
  %v4203 = vmul.f32 %v3691, 0.01
  %v4204 = vmul.f32 %v3692, 0.01
  %v4205 = vmul.f32 %v3693, 0.01
  %v4206 = vmul.f32 %v3694, 0.01
  %v4207 = vmul.f32 %v3695, 0.01
  %v4208 = vmul.f32 %v3696, 0.01
  %v4209 = vmul.f32 %v3697, 0.01
  %v4210 = vmul.f32 %v3698, 0.01
  %v4211 = vmul.f32 %v3699, 0.01
  %v4212 = vmul.f32 %v3700, 0.01
  %v4213 = vmul.f32 %v3701, 0.01
  %v4214 = vmul.f32 %v3702, 0.01
  %v4215 = vmul.f32 %v3703, 0.01
  %v4216 = vmul.f32 %v3704, 0.01
  %v4217 = vmul.f32 %v3705, 0.01
  %v4218 = vmul.f32 %v3706, 0.01
  %v4219 = vmul.f32 %v3707, 0.01
  %v4220 = vmul.f32 %v3708, 0.01
  %v4221 = vmul.f32 %v3709, 0.01
  %v4222 = vmul.f32 %v3710, 0.01
  %v4223 = vmul.f32 %v3711, 0.01
  %v4224 = vmul.f32 %v3712, 0.01
  %v4225 = vmul.f32 %v3713, 0.01
  %v4226 = vmul.f32 %v3714, 0.01
  %v4227 = vmul.f32 %v3715, 0.01
  %v4228 = vmul.f32 %v3716, 0.01
  %v4229 = vmul.f32 %v3717, 0.01
  %v4230 = vmul.f32 %v3718, 0.01
  %v4231 = vmul.f32 %v3719, 0.01
  %v4232 = vmul.f32 %v3720, 0.01
  %v4233 = vmul.f32 %v3721, 0.01
  %v4234 = vmul.f32 %v3722, 0.01
  %v4235 = vmul.f32 %v3723, 0.01
  %v4236 = vmul.f32 %v3724, 0.01
  %v4237 = vmul.f32 %v3725, 0.01
  %v4238 = vmul.f32 %v3726, 0.01
  %v4239 = vmul.f32 %v3727, 0.01
  %v4240 = vmul.f32 %v3728, 0.01
  %v4241 = vmul.f32 %v3729, 0.01
  %v4242 = vmul.f32 %v3730, 0.01
  %v4243 = vmul.f32 %v3731, 0.01
  %v4244 = vmul.f32 %v3732, 0.01
  %v4245 = vmul.f32 %v3733, 0.01
  %v4246 = vmul.f32 %v3734, 0.01
  %v4247 = vmul.f32 %v3735, 0.01
  %v4248 = vmul.f32 %v3736, 0.01
  %v4249 = vmul.f32 %v3737, 0.01
  %v4250 = vmul.f32 %v3738, 0.01
  %v4251 = vmul.f32 %v3739, 0.01
  %v4252 = vmul.f32 %v3740, 0.01
  %v4253 = vmul.f32 %v3741, 0.01
  %v4254 = vmul.f32 %v3742, 0.01
  %v4255 = vmul.f32 %v3743, 0.01
  %v4256 = vmul.f32 %v3744, 0.01
  %v4257 = vmul.f32 %v3745, 0.01
  %v4258 = vmul.f32 %v3746, 0.01
  %v4259 = vmul.f32 %v3747, 0.01
  %v4260 = vmul.f32 %v3748, 0.01
  %v4261 = vmul.f32 %v3749, 0.01
  %v4262 = vmul.f32 %v3750, 0.01
  %v4263 = vmul.f32 %v3751, 0.01
  %v4264 = vmul.f32 %v3752, 0.01
  %v4265 = vmul.f32 %v3753, 0.01
  %v4266 = vmul.f32 %v3754, 0.01
  %v4267 = vmul.f32 %v3755, 0.01
  %v4268 = vmul.f32 %v3756, 0.01
  %v4269 = vmul.f32 %v3757, 0.01
  %v4270 = vmul.f32 %v3758, 0.01
  %v4271 = vmul.f32 %v3759, 0.01
  %v4272 = vmul.f32 %v3760, 0.01
  %v4273 = vmul.f32 %v3761, 0.01
  %v4274 = vmul.f32 %v3762, 0.01
  %v4275 = vmul.f32 %v3763, 0.01
  %v4276 = vmul.f32 %v3764, 0.01
  %v4277 = vmul.f32 %v3765, 0.01
  %v4278 = vmul.f32 %v3766, 0.01
  %v4279 = vmul.f32 %v3767, 0.01
  %v4280 = vmul.f32 %v3768, 0.01
  %v4281 = vmul.f32 %v3769, 0.01
  %v4282 = vmul.f32 %v3770, 0.01
  %v4283 = vmul.f32 %v3771, 0.01
  %v4284 = vmul.f32 %v3772, 0.01
  %v4285 = vmul.f32 %v3773, 0.01
  %v4286 = vmul.f32 %v3774, 0.01
  %v4287 = vmul.f32 %v3775, 0.01
  %v4288 = vmul.f32 %v3776, 0.01
  %v4289 = vmul.f32 %v3777, 0.01
  %v4290 = vmul.f32 %v3778, 0.01
  %v4291 = vmul.f32 %v3779, 0.01
  %v4292 = vmul.f32 %v3780, 0.01
  %v4293 = vmul.f32 %v3781, 0.01
  %v4294 = vmul.f32 %v3782, 0.01
  %v4295 = vmul.f32 %v3783, 0.01
  %v4296 = vmul.f32 %v3784, 0.01
  %v4297 = vmul.f32 %v3785, 0.01
  %v4298 = vmul.f32 %v3786, 0.01
  %v4299 = vmul.f32 %v3787, 0.01
  %v4300 = vmul.f32 %v3788, 0.01
  %v4301 = vmul.f32 %v3789, 0.01
  %v4302 = vmul.f32 %v3790, 0.01
  %v4303 = vmul.f32 %v3791, 0.01
  %v4304 = vmul.f32 %v3792, 0.01
  %v4305 = vmul.f32 %v3793, 0.01
  %v4306 = vmul.f32 %v3794, 0.01
  %v4307 = vmul.f32 %v3795, 0.01
  %v4308 = vmul.f32 %v3796, 0.01
  %v4309 = vmul.f32 %v3797, 0.01
  %v4310 = vmul.f32 %v3798, 0.01
  %v4311 = vmul.f32 %v3799, 0.01
  %v4312 = vmul.f32 %v3800, 0.01
  %v4313 = vmul.f32 %v3801, 0.01
  %v4314 = vmul.f32 %v3802, 0.01
  %v4315 = vmul.f32 %v3803, 0.01
  %v4316 = vmul.f32 %v3804, 0.01
  %v4317 = vmul.f32 %v3805, 0.01
  %v4318 = vmul.f32 %v3806, 0.01
  %v4319 = vmul.f32 %v3807, 0.01
  %v4320 = vmul.f32 %v3808, 0.01
  %v4321 = vmul.f32 %v3809, 0.01
  %v4322 = vmul.f32 %v3810, 0.01
  %v4323 = vmul.f32 %v3811, 0.01
  %v4324 = vmul.f32 %v3812, 0.01
  %v4325 = vmul.f32 %v3813, 0.01
  %v4326 = vmul.f32 %v3814, 0.01
  %v4327 = vmul.f32 %v3815, 0.01
  %v4328 = vmul.f32 %v3816, 0.01
  %v4329 = vmul.f32 %v3817, 0.01
  %v4330 = vmul.f32 %v3818, 0.01
  %v4331 = vmul.f32 %v3819, 0.01
  %v4332 = vmul.f32 %v3820, 0.01
  %v4333 = vmul.f32 %v3821, 0.01
  %v4334 = vmul.f32 %v3822, 0.01
  %v4335 = vmul.f32 %v3823, 0.01
  %v4336 = vmul.f32 %v3824, 0.01
  %v4337 = vmul.f32 %v3825, 0.01
  %v4338 = vmul.f32 %v3826, 0.01
  %v4339 = vmul.f32 %v3827, 0.01
  %v4340 = vmul.f32 %v3828, 0.01
  %v4341 = vmul.f32 %v3829, 0.01
  %v4342 = vmul.f32 %v3830, 0.01
  %v4343 = vmul.f32 %v3831, 0.01
  %v4344 = vmul.f32 %v3832, 0.01
  %v4345 = vmul.f32 %v3833, 0.01
  %v4346 = vmul.f32 %v3834, 0.01
  %v4347 = vmul.f32 %v3835, 0.01
  %v4348 = vmul.f32 %v3836, 0.01
  %v4349 = vmul.f32 %v3837, 0.01
  %v4350 = vmul.f32 %v3838, 0.01
  %v4351 = vmul.f32 %v3839, 0.01
  %v4352 = vmul.f32 %v3840, 0.01
  %v4353 = vmul.f32 %v3841, 0.01
  %v4354 = vmul.f32 %v3842, 0.01
  %v4355 = vmul.f32 %v3843, 0.01
  %v4356 = vmul.f32 %v3844, 0.01
  %v4357 = vmul.f32 %v3845, 0.01
  %v4358 = vmul.f32 %v3846, 0.01
  %v4359 = vmul.f32 %v3847, 0.01
  %v4360 = vmul.f32 %v3848, 0.01
  %v4361 = vmul.f32 %v3849, 0.01
  %v4362 = vmul.f32 %v3850, 0.01
  %v4363 = vsel %vm3851, %v3595, %v4107
  %v4364 = vsel %vm3852, %v3596, %v4108
  %v4365 = vsel %vm3853, %v3597, %v4109
  %v4366 = vsel %vm3854, %v3598, %v4110
  %v4367 = vsel %vm3855, %v3599, %v4111
  %v4368 = vsel %vm3856, %v3600, %v4112
  %v4369 = vsel %vm3857, %v3601, %v4113
  %v4370 = vsel %vm3858, %v3602, %v4114
  %v4371 = vsel %vm3859, %v3603, %v4115
  %v4372 = vsel %vm3860, %v3604, %v4116
  %v4373 = vsel %vm3861, %v3605, %v4117
  %v4374 = vsel %vm3862, %v3606, %v4118
  %v4375 = vsel %vm3863, %v3607, %v4119
  %v4376 = vsel %vm3864, %v3608, %v4120
  %v4377 = vsel %vm3865, %v3609, %v4121
  %v4378 = vsel %vm3866, %v3610, %v4122
  %v4379 = vsel %vm3867, %v3611, %v4123
  %v4380 = vsel %vm3868, %v3612, %v4124
  %v4381 = vsel %vm3869, %v3613, %v4125
  %v4382 = vsel %vm3870, %v3614, %v4126
  %v4383 = vsel %vm3871, %v3615, %v4127
  %v4384 = vsel %vm3872, %v3616, %v4128
  %v4385 = vsel %vm3873, %v3617, %v4129
  %v4386 = vsel %vm3874, %v3618, %v4130
  %v4387 = vsel %vm3875, %v3619, %v4131
  %v4388 = vsel %vm3876, %v3620, %v4132
  %v4389 = vsel %vm3877, %v3621, %v4133
  %v4390 = vsel %vm3878, %v3622, %v4134
  %v4391 = vsel %vm3879, %v3623, %v4135
  %v4392 = vsel %vm3880, %v3624, %v4136
  %v4393 = vsel %vm3881, %v3625, %v4137
  %v4394 = vsel %vm3882, %v3626, %v4138
  %v4395 = vsel %vm3883, %v3627, %v4139
  %v4396 = vsel %vm3884, %v3628, %v4140
  %v4397 = vsel %vm3885, %v3629, %v4141
  %v4398 = vsel %vm3886, %v3630, %v4142
  %v4399 = vsel %vm3887, %v3631, %v4143
  %v4400 = vsel %vm3888, %v3632, %v4144
  %v4401 = vsel %vm3889, %v3633, %v4145
  %v4402 = vsel %vm3890, %v3634, %v4146
  %v4403 = vsel %vm3891, %v3635, %v4147
  %v4404 = vsel %vm3892, %v3636, %v4148
  %v4405 = vsel %vm3893, %v3637, %v4149
  %v4406 = vsel %vm3894, %v3638, %v4150
  %v4407 = vsel %vm3895, %v3639, %v4151
  %v4408 = vsel %vm3896, %v3640, %v4152
  %v4409 = vsel %vm3897, %v3641, %v4153
  %v4410 = vsel %vm3898, %v3642, %v4154
  %v4411 = vsel %vm3899, %v3643, %v4155
  %v4412 = vsel %vm3900, %v3644, %v4156
  %v4413 = vsel %vm3901, %v3645, %v4157
  %v4414 = vsel %vm3902, %v3646, %v4158
  %v4415 = vsel %vm3903, %v3647, %v4159
  %v4416 = vsel %vm3904, %v3648, %v4160
  %v4417 = vsel %vm3905, %v3649, %v4161
  %v4418 = vsel %vm3906, %v3650, %v4162
  %v4419 = vsel %vm3907, %v3651, %v4163
  %v4420 = vsel %vm3908, %v3652, %v4164
  %v4421 = vsel %vm3909, %v3653, %v4165
  %v4422 = vsel %vm3910, %v3654, %v4166
  %v4423 = vsel %vm3911, %v3655, %v4167
  %v4424 = vsel %vm3912, %v3656, %v4168
  %v4425 = vsel %vm3913, %v3657, %v4169
  %v4426 = vsel %vm3914, %v3658, %v4170
  %v4427 = vsel %vm3915, %v3659, %v4171
  %v4428 = vsel %vm3916, %v3660, %v4172
  %v4429 = vsel %vm3917, %v3661, %v4173
  %v4430 = vsel %vm3918, %v3662, %v4174
  %v4431 = vsel %vm3919, %v3663, %v4175
  %v4432 = vsel %vm3920, %v3664, %v4176
  %v4433 = vsel %vm3921, %v3665, %v4177
  %v4434 = vsel %vm3922, %v3666, %v4178
  %v4435 = vsel %vm3923, %v3667, %v4179
  %v4436 = vsel %vm3924, %v3668, %v4180
  %v4437 = vsel %vm3925, %v3669, %v4181
  %v4438 = vsel %vm3926, %v3670, %v4182
  %v4439 = vsel %vm3927, %v3671, %v4183
  %v4440 = vsel %vm3928, %v3672, %v4184
  %v4441 = vsel %vm3929, %v3673, %v4185
  %v4442 = vsel %vm3930, %v3674, %v4186
  %v4443 = vsel %vm3931, %v3675, %v4187
  %v4444 = vsel %vm3932, %v3676, %v4188
  %v4445 = vsel %vm3933, %v3677, %v4189
  %v4446 = vsel %vm3934, %v3678, %v4190
  %v4447 = vsel %vm3935, %v3679, %v4191
  %v4448 = vsel %vm3936, %v3680, %v4192
  %v4449 = vsel %vm3937, %v3681, %v4193
  %v4450 = vsel %vm3938, %v3682, %v4194
  %v4451 = vsel %vm3939, %v3683, %v4195
  %v4452 = vsel %vm3940, %v3684, %v4196
  %v4453 = vsel %vm3941, %v3685, %v4197
  %v4454 = vsel %vm3942, %v3686, %v4198
  %v4455 = vsel %vm3943, %v3687, %v4199
  %v4456 = vsel %vm3944, %v3688, %v4200
  %v4457 = vsel %vm3945, %v3689, %v4201
  %v4458 = vsel %vm3946, %v3690, %v4202
  %v4459 = vsel %vm3947, %v3691, %v4203
  %v4460 = vsel %vm3948, %v3692, %v4204
  %v4461 = vsel %vm3949, %v3693, %v4205
  %v4462 = vsel %vm3950, %v3694, %v4206
  %v4463 = vsel %vm3951, %v3695, %v4207
  %v4464 = vsel %vm3952, %v3696, %v4208
  %v4465 = vsel %vm3953, %v3697, %v4209
  %v4466 = vsel %vm3954, %v3698, %v4210
  %v4467 = vsel %vm3955, %v3699, %v4211
  %v4468 = vsel %vm3956, %v3700, %v4212
  %v4469 = vsel %vm3957, %v3701, %v4213
  %v4470 = vsel %vm3958, %v3702, %v4214
  %v4471 = vsel %vm3959, %v3703, %v4215
  %v4472 = vsel %vm3960, %v3704, %v4216
  %v4473 = vsel %vm3961, %v3705, %v4217
  %v4474 = vsel %vm3962, %v3706, %v4218
  %v4475 = vsel %vm3963, %v3707, %v4219
  %v4476 = vsel %vm3964, %v3708, %v4220
  %v4477 = vsel %vm3965, %v3709, %v4221
  %v4478 = vsel %vm3966, %v3710, %v4222
  %v4479 = vsel %vm3967, %v3711, %v4223
  %v4480 = vsel %vm3968, %v3712, %v4224
  %v4481 = vsel %vm3969, %v3713, %v4225
  %v4482 = vsel %vm3970, %v3714, %v4226
  %v4483 = vsel %vm3971, %v3715, %v4227
  %v4484 = vsel %vm3972, %v3716, %v4228
  %v4485 = vsel %vm3973, %v3717, %v4229
  %v4486 = vsel %vm3974, %v3718, %v4230
  %v4487 = vsel %vm3975, %v3719, %v4231
  %v4488 = vsel %vm3976, %v3720, %v4232
  %v4489 = vsel %vm3977, %v3721, %v4233
  %v4490 = vsel %vm3978, %v3722, %v4234
  %v4491 = vsel %vm3979, %v3723, %v4235
  %v4492 = vsel %vm3980, %v3724, %v4236
  %v4493 = vsel %vm3981, %v3725, %v4237
  %v4494 = vsel %vm3982, %v3726, %v4238
  %v4495 = vsel %vm3983, %v3727, %v4239
  %v4496 = vsel %vm3984, %v3728, %v4240
  %v4497 = vsel %vm3985, %v3729, %v4241
  %v4498 = vsel %vm3986, %v3730, %v4242
  %v4499 = vsel %vm3987, %v3731, %v4243
  %v4500 = vsel %vm3988, %v3732, %v4244
  %v4501 = vsel %vm3989, %v3733, %v4245
  %v4502 = vsel %vm3990, %v3734, %v4246
  %v4503 = vsel %vm3991, %v3735, %v4247
  %v4504 = vsel %vm3992, %v3736, %v4248
  %v4505 = vsel %vm3993, %v3737, %v4249
  %v4506 = vsel %vm3994, %v3738, %v4250
  %v4507 = vsel %vm3995, %v3739, %v4251
  %v4508 = vsel %vm3996, %v3740, %v4252
  %v4509 = vsel %vm3997, %v3741, %v4253
  %v4510 = vsel %vm3998, %v3742, %v4254
  %v4511 = vsel %vm3999, %v3743, %v4255
  %v4512 = vsel %vm4000, %v3744, %v4256
  %v4513 = vsel %vm4001, %v3745, %v4257
  %v4514 = vsel %vm4002, %v3746, %v4258
  %v4515 = vsel %vm4003, %v3747, %v4259
  %v4516 = vsel %vm4004, %v3748, %v4260
  %v4517 = vsel %vm4005, %v3749, %v4261
  %v4518 = vsel %vm4006, %v3750, %v4262
  %v4519 = vsel %vm4007, %v3751, %v4263
  %v4520 = vsel %vm4008, %v3752, %v4264
  %v4521 = vsel %vm4009, %v3753, %v4265
  %v4522 = vsel %vm4010, %v3754, %v4266
  %v4523 = vsel %vm4011, %v3755, %v4267
  %v4524 = vsel %vm4012, %v3756, %v4268
  %v4525 = vsel %vm4013, %v3757, %v4269
  %v4526 = vsel %vm4014, %v3758, %v4270
  %v4527 = vsel %vm4015, %v3759, %v4271
  %v4528 = vsel %vm4016, %v3760, %v4272
  %v4529 = vsel %vm4017, %v3761, %v4273
  %v4530 = vsel %vm4018, %v3762, %v4274
  %v4531 = vsel %vm4019, %v3763, %v4275
  %v4532 = vsel %vm4020, %v3764, %v4276
  %v4533 = vsel %vm4021, %v3765, %v4277
  %v4534 = vsel %vm4022, %v3766, %v4278
  %v4535 = vsel %vm4023, %v3767, %v4279
  %v4536 = vsel %vm4024, %v3768, %v4280
  %v4537 = vsel %vm4025, %v3769, %v4281
  %v4538 = vsel %vm4026, %v3770, %v4282
  %v4539 = vsel %vm4027, %v3771, %v4283
  %v4540 = vsel %vm4028, %v3772, %v4284
  %v4541 = vsel %vm4029, %v3773, %v4285
  %v4542 = vsel %vm4030, %v3774, %v4286
  %v4543 = vsel %vm4031, %v3775, %v4287
  %v4544 = vsel %vm4032, %v3776, %v4288
  %v4545 = vsel %vm4033, %v3777, %v4289
  %v4546 = vsel %vm4034, %v3778, %v4290
  %v4547 = vsel %vm4035, %v3779, %v4291
  %v4548 = vsel %vm4036, %v3780, %v4292
  %v4549 = vsel %vm4037, %v3781, %v4293
  %v4550 = vsel %vm4038, %v3782, %v4294
  %v4551 = vsel %vm4039, %v3783, %v4295
  %v4552 = vsel %vm4040, %v3784, %v4296
  %v4553 = vsel %vm4041, %v3785, %v4297
  %v4554 = vsel %vm4042, %v3786, %v4298
  %v4555 = vsel %vm4043, %v3787, %v4299
  %v4556 = vsel %vm4044, %v3788, %v4300
  %v4557 = vsel %vm4045, %v3789, %v4301
  %v4558 = vsel %vm4046, %v3790, %v4302
  %v4559 = vsel %vm4047, %v3791, %v4303
  %v4560 = vsel %vm4048, %v3792, %v4304
  %v4561 = vsel %vm4049, %v3793, %v4305
  %v4562 = vsel %vm4050, %v3794, %v4306
  %v4563 = vsel %vm4051, %v3795, %v4307
  %v4564 = vsel %vm4052, %v3796, %v4308
  %v4565 = vsel %vm4053, %v3797, %v4309
  %v4566 = vsel %vm4054, %v3798, %v4310
  %v4567 = vsel %vm4055, %v3799, %v4311
  %v4568 = vsel %vm4056, %v3800, %v4312
  %v4569 = vsel %vm4057, %v3801, %v4313
  %v4570 = vsel %vm4058, %v3802, %v4314
  %v4571 = vsel %vm4059, %v3803, %v4315
  %v4572 = vsel %vm4060, %v3804, %v4316
  %v4573 = vsel %vm4061, %v3805, %v4317
  %v4574 = vsel %vm4062, %v3806, %v4318
  %v4575 = vsel %vm4063, %v3807, %v4319
  %v4576 = vsel %vm4064, %v3808, %v4320
  %v4577 = vsel %vm4065, %v3809, %v4321
  %v4578 = vsel %vm4066, %v3810, %v4322
  %v4579 = vsel %vm4067, %v3811, %v4323
  %v4580 = vsel %vm4068, %v3812, %v4324
  %v4581 = vsel %vm4069, %v3813, %v4325
  %v4582 = vsel %vm4070, %v3814, %v4326
  %v4583 = vsel %vm4071, %v3815, %v4327
  %v4584 = vsel %vm4072, %v3816, %v4328
  %v4585 = vsel %vm4073, %v3817, %v4329
  %v4586 = vsel %vm4074, %v3818, %v4330
  %v4587 = vsel %vm4075, %v3819, %v4331
  %v4588 = vsel %vm4076, %v3820, %v4332
  %v4589 = vsel %vm4077, %v3821, %v4333
  %v4590 = vsel %vm4078, %v3822, %v4334
  %v4591 = vsel %vm4079, %v3823, %v4335
  %v4592 = vsel %vm4080, %v3824, %v4336
  %v4593 = vsel %vm4081, %v3825, %v4337
  %v4594 = vsel %vm4082, %v3826, %v4338
  %v4595 = vsel %vm4083, %v3827, %v4339
  %v4596 = vsel %vm4084, %v3828, %v4340
  %v4597 = vsel %vm4085, %v3829, %v4341
  %v4598 = vsel %vm4086, %v3830, %v4342
  %v4599 = vsel %vm4087, %v3831, %v4343
  %v4600 = vsel %vm4088, %v3832, %v4344
  %v4601 = vsel %vm4089, %v3833, %v4345
  %v4602 = vsel %vm4090, %v3834, %v4346
  %v4603 = vsel %vm4091, %v3835, %v4347
  %v4604 = vsel %vm4092, %v3836, %v4348
  %v4605 = vsel %vm4093, %v3837, %v4349
  %v4606 = vsel %vm4094, %v3838, %v4350
  %v4607 = vsel %vm4095, %v3839, %v4351
  %v4608 = vsel %vm4096, %v3840, %v4352
  %v4609 = vsel %vm4097, %v3841, %v4353
  %v4610 = vsel %vm4098, %v3842, %v4354
  %v4611 = vsel %vm4099, %v3843, %v4355
  %v4612 = vsel %vm4100, %v3844, %v4356
  %v4613 = vsel %vm4101, %v3845, %v4357
  %v4614 = vsel %vm4102, %v3846, %v4358
  %v4615 = vsel %vm4103, %v3847, %v4359
  %v4616 = vsel %vm4104, %v3848, %v4360
  %v4617 = vsel %vm4105, %v3849, %v4361
  %v4618 = vsel %vm4106, %v3850, %v4362
  %4619 = vst.msk [vmem:[%s5] sm:$0xff] %vm1761, %v4363
  %4620 = vst.msk [vmem:[%s5 + $0x8] sm:$0xff] %vm1761, %v4364
  %4621 = vst.msk [vmem:[%s5 + $0x10] sm:$0xff] %vm1761, %v4365
  %4622 = vst.msk [vmem:[%s5 + $0x18] sm:$0xff] %vm1761, %v4366
  %4623 = vst.msk [vmem:[%s5 + $0x20] sm:$0xff] %vm1761, %v4367
  %4624 = vst.msk [vmem:[%s5 + $0x28] sm:$0xff] %vm1761, %v4368
  %4625 = vst.msk [vmem:[%s5 + $0x30] sm:$0xff] %vm1761, %v4369
  %4626 = vst.msk [vmem:[%s5 + $0x38] sm:$0xff] %vm1761, %v4370
  %4627 = vst.msk [vmem:[%s5 + $0x40] sm:$0xff] %vm1761, %v4371
  %4628 = vst.msk [vmem:[%s5 + $0x48] sm:$0xff] %vm1761, %v4372
  %4629 = vst.msk [vmem:[%s5 + $0x50] sm:$0xff] %vm1761, %v4373
  %4630 = vst.msk [vmem:[%s5 + $0x58] sm:$0xff] %vm1761, %v4374
  %4631 = vst.msk [vmem:[%s5 + $0x60] sm:$0xff] %vm1761, %v4375
  %4632 = vst.msk [vmem:[%s5 + $0x68] sm:$0xff] %vm1761, %v4376
  %4633 = vst.msk [vmem:[%s5 + $0x70] sm:$0xff] %vm1761, %v4377
  %4634 = vst.msk [vmem:[%s5 + $0x78] sm:$0xff] %vm1761, %v4378
  %4635 = vst.msk [vmem:[%s5 + $0x80] sm:$0xff] %vm1761, %v4379
  %4636 = vst.msk [vmem:[%s5 + $0x88] sm:$0xff] %vm1761, %v4380
  %4637 = vst.msk [vmem:[%s5 + $0x90] sm:$0xff] %vm1761, %v4381
  %4638 = vst.msk [vmem:[%s5 + $0x98] sm:$0xff] %vm1761, %v4382
  %4639 = vst.msk [vmem:[%s5 + $0xa0] sm:$0xff] %vm1761, %v4383
  %4640 = vst.msk [vmem:[%s5 + $0xa8] sm:$0xff] %vm1761, %v4384
  %4641 = vst.msk [vmem:[%s5 + $0xb0] sm:$0xff] %vm1761, %v4385
  %4642 = vst.msk [vmem:[%s5 + $0xb8] sm:$0xff] %vm1761, %v4386
  %4643 = vst.msk [vmem:[%s5 + $0xc0] sm:$0xff] %vm1761, %v4387
  %4644 = vst.msk [vmem:[%s5 + $0xc8] sm:$0xff] %vm1761, %v4388
  %4645 = vst.msk [vmem:[%s5 + $0xd0] sm:$0xff] %vm1761, %v4389
  %4646 = vst.msk [vmem:[%s5 + $0xd8] sm:$0xff] %vm1761, %v4390
  %4647 = vst.msk [vmem:[%s5 + $0xe0] sm:$0xff] %vm1761, %v4391
  %4648 = vst.msk [vmem:[%s5 + $0xe8] sm:$0xff] %vm1761, %v4392
  %4649 = vst.msk [vmem:[%s5 + $0xf0] sm:$0xff] %vm1761, %v4393
  %4650 = vst.msk [vmem:[%s5 + $0xf8] sm:$0xff] %vm1761, %v4394
  %4651 = vst.msk [vmem:[%s5 + $0x100] sm:$0xff] %vm1761, %v4395
  %4652 = vst.msk [vmem:[%s5 + $0x108] sm:$0xff] %vm1761, %v4396
  %4653 = vst.msk [vmem:[%s5 + $0x110] sm:$0xff] %vm1761, %v4397
  %4654 = vst.msk [vmem:[%s5 + $0x118] sm:$0xff] %vm1761, %v4398
  %4655 = vst.msk [vmem:[%s5 + $0x120] sm:$0xff] %vm1761, %v4399
  %4656 = vst.msk [vmem:[%s5 + $0x128] sm:$0xff] %vm1761, %v4400
  %4657 = vst.msk [vmem:[%s5 + $0x130] sm:$0xff] %vm1761, %v4401
  %4658 = vst.msk [vmem:[%s5 + $0x138] sm:$0xff] %vm1761, %v4402
  %4659 = vst.msk [vmem:[%s5 + $0x140] sm:$0xff] %vm1761, %v4403
  %4660 = vst.msk [vmem:[%s5 + $0x148] sm:$0xff] %vm1761, %v4404
  %4661 = vst.msk [vmem:[%s5 + $0x150] sm:$0xff] %vm1761, %v4405
  %4662 = vst.msk [vmem:[%s5 + $0x158] sm:$0xff] %vm1761, %v4406
  %4663 = vst.msk [vmem:[%s5 + $0x160] sm:$0xff] %vm1761, %v4407
  %4664 = vst.msk [vmem:[%s5 + $0x168] sm:$0xff] %vm1761, %v4408
  %4665 = vst.msk [vmem:[%s5 + $0x170] sm:$0xff] %vm1761, %v4409
  %4666 = vst.msk [vmem:[%s5 + $0x178] sm:$0xff] %vm1761, %v4410
  %4667 = vst.msk [vmem:[%s5 + $0x180] sm:$0xff] %vm1761, %v4411
  %4668 = vst.msk [vmem:[%s5 + $0x188] sm:$0xff] %vm1761, %v4412
  %4669 = vst.msk [vmem:[%s5 + $0x190] sm:$0xff] %vm1761, %v4413
  %4670 = vst.msk [vmem:[%s5 + $0x198] sm:$0xff] %vm1761, %v4414
  %4671 = vst.msk [vmem:[%s5 + $0x1a0] sm:$0xff] %vm1761, %v4415
  %4672 = vst.msk [vmem:[%s5 + $0x1a8] sm:$0xff] %vm1761, %v4416
  %4673 = vst.msk [vmem:[%s5 + $0x1b0] sm:$0xff] %vm1761, %v4417
  %4674 = vst.msk [vmem:[%s5 + $0x1b8] sm:$0xff] %vm1761, %v4418
  %4675 = vst.msk [vmem:[%s5 + $0x1c0] sm:$0xff] %vm1761, %v4419
  %4676 = vst.msk [vmem:[%s5 + $0x1c8] sm:$0xff] %vm1761, %v4420
  %4677 = vst.msk [vmem:[%s5 + $0x1d0] sm:$0xff] %vm1761, %v4421
  %4678 = vst.msk [vmem:[%s5 + $0x1d8] sm:$0xff] %vm1761, %v4422
  %4679 = vst.msk [vmem:[%s5 + $0x1e0] sm:$0xff] %vm1761, %v4423
  %4680 = vst.msk [vmem:[%s5 + $0x1e8] sm:$0xff] %vm1761, %v4424
  %4681 = vst.msk [vmem:[%s5 + $0x1f0] sm:$0xff] %vm1761, %v4425
  %4682 = vst.msk [vmem:[%s5 + $0x1f8] sm:$0xff] %vm1761, %v4426
  %4683 = vst.msk [vmem:[%s5 + $0x200] sm:$0xff] %vm1761, %v4427
  %4684 = vst.msk [vmem:[%s5 + $0x208] sm:$0xff] %vm1761, %v4428
  %4685 = vst.msk [vmem:[%s5 + $0x210] sm:$0xff] %vm1761, %v4429
  %4686 = vst.msk [vmem:[%s5 + $0x218] sm:$0xff] %vm1761, %v4430
  %4687 = vst.msk [vmem:[%s5 + $0x220] sm:$0xff] %vm1761, %v4431
  %4688 = vst.msk [vmem:[%s5 + $0x228] sm:$0xff] %vm1761, %v4432
  %4689 = vst.msk [vmem:[%s5 + $0x230] sm:$0xff] %vm1761, %v4433
  %4690 = vst.msk [vmem:[%s5 + $0x238] sm:$0xff] %vm1761, %v4434
  %4691 = vst.msk [vmem:[%s5 + $0x240] sm:$0xff] %vm1761, %v4435
  %4692 = vst.msk [vmem:[%s5 + $0x248] sm:$0xff] %vm1761, %v4436
  %4693 = vst.msk [vmem:[%s5 + $0x250] sm:$0xff] %vm1761, %v4437
  %4694 = vst.msk [vmem:[%s5 + $0x258] sm:$0xff] %vm1761, %v4438
  %4695 = vst.msk [vmem:[%s5 + $0x260] sm:$0xff] %vm1761, %v4439
  %4696 = vst.msk [vmem:[%s5 + $0x268] sm:$0xff] %vm1761, %v4440
  %4697 = vst.msk [vmem:[%s5 + $0x270] sm:$0xff] %vm1761, %v4441
  %4698 = vst.msk [vmem:[%s5 + $0x278] sm:$0xff] %vm1761, %v4442
  %4699 = vst.msk [vmem:[%s5 + $0x280] sm:$0xff] %vm1761, %v4443
  %4700 = vst.msk [vmem:[%s5 + $0x288] sm:$0xff] %vm1761, %v4444
  %4701 = vst.msk [vmem:[%s5 + $0x290] sm:$0xff] %vm1761, %v4445
  %4702 = vst.msk [vmem:[%s5 + $0x298] sm:$0xff] %vm1761, %v4446
  %4703 = vst.msk [vmem:[%s5 + $0x2a0] sm:$0xff] %vm1761, %v4447
  %4704 = vst.msk [vmem:[%s5 + $0x2a8] sm:$0xff] %vm1761, %v4448
  %4705 = vst.msk [vmem:[%s5 + $0x2b0] sm:$0xff] %vm1761, %v4449
  %4706 = vst.msk [vmem:[%s5 + $0x2b8] sm:$0xff] %vm1761, %v4450
  %4707 = vst.msk [vmem:[%s5 + $0x2c0] sm:$0xff] %vm1761, %v4451
  %4708 = vst.msk [vmem:[%s5 + $0x2c8] sm:$0xff] %vm1761, %v4452
  %4709 = vst.msk [vmem:[%s5 + $0x2d0] sm:$0xff] %vm1761, %v4453
  %4710 = vst.msk [vmem:[%s5 + $0x2d8] sm:$0xff] %vm1761, %v4454
  %4711 = vst.msk [vmem:[%s5 + $0x2e0] sm:$0xff] %vm1761, %v4455
  %4712 = vst.msk [vmem:[%s5 + $0x2e8] sm:$0xff] %vm1761, %v4456
  %4713 = vst.msk [vmem:[%s5 + $0x2f0] sm:$0xff] %vm1761, %v4457
  %4714 = vst.msk [vmem:[%s5 + $0x2f8] sm:$0xff] %vm1761, %v4458
  %4715 = vst.msk [vmem:[%s5 + $0x300] sm:$0xff] %vm1761, %v4459
  %4716 = vst.msk [vmem:[%s5 + $0x308] sm:$0xff] %vm1761, %v4460
  %4717 = vst.msk [vmem:[%s5 + $0x310] sm:$0xff] %vm1761, %v4461
  %4718 = vst.msk [vmem:[%s5 + $0x318] sm:$0xff] %vm1761, %v4462
  %4719 = vst.msk [vmem:[%s5 + $0x320] sm:$0xff] %vm1761, %v4463
  %4720 = vst.msk [vmem:[%s5 + $0x328] sm:$0xff] %vm1761, %v4464
  %4721 = vst.msk [vmem:[%s5 + $0x330] sm:$0xff] %vm1761, %v4465
  %4722 = vst.msk [vmem:[%s5 + $0x338] sm:$0xff] %vm1761, %v4466
  %4723 = vst.msk [vmem:[%s5 + $0x340] sm:$0xff] %vm1761, %v4467
  %4724 = vst.msk [vmem:[%s5 + $0x348] sm:$0xff] %vm1761, %v4468
  %4725 = vst.msk [vmem:[%s5 + $0x350] sm:$0xff] %vm1761, %v4469
  %4726 = vst.msk [vmem:[%s5 + $0x358] sm:$0xff] %vm1761, %v4470
  %4727 = vst.msk [vmem:[%s5 + $0x360] sm:$0xff] %vm1761, %v4471
  %4728 = vst.msk [vmem:[%s5 + $0x368] sm:$0xff] %vm1761, %v4472
  %4729 = vst.msk [vmem:[%s5 + $0x370] sm:$0xff] %vm1761, %v4473
  %4730 = vst.msk [vmem:[%s5 + $0x378] sm:$0xff] %vm1761, %v4474
  %4731 = vst.msk [vmem:[%s5 + $0x380] sm:$0xff] %vm1761, %v4475
  %4732 = vst.msk [vmem:[%s5 + $0x388] sm:$0xff] %vm1761, %v4476
  %4733 = vst.msk [vmem:[%s5 + $0x390] sm:$0xff] %vm1761, %v4477
  %4734 = vst.msk [vmem:[%s5 + $0x398] sm:$0xff] %vm1761, %v4478
  %4735 = vst.msk [vmem:[%s5 + $0x3a0] sm:$0xff] %vm1761, %v4479
  %4736 = vst.msk [vmem:[%s5 + $0x3a8] sm:$0xff] %vm1761, %v4480
  %4737 = vst.msk [vmem:[%s5 + $0x3b0] sm:$0xff] %vm1761, %v4481
  %4738 = vst.msk [vmem:[%s5 + $0x3b8] sm:$0xff] %vm1761, %v4482
  %4739 = vst.msk [vmem:[%s5 + $0x3c0] sm:$0xff] %vm1761, %v4483
  %4740 = vst.msk [vmem:[%s5 + $0x3c8] sm:$0xff] %vm1761, %v4484
  %4741 = vst.msk [vmem:[%s5 + $0x3d0] sm:$0xff] %vm1761, %v4485
  %4742 = vst.msk [vmem:[%s5 + $0x3d8] sm:$0xff] %vm1761, %v4486
  %4743 = vst.msk [vmem:[%s5 + $0x3e0] sm:$0xff] %vm1761, %v4487
  %4744 = vst.msk [vmem:[%s5 + $0x3e8] sm:$0xff] %vm1761, %v4488
  %4745 = vst.msk [vmem:[%s5 + $0x3f0] sm:$0xff] %vm1761, %v4489
  %4746 = vst.msk [vmem:[%s5 + $0x3f8] sm:$0xff] %vm1761, %v4490
  %4747 = vst.msk [vmem:[%s5 + $0x400] sm:$0xff] %vm1761, %v4491
  %4748 = vst.msk [vmem:[%s5 + $0x408] sm:$0xff] %vm1761, %v4492
  %4749 = vst.msk [vmem:[%s5 + $0x410] sm:$0xff] %vm1761, %v4493
  %4750 = vst.msk [vmem:[%s5 + $0x418] sm:$0xff] %vm1761, %v4494
  %4751 = vst.msk [vmem:[%s5 + $0x420] sm:$0xff] %vm1761, %v4495
  %4752 = vst.msk [vmem:[%s5 + $0x428] sm:$0xff] %vm1761, %v4496
  %4753 = vst.msk [vmem:[%s5 + $0x430] sm:$0xff] %vm1761, %v4497
  %4754 = vst.msk [vmem:[%s5 + $0x438] sm:$0xff] %vm1761, %v4498
  %4755 = vst.msk [vmem:[%s5 + $0x440] sm:$0xff] %vm1761, %v4499
  %4756 = vst.msk [vmem:[%s5 + $0x448] sm:$0xff] %vm1761, %v4500
  %4757 = vst.msk [vmem:[%s5 + $0x450] sm:$0xff] %vm1761, %v4501
  %4758 = vst.msk [vmem:[%s5 + $0x458] sm:$0xff] %vm1761, %v4502
  %4759 = vst.msk [vmem:[%s5 + $0x460] sm:$0xff] %vm1761, %v4503
  %4760 = vst.msk [vmem:[%s5 + $0x468] sm:$0xff] %vm1761, %v4504
  %4761 = vst.msk [vmem:[%s5 + $0x470] sm:$0xff] %vm1761, %v4505
  %4762 = vst.msk [vmem:[%s5 + $0x478] sm:$0xff] %vm1761, %v4506
  %4763 = vst.msk [vmem:[%s5 + $0x480] sm:$0xff] %vm1761, %v4507
  %4764 = vst.msk [vmem:[%s5 + $0x488] sm:$0xff] %vm1761, %v4508
  %4765 = vst.msk [vmem:[%s5 + $0x490] sm:$0xff] %vm1761, %v4509
  %4766 = vst.msk [vmem:[%s5 + $0x498] sm:$0xff] %vm1761, %v4510
  %4767 = vst.msk [vmem:[%s5 + $0x4a0] sm:$0xff] %vm1761, %v4511
  %4768 = vst.msk [vmem:[%s5 + $0x4a8] sm:$0xff] %vm1761, %v4512
  %4769 = vst.msk [vmem:[%s5 + $0x4b0] sm:$0xff] %vm1761, %v4513
  %4770 = vst.msk [vmem:[%s5 + $0x4b8] sm:$0xff] %vm1761, %v4514
  %4771 = vst.msk [vmem:[%s5 + $0x4c0] sm:$0xff] %vm1761, %v4515
  %4772 = vst.msk [vmem:[%s5 + $0x4c8] sm:$0xff] %vm1761, %v4516
  %4773 = vst.msk [vmem:[%s5 + $0x4d0] sm:$0xff] %vm1761, %v4517
  %4774 = vst.msk [vmem:[%s5 + $0x4d8] sm:$0xff] %vm1761, %v4518
  %4775 = vst.msk [vmem:[%s5 + $0x4e0] sm:$0xff] %vm1761, %v4519
  %4776 = vst.msk [vmem:[%s5 + $0x4e8] sm:$0xff] %vm1761, %v4520
  %4777 = vst.msk [vmem:[%s5 + $0x4f0] sm:$0xff] %vm1761, %v4521
  %4778 = vst.msk [vmem:[%s5 + $0x4f8] sm:$0xff] %vm1761, %v4522
  %4779 = vst.msk [vmem:[%s5 + $0x500] sm:$0xff] %vm1761, %v4523
  %4780 = vst.msk [vmem:[%s5 + $0x508] sm:$0xff] %vm1761, %v4524
  %4781 = vst.msk [vmem:[%s5 + $0x510] sm:$0xff] %vm1761, %v4525
  %4782 = vst.msk [vmem:[%s5 + $0x518] sm:$0xff] %vm1761, %v4526
  %4783 = vst.msk [vmem:[%s5 + $0x520] sm:$0xff] %vm1761, %v4527
  %4784 = vst.msk [vmem:[%s5 + $0x528] sm:$0xff] %vm1761, %v4528
  %4785 = vst.msk [vmem:[%s5 + $0x530] sm:$0xff] %vm1761, %v4529
  %4786 = vst.msk [vmem:[%s5 + $0x538] sm:$0xff] %vm1761, %v4530
  %4787 = vst.msk [vmem:[%s5 + $0x540] sm:$0xff] %vm1761, %v4531
  %4788 = vst.msk [vmem:[%s5 + $0x548] sm:$0xff] %vm1761, %v4532
  %4789 = vst.msk [vmem:[%s5 + $0x550] sm:$0xff] %vm1761, %v4533
  %4790 = vst.msk [vmem:[%s5 + $0x558] sm:$0xff] %vm1761, %v4534
  %4791 = vst.msk [vmem:[%s5 + $0x560] sm:$0xff] %vm1761, %v4535
  %4792 = vst.msk [vmem:[%s5 + $0x568] sm:$0xff] %vm1761, %v4536
  %4793 = vst.msk [vmem:[%s5 + $0x570] sm:$0xff] %vm1761, %v4537
  %4794 = vst.msk [vmem:[%s5 + $0x578] sm:$0xff] %vm1761, %v4538
  %4795 = vst.msk [vmem:[%s5 + $0x580] sm:$0xff] %vm1761, %v4539
  %4796 = vst.msk [vmem:[%s5 + $0x588] sm:$0xff] %vm1761, %v4540
  %4797 = vst.msk [vmem:[%s5 + $0x590] sm:$0xff] %vm1761, %v4541
  %4798 = vst.msk [vmem:[%s5 + $0x598] sm:$0xff] %vm1761, %v4542
  %4799 = vst.msk [vmem:[%s5 + $0x5a0] sm:$0xff] %vm1761, %v4543
  %4800 = vst.msk [vmem:[%s5 + $0x5a8] sm:$0xff] %vm1761, %v4544
  %4801 = vst.msk [vmem:[%s5 + $0x5b0] sm:$0xff] %vm1761, %v4545
  %4802 = vst.msk [vmem:[%s5 + $0x5b8] sm:$0xff] %vm1761, %v4546
  %4803 = vst.msk [vmem:[%s5 + $0x5c0] sm:$0xff] %vm1761, %v4547
  %4804 = vst.msk [vmem:[%s5 + $0x5c8] sm:$0xff] %vm1761, %v4548
  %4805 = vst.msk [vmem:[%s5 + $0x5d0] sm:$0xff] %vm1761, %v4549
  %4806 = vst.msk [vmem:[%s5 + $0x5d8] sm:$0xff] %vm1761, %v4550
  %4807 = vst.msk [vmem:[%s5 + $0x5e0] sm:$0xff] %vm1761, %v4551
  %4808 = vst.msk [vmem:[%s5 + $0x5e8] sm:$0xff] %vm1761, %v4552
  %4809 = vst.msk [vmem:[%s5 + $0x5f0] sm:$0xff] %vm1761, %v4553
  %4810 = vst.msk [vmem:[%s5 + $0x5f8] sm:$0xff] %vm1761, %v4554
  %4811 = vst.msk [vmem:[%s5 + $0x600] sm:$0xff] %vm1761, %v4555
  %4812 = vst.msk [vmem:[%s5 + $0x608] sm:$0xff] %vm1761, %v4556
  %4813 = vst.msk [vmem:[%s5 + $0x610] sm:$0xff] %vm1761, %v4557
  %4814 = vst.msk [vmem:[%s5 + $0x618] sm:$0xff] %vm1761, %v4558
  %4815 = vst.msk [vmem:[%s5 + $0x620] sm:$0xff] %vm1761, %v4559
  %4816 = vst.msk [vmem:[%s5 + $0x628] sm:$0xff] %vm1761, %v4560
  %4817 = vst.msk [vmem:[%s5 + $0x630] sm:$0xff] %vm1761, %v4561
  %4818 = vst.msk [vmem:[%s5 + $0x638] sm:$0xff] %vm1761, %v4562
  %4819 = vst.msk [vmem:[%s5 + $0x640] sm:$0xff] %vm1761, %v4563
  %4820 = vst.msk [vmem:[%s5 + $0x648] sm:$0xff] %vm1761, %v4564
  %4821 = vst.msk [vmem:[%s5 + $0x650] sm:$0xff] %vm1761, %v4565
  %4822 = vst.msk [vmem:[%s5 + $0x658] sm:$0xff] %vm1761, %v4566
  %4823 = vst.msk [vmem:[%s5 + $0x660] sm:$0xff] %vm1761, %v4567
  %4824 = vst.msk [vmem:[%s5 + $0x668] sm:$0xff] %vm1761, %v4568
  %4825 = vst.msk [vmem:[%s5 + $0x670] sm:$0xff] %vm1761, %v4569
  %4826 = vst.msk [vmem:[%s5 + $0x678] sm:$0xff] %vm1761, %v4570
  %4827 = vst.msk [vmem:[%s5 + $0x680] sm:$0xff] %vm1761, %v4571
  %4828 = vst.msk [vmem:[%s5 + $0x688] sm:$0xff] %vm1761, %v4572
  %4829 = vst.msk [vmem:[%s5 + $0x690] sm:$0xff] %vm1761, %v4573
  %4830 = vst.msk [vmem:[%s5 + $0x698] sm:$0xff] %vm1761, %v4574
  %4831 = vst.msk [vmem:[%s5 + $0x6a0] sm:$0xff] %vm1761, %v4575
  %4832 = vst.msk [vmem:[%s5 + $0x6a8] sm:$0xff] %vm1761, %v4576
  %4833 = vst.msk [vmem:[%s5 + $0x6b0] sm:$0xff] %vm1761, %v4577
  %4834 = vst.msk [vmem:[%s5 + $0x6b8] sm:$0xff] %vm1761, %v4578
  %4835 = vst.msk [vmem:[%s5 + $0x6c0] sm:$0xff] %vm1761, %v4579
  %4836 = vst.msk [vmem:[%s5 + $0x6c8] sm:$0xff] %vm1761, %v4580
  %4837 = vst.msk [vmem:[%s5 + $0x6d0] sm:$0xff] %vm1761, %v4581
  %4838 = vst.msk [vmem:[%s5 + $0x6d8] sm:$0xff] %vm1761, %v4582
  %4839 = vst.msk [vmem:[%s5 + $0x6e0] sm:$0xff] %vm1761, %v4583
  %4840 = vst.msk [vmem:[%s5 + $0x6e8] sm:$0xff] %vm1761, %v4584
  %4841 = vst.msk [vmem:[%s5 + $0x6f0] sm:$0xff] %vm1761, %v4585
  %4842 = vst.msk [vmem:[%s5 + $0x6f8] sm:$0xff] %vm1761, %v4586
  %4843 = vst.msk [vmem:[%s5 + $0x700] sm:$0xff] %vm1761, %v4587
  %4844 = vst.msk [vmem:[%s5 + $0x708] sm:$0xff] %vm1761, %v4588
  %4845 = vst.msk [vmem:[%s5 + $0x710] sm:$0xff] %vm1761, %v4589
  %4846 = vst.msk [vmem:[%s5 + $0x718] sm:$0xff] %vm1761, %v4590
  %4847 = vst.msk [vmem:[%s5 + $0x720] sm:$0xff] %vm1761, %v4591
  %4848 = vst.msk [vmem:[%s5 + $0x728] sm:$0xff] %vm1761, %v4592
  %4849 = vst.msk [vmem:[%s5 + $0x730] sm:$0xff] %vm1761, %v4593
  %4850 = vst.msk [vmem:[%s5 + $0x738] sm:$0xff] %vm1761, %v4594
  %4851 = vst.msk [vmem:[%s5 + $0x740] sm:$0xff] %vm1761, %v4595
  %4852 = vst.msk [vmem:[%s5 + $0x748] sm:$0xff] %vm1761, %v4596
  %4853 = vst.msk [vmem:[%s5 + $0x750] sm:$0xff] %vm1761, %v4597
  %4854 = vst.msk [vmem:[%s5 + $0x758] sm:$0xff] %vm1761, %v4598
  %4855 = vst.msk [vmem:[%s5 + $0x760] sm:$0xff] %vm1761, %v4599
  %4856 = vst.msk [vmem:[%s5 + $0x768] sm:$0xff] %vm1761, %v4600
  %4857 = vst.msk [vmem:[%s5 + $0x770] sm:$0xff] %vm1761, %v4601
  %4858 = vst.msk [vmem:[%s5 + $0x778] sm:$0xff] %vm1761, %v4602
  %4859 = vst.msk [vmem:[%s5 + $0x780] sm:$0xff] %vm1761, %v4603
  %4860 = vst.msk [vmem:[%s5 + $0x788] sm:$0xff] %vm1761, %v4604
  %4861 = vst.msk [vmem:[%s5 + $0x790] sm:$0xff] %vm1761, %v4605
  %4862 = vst.msk [vmem:[%s5 + $0x798] sm:$0xff] %vm1761, %v4606
  %4863 = vst.msk [vmem:[%s5 + $0x7a0] sm:$0xff] %vm1761, %v4607
  %4864 = vst.msk [vmem:[%s5 + $0x7a8] sm:$0xff] %vm1761, %v4608
  %4865 = vst.msk [vmem:[%s5 + $0x7b0] sm:$0xff] %vm1761, %v4609
  %4866 = vst.msk [vmem:[%s5 + $0x7b8] sm:$0xff] %vm1761, %v4610
  %4867 = vst.msk [vmem:[%s5 + $0x7c0] sm:$0xff] %vm1761, %v4611
  %4868 = vst.msk [vmem:[%s5 + $0x7c8] sm:$0xff] %vm1761, %v4612
  %4869 = vst.msk [vmem:[%s5 + $0x7d0] sm:$0xff] %vm1761, %v4613
  %4870 = vst.msk [vmem:[%s5 + $0x7d8] sm:$0xff] %vm1761, %v4614
  %4871 = vst.msk [vmem:[%s5 + $0x7e0] sm:$0xff] %vm1761, %v4615
  %4872 = vst.msk [vmem:[%s5 + $0x7e8] sm:$0xff] %vm1761, %v4616
  %4873 = vst.msk [vmem:[%s5 + $0x7f0] sm:$0xff] %vm1761, %v4617
  %4874 = vst.msk [vmem:[%s5 + $0x7f8] sm:$0xff] %vm1761, %v4618
  // Predicated region
  $region22: #{discriminator_forward.5} parent=0 // pred_check
    _
  $region23: #{discriminator_forward.5} parent=0 // pred_check_branch
    %4876 = sbr.rel (0) target = $region25
  $region24: #{discriminator_forward.5} parent=0 // pred_region
    _
  $region25: #{discriminator_forward.5} parent=0 // pred_fallthru
    _
  // Predicated region
  $region26: #{discriminator_forward.5} parent=0 // pred_check
    _
  $region27: #{discriminator_forward.5} parent=0 // pred_check_branch
    %4878 = sbr.rel (0) target = $region29
  $region28: #{discriminator_forward.5} parent=0 // pred_region
    _
  $region29: #{discriminator_forward.5} parent=0 // pred_fallthru
    _

// kernel: discriminator_forward.6
$region0: #{discriminator_forward.6}
  #allocation0 [shape = 'u32[]', space=smem, size = 0x4, offset = 0x4, fixed_abs, tag = 'smem constant byte address 0x4 - core index']
  #allocation1 [shape = 'u32[72,128]{1,0:T(1,128)}', space=vmem, size = 0x9000, scoped, tag = 'internal scratch']
  %s0 = inlined_call_operand.vmem [shape: bf16[512,128], index: 0, kind: input, shape index: {}]
  %s1 = inlined_call_operand.vmem [shape: bf16[128,16], index: 1, kind: input, shape index: {}]
  %s2 = inlined_call_operand.vmem [shape: f32[1,16], index: 2, kind: input, shape index: {}]
  %s3 = inlined_call_operand.vmem [shape: f32[1,16], index: 3, kind: input, shape index: {}]
  %s4 = inlined_call_operand.vmem [shape: f32[1,16], index: 4, kind: input, shape index: {}]
  %s5 = inlined_call_operand.vmem [shape: f32[512,16], index: 5, kind: output, shape index: {}]
  %s6 = sld [smem:[#allocation0]]
  $region30: #{discriminator_forward.6} parent=0
    _
  %s8 = ssub.s32 1, %s6
  %s9 = scalar_select 0, %s8, %s6
  // Predicated region
  $region2: #{discriminator_forward.6} parent=0 // pred_check
    _
  $region3: #{discriminator_forward.6} parent=0 // pred_check_branch
    %11 = sbr.rel (0) target = $region5
  $region4: #{discriminator_forward.6} parent=0 // pred_region
    _
  $region5: #{discriminator_forward.6} parent=0 // pred_fallthru
    _
  // Predicated region
  $region6: #{discriminator_forward.6} parent=0 // pred_check
    _
  $region7: #{discriminator_forward.6} parent=0 // pred_check_branch
    %13 = sbr.rel (0) target = $region9
  $region8: #{discriminator_forward.6} parent=0 // pred_region
    _
  $region9: #{discriminator_forward.6} parent=0 // pred_fallthru
    _
  // Predicated region
  $region10: #{discriminator_forward.6} parent=0 // pred_check
    _
  $region11: #{discriminator_forward.6} parent=0 // pred_check_branch
    %15 = sbr.rel (0) target = $region13
  $region12: #{discriminator_forward.6} parent=0 // pred_region
    _
  $region13: #{discriminator_forward.6} parent=0 // pred_fallthru
    _
  // Predicated region
  $region14: #{discriminator_forward.6} parent=0 // pred_check
    _
  $region15: #{discriminator_forward.6} parent=0 // pred_check_branch
    %17 = sbr.rel (0) target = $region17
  $region16: #{discriminator_forward.6} parent=0 // pred_region
    _
  $region17: #{discriminator_forward.6} parent=0 // pred_fallthru
    _
  // Predicated region
  $region18: #{discriminator_forward.6} parent=0 // pred_check
    _
  $region19: #{discriminator_forward.6} parent=0 // pred_check_branch
    %19 = sbr.rel (0) target = $region21
  $region20: #{discriminator_forward.6} parent=0 // pred_region
    _
  $region21: #{discriminator_forward.6} parent=0 // pred_fallthru
    _
  %v20 = vld [vmem:[%s0] sm:$0xf]
  %v21 = vld [vmem:[%s0 + $0x4] sm:$0xf]
  %v22 = vld [vmem:[%s0 + $0x8] sm:$0xf]
  %v23 = vld [vmem:[%s0 + $0xc] sm:$0xf]
  %v24 = vld [vmem:[%s0 + $0x10] sm:$0xf]
  %v25 = vld [vmem:[%s0 + $0x14] sm:$0xf]
  %v26 = vld [vmem:[%s0 + $0x18] sm:$0xf]
  %v27 = vld [vmem:[%s0 + $0x1c] sm:$0xf]
  %v28 = vld [vmem:[%s0 + $0x20] sm:$0xf]
  %v29 = vld [vmem:[%s0 + $0x24] sm:$0xf]
  %v30 = vld [vmem:[%s0 + $0x28] sm:$0xf]
  %v31 = vld [vmem:[%s0 + $0x2c] sm:$0xf]
  %v32 = vld [vmem:[%s0 + $0x30] sm:$0xf]
  %v33 = vld [vmem:[%s0 + $0x34] sm:$0xf]
  %v34 = vld [vmem:[%s0 + $0x38] sm:$0xf]
  %v35 = vld [vmem:[%s0 + $0x3c] sm:$0xf]
  %v36 = vld [vmem:[%s0 + $0x40] sm:$0xf]
  %v37 = vld [vmem:[%s0 + $0x44] sm:$0xf]
  %v38 = vld [vmem:[%s0 + $0x48] sm:$0xf]
  %v39 = vld [vmem:[%s0 + $0x4c] sm:$0xf]
  %v40 = vld [vmem:[%s0 + $0x50] sm:$0xf]
  %v41 = vld [vmem:[%s0 + $0x54] sm:$0xf]
  %v42 = vld [vmem:[%s0 + $0x58] sm:$0xf]
  %v43 = vld [vmem:[%s0 + $0x5c] sm:$0xf]
  %v44 = vld [vmem:[%s0 + $0x60] sm:$0xf]
  %v45 = vld [vmem:[%s0 + $0x64] sm:$0xf]
  %v46 = vld [vmem:[%s0 + $0x68] sm:$0xf]
  %v47 = vld [vmem:[%s0 + $0x6c] sm:$0xf]
  %v48 = vld [vmem:[%s0 + $0x70] sm:$0xf]
  %v49 = vld [vmem:[%s0 + $0x74] sm:$0xf]
  %v50 = vld [vmem:[%s0 + $0x78] sm:$0xf]
  %v51 = vld [vmem:[%s0 + $0x7c] sm:$0xf]
  %v52 = vld [vmem:[%s0 + $0x80] sm:$0xf]
  %v53 = vld [vmem:[%s0 + $0x84] sm:$0xf]
  %v54 = vld [vmem:[%s0 + $0x88] sm:$0xf]
  %v55 = vld [vmem:[%s0 + $0x8c] sm:$0xf]
  %v56 = vld [vmem:[%s0 + $0x90] sm:$0xf]
  %v57 = vld [vmem:[%s0 + $0x94] sm:$0xf]
  %v58 = vld [vmem:[%s0 + $0x98] sm:$0xf]
  %v59 = vld [vmem:[%s0 + $0x9c] sm:$0xf]
  %v60 = vld [vmem:[%s0 + $0xa0] sm:$0xf]
  %v61 = vld [vmem:[%s0 + $0xa4] sm:$0xf]
  %v62 = vld [vmem:[%s0 + $0xa8] sm:$0xf]
  %v63 = vld [vmem:[%s0 + $0xac] sm:$0xf]
  %v64 = vld [vmem:[%s0 + $0xb0] sm:$0xf]
  %v65 = vld [vmem:[%s0 + $0xb4] sm:$0xf]
  %v66 = vld [vmem:[%s0 + $0xb8] sm:$0xf]
  %v67 = vld [vmem:[%s0 + $0xbc] sm:$0xf]
  %v68 = vld [vmem:[%s0 + $0xc0] sm:$0xf]
  %v69 = vld [vmem:[%s0 + $0xc4] sm:$0xf]
  %v70 = vld [vmem:[%s0 + $0xc8] sm:$0xf]
  %v71 = vld [vmem:[%s0 + $0xcc] sm:$0xf]
  %v72 = vld [vmem:[%s0 + $0xd0] sm:$0xf]
  %v73 = vld [vmem:[%s0 + $0xd4] sm:$0xf]
  %v74 = vld [vmem:[%s0 + $0xd8] sm:$0xf]
  %v75 = vld [vmem:[%s0 + $0xdc] sm:$0xf]
  %v76 = vld [vmem:[%s0 + $0xe0] sm:$0xf]
  %v77 = vld [vmem:[%s0 + $0xe4] sm:$0xf]
  %v78 = vld [vmem:[%s0 + $0xe8] sm:$0xf]
  %v79 = vld [vmem:[%s0 + $0xec] sm:$0xf]
  %v80 = vld [vmem:[%s0 + $0xf0] sm:$0xf]
  %v81 = vld [vmem:[%s0 + $0xf4] sm:$0xf]
  %v82 = vld [vmem:[%s0 + $0xf8] sm:$0xf]
  %v83 = vld [vmem:[%s0 + $0xfc] sm:$0xf]
  %v84 = vld [vmem:[%s1] sm:$0xf]
  %v85 = vld [vmem:[%s1 + $0x4] sm:$0xf]
  %v86 = vld [vmem:[%s1 + $0x8] sm:$0xf]
  %v87 = vld [vmem:[%s1 + $0xc] sm:$0xf]
  %v88 = vld [vmem:[%s1 + $0x10] sm:$0xf]
  %v89 = vld [vmem:[%s1 + $0x14] sm:$0xf]
  %v90 = vld [vmem:[%s1 + $0x18] sm:$0xf]
  %v91 = vld [vmem:[%s1 + $0x1c] sm:$0xf]
  %v92 = vld [vmem:[%s1 + $0x20] sm:$0xf]
  %v93 = vld [vmem:[%s1 + $0x24] sm:$0xf]
  %v94 = vld [vmem:[%s1 + $0x28] sm:$0xf]
  %v95 = vld [vmem:[%s1 + $0x2c] sm:$0xf]
  %v96 = vld [vmem:[%s1 + $0x30] sm:$0xf]
  %v97 = vld [vmem:[%s1 + $0x34] sm:$0xf]
  %v98 = vld [vmem:[%s1 + $0x38] sm:$0xf]
  %v99 = vld [vmem:[%s1 + $0x3c] sm:$0xf]
  %v100 = vld [vmem:[%s2] sm:$0x1]
  %v102 = vperm.slane %v100, 0
  %v168 = vunpack.c.l.b16 %v20
  %v169 = vunpack.c.l.b16 %v21
  %v170 = vunpack.c.l.b16 %v22
  %v171 = vunpack.c.l.b16 %v23
  %v172 = vunpack.c.l.b16 %v24
  %v173 = vunpack.c.l.b16 %v25
  %v174 = vunpack.c.l.b16 %v26
  %v175 = vunpack.c.l.b16 %v27
  %v176 = vunpack.c.l.b16 %v28
  %v177 = vunpack.c.l.b16 %v29
  %v178 = vunpack.c.l.b16 %v30
  %v179 = vunpack.c.l.b16 %v31
  %v180 = vunpack.c.l.b16 %v32
  %v181 = vunpack.c.l.b16 %v33
  %v182 = vunpack.c.l.b16 %v34
  %v183 = vunpack.c.l.b16 %v35
  %v184 = vunpack.c.l.b16 %v36
  %v185 = vunpack.c.l.b16 %v37
  %v186 = vunpack.c.l.b16 %v38
  %v187 = vunpack.c.l.b16 %v39
  %v188 = vunpack.c.l.b16 %v40
  %v189 = vunpack.c.l.b16 %v41
  %v190 = vunpack.c.l.b16 %v42
  %v191 = vunpack.c.l.b16 %v43
  %v192 = vunpack.c.l.b16 %v44
  %v193 = vunpack.c.l.b16 %v45
  %v194 = vunpack.c.l.b16 %v46
  %v195 = vunpack.c.l.b16 %v47
  %v196 = vunpack.c.l.b16 %v48
  %v197 = vunpack.c.l.b16 %v49
  %v198 = vunpack.c.l.b16 %v50
  %v199 = vunpack.c.l.b16 %v51
  %v200 = vunpack.c.l.b16 %v52
  %v201 = vunpack.c.l.b16 %v53
  %v202 = vunpack.c.l.b16 %v54
  %v203 = vunpack.c.l.b16 %v55
  %v204 = vunpack.c.l.b16 %v56
  %v205 = vunpack.c.l.b16 %v57
  %v206 = vunpack.c.l.b16 %v58
  %v207 = vunpack.c.l.b16 %v59
  %v208 = vunpack.c.l.b16 %v60
  %v209 = vunpack.c.l.b16 %v61
  %v210 = vunpack.c.l.b16 %v62
  %v211 = vunpack.c.l.b16 %v63
  %v212 = vunpack.c.l.b16 %v64
  %v213 = vunpack.c.l.b16 %v65
  %v214 = vunpack.c.l.b16 %v66
  %v215 = vunpack.c.l.b16 %v67
  %v216 = vunpack.c.l.b16 %v68
  %v217 = vunpack.c.l.b16 %v69
  %v218 = vunpack.c.l.b16 %v70
  %v219 = vunpack.c.l.b16 %v71
  %v220 = vunpack.c.l.b16 %v72
  %v221 = vunpack.c.l.b16 %v73
  %v222 = vunpack.c.l.b16 %v74
  %v223 = vunpack.c.l.b16 %v75
  %v224 = vunpack.c.l.b16 %v76
  %v225 = vunpack.c.l.b16 %v77
  %v226 = vunpack.c.l.b16 %v78
  %v227 = vunpack.c.l.b16 %v79
  %v228 = vunpack.c.l.b16 %v80
  %v229 = vunpack.c.l.b16 %v81
  %v230 = vunpack.c.l.b16 %v82
  %v231 = vunpack.c.l.b16 %v83
  %v232 = vpack.c.b16 %v169, %v168
  %v233 = vpack.c.b16 %v171, %v170
  %v234 = vpack.c.b16 %v173, %v172
  %v235 = vpack.c.b16 %v175, %v174
  %v236 = vpack.c.b16 %v177, %v176
  %v237 = vpack.c.b16 %v179, %v178
  %v238 = vpack.c.b16 %v181, %v180
  %v239 = vpack.c.b16 %v183, %v182
  %v240 = vpack.c.b16 %v185, %v184
  %v241 = vpack.c.b16 %v187, %v186
  %v242 = vpack.c.b16 %v189, %v188
  %v243 = vpack.c.b16 %v191, %v190
  %v244 = vpack.c.b16 %v193, %v192
  %v245 = vpack.c.b16 %v195, %v194
  %v246 = vpack.c.b16 %v197, %v196
  %v247 = vpack.c.b16 %v199, %v198
  %v248 = vpack.c.b16 %v201, %v200
  %v249 = vpack.c.b16 %v203, %v202
  %v250 = vpack.c.b16 %v205, %v204
  %v251 = vpack.c.b16 %v207, %v206
  %v252 = vpack.c.b16 %v209, %v208
  %v253 = vpack.c.b16 %v211, %v210
  %v254 = vpack.c.b16 %v213, %v212
  %v255 = vpack.c.b16 %v215, %v214
  %v256 = vpack.c.b16 %v217, %v216
  %v257 = vpack.c.b16 %v219, %v218
  %v258 = vpack.c.b16 %v221, %v220
  %v259 = vpack.c.b16 %v223, %v222
  %v260 = vpack.c.b16 %v225, %v224
  %v261 = vpack.c.b16 %v227, %v226
  %v262 = vpack.c.b16 %v229, %v228
  %v263 = vpack.c.b16 %v231, %v230
  %v312 = vunpack.c.l.b16 %v84
  %v313 = vunpack.c.l.b16 %v85
  %v314 = vunpack.c.l.b16 %v86
  %v315 = vunpack.c.l.b16 %v87
  %v316 = vunpack.c.l.b16 %v88
  %v317 = vunpack.c.l.b16 %v89
  %v318 = vunpack.c.l.b16 %v90
  %v319 = vunpack.c.l.b16 %v91
  %v320 = vunpack.c.l.b16 %v92
  %v321 = vunpack.c.l.b16 %v93
  %v322 = vunpack.c.l.b16 %v94
  %v323 = vunpack.c.l.b16 %v95
  %v324 = vunpack.c.l.b16 %v96
  %v325 = vunpack.c.l.b16 %v97
  %v326 = vunpack.c.l.b16 %v98
  %v327 = vunpack.c.l.b16 %v99
  %v328 = vpack.c.b16 %v313, %v312
  %v329 = vpack.c.b16 %v315, %v314
  %v330 = vpack.c.b16 %v317, %v316
  %v331 = vpack.c.b16 %v319, %v318
  %v332 = vpack.c.b16 %v321, %v320
  %v333 = vpack.c.b16 %v323, %v322
  %v334 = vpack.c.b16 %v325, %v324
  %v335 = vpack.c.b16 %v327, %v326
  %344 = vmatpush.bf16.msra.mxu0 %v335
  %345 = vmatpush.bf16.msra.mxu0 %v334
  %346 = vmatpush.bf16.msra.mxu0 %v333
  %347 = vmatpush.bf16.msra.mxu0 %v332
  %348 = vmatpush.bf16.msra.mxu0 %v331
  %349 = vmatpush.bf16.msra.mxu0 %v330
  %350 = vmatpush.bf16.msra.mxu0 %v329
  %351 = vmatpush.bf16.msra.mxu0 %v328
  %352 = vmatmul.bf16.gmra.mxu0 %v232
  %v353 = vpop.f32.mrf.mxu0
  %v354 = vadd.f32 %v102, %v353
  %v355 = vpop.f32.mrf.mxu0
  %v356 = vadd.f32 %v102, %v355
  %357 = vmatmul.bf16.gmra.mxu0 %v233
  %v358 = vpop.f32.mrf.mxu0
  %v359 = vadd.f32 %v102, %v358
  %v360 = vpop.f32.mrf.mxu0
  %v361 = vadd.f32 %v102, %v360
  %362 = vmatmul.bf16.gmra.mxu0 %v234
  %v363 = vpop.f32.mrf.mxu0
  %v364 = vadd.f32 %v102, %v363
  %v365 = vpop.f32.mrf.mxu0
  %v366 = vadd.f32 %v102, %v365
  %367 = vmatmul.bf16.gmra.mxu0 %v235
  %v368 = vpop.f32.mrf.mxu0
  %v369 = vadd.f32 %v102, %v368
  %v370 = vpop.f32.mrf.mxu0
  %v371 = vadd.f32 %v102, %v370
  %372 = vmatmul.bf16.gmra.mxu0 %v236
  %v373 = vpop.f32.mrf.mxu0
  %v374 = vadd.f32 %v102, %v373
  %v375 = vpop.f32.mrf.mxu0
  %v376 = vadd.f32 %v102, %v375
  %377 = vmatmul.bf16.gmra.mxu0 %v237
  %v378 = vpop.f32.mrf.mxu0
  %v379 = vadd.f32 %v102, %v378
  %v380 = vpop.f32.mrf.mxu0
  %v381 = vadd.f32 %v102, %v380
  %382 = vmatmul.bf16.gmra.mxu0 %v238
  %v383 = vpop.f32.mrf.mxu0
  %v384 = vadd.f32 %v102, %v383
  %v385 = vpop.f32.mrf.mxu0
  %v386 = vadd.f32 %v102, %v385
  %387 = vmatmul.bf16.gmra.mxu0 %v239
  %v388 = vpop.f32.mrf.mxu0
  %v389 = vadd.f32 %v102, %v388
  %v390 = vpop.f32.mrf.mxu0
  %v391 = vadd.f32 %v102, %v390
  %392 = vmatmul.bf16.gmra.mxu0 %v240
  %v393 = vpop.f32.mrf.mxu0
  %v394 = vadd.f32 %v102, %v393
  %v395 = vpop.f32.mrf.mxu0
  %v396 = vadd.f32 %v102, %v395
  %397 = vmatmul.bf16.gmra.mxu0 %v241
  %v398 = vpop.f32.mrf.mxu0
  %v399 = vadd.f32 %v102, %v398
  %v400 = vpop.f32.mrf.mxu0
  %v401 = vadd.f32 %v102, %v400
  %402 = vmatmul.bf16.gmra.mxu0 %v242
  %v403 = vpop.f32.mrf.mxu0
  %v404 = vadd.f32 %v102, %v403
  %v405 = vpop.f32.mrf.mxu0
  %v406 = vadd.f32 %v102, %v405
  %407 = vmatmul.bf16.gmra.mxu0 %v243
  %v408 = vpop.f32.mrf.mxu0
  %v409 = vadd.f32 %v102, %v408
  %v410 = vpop.f32.mrf.mxu0
  %v411 = vadd.f32 %v102, %v410
  %412 = vmatmul.bf16.gmra.mxu0 %v244
  %v413 = vpop.f32.mrf.mxu0
  %v414 = vadd.f32 %v102, %v413
  %v415 = vpop.f32.mrf.mxu0
  %v416 = vadd.f32 %v102, %v415
  %417 = vmatmul.bf16.gmra.mxu0 %v245
  %v418 = vpop.f32.mrf.mxu0
  %v419 = vadd.f32 %v102, %v418
  %v420 = vpop.f32.mrf.mxu0
  %v421 = vadd.f32 %v102, %v420
  %422 = vmatmul.bf16.gmra.mxu0 %v246
  %v423 = vpop.f32.mrf.mxu0
  %v424 = vadd.f32 %v102, %v423
  %v425 = vpop.f32.mrf.mxu0
  %v426 = vadd.f32 %v102, %v425
  %427 = vmatmul.bf16.gmra.mxu0 %v247
  %v428 = vpop.f32.mrf.mxu0
  %v429 = vadd.f32 %v102, %v428
  %v430 = vpop.f32.mrf.mxu0
  %v431 = vadd.f32 %v102, %v430
  %432 = vmatmul.bf16.gmra.mxu0 %v248
  %v433 = vpop.f32.mrf.mxu0
  %v434 = vadd.f32 %v102, %v433
  %v435 = vpop.f32.mrf.mxu0
  %v436 = vadd.f32 %v102, %v435
  %437 = vmatmul.bf16.gmra.mxu0 %v249
  %v438 = vpop.f32.mrf.mxu0
  %v439 = vadd.f32 %v102, %v438
  %v440 = vpop.f32.mrf.mxu0
  %v441 = vadd.f32 %v102, %v440
  %442 = vmatmul.bf16.gmra.mxu0 %v250
  %v443 = vpop.f32.mrf.mxu0
  %v444 = vadd.f32 %v102, %v443
  %v445 = vpop.f32.mrf.mxu0
  %v446 = vadd.f32 %v102, %v445
  %447 = vmatmul.bf16.gmra.mxu0 %v251
  %v448 = vpop.f32.mrf.mxu0
  %v449 = vadd.f32 %v102, %v448
  %v450 = vpop.f32.mrf.mxu0
  %v451 = vadd.f32 %v102, %v450
  %452 = vmatmul.bf16.gmra.mxu0 %v252
  %v453 = vpop.f32.mrf.mxu0
  %v454 = vadd.f32 %v102, %v453
  %v455 = vpop.f32.mrf.mxu0
  %v456 = vadd.f32 %v102, %v455
  %457 = vmatmul.bf16.gmra.mxu0 %v253
  %v458 = vpop.f32.mrf.mxu0
  %v459 = vadd.f32 %v102, %v458
  %v460 = vpop.f32.mrf.mxu0
  %v461 = vadd.f32 %v102, %v460
  %462 = vmatmul.bf16.gmra.mxu0 %v254
  %v463 = vpop.f32.mrf.mxu0
  %v464 = vadd.f32 %v102, %v463
  %v465 = vpop.f32.mrf.mxu0
  %v466 = vadd.f32 %v102, %v465
  %467 = vmatmul.bf16.gmra.mxu0 %v255
  %v468 = vpop.f32.mrf.mxu0
  %v469 = vadd.f32 %v102, %v468
  %v470 = vpop.f32.mrf.mxu0
  %v471 = vadd.f32 %v102, %v470
  %472 = vmatmul.bf16.gmra.mxu0 %v256
  %v473 = vpop.f32.mrf.mxu0
  %v474 = vadd.f32 %v102, %v473
  %v475 = vpop.f32.mrf.mxu0
  %v476 = vadd.f32 %v102, %v475
  %477 = vmatmul.bf16.gmra.mxu0 %v257
  %v478 = vpop.f32.mrf.mxu0
  %v479 = vadd.f32 %v102, %v478
  %v480 = vpop.f32.mrf.mxu0
  %v481 = vadd.f32 %v102, %v480
  %482 = vmatmul.bf16.gmra.mxu0 %v258
  %v483 = vpop.f32.mrf.mxu0
  %v484 = vadd.f32 %v102, %v483
  %v485 = vpop.f32.mrf.mxu0
  %v486 = vadd.f32 %v102, %v485
  %487 = vmatmul.bf16.gmra.mxu0 %v259
  %v488 = vpop.f32.mrf.mxu0
  %v489 = vadd.f32 %v102, %v488
  %v490 = vpop.f32.mrf.mxu0
  %v491 = vadd.f32 %v102, %v490
  %492 = vmatmul.bf16.gmra.mxu0 %v260
  %v493 = vpop.f32.mrf.mxu0
  %v494 = vadd.f32 %v102, %v493
  %v495 = vpop.f32.mrf.mxu0
  %v496 = vadd.f32 %v102, %v495
  %497 = vmatmul.bf16.gmra.mxu0 %v261
  %v498 = vpop.f32.mrf.mxu0
  %v499 = vadd.f32 %v102, %v498
  %v500 = vpop.f32.mrf.mxu0
  %v501 = vadd.f32 %v102, %v500
  %502 = vmatmul.bf16.gmra.mxu0 %v262
  %v503 = vpop.f32.mrf.mxu0
  %v504 = vadd.f32 %v102, %v503
  %v505 = vpop.f32.mrf.mxu0
  %v506 = vadd.f32 %v102, %v505
  %507 = vmatmul.bf16.gmra.mxu0 %v263
  %v508 = vpop.f32.mrf.mxu0
  %v509 = vadd.f32 %v102, %v508
  %v510 = vpop.f32.mrf.mxu0
  %v511 = vadd.f32 %v102, %v510
  %512 = vdwg.mxu0
  %vm513 = vcmask 130048
  %v514 = vsel %vm513, %v354, 0.0
  %v515 = vsel %vm513, %v356, 0.0
  %v516 = vadd.f32 %v514, %v515
  %v517 = vsel %vm513, %v359, 0.0
  %v518 = vadd.f32 %v516, %v517
  %v519 = vsel %vm513, %v361, 0.0
  %v520 = vadd.f32 %v518, %v519
  %v521 = vsel %vm513, %v364, 0.0
  %v522 = vadd.f32 %v520, %v521
  %v523 = vsel %vm513, %v366, 0.0
  %v524 = vadd.f32 %v522, %v523
  %v525 = vsel %vm513, %v369, 0.0
  %v526 = vadd.f32 %v524, %v525
  %v527 = vsel %vm513, %v371, 0.0
  %v528 = vadd.f32 %v526, %v527
  %v529 = vsel %vm513, %v374, 0.0
  %v530 = vadd.f32 %v528, %v529
  %v531 = vsel %vm513, %v376, 0.0
  %v532 = vadd.f32 %v530, %v531
  %v533 = vsel %vm513, %v379, 0.0
  %v534 = vadd.f32 %v532, %v533
  %v535 = vsel %vm513, %v381, 0.0
  %v536 = vadd.f32 %v534, %v535
  %v537 = vsel %vm513, %v384, 0.0
  %v538 = vadd.f32 %v536, %v537
  %v539 = vsel %vm513, %v386, 0.0
  %v540 = vadd.f32 %v538, %v539
  %v541 = vsel %vm513, %v389, 0.0
  %v542 = vadd.f32 %v540, %v541
  %v543 = vsel %vm513, %v391, 0.0
  %v544 = vadd.f32 %v542, %v543
  %v545 = vsel %vm513, %v394, 0.0
  %v546 = vadd.f32 %v544, %v545
  %v547 = vsel %vm513, %v396, 0.0
  %v548 = vadd.f32 %v546, %v547
  %v549 = vsel %vm513, %v399, 0.0
  %v550 = vadd.f32 %v548, %v549
  %v551 = vsel %vm513, %v401, 0.0
  %v552 = vadd.f32 %v550, %v551
  %v553 = vsel %vm513, %v404, 0.0
  %v554 = vadd.f32 %v552, %v553
  %v555 = vsel %vm513, %v406, 0.0
  %v556 = vadd.f32 %v554, %v555
  %v557 = vsel %vm513, %v409, 0.0
  %v558 = vadd.f32 %v556, %v557
  %v559 = vsel %vm513, %v411, 0.0
  %v560 = vadd.f32 %v558, %v559
  %v561 = vsel %vm513, %v414, 0.0
  %v562 = vadd.f32 %v560, %v561
  %v563 = vsel %vm513, %v416, 0.0
  %v564 = vadd.f32 %v562, %v563
  %v565 = vsel %vm513, %v419, 0.0
  %v566 = vadd.f32 %v564, %v565
  %v567 = vsel %vm513, %v421, 0.0
  %v568 = vadd.f32 %v566, %v567
  %v569 = vsel %vm513, %v424, 0.0
  %v570 = vadd.f32 %v568, %v569
  %v571 = vsel %vm513, %v426, 0.0
  %v572 = vadd.f32 %v570, %v571
  %v573 = vsel %vm513, %v429, 0.0
  %v574 = vadd.f32 %v572, %v573
  %v575 = vsel %vm513, %v431, 0.0
  %v576 = vadd.f32 %v574, %v575
  %v577 = vsel %vm513, %v434, 0.0
  %v578 = vadd.f32 %v576, %v577
  %v579 = vsel %vm513, %v436, 0.0
  %v580 = vadd.f32 %v578, %v579
  %v581 = vsel %vm513, %v439, 0.0
  %v582 = vadd.f32 %v580, %v581
  %v583 = vsel %vm513, %v441, 0.0
  %v584 = vadd.f32 %v582, %v583
  %v585 = vsel %vm513, %v444, 0.0
  %v586 = vadd.f32 %v584, %v585
  %v587 = vsel %vm513, %v446, 0.0
  %v588 = vadd.f32 %v586, %v587
  %v589 = vsel %vm513, %v449, 0.0
  %v590 = vadd.f32 %v588, %v589
  %v591 = vsel %vm513, %v451, 0.0
  %v592 = vadd.f32 %v590, %v591
  %v593 = vsel %vm513, %v454, 0.0
  %v594 = vadd.f32 %v592, %v593
  %v595 = vsel %vm513, %v456, 0.0
  %v596 = vadd.f32 %v594, %v595
  %v597 = vsel %vm513, %v459, 0.0
  %v598 = vadd.f32 %v596, %v597
  %v599 = vsel %vm513, %v461, 0.0
  %v600 = vadd.f32 %v598, %v599
  %v601 = vsel %vm513, %v464, 0.0
  %v602 = vadd.f32 %v600, %v601
  %v603 = vsel %vm513, %v466, 0.0
  %v604 = vadd.f32 %v602, %v603
  %v605 = vsel %vm513, %v469, 0.0
  %v606 = vadd.f32 %v604, %v605
  %v607 = vsel %vm513, %v471, 0.0
  %v608 = vadd.f32 %v606, %v607
  %v609 = vsel %vm513, %v474, 0.0
  %v610 = vadd.f32 %v608, %v609
  %v611 = vsel %vm513, %v476, 0.0
  %v612 = vadd.f32 %v610, %v611
  %v613 = vsel %vm513, %v479, 0.0
  %v614 = vadd.f32 %v612, %v613
  %v615 = vsel %vm513, %v481, 0.0
  %v616 = vadd.f32 %v614, %v615
  %v617 = vsel %vm513, %v484, 0.0
  %v618 = vadd.f32 %v616, %v617
  %v619 = vsel %vm513, %v486, 0.0
  %v620 = vadd.f32 %v618, %v619
  %v621 = vsel %vm513, %v489, 0.0
  %v622 = vadd.f32 %v620, %v621
  %v623 = vsel %vm513, %v491, 0.0
  %v624 = vadd.f32 %v622, %v623
  %v625 = vsel %vm513, %v494, 0.0
  %v626 = vadd.f32 %v624, %v625
  %v627 = vsel %vm513, %v496, 0.0
  %v628 = vadd.f32 %v626, %v627
  %v629 = vsel %vm513, %v499, 0.0
  %v630 = vadd.f32 %v628, %v629
  %v631 = vsel %vm513, %v501, 0.0
  %v632 = vadd.f32 %v630, %v631
  %v633 = vsel %vm513, %v504, 0.0
  %v634 = vadd.f32 %v632, %v633
  %v635 = vsel %vm513, %v506, 0.0
  %v636 = vadd.f32 %v634, %v635
  %v637 = vsel %vm513, %v509, 0.0
  %v638 = vadd.f32 %v636, %v637
  %v639 = vsel %vm513, %v511, 0.0
  %v640 = vadd.f32 %v638, %v639
  %v641 = vrot.slane %v640, 4
  %v642 = vadd.f32 %v640, %v641
  %v643 = vrot.slane %v642, 2
  %v644 = vadd.f32 %v642, %v643
  %v645 = vrot.slane %v644, 1
  %v646 = vadd.f32 %v644, %v645
  %v647 = vrcp.pop 512.0
  %v648 = vmul.f32 512.0, %v647
  %v649 = vsub.f32 1.0, %v648
  %v650 = vmul.f32 %v647, %v649
  %v651 = vadd.f32 %v647, %v650
  %vm652 = vweird.f32 %v647
  %v653 = vsel %vm652, %v647, %v651
  %v654 = vmul.f32 %v646, %v653
  %v655 = vsub.f32 %v354, %v654
  %v656 = vsub.f32 %v356, %v654
  %v657 = vsub.f32 %v359, %v654
  %v658 = vsub.f32 %v361, %v654
  %v659 = vsub.f32 %v364, %v654
  %v660 = vsub.f32 %v366, %v654
  %v661 = vsub.f32 %v369, %v654
  %v662 = vsub.f32 %v371, %v654
  %v663 = vsub.f32 %v374, %v654
  %v664 = vsub.f32 %v376, %v654
  %v665 = vsub.f32 %v379, %v654
  %v666 = vsub.f32 %v381, %v654
  %v667 = vsub.f32 %v384, %v654
  %v668 = vsub.f32 %v386, %v654
  %v669 = vsub.f32 %v389, %v654
  %v670 = vsub.f32 %v391, %v654
  %v671 = vsub.f32 %v394, %v654
  %v672 = vsub.f32 %v396, %v654
  %v673 = vsub.f32 %v399, %v654
  %v674 = vsub.f32 %v401, %v654
  %v675 = vsub.f32 %v404, %v654
  %v676 = vsub.f32 %v406, %v654
  %v677 = vsub.f32 %v409, %v654
  %v678 = vsub.f32 %v411, %v654
  %v679 = vsub.f32 %v414, %v654
  %v680 = vsub.f32 %v416, %v654
  %v681 = vsub.f32 %v419, %v654
  %v682 = vsub.f32 %v421, %v654
  %v683 = vsub.f32 %v424, %v654
  %v684 = vsub.f32 %v426, %v654
  %v685 = vsub.f32 %v429, %v654
  %v686 = vsub.f32 %v431, %v654
  %v687 = vsub.f32 %v434, %v654
  %v688 = vsub.f32 %v436, %v654
  %v689 = vsub.f32 %v439, %v654
  %v690 = vsub.f32 %v441, %v654
  %v691 = vsub.f32 %v444, %v654
  %v692 = vsub.f32 %v446, %v654
  %v693 = vsub.f32 %v449, %v654
  %v694 = vsub.f32 %v451, %v654
  %v695 = vsub.f32 %v454, %v654
  %v696 = vsub.f32 %v456, %v654
  %v697 = vsub.f32 %v459, %v654
  %v698 = vsub.f32 %v461, %v654
  %v699 = vsub.f32 %v464, %v654
  %v700 = vsub.f32 %v466, %v654
  %v701 = vsub.f32 %v469, %v654
  %v702 = vsub.f32 %v471, %v654
  %v703 = vsub.f32 %v474, %v654
  %v704 = vsub.f32 %v476, %v654
  %v705 = vsub.f32 %v479, %v654
  %v706 = vsub.f32 %v481, %v654
  %v707 = vsub.f32 %v484, %v654
  %v708 = vsub.f32 %v486, %v654
  %v709 = vsub.f32 %v489, %v654
  %v710 = vsub.f32 %v491, %v654
  %v711 = vsub.f32 %v494, %v654
  %v712 = vsub.f32 %v496, %v654
  %v713 = vsub.f32 %v499, %v654
  %v714 = vsub.f32 %v501, %v654
  %v715 = vsub.f32 %v504, %v654
  %v716 = vsub.f32 %v506, %v654
  %v717 = vsub.f32 %v509, %v654
  %v718 = vsub.f32 %v511, %v654
  %v719 = vmul.f32 %v655, %v655
  %v720 = vmul.f32 %v656, %v656
  %v721 = vmul.f32 %v657, %v657
  %v722 = vmul.f32 %v658, %v658
  %v723 = vmul.f32 %v659, %v659
  %v724 = vmul.f32 %v660, %v660
  %v725 = vmul.f32 %v661, %v661
  %v726 = vmul.f32 %v662, %v662
  %v727 = vmul.f32 %v663, %v663
  %v728 = vmul.f32 %v664, %v664
  %v729 = vmul.f32 %v665, %v665
  %v730 = vmul.f32 %v666, %v666
  %v731 = vmul.f32 %v667, %v667
  %v732 = vmul.f32 %v668, %v668
  %v733 = vmul.f32 %v669, %v669
  %v734 = vmul.f32 %v670, %v670
  %v735 = vmul.f32 %v671, %v671
  %v736 = vmul.f32 %v672, %v672
  %v737 = vmul.f32 %v673, %v673
  %v738 = vmul.f32 %v674, %v674
  %v739 = vmul.f32 %v675, %v675
  %v740 = vmul.f32 %v676, %v676
  %v741 = vmul.f32 %v677, %v677
  %v742 = vmul.f32 %v678, %v678
  %v743 = vmul.f32 %v679, %v679
  %v744 = vmul.f32 %v680, %v680
  %v745 = vmul.f32 %v681, %v681
  %v746 = vmul.f32 %v682, %v682
  %v747 = vmul.f32 %v683, %v683
  %v748 = vmul.f32 %v684, %v684
  %v749 = vmul.f32 %v685, %v685
  %v750 = vmul.f32 %v686, %v686
  %v751 = vmul.f32 %v687, %v687
  %v752 = vmul.f32 %v688, %v688
  %v753 = vmul.f32 %v689, %v689
  %v754 = vmul.f32 %v690, %v690
  %v755 = vmul.f32 %v691, %v691
  %v756 = vmul.f32 %v692, %v692
  %v757 = vmul.f32 %v693, %v693
  %v758 = vmul.f32 %v694, %v694
  %v759 = vmul.f32 %v695, %v695
  %v760 = vmul.f32 %v696, %v696
  %v761 = vmul.f32 %v697, %v697
  %v762 = vmul.f32 %v698, %v698
  %v763 = vmul.f32 %v699, %v699
  %v764 = vmul.f32 %v700, %v700
  %v765 = vmul.f32 %v701, %v701
  %v766 = vmul.f32 %v702, %v702
  %v767 = vmul.f32 %v703, %v703
  %v768 = vmul.f32 %v704, %v704
  %v769 = vmul.f32 %v705, %v705
  %v770 = vmul.f32 %v706, %v706
  %v771 = vmul.f32 %v707, %v707
  %v772 = vmul.f32 %v708, %v708
  %v773 = vmul.f32 %v709, %v709
  %v774 = vmul.f32 %v710, %v710
  %v775 = vmul.f32 %v711, %v711
  %v776 = vmul.f32 %v712, %v712
  %v777 = vmul.f32 %v713, %v713
  %v778 = vmul.f32 %v714, %v714
  %v779 = vmul.f32 %v715, %v715
  %v780 = vmul.f32 %v716, %v716
  %v781 = vmul.f32 %v717, %v717
  %v782 = vmul.f32 %v718, %v718
  %v783 = vsel %vm513, %v719, 0.0
  %v784 = vsel %vm513, %v720, 0.0
  %v785 = vadd.f32 %v783, %v784
  %v786 = vsel %vm513, %v721, 0.0
  %v787 = vadd.f32 %v785, %v786
  %v788 = vsel %vm513, %v722, 0.0
  %v789 = vadd.f32 %v787, %v788
  %v790 = vsel %vm513, %v723, 0.0
  %v791 = vadd.f32 %v789, %v790
  %v792 = vsel %vm513, %v724, 0.0
  %v793 = vadd.f32 %v791, %v792
  %v794 = vsel %vm513, %v725, 0.0
  %v795 = vadd.f32 %v793, %v794
  %v796 = vsel %vm513, %v726, 0.0
  %v797 = vadd.f32 %v795, %v796
  %v798 = vsel %vm513, %v727, 0.0
  %v799 = vadd.f32 %v797, %v798
  %v800 = vsel %vm513, %v728, 0.0
  %v801 = vadd.f32 %v799, %v800
  %v802 = vsel %vm513, %v729, 0.0
  %v803 = vadd.f32 %v801, %v802
  %v804 = vsel %vm513, %v730, 0.0
  %v805 = vadd.f32 %v803, %v804
  %v806 = vsel %vm513, %v731, 0.0
  %v807 = vadd.f32 %v805, %v806
  %v808 = vsel %vm513, %v732, 0.0
  %v809 = vadd.f32 %v807, %v808
  %v810 = vsel %vm513, %v733, 0.0
  %v811 = vadd.f32 %v809, %v810
  %v812 = vsel %vm513, %v734, 0.0
  %v813 = vadd.f32 %v811, %v812
  %v814 = vsel %vm513, %v735, 0.0
  %v815 = vadd.f32 %v813, %v814
  %v816 = vsel %vm513, %v736, 0.0
  %v817 = vadd.f32 %v815, %v816
  %v818 = vsel %vm513, %v737, 0.0
  %v819 = vadd.f32 %v817, %v818
  %v820 = vsel %vm513, %v738, 0.0
  %v821 = vadd.f32 %v819, %v820
  %v822 = vsel %vm513, %v739, 0.0
  %v823 = vadd.f32 %v821, %v822
  %v824 = vsel %vm513, %v740, 0.0
  %v825 = vadd.f32 %v823, %v824
  %v826 = vsel %vm513, %v741, 0.0
  %v827 = vadd.f32 %v825, %v826
  %v828 = vsel %vm513, %v742, 0.0
  %v829 = vadd.f32 %v827, %v828
  %v830 = vsel %vm513, %v743, 0.0
  %v831 = vadd.f32 %v829, %v830
  %v832 = vsel %vm513, %v744, 0.0
  %v833 = vadd.f32 %v831, %v832
  %v834 = vsel %vm513, %v745, 0.0
  %v835 = vadd.f32 %v833, %v834
  %v836 = vsel %vm513, %v746, 0.0
  %v837 = vadd.f32 %v835, %v836
  %v838 = vsel %vm513, %v747, 0.0
  %v839 = vadd.f32 %v837, %v838
  %v840 = vsel %vm513, %v748, 0.0
  %v841 = vadd.f32 %v839, %v840
  %v842 = vsel %vm513, %v749, 0.0
  %v843 = vadd.f32 %v841, %v842
  %v844 = vsel %vm513, %v750, 0.0
  %v845 = vadd.f32 %v843, %v844
  %v846 = vsel %vm513, %v751, 0.0
  %v847 = vadd.f32 %v845, %v846
  %v848 = vsel %vm513, %v752, 0.0
  %v849 = vadd.f32 %v847, %v848
  %v850 = vsel %vm513, %v753, 0.0
  %v851 = vadd.f32 %v849, %v850
  %v852 = vsel %vm513, %v754, 0.0
  %v853 = vadd.f32 %v851, %v852
  %v854 = vsel %vm513, %v755, 0.0
  %v855 = vadd.f32 %v853, %v854
  %v856 = vsel %vm513, %v756, 0.0
  %v857 = vadd.f32 %v855, %v856
  %v858 = vsel %vm513, %v757, 0.0
  %v859 = vadd.f32 %v857, %v858
  %v860 = vsel %vm513, %v758, 0.0
  %v861 = vadd.f32 %v859, %v860
  %v862 = vsel %vm513, %v759, 0.0
  %v863 = vadd.f32 %v861, %v862
  %v864 = vsel %vm513, %v760, 0.0
  %v865 = vadd.f32 %v863, %v864
  %v866 = vsel %vm513, %v761, 0.0
  %v867 = vadd.f32 %v865, %v866
  %v868 = vsel %vm513, %v762, 0.0
  %v869 = vadd.f32 %v867, %v868
  %v870 = vsel %vm513, %v763, 0.0
  %v871 = vadd.f32 %v869, %v870
  %v872 = vsel %vm513, %v764, 0.0
  %v873 = vadd.f32 %v871, %v872
  %v874 = vsel %vm513, %v765, 0.0
  %v875 = vadd.f32 %v873, %v874
  %v876 = vsel %vm513, %v766, 0.0
  %v877 = vadd.f32 %v875, %v876
  %v878 = vsel %vm513, %v767, 0.0
  %v879 = vadd.f32 %v877, %v878
  %v880 = vsel %vm513, %v768, 0.0
  %v881 = vadd.f32 %v879, %v880
  %v882 = vsel %vm513, %v769, 0.0
  %v883 = vadd.f32 %v881, %v882
  %v884 = vsel %vm513, %v770, 0.0
  %v885 = vadd.f32 %v883, %v884
  %v886 = vsel %vm513, %v771, 0.0
  %v887 = vadd.f32 %v885, %v886
  %v888 = vsel %vm513, %v772, 0.0
  %v889 = vadd.f32 %v887, %v888
  %v890 = vsel %vm513, %v773, 0.0
  %v891 = vadd.f32 %v889, %v890
  %v892 = vsel %vm513, %v774, 0.0
  %v893 = vadd.f32 %v891, %v892
  %v894 = vsel %vm513, %v775, 0.0
  %v895 = vadd.f32 %v893, %v894
  %v896 = vsel %vm513, %v776, 0.0
  %v897 = vadd.f32 %v895, %v896
  %v898 = vsel %vm513, %v777, 0.0
  %v899 = vadd.f32 %v897, %v898
  %v900 = vsel %vm513, %v778, 0.0
  %v901 = vadd.f32 %v899, %v900
  %v902 = vsel %vm513, %v779, 0.0
  %v903 = vadd.f32 %v901, %v902
  %v904 = vsel %vm513, %v780, 0.0
  %v905 = vadd.f32 %v903, %v904
  %v906 = vsel %vm513, %v781, 0.0
  %v907 = vadd.f32 %v905, %v906
  %v908 = vsel %vm513, %v782, 0.0
  %v909 = vadd.f32 %v907, %v908
  %v910 = vrot.slane %v909, 4
  %v911 = vadd.f32 %v909, %v910
  %v912 = vrot.slane %v911, 2
  %v913 = vadd.f32 %v911, %v912
  %v914 = vrot.slane %v913, 1
  %v915 = vadd.f32 %v913, %v914
  %v916 = vmul.f32 %v915, %v653
  %v917 = vld [vmem:[%s3] sm:$0x1]
  %v918 = vadd.f32 %v916, 1e-05
  %v919 = vrsqrt.pop %v918
  %v920 = vmul.f32 %v919, %v918
  %v921 = vmul.f32 %v920, %v919
  %v922 = vmul.f32 0.5, %v921
  %v923 = vsub.f32 1.5, %v922
  %v924 = vmul.f32 %v919, %v923
  %vm925 = vweird.f32 %v918
  %vm926 = vweird.f32 %v919
  %vm927 = vmor %vm925, %vm926
  %v928 = vsel %vm927, %v919, %v924
  %v929 = vmul.f32 %v917, %v928
  %v930 = vld [vmem:[%s4] sm:$0x1]
  %v931 = vmul.f32 %v654, %v929
  %v932 = vsub.f32 %v930, %v931
  %v934 = vperm.slane %v929, 0
  %v936 = vmul.f32 %v354, %v934
  %v937 = vmul.f32 %v356, %v934
  %v938 = vmul.f32 %v359, %v934
  %v939 = vmul.f32 %v361, %v934
  %v940 = vmul.f32 %v364, %v934
  %v941 = vmul.f32 %v366, %v934
  %v942 = vmul.f32 %v369, %v934
  %v943 = vmul.f32 %v371, %v934
  %v944 = vmul.f32 %v374, %v934
  %v945 = vmul.f32 %v376, %v934
  %v946 = vmul.f32 %v379, %v934
  %v947 = vmul.f32 %v381, %v934
  %v948 = vmul.f32 %v384, %v934
  %v949 = vmul.f32 %v386, %v934
  %v950 = vmul.f32 %v389, %v934
  %v951 = vmul.f32 %v391, %v934
  %v952 = vmul.f32 %v394, %v934
  %v953 = vmul.f32 %v396, %v934
  %v954 = vmul.f32 %v399, %v934
  %v955 = vmul.f32 %v401, %v934
  %v956 = vmul.f32 %v404, %v934
  %v957 = vmul.f32 %v406, %v934
  %v958 = vmul.f32 %v409, %v934
  %v959 = vmul.f32 %v411, %v934
  %v960 = vmul.f32 %v414, %v934
  %v961 = vmul.f32 %v416, %v934
  %v962 = vmul.f32 %v419, %v934
  %v963 = vmul.f32 %v421, %v934
  %v964 = vmul.f32 %v424, %v934
  %v965 = vmul.f32 %v426, %v934
  %v966 = vmul.f32 %v429, %v934
  %v967 = vmul.f32 %v431, %v934
  %v968 = vmul.f32 %v434, %v934
  %v969 = vmul.f32 %v436, %v934
  %v970 = vmul.f32 %v439, %v934
  %v971 = vmul.f32 %v441, %v934
  %v972 = vmul.f32 %v444, %v934
  %v973 = vmul.f32 %v446, %v934
  %v974 = vmul.f32 %v449, %v934
  %v975 = vmul.f32 %v451, %v934
  %v976 = vmul.f32 %v454, %v934
  %v977 = vmul.f32 %v456, %v934
  %v978 = vmul.f32 %v459, %v934
  %v979 = vmul.f32 %v461, %v934
  %v980 = vmul.f32 %v464, %v934
  %v981 = vmul.f32 %v466, %v934
  %v982 = vmul.f32 %v469, %v934
  %v983 = vmul.f32 %v471, %v934
  %v984 = vmul.f32 %v474, %v934
  %v985 = vmul.f32 %v476, %v934
  %v986 = vmul.f32 %v479, %v934
  %v987 = vmul.f32 %v481, %v934
  %v988 = vmul.f32 %v484, %v934
  %v989 = vmul.f32 %v486, %v934
  %v990 = vmul.f32 %v489, %v934
  %v991 = vmul.f32 %v491, %v934
  %v992 = vmul.f32 %v494, %v934
  %v993 = vmul.f32 %v496, %v934
  %v994 = vmul.f32 %v499, %v934
  %v995 = vmul.f32 %v501, %v934
  %v996 = vmul.f32 %v504, %v934
  %v997 = vmul.f32 %v506, %v934
  %v998 = vmul.f32 %v509, %v934
  %v999 = vmul.f32 %v511, %v934
  %v1001 = vperm.slane %v932, 0
  %v1003 = vadd.f32 %v936, %v1001
  %v1004 = vadd.f32 %v937, %v1001
  %v1005 = vadd.f32 %v938, %v1001
  %v1006 = vadd.f32 %v939, %v1001
  %v1007 = vadd.f32 %v940, %v1001
  %v1008 = vadd.f32 %v941, %v1001
  %v1009 = vadd.f32 %v942, %v1001
  %v1010 = vadd.f32 %v943, %v1001
  %v1011 = vadd.f32 %v944, %v1001
  %v1012 = vadd.f32 %v945, %v1001
  %v1013 = vadd.f32 %v946, %v1001
  %v1014 = vadd.f32 %v947, %v1001
  %v1015 = vadd.f32 %v948, %v1001
  %v1016 = vadd.f32 %v949, %v1001
  %v1017 = vadd.f32 %v950, %v1001
  %v1018 = vadd.f32 %v951, %v1001
  %v1019 = vadd.f32 %v952, %v1001
  %v1020 = vadd.f32 %v953, %v1001
  %v1021 = vadd.f32 %v954, %v1001
  %v1022 = vadd.f32 %v955, %v1001
  %v1023 = vadd.f32 %v956, %v1001
  %v1024 = vadd.f32 %v957, %v1001
  %v1025 = vadd.f32 %v958, %v1001
  %v1026 = vadd.f32 %v959, %v1001
  %v1027 = vadd.f32 %v960, %v1001
  %v1028 = vadd.f32 %v961, %v1001
  %v1029 = vadd.f32 %v962, %v1001
  %v1030 = vadd.f32 %v963, %v1001
  %v1031 = vadd.f32 %v964, %v1001
  %v1032 = vadd.f32 %v965, %v1001
  %v1033 = vadd.f32 %v966, %v1001
  %v1034 = vadd.f32 %v967, %v1001
  %v1035 = vadd.f32 %v968, %v1001
  %v1036 = vadd.f32 %v969, %v1001
  %v1037 = vadd.f32 %v970, %v1001
  %v1038 = vadd.f32 %v971, %v1001
  %v1039 = vadd.f32 %v972, %v1001
  %v1040 = vadd.f32 %v973, %v1001
  %v1041 = vadd.f32 %v974, %v1001
  %v1042 = vadd.f32 %v975, %v1001
  %v1043 = vadd.f32 %v976, %v1001
  %v1044 = vadd.f32 %v977, %v1001
  %v1045 = vadd.f32 %v978, %v1001
  %v1046 = vadd.f32 %v979, %v1001
  %v1047 = vadd.f32 %v980, %v1001
  %v1048 = vadd.f32 %v981, %v1001
  %v1049 = vadd.f32 %v982, %v1001
  %v1050 = vadd.f32 %v983, %v1001
  %v1051 = vadd.f32 %v984, %v1001
  %v1052 = vadd.f32 %v985, %v1001
  %v1053 = vadd.f32 %v986, %v1001
  %v1054 = vadd.f32 %v987, %v1001
  %v1055 = vadd.f32 %v988, %v1001
  %v1056 = vadd.f32 %v989, %v1001
  %v1057 = vadd.f32 %v990, %v1001
  %v1058 = vadd.f32 %v991, %v1001
  %v1059 = vadd.f32 %v992, %v1001
  %v1060 = vadd.f32 %v993, %v1001
  %v1061 = vadd.f32 %v994, %v1001
  %v1062 = vadd.f32 %v995, %v1001
  %v1063 = vadd.f32 %v996, %v1001
  %v1064 = vadd.f32 %v997, %v1001
  %v1065 = vadd.f32 %v998, %v1001
  %v1066 = vadd.f32 %v999, %v1001
  %vm1067 = vcmp.ge.f32.partialorder %v1003, 0.0
  %vm1068 = vcmp.ge.f32.partialorder %v1004, 0.0
  %vm1069 = vcmp.ge.f32.partialorder %v1005, 0.0
  %vm1070 = vcmp.ge.f32.partialorder %v1006, 0.0
  %vm1071 = vcmp.ge.f32.partialorder %v1007, 0.0
  %vm1072 = vcmp.ge.f32.partialorder %v1008, 0.0
  %vm1073 = vcmp.ge.f32.partialorder %v1009, 0.0
  %vm1074 = vcmp.ge.f32.partialorder %v1010, 0.0
  %vm1075 = vcmp.ge.f32.partialorder %v1011, 0.0
  %vm1076 = vcmp.ge.f32.partialorder %v1012, 0.0
  %vm1077 = vcmp.ge.f32.partialorder %v1013, 0.0
  %vm1078 = vcmp.ge.f32.partialorder %v1014, 0.0
  %vm1079 = vcmp.ge.f32.partialorder %v1015, 0.0
  %vm1080 = vcmp.ge.f32.partialorder %v1016, 0.0
  %vm1081 = vcmp.ge.f32.partialorder %v1017, 0.0
  %vm1082 = vcmp.ge.f32.partialorder %v1018, 0.0
  %vm1083 = vcmp.ge.f32.partialorder %v1019, 0.0
  %vm1084 = vcmp.ge.f32.partialorder %v1020, 0.0
  %vm1085 = vcmp.ge.f32.partialorder %v1021, 0.0
  %vm1086 = vcmp.ge.f32.partialorder %v1022, 0.0
  %vm1087 = vcmp.ge.f32.partialorder %v1023, 0.0
  %vm1088 = vcmp.ge.f32.partialorder %v1024, 0.0
  %vm1089 = vcmp.ge.f32.partialorder %v1025, 0.0
  %vm1090 = vcmp.ge.f32.partialorder %v1026, 0.0
  %vm1091 = vcmp.ge.f32.partialorder %v1027, 0.0
  %vm1092 = vcmp.ge.f32.partialorder %v1028, 0.0
  %vm1093 = vcmp.ge.f32.partialorder %v1029, 0.0
  %vm1094 = vcmp.ge.f32.partialorder %v1030, 0.0
  %vm1095 = vcmp.ge.f32.partialorder %v1031, 0.0
  %vm1096 = vcmp.ge.f32.partialorder %v1032, 0.0
  %vm1097 = vcmp.ge.f32.partialorder %v1033, 0.0
  %vm1098 = vcmp.ge.f32.partialorder %v1034, 0.0
  %vm1099 = vcmp.ge.f32.partialorder %v1035, 0.0
  %vm1100 = vcmp.ge.f32.partialorder %v1036, 0.0
  %vm1101 = vcmp.ge.f32.partialorder %v1037, 0.0
  %vm1102 = vcmp.ge.f32.partialorder %v1038, 0.0
  %vm1103 = vcmp.ge.f32.partialorder %v1039, 0.0
  %vm1104 = vcmp.ge.f32.partialorder %v1040, 0.0
  %vm1105 = vcmp.ge.f32.partialorder %v1041, 0.0
  %vm1106 = vcmp.ge.f32.partialorder %v1042, 0.0
  %vm1107 = vcmp.ge.f32.partialorder %v1043, 0.0
  %vm1108 = vcmp.ge.f32.partialorder %v1044, 0.0
  %vm1109 = vcmp.ge.f32.partialorder %v1045, 0.0
  %vm1110 = vcmp.ge.f32.partialorder %v1046, 0.0
  %vm1111 = vcmp.ge.f32.partialorder %v1047, 0.0
  %vm1112 = vcmp.ge.f32.partialorder %v1048, 0.0
  %vm1113 = vcmp.ge.f32.partialorder %v1049, 0.0
  %vm1114 = vcmp.ge.f32.partialorder %v1050, 0.0
  %vm1115 = vcmp.ge.f32.partialorder %v1051, 0.0
  %vm1116 = vcmp.ge.f32.partialorder %v1052, 0.0
  %vm1117 = vcmp.ge.f32.partialorder %v1053, 0.0
  %vm1118 = vcmp.ge.f32.partialorder %v1054, 0.0
  %vm1119 = vcmp.ge.f32.partialorder %v1055, 0.0
  %vm1120 = vcmp.ge.f32.partialorder %v1056, 0.0
  %vm1121 = vcmp.ge.f32.partialorder %v1057, 0.0
  %vm1122 = vcmp.ge.f32.partialorder %v1058, 0.0
  %vm1123 = vcmp.ge.f32.partialorder %v1059, 0.0
  %vm1124 = vcmp.ge.f32.partialorder %v1060, 0.0
  %vm1125 = vcmp.ge.f32.partialorder %v1061, 0.0
  %vm1126 = vcmp.ge.f32.partialorder %v1062, 0.0
  %vm1127 = vcmp.ge.f32.partialorder %v1063, 0.0
  %vm1128 = vcmp.ge.f32.partialorder %v1064, 0.0
  %vm1129 = vcmp.ge.f32.partialorder %v1065, 0.0
  %vm1130 = vcmp.ge.f32.partialorder %v1066, 0.0
  %v1131 = vmul.f32 %v1003, 0.01
  %v1132 = vmul.f32 %v1004, 0.01
  %v1133 = vmul.f32 %v1005, 0.01
  %v1134 = vmul.f32 %v1006, 0.01
  %v1135 = vmul.f32 %v1007, 0.01
  %v1136 = vmul.f32 %v1008, 0.01
  %v1137 = vmul.f32 %v1009, 0.01
  %v1138 = vmul.f32 %v1010, 0.01
  %v1139 = vmul.f32 %v1011, 0.01
  %v1140 = vmul.f32 %v1012, 0.01
  %v1141 = vmul.f32 %v1013, 0.01
  %v1142 = vmul.f32 %v1014, 0.01
  %v1143 = vmul.f32 %v1015, 0.01
  %v1144 = vmul.f32 %v1016, 0.01
  %v1145 = vmul.f32 %v1017, 0.01
  %v1146 = vmul.f32 %v1018, 0.01
  %v1147 = vmul.f32 %v1019, 0.01
  %v1148 = vmul.f32 %v1020, 0.01
  %v1149 = vmul.f32 %v1021, 0.01
  %v1150 = vmul.f32 %v1022, 0.01
  %v1151 = vmul.f32 %v1023, 0.01
  %v1152 = vmul.f32 %v1024, 0.01
  %v1153 = vmul.f32 %v1025, 0.01
  %v1154 = vmul.f32 %v1026, 0.01
  %v1155 = vmul.f32 %v1027, 0.01
  %v1156 = vmul.f32 %v1028, 0.01
  %v1157 = vmul.f32 %v1029, 0.01
  %v1158 = vmul.f32 %v1030, 0.01
  %v1159 = vmul.f32 %v1031, 0.01
  %v1160 = vmul.f32 %v1032, 0.01
  %v1161 = vmul.f32 %v1033, 0.01
  %v1162 = vmul.f32 %v1034, 0.01
  %v1163 = vmul.f32 %v1035, 0.01
  %v1164 = vmul.f32 %v1036, 0.01
  %v1165 = vmul.f32 %v1037, 0.01
  %v1166 = vmul.f32 %v1038, 0.01
  %v1167 = vmul.f32 %v1039, 0.01
  %v1168 = vmul.f32 %v1040, 0.01
  %v1169 = vmul.f32 %v1041, 0.01
  %v1170 = vmul.f32 %v1042, 0.01
  %v1171 = vmul.f32 %v1043, 0.01
  %v1172 = vmul.f32 %v1044, 0.01
  %v1173 = vmul.f32 %v1045, 0.01
  %v1174 = vmul.f32 %v1046, 0.01
  %v1175 = vmul.f32 %v1047, 0.01
  %v1176 = vmul.f32 %v1048, 0.01
  %v1177 = vmul.f32 %v1049, 0.01
  %v1178 = vmul.f32 %v1050, 0.01
  %v1179 = vmul.f32 %v1051, 0.01
  %v1180 = vmul.f32 %v1052, 0.01
  %v1181 = vmul.f32 %v1053, 0.01
  %v1182 = vmul.f32 %v1054, 0.01
  %v1183 = vmul.f32 %v1055, 0.01
  %v1184 = vmul.f32 %v1056, 0.01
  %v1185 = vmul.f32 %v1057, 0.01
  %v1186 = vmul.f32 %v1058, 0.01
  %v1187 = vmul.f32 %v1059, 0.01
  %v1188 = vmul.f32 %v1060, 0.01
  %v1189 = vmul.f32 %v1061, 0.01
  %v1190 = vmul.f32 %v1062, 0.01
  %v1191 = vmul.f32 %v1063, 0.01
  %v1192 = vmul.f32 %v1064, 0.01
  %v1193 = vmul.f32 %v1065, 0.01
  %v1194 = vmul.f32 %v1066, 0.01
  %v1195 = vsel %vm1067, %v1003, %v1131
  %v1196 = vsel %vm1068, %v1004, %v1132
  %v1197 = vsel %vm1069, %v1005, %v1133
  %v1198 = vsel %vm1070, %v1006, %v1134
  %v1199 = vsel %vm1071, %v1007, %v1135
  %v1200 = vsel %vm1072, %v1008, %v1136
  %v1201 = vsel %vm1073, %v1009, %v1137
  %v1202 = vsel %vm1074, %v1010, %v1138
  %v1203 = vsel %vm1075, %v1011, %v1139
  %v1204 = vsel %vm1076, %v1012, %v1140
  %v1205 = vsel %vm1077, %v1013, %v1141
  %v1206 = vsel %vm1078, %v1014, %v1142
  %v1207 = vsel %vm1079, %v1015, %v1143
  %v1208 = vsel %vm1080, %v1016, %v1144
  %v1209 = vsel %vm1081, %v1017, %v1145
  %v1210 = vsel %vm1082, %v1018, %v1146
  %v1211 = vsel %vm1083, %v1019, %v1147
  %v1212 = vsel %vm1084, %v1020, %v1148
  %v1213 = vsel %vm1085, %v1021, %v1149
  %v1214 = vsel %vm1086, %v1022, %v1150
  %v1215 = vsel %vm1087, %v1023, %v1151
  %v1216 = vsel %vm1088, %v1024, %v1152
  %v1217 = vsel %vm1089, %v1025, %v1153
  %v1218 = vsel %vm1090, %v1026, %v1154
  %v1219 = vsel %vm1091, %v1027, %v1155
  %v1220 = vsel %vm1092, %v1028, %v1156
  %v1221 = vsel %vm1093, %v1029, %v1157
  %v1222 = vsel %vm1094, %v1030, %v1158
  %v1223 = vsel %vm1095, %v1031, %v1159
  %v1224 = vsel %vm1096, %v1032, %v1160
  %v1225 = vsel %vm1097, %v1033, %v1161
  %v1226 = vsel %vm1098, %v1034, %v1162
  %v1227 = vsel %vm1099, %v1035, %v1163
  %v1228 = vsel %vm1100, %v1036, %v1164
  %v1229 = vsel %vm1101, %v1037, %v1165
  %v1230 = vsel %vm1102, %v1038, %v1166
  %v1231 = vsel %vm1103, %v1039, %v1167
  %v1232 = vsel %vm1104, %v1040, %v1168
  %v1233 = vsel %vm1105, %v1041, %v1169
  %v1234 = vsel %vm1106, %v1042, %v1170
  %v1235 = vsel %vm1107, %v1043, %v1171
  %v1236 = vsel %vm1108, %v1044, %v1172
  %v1237 = vsel %vm1109, %v1045, %v1173
  %v1238 = vsel %vm1110, %v1046, %v1174
  %v1239 = vsel %vm1111, %v1047, %v1175
  %v1240 = vsel %vm1112, %v1048, %v1176
  %v1241 = vsel %vm1113, %v1049, %v1177
  %v1242 = vsel %vm1114, %v1050, %v1178
  %v1243 = vsel %vm1115, %v1051, %v1179
  %v1244 = vsel %vm1116, %v1052, %v1180
  %v1245 = vsel %vm1117, %v1053, %v1181
  %v1246 = vsel %vm1118, %v1054, %v1182
  %v1247 = vsel %vm1119, %v1055, %v1183
  %v1248 = vsel %vm1120, %v1056, %v1184
  %v1249 = vsel %vm1121, %v1057, %v1185
  %v1250 = vsel %vm1122, %v1058, %v1186
  %v1251 = vsel %vm1123, %v1059, %v1187
  %v1252 = vsel %vm1124, %v1060, %v1188
  %v1253 = vsel %vm1125, %v1061, %v1189
  %v1254 = vsel %vm1126, %v1062, %v1190
  %v1255 = vsel %vm1127, %v1063, %v1191
  %v1256 = vsel %vm1128, %v1064, %v1192
  %v1257 = vsel %vm1129, %v1065, %v1193
  %v1258 = vsel %vm1130, %v1066, %v1194
  %1259 = vst.msk [vmem:[%s5] sm:$0xff] %vm513, %v1195
  %1260 = vst.msk [vmem:[%s5 + $0x8] sm:$0xff] %vm513, %v1196
  %1261 = vst.msk [vmem:[%s5 + $0x10] sm:$0xff] %vm513, %v1197
  %1262 = vst.msk [vmem:[%s5 + $0x18] sm:$0xff] %vm513, %v1198
  %1263 = vst.msk [vmem:[%s5 + $0x20] sm:$0xff] %vm513, %v1199
  %1264 = vst.msk [vmem:[%s5 + $0x28] sm:$0xff] %vm513, %v1200
  %1265 = vst.msk [vmem:[%s5 + $0x30] sm:$0xff] %vm513, %v1201
  %1266 = vst.msk [vmem:[%s5 + $0x38] sm:$0xff] %vm513, %v1202
  %1267 = vst.msk [vmem:[%s5 + $0x40] sm:$0xff] %vm513, %v1203
  %1268 = vst.msk [vmem:[%s5 + $0x48] sm:$0xff] %vm513, %v1204
  %1269 = vst.msk [vmem:[%s5 + $0x50] sm:$0xff] %vm513, %v1205
  %1270 = vst.msk [vmem:[%s5 + $0x58] sm:$0xff] %vm513, %v1206
  %1271 = vst.msk [vmem:[%s5 + $0x60] sm:$0xff] %vm513, %v1207
  %1272 = vst.msk [vmem:[%s5 + $0x68] sm:$0xff] %vm513, %v1208
  %1273 = vst.msk [vmem:[%s5 + $0x70] sm:$0xff] %vm513, %v1209
  %1274 = vst.msk [vmem:[%s5 + $0x78] sm:$0xff] %vm513, %v1210
  %1275 = vst.msk [vmem:[%s5 + $0x80] sm:$0xff] %vm513, %v1211
  %1276 = vst.msk [vmem:[%s5 + $0x88] sm:$0xff] %vm513, %v1212
  %1277 = vst.msk [vmem:[%s5 + $0x90] sm:$0xff] %vm513, %v1213
  %1278 = vst.msk [vmem:[%s5 + $0x98] sm:$0xff] %vm513, %v1214
  %1279 = vst.msk [vmem:[%s5 + $0xa0] sm:$0xff] %vm513, %v1215
  %1280 = vst.msk [vmem:[%s5 + $0xa8] sm:$0xff] %vm513, %v1216
  %1281 = vst.msk [vmem:[%s5 + $0xb0] sm:$0xff] %vm513, %v1217
  %1282 = vst.msk [vmem:[%s5 + $0xb8] sm:$0xff] %vm513, %v1218
  %1283 = vst.msk [vmem:[%s5 + $0xc0] sm:$0xff] %vm513, %v1219
  %1284 = vst.msk [vmem:[%s5 + $0xc8] sm:$0xff] %vm513, %v1220
  %1285 = vst.msk [vmem:[%s5 + $0xd0] sm:$0xff] %vm513, %v1221
  %1286 = vst.msk [vmem:[%s5 + $0xd8] sm:$0xff] %vm513, %v1222
  %1287 = vst.msk [vmem:[%s5 + $0xe0] sm:$0xff] %vm513, %v1223
  %1288 = vst.msk [vmem:[%s5 + $0xe8] sm:$0xff] %vm513, %v1224
  %1289 = vst.msk [vmem:[%s5 + $0xf0] sm:$0xff] %vm513, %v1225
  %1290 = vst.msk [vmem:[%s5 + $0xf8] sm:$0xff] %vm513, %v1226
  %1291 = vst.msk [vmem:[%s5 + $0x100] sm:$0xff] %vm513, %v1227
  %1292 = vst.msk [vmem:[%s5 + $0x108] sm:$0xff] %vm513, %v1228
  %1293 = vst.msk [vmem:[%s5 + $0x110] sm:$0xff] %vm513, %v1229
  %1294 = vst.msk [vmem:[%s5 + $0x118] sm:$0xff] %vm513, %v1230
  %1295 = vst.msk [vmem:[%s5 + $0x120] sm:$0xff] %vm513, %v1231
  %1296 = vst.msk [vmem:[%s5 + $0x128] sm:$0xff] %vm513, %v1232
  %1297 = vst.msk [vmem:[%s5 + $0x130] sm:$0xff] %vm513, %v1233
  %1298 = vst.msk [vmem:[%s5 + $0x138] sm:$0xff] %vm513, %v1234
  %1299 = vst.msk [vmem:[%s5 + $0x140] sm:$0xff] %vm513, %v1235
  %1300 = vst.msk [vmem:[%s5 + $0x148] sm:$0xff] %vm513, %v1236
  %1301 = vst.msk [vmem:[%s5 + $0x150] sm:$0xff] %vm513, %v1237
  %1302 = vst.msk [vmem:[%s5 + $0x158] sm:$0xff] %vm513, %v1238
  %1303 = vst.msk [vmem:[%s5 + $0x160] sm:$0xff] %vm513, %v1239
  %1304 = vst.msk [vmem:[%s5 + $0x168] sm:$0xff] %vm513, %v1240
  %1305 = vst.msk [vmem:[%s5 + $0x170] sm:$0xff] %vm513, %v1241
  %1306 = vst.msk [vmem:[%s5 + $0x178] sm:$0xff] %vm513, %v1242
  %1307 = vst.msk [vmem:[%s5 + $0x180] sm:$0xff] %vm513, %v1243
  %1308 = vst.msk [vmem:[%s5 + $0x188] sm:$0xff] %vm513, %v1244
  %1309 = vst.msk [vmem:[%s5 + $0x190] sm:$0xff] %vm513, %v1245
  %1310 = vst.msk [vmem:[%s5 + $0x198] sm:$0xff] %vm513, %v1246
  %1311 = vst.msk [vmem:[%s5 + $0x1a0] sm:$0xff] %vm513, %v1247
  %1312 = vst.msk [vmem:[%s5 + $0x1a8] sm:$0xff] %vm513, %v1248
  %1313 = vst.msk [vmem:[%s5 + $0x1b0] sm:$0xff] %vm513, %v1249
  %1314 = vst.msk [vmem:[%s5 + $0x1b8] sm:$0xff] %vm513, %v1250
  %1315 = vst.msk [vmem:[%s5 + $0x1c0] sm:$0xff] %vm513, %v1251
  %1316 = vst.msk [vmem:[%s5 + $0x1c8] sm:$0xff] %vm513, %v1252
  %1317 = vst.msk [vmem:[%s5 + $0x1d0] sm:$0xff] %vm513, %v1253
  %1318 = vst.msk [vmem:[%s5 + $0x1d8] sm:$0xff] %vm513, %v1254
  %1319 = vst.msk [vmem:[%s5 + $0x1e0] sm:$0xff] %vm513, %v1255
  %1320 = vst.msk [vmem:[%s5 + $0x1e8] sm:$0xff] %vm513, %v1256
  %1321 = vst.msk [vmem:[%s5 + $0x1f0] sm:$0xff] %vm513, %v1257
  %1322 = vst.msk [vmem:[%s5 + $0x1f8] sm:$0xff] %vm513, %v1258
  // Predicated region
  $region22: #{discriminator_forward.6} parent=0 // pred_check
    _
  $region23: #{discriminator_forward.6} parent=0 // pred_check_branch
    %1324 = sbr.rel (0) target = $region25
  $region24: #{discriminator_forward.6} parent=0 // pred_region
    _
  $region25: #{discriminator_forward.6} parent=0 // pred_fallthru
    _
  // Predicated region
  $region26: #{discriminator_forward.6} parent=0 // pred_check
    _
  $region27: #{discriminator_forward.6} parent=0 // pred_check_branch
    %1326 = sbr.rel (0) target = $region29
  $region28: #{discriminator_forward.6} parent=0 // pred_region
    _
  $region29: #{discriminator_forward.6} parent=0 // pred_fallthru
    _

// kernel: discriminator_forward.7
$region0: #{discriminator_forward.7}
  #allocation0 [shape = 'u32[]', space=smem, size = 0x4, offset = 0x4, fixed_abs, tag = 'smem constant byte address 0x4 - core index']
  #allocation1 [shape = 'u32[72,128]{1,0:T(1,128)}', space=vmem, size = 0x9000, scoped, tag = 'internal scratch']
  %s0 = inlined_call_operand.vmem [shape: bf16[128,256], index: 0, kind: input, shape index: {}]
  %s1 = inlined_call_operand.vmem [shape: bf16[256,32], index: 1, kind: input, shape index: {}]
  %s2 = inlined_call_operand.vmem [shape: f32[1,32], index: 2, kind: input, shape index: {}]
  %s3 = inlined_call_operand.vmem [shape: f32[1,32], index: 3, kind: input, shape index: {}]
  %s4 = inlined_call_operand.vmem [shape: f32[1,32], index: 4, kind: input, shape index: {}]
  %s5 = inlined_call_operand.vmem [shape: f32[128,32], index: 5, kind: output, shape index: {}]
  %s6 = sld [smem:[#allocation0]]
  $region30: #{discriminator_forward.7} parent=0
    _
  %s8 = ssub.s32 1, %s6
  %s9 = scalar_select 0, %s8, %s6
  // Predicated region
  $region2: #{discriminator_forward.7} parent=0 // pred_check
    _
  $region3: #{discriminator_forward.7} parent=0 // pred_check_branch
    %11 = sbr.rel (0) target = $region5
  $region4: #{discriminator_forward.7} parent=0 // pred_region
    _
  $region5: #{discriminator_forward.7} parent=0 // pred_fallthru
    _
  // Predicated region
  $region6: #{discriminator_forward.7} parent=0 // pred_check
    _
  $region7: #{discriminator_forward.7} parent=0 // pred_check_branch
    %13 = sbr.rel (0) target = $region9
  $region8: #{discriminator_forward.7} parent=0 // pred_region
    _
  $region9: #{discriminator_forward.7} parent=0 // pred_fallthru
    _
  // Predicated region
  $region10: #{discriminator_forward.7} parent=0 // pred_check
    _
  $region11: #{discriminator_forward.7} parent=0 // pred_check_branch
    %15 = sbr.rel (0) target = $region13
  $region12: #{discriminator_forward.7} parent=0 // pred_region
    _
  $region13: #{discriminator_forward.7} parent=0 // pred_fallthru
    _
  // Predicated region
  $region14: #{discriminator_forward.7} parent=0 // pred_check
    _
  $region15: #{discriminator_forward.7} parent=0 // pred_check_branch
    %17 = sbr.rel (0) target = $region17
  $region16: #{discriminator_forward.7} parent=0 // pred_region
    _
  $region17: #{discriminator_forward.7} parent=0 // pred_fallthru
    _
  // Predicated region
  $region18: #{discriminator_forward.7} parent=0 // pred_check
    _
  $region19: #{discriminator_forward.7} parent=0 // pred_check_branch
    %19 = sbr.rel (0) target = $region21
  $region20: #{discriminator_forward.7} parent=0 // pred_region
    _
  $region21: #{discriminator_forward.7} parent=0 // pred_fallthru
    _
  %v20 = vld [vmem:[%s0] sm:$0xff]
  %v21 = vld [vmem:[%s0 + $0x8] sm:$0xff]
  %v22 = vld [vmem:[%s0 + $0x10] sm:$0xff]
  %v23 = vld [vmem:[%s0 + $0x18] sm:$0xff]
  %v24 = vld [vmem:[%s0 + $0x20] sm:$0xff]
  %v25 = vld [vmem:[%s0 + $0x28] sm:$0xff]
  %v26 = vld [vmem:[%s0 + $0x30] sm:$0xff]
  %v27 = vld [vmem:[%s0 + $0x38] sm:$0xff]
  %v28 = vld [vmem:[%s0 + $0x40] sm:$0xff]
  %v29 = vld [vmem:[%s0 + $0x48] sm:$0xff]
  %v30 = vld [vmem:[%s0 + $0x50] sm:$0xff]
  %v31 = vld [vmem:[%s0 + $0x58] sm:$0xff]
  %v32 = vld [vmem:[%s0 + $0x60] sm:$0xff]
  %v33 = vld [vmem:[%s0 + $0x68] sm:$0xff]
  %v34 = vld [vmem:[%s0 + $0x70] sm:$0xff]
  %v35 = vld [vmem:[%s0 + $0x78] sm:$0xff]
  %v36 = vld [vmem:[%s1] sm:$0xf]
  %v37 = vld [vmem:[%s1 + $0x4] sm:$0xf]
  %v38 = vld [vmem:[%s1 + $0x8] sm:$0xf]
  %v39 = vld [vmem:[%s1 + $0xc] sm:$0xf]
  %v40 = vld [vmem:[%s1 + $0x10] sm:$0xf]
  %v41 = vld [vmem:[%s1 + $0x14] sm:$0xf]
  %v42 = vld [vmem:[%s1 + $0x18] sm:$0xf]
  %v43 = vld [vmem:[%s1 + $0x1c] sm:$0xf]
  %v44 = vld [vmem:[%s1 + $0x20] sm:$0xf]
  %v45 = vld [vmem:[%s1 + $0x24] sm:$0xf]
  %v46 = vld [vmem:[%s1 + $0x28] sm:$0xf]
  %v47 = vld [vmem:[%s1 + $0x2c] sm:$0xf]
  %v48 = vld [vmem:[%s1 + $0x30] sm:$0xf]
  %v49 = vld [vmem:[%s1 + $0x34] sm:$0xf]
  %v50 = vld [vmem:[%s1 + $0x38] sm:$0xf]
  %v51 = vld [vmem:[%s1 + $0x3c] sm:$0xf]
  %v52 = vld [vmem:[%s1 + $0x40] sm:$0xf]
  %v53 = vld [vmem:[%s1 + $0x44] sm:$0xf]
  %v54 = vld [vmem:[%s1 + $0x48] sm:$0xf]
  %v55 = vld [vmem:[%s1 + $0x4c] sm:$0xf]
  %v56 = vld [vmem:[%s1 + $0x50] sm:$0xf]
  %v57 = vld [vmem:[%s1 + $0x54] sm:$0xf]
  %v58 = vld [vmem:[%s1 + $0x58] sm:$0xf]
  %v59 = vld [vmem:[%s1 + $0x5c] sm:$0xf]
  %v60 = vld [vmem:[%s1 + $0x60] sm:$0xf]
  %v61 = vld [vmem:[%s1 + $0x64] sm:$0xf]
  %v62 = vld [vmem:[%s1 + $0x68] sm:$0xf]
  %v63 = vld [vmem:[%s1 + $0x6c] sm:$0xf]
  %v64 = vld [vmem:[%s1 + $0x70] sm:$0xf]
  %v65 = vld [vmem:[%s1 + $0x74] sm:$0xf]
  %v66 = vld [vmem:[%s1 + $0x78] sm:$0xf]
  %v67 = vld [vmem:[%s1 + $0x7c] sm:$0xf]
  %v68 = vld [vmem:[%s2] sm:$0x1]
  %v70 = vperm.slane %v68, 0
  %v88 = vunpack.c.l.b16 %v20
  %v89 = vunpack.c.h.b16 %v20
  %v90 = vunpack.c.l.b16 %v21
  %v91 = vunpack.c.h.b16 %v21
  %v92 = vunpack.c.l.b16 %v22
  %v93 = vunpack.c.h.b16 %v22
  %v94 = vunpack.c.l.b16 %v23
  %v95 = vunpack.c.h.b16 %v23
  %v96 = vunpack.c.l.b16 %v24
  %v97 = vunpack.c.h.b16 %v24
  %v98 = vunpack.c.l.b16 %v25
  %v99 = vunpack.c.h.b16 %v25
  %v100 = vunpack.c.l.b16 %v26
  %v101 = vunpack.c.h.b16 %v26
  %v102 = vunpack.c.l.b16 %v27
  %v103 = vunpack.c.h.b16 %v27
  %v104 = vunpack.c.l.b16 %v28
  %v105 = vunpack.c.h.b16 %v28
  %v106 = vunpack.c.l.b16 %v29
  %v107 = vunpack.c.h.b16 %v29
  %v108 = vunpack.c.l.b16 %v30
  %v109 = vunpack.c.h.b16 %v30
  %v110 = vunpack.c.l.b16 %v31
  %v111 = vunpack.c.h.b16 %v31
  %v112 = vunpack.c.l.b16 %v32
  %v113 = vunpack.c.h.b16 %v32
  %v114 = vunpack.c.l.b16 %v33
  %v115 = vunpack.c.h.b16 %v33
  %v116 = vunpack.c.l.b16 %v34
  %v117 = vunpack.c.h.b16 %v34
  %v118 = vunpack.c.l.b16 %v35
  %v119 = vunpack.c.h.b16 %v35
  %v120 = vpack.c.b16 %v90, %v88
  %v121 = vpack.c.b16 %v91, %v89
  %v122 = vpack.c.b16 %v94, %v92
  %v123 = vpack.c.b16 %v95, %v93
  %v124 = vpack.c.b16 %v98, %v96
  %v125 = vpack.c.b16 %v99, %v97
  %v126 = vpack.c.b16 %v102, %v100
  %v127 = vpack.c.b16 %v103, %v101
  %v128 = vpack.c.b16 %v106, %v104
  %v129 = vpack.c.b16 %v107, %v105
  %v130 = vpack.c.b16 %v110, %v108
  %v131 = vpack.c.b16 %v111, %v109
  %v132 = vpack.c.b16 %v114, %v112
  %v133 = vpack.c.b16 %v115, %v113
  %v134 = vpack.c.b16 %v118, %v116
  %v135 = vpack.c.b16 %v119, %v117
  %v184 = vunpack.c.l.b16 %v36
  %v185 = vunpack.c.l.b16 %v37
  %v186 = vunpack.c.l.b16 %v38
  %v187 = vunpack.c.l.b16 %v39
  %v188 = vunpack.c.l.b16 %v40
  %v189 = vunpack.c.l.b16 %v41
  %v190 = vunpack.c.l.b16 %v42
  %v191 = vunpack.c.l.b16 %v43
  %v192 = vunpack.c.l.b16 %v44
  %v193 = vunpack.c.l.b16 %v45
  %v194 = vunpack.c.l.b16 %v46
  %v195 = vunpack.c.l.b16 %v47
  %v196 = vunpack.c.l.b16 %v48
  %v197 = vunpack.c.l.b16 %v49
  %v198 = vunpack.c.l.b16 %v50
  %v199 = vunpack.c.l.b16 %v51
  %v200 = vunpack.c.l.b16 %v52
  %v201 = vunpack.c.l.b16 %v53
  %v202 = vunpack.c.l.b16 %v54
  %v203 = vunpack.c.l.b16 %v55
  %v204 = vunpack.c.l.b16 %v56
  %v205 = vunpack.c.l.b16 %v57
  %v206 = vunpack.c.l.b16 %v58
  %v207 = vunpack.c.l.b16 %v59
  %v208 = vunpack.c.l.b16 %v60
  %v209 = vunpack.c.l.b16 %v61
  %v210 = vunpack.c.l.b16 %v62
  %v211 = vunpack.c.l.b16 %v63
  %v212 = vunpack.c.l.b16 %v64
  %v213 = vunpack.c.l.b16 %v65
  %v214 = vunpack.c.l.b16 %v66
  %v215 = vunpack.c.l.b16 %v67
  %v216 = vpack.c.b16 %v185, %v184
  %v217 = vpack.c.b16 %v187, %v186
  %v218 = vpack.c.b16 %v189, %v188
  %v219 = vpack.c.b16 %v191, %v190
  %v220 = vpack.c.b16 %v193, %v192
  %v221 = vpack.c.b16 %v195, %v194
  %v222 = vpack.c.b16 %v197, %v196
  %v223 = vpack.c.b16 %v199, %v198
  %v224 = vpack.c.b16 %v201, %v200
  %v225 = vpack.c.b16 %v203, %v202
  %v226 = vpack.c.b16 %v205, %v204
  %v227 = vpack.c.b16 %v207, %v206
  %v228 = vpack.c.b16 %v209, %v208
  %v229 = vpack.c.b16 %v211, %v210
  %v230 = vpack.c.b16 %v213, %v212
  %v231 = vpack.c.b16 %v215, %v214
  %248 = vmatpush.bf16.msra.mxu0 %v223
  %249 = vmatpush.bf16.msra.mxu0 %v222
  %250 = vmatpush.bf16.msra.mxu0 %v221
  %251 = vmatpush.bf16.msra.mxu0 %v220
  %252 = vmatpush.bf16.msra.mxu0 %v219
  %253 = vmatpush.bf16.msra.mxu0 %v218
  %254 = vmatpush.bf16.msra.mxu0 %v217
  %255 = vmatpush.bf16.msra.mxu0 %v216
  %256 = vmatmul.bf16.gmra.mxu0 %v120
  %v257 = vpop.f32.mrf.mxu0
  %v258 = vadd.f32 %v70, %v257
  %v259 = vpop.f32.mrf.mxu0
  %v260 = vadd.f32 %v70, %v259
  %261 = vmatmul.bf16.gmra.mxu0 %v122
  %v262 = vpop.f32.mrf.mxu0
  %v263 = vadd.f32 %v70, %v262
  %v264 = vpop.f32.mrf.mxu0
  %v265 = vadd.f32 %v70, %v264
  %266 = vmatmul.bf16.gmra.mxu0 %v124
  %v267 = vpop.f32.mrf.mxu0
  %v268 = vadd.f32 %v70, %v267
  %v269 = vpop.f32.mrf.mxu0
  %v270 = vadd.f32 %v70, %v269
  %271 = vmatmul.bf16.gmra.mxu0 %v126
  %v272 = vpop.f32.mrf.mxu0
  %v273 = vadd.f32 %v70, %v272
  %v274 = vpop.f32.mrf.mxu0
  %v275 = vadd.f32 %v70, %v274
  %276 = vmatmul.bf16.gmra.mxu0 %v128
  %v277 = vpop.f32.mrf.mxu0
  %v278 = vadd.f32 %v70, %v277
  %v279 = vpop.f32.mrf.mxu0
  %v280 = vadd.f32 %v70, %v279
  %281 = vmatmul.bf16.gmra.mxu0 %v130
  %v282 = vpop.f32.mrf.mxu0
  %v283 = vadd.f32 %v70, %v282
  %v284 = vpop.f32.mrf.mxu0
  %v285 = vadd.f32 %v70, %v284
  %286 = vmatmul.bf16.gmra.mxu0 %v132
  %v287 = vpop.f32.mrf.mxu0
  %v288 = vadd.f32 %v70, %v287
  %v289 = vpop.f32.mrf.mxu0
  %v290 = vadd.f32 %v70, %v289
  %291 = vmatmul.bf16.gmra.mxu0 %v134
  %v292 = vpop.f32.mrf.mxu0
  %v293 = vadd.f32 %v70, %v292
  %v294 = vpop.f32.mrf.mxu0
  %v295 = vadd.f32 %v70, %v294
  %296 = vdwg.mxu0
  %297 = vmatpush.bf16.msra.mxu0 %v231
  %298 = vmatpush.bf16.msra.mxu0 %v230
  %299 = vmatpush.bf16.msra.mxu0 %v229
  %300 = vmatpush.bf16.msra.mxu0 %v228
  %301 = vmatpush.bf16.msra.mxu0 %v227
  %302 = vmatpush.bf16.msra.mxu0 %v226
  %303 = vmatpush.bf16.msra.mxu0 %v225
  %304 = vmatpush.bf16.msra.mxu0 %v224
  %305 = vmatmul.bf16.gmra.mxu0 %v121
  %v306 = vpop.f32.mrf.mxu0
  %v307 = vadd.f32 %v258, %v306
  %v308 = vpop.f32.mrf.mxu0
  %v309 = vadd.f32 %v260, %v308
  %310 = vmatmul.bf16.gmra.mxu0 %v123
  %v311 = vpop.f32.mrf.mxu0
  %v312 = vadd.f32 %v263, %v311
  %v313 = vpop.f32.mrf.mxu0
  %v314 = vadd.f32 %v265, %v313
  %315 = vmatmul.bf16.gmra.mxu0 %v125
  %v316 = vpop.f32.mrf.mxu0
  %v317 = vadd.f32 %v268, %v316
  %v318 = vpop.f32.mrf.mxu0
  %v319 = vadd.f32 %v270, %v318
  %320 = vmatmul.bf16.gmra.mxu0 %v127
  %v321 = vpop.f32.mrf.mxu0
  %v322 = vadd.f32 %v273, %v321
  %v323 = vpop.f32.mrf.mxu0
  %v324 = vadd.f32 %v275, %v323
  %325 = vmatmul.bf16.gmra.mxu0 %v129
  %v326 = vpop.f32.mrf.mxu0
  %v327 = vadd.f32 %v278, %v326
  %v328 = vpop.f32.mrf.mxu0
  %v329 = vadd.f32 %v280, %v328
  %330 = vmatmul.bf16.gmra.mxu0 %v131
  %v331 = vpop.f32.mrf.mxu0
  %v332 = vadd.f32 %v283, %v331
  %v333 = vpop.f32.mrf.mxu0
  %v334 = vadd.f32 %v285, %v333
  %335 = vmatmul.bf16.gmra.mxu0 %v133
  %v336 = vpop.f32.mrf.mxu0
  %v337 = vadd.f32 %v288, %v336
  %v338 = vpop.f32.mrf.mxu0
  %v339 = vadd.f32 %v290, %v338
  %340 = vmatmul.bf16.gmra.mxu0 %v135
  %v341 = vpop.f32.mrf.mxu0
  %v342 = vadd.f32 %v293, %v341
  %v343 = vpop.f32.mrf.mxu0
  %v344 = vadd.f32 %v295, %v343
  %345 = vdwg.mxu0
  %vm346 = vcmask 261120
  %v347 = vsel %vm346, %v307, 0.0
  %v348 = vsel %vm346, %v309, 0.0
  %v349 = vadd.f32 %v347, %v348
  %v350 = vsel %vm346, %v312, 0.0
  %v351 = vadd.f32 %v349, %v350
  %v352 = vsel %vm346, %v314, 0.0
  %v353 = vadd.f32 %v351, %v352
  %v354 = vsel %vm346, %v317, 0.0
  %v355 = vadd.f32 %v353, %v354
  %v356 = vsel %vm346, %v319, 0.0
  %v357 = vadd.f32 %v355, %v356
  %v358 = vsel %vm346, %v322, 0.0
  %v359 = vadd.f32 %v357, %v358
  %v360 = vsel %vm346, %v324, 0.0
  %v361 = vadd.f32 %v359, %v360
  %v362 = vsel %vm346, %v327, 0.0
  %v363 = vadd.f32 %v361, %v362
  %v364 = vsel %vm346, %v329, 0.0
  %v365 = vadd.f32 %v363, %v364
  %v366 = vsel %vm346, %v332, 0.0
  %v367 = vadd.f32 %v365, %v366
  %v368 = vsel %vm346, %v334, 0.0
  %v369 = vadd.f32 %v367, %v368
  %v370 = vsel %vm346, %v337, 0.0
  %v371 = vadd.f32 %v369, %v370
  %v372 = vsel %vm346, %v339, 0.0
  %v373 = vadd.f32 %v371, %v372
  %v374 = vsel %vm346, %v342, 0.0
  %v375 = vadd.f32 %v373, %v374
  %v376 = vsel %vm346, %v344, 0.0
  %v377 = vadd.f32 %v375, %v376
  %v378 = vrot.slane %v377, 4
  %v379 = vadd.f32 %v377, %v378
  %v380 = vrot.slane %v379, 2
  %v381 = vadd.f32 %v379, %v380
  %v382 = vrot.slane %v381, 1
  %v383 = vadd.f32 %v381, %v382
  %v384 = vrcp.pop 128.0
  %v385 = vmul.f32 128.0, %v384
  %v386 = vsub.f32 1.0, %v385
  %v387 = vmul.f32 %v384, %v386
  %v388 = vadd.f32 %v384, %v387
  %vm389 = vweird.f32 %v384
  %v390 = vsel %vm389, %v384, %v388
  %v391 = vmul.f32 %v383, %v390
  %v392 = vsub.f32 %v307, %v391
  %v393 = vsub.f32 %v309, %v391
  %v394 = vsub.f32 %v312, %v391
  %v395 = vsub.f32 %v314, %v391
  %v396 = vsub.f32 %v317, %v391
  %v397 = vsub.f32 %v319, %v391
  %v398 = vsub.f32 %v322, %v391
  %v399 = vsub.f32 %v324, %v391
  %v400 = vsub.f32 %v327, %v391
  %v401 = vsub.f32 %v329, %v391
  %v402 = vsub.f32 %v332, %v391
  %v403 = vsub.f32 %v334, %v391
  %v404 = vsub.f32 %v337, %v391
  %v405 = vsub.f32 %v339, %v391
  %v406 = vsub.f32 %v342, %v391
  %v407 = vsub.f32 %v344, %v391
  %v408 = vmul.f32 %v392, %v392
  %v409 = vmul.f32 %v393, %v393
  %v410 = vmul.f32 %v394, %v394
  %v411 = vmul.f32 %v395, %v395
  %v412 = vmul.f32 %v396, %v396
  %v413 = vmul.f32 %v397, %v397
  %v414 = vmul.f32 %v398, %v398
  %v415 = vmul.f32 %v399, %v399
  %v416 = vmul.f32 %v400, %v400
  %v417 = vmul.f32 %v401, %v401
  %v418 = vmul.f32 %v402, %v402
  %v419 = vmul.f32 %v403, %v403
  %v420 = vmul.f32 %v404, %v404
  %v421 = vmul.f32 %v405, %v405
  %v422 = vmul.f32 %v406, %v406
  %v423 = vmul.f32 %v407, %v407
  %v424 = vsel %vm346, %v408, 0.0
  %v425 = vsel %vm346, %v409, 0.0
  %v426 = vadd.f32 %v424, %v425
  %v427 = vsel %vm346, %v410, 0.0
  %v428 = vadd.f32 %v426, %v427
  %v429 = vsel %vm346, %v411, 0.0
  %v430 = vadd.f32 %v428, %v429
  %v431 = vsel %vm346, %v412, 0.0
  %v432 = vadd.f32 %v430, %v431
  %v433 = vsel %vm346, %v413, 0.0
  %v434 = vadd.f32 %v432, %v433
  %v435 = vsel %vm346, %v414, 0.0
  %v436 = vadd.f32 %v434, %v435
  %v437 = vsel %vm346, %v415, 0.0
  %v438 = vadd.f32 %v436, %v437
  %v439 = vsel %vm346, %v416, 0.0
  %v440 = vadd.f32 %v438, %v439
  %v441 = vsel %vm346, %v417, 0.0
  %v442 = vadd.f32 %v440, %v441
  %v443 = vsel %vm346, %v418, 0.0
  %v444 = vadd.f32 %v442, %v443
  %v445 = vsel %vm346, %v419, 0.0
  %v446 = vadd.f32 %v444, %v445
  %v447 = vsel %vm346, %v420, 0.0
  %v448 = vadd.f32 %v446, %v447
  %v449 = vsel %vm346, %v421, 0.0
  %v450 = vadd.f32 %v448, %v449
  %v451 = vsel %vm346, %v422, 0.0
  %v452 = vadd.f32 %v450, %v451
  %v453 = vsel %vm346, %v423, 0.0
  %v454 = vadd.f32 %v452, %v453
  %v455 = vrot.slane %v454, 4
  %v456 = vadd.f32 %v454, %v455
  %v457 = vrot.slane %v456, 2
  %v458 = vadd.f32 %v456, %v457
  %v459 = vrot.slane %v458, 1
  %v460 = vadd.f32 %v458, %v459
  %v461 = vmul.f32 %v460, %v390
  %v462 = vld [vmem:[%s3] sm:$0x1]
  %v463 = vadd.f32 %v461, 1e-05
  %v464 = vrsqrt.pop %v463
  %v465 = vmul.f32 %v464, %v463
  %v466 = vmul.f32 %v465, %v464
  %v467 = vmul.f32 0.5, %v466
  %v468 = vsub.f32 1.5, %v467
  %v469 = vmul.f32 %v464, %v468
  %vm470 = vweird.f32 %v463
  %vm471 = vweird.f32 %v464
  %vm472 = vmor %vm470, %vm471
  %v473 = vsel %vm472, %v464, %v469
  %v474 = vmul.f32 %v462, %v473
  %v475 = vld [vmem:[%s4] sm:$0x1]
  %v476 = vmul.f32 %v391, %v474
  %v477 = vsub.f32 %v475, %v476
  %v479 = vperm.slane %v474, 0
  %v481 = vmul.f32 %v307, %v479
  %v482 = vmul.f32 %v309, %v479
  %v483 = vmul.f32 %v312, %v479
  %v484 = vmul.f32 %v314, %v479
  %v485 = vmul.f32 %v317, %v479
  %v486 = vmul.f32 %v319, %v479
  %v487 = vmul.f32 %v322, %v479
  %v488 = vmul.f32 %v324, %v479
  %v489 = vmul.f32 %v327, %v479
  %v490 = vmul.f32 %v329, %v479
  %v491 = vmul.f32 %v332, %v479
  %v492 = vmul.f32 %v334, %v479
  %v493 = vmul.f32 %v337, %v479
  %v494 = vmul.f32 %v339, %v479
  %v495 = vmul.f32 %v342, %v479
  %v496 = vmul.f32 %v344, %v479
  %v498 = vperm.slane %v477, 0
  %v500 = vadd.f32 %v481, %v498
  %v501 = vadd.f32 %v482, %v498
  %v502 = vadd.f32 %v483, %v498
  %v503 = vadd.f32 %v484, %v498
  %v504 = vadd.f32 %v485, %v498
  %v505 = vadd.f32 %v486, %v498
  %v506 = vadd.f32 %v487, %v498
  %v507 = vadd.f32 %v488, %v498
  %v508 = vadd.f32 %v489, %v498
  %v509 = vadd.f32 %v490, %v498
  %v510 = vadd.f32 %v491, %v498
  %v511 = vadd.f32 %v492, %v498
  %v512 = vadd.f32 %v493, %v498
  %v513 = vadd.f32 %v494, %v498
  %v514 = vadd.f32 %v495, %v498
  %v515 = vadd.f32 %v496, %v498
  %vm516 = vcmp.ge.f32.partialorder %v500, 0.0
  %vm517 = vcmp.ge.f32.partialorder %v501, 0.0
  %vm518 = vcmp.ge.f32.partialorder %v502, 0.0
  %vm519 = vcmp.ge.f32.partialorder %v503, 0.0
  %vm520 = vcmp.ge.f32.partialorder %v504, 0.0
  %vm521 = vcmp.ge.f32.partialorder %v505, 0.0
  %vm522 = vcmp.ge.f32.partialorder %v506, 0.0
  %vm523 = vcmp.ge.f32.partialorder %v507, 0.0
  %vm524 = vcmp.ge.f32.partialorder %v508, 0.0
  %vm525 = vcmp.ge.f32.partialorder %v509, 0.0
  %vm526 = vcmp.ge.f32.partialorder %v510, 0.0
  %vm527 = vcmp.ge.f32.partialorder %v511, 0.0
  %vm528 = vcmp.ge.f32.partialorder %v512, 0.0
  %vm529 = vcmp.ge.f32.partialorder %v513, 0.0
  %vm530 = vcmp.ge.f32.partialorder %v514, 0.0
  %vm531 = vcmp.ge.f32.partialorder %v515, 0.0
  %v532 = vmul.f32 %v500, 0.01
  %v533 = vmul.f32 %v501, 0.01
  %v534 = vmul.f32 %v502, 0.01
  %v535 = vmul.f32 %v503, 0.01
  %v536 = vmul.f32 %v504, 0.01
  %v537 = vmul.f32 %v505, 0.01
  %v538 = vmul.f32 %v506, 0.01
  %v539 = vmul.f32 %v507, 0.01
  %v540 = vmul.f32 %v508, 0.01
  %v541 = vmul.f32 %v509, 0.01
  %v542 = vmul.f32 %v510, 0.01
  %v543 = vmul.f32 %v511, 0.01
  %v544 = vmul.f32 %v512, 0.01
  %v545 = vmul.f32 %v513, 0.01
  %v546 = vmul.f32 %v514, 0.01
  %v547 = vmul.f32 %v515, 0.01
  %v548 = vsel %vm516, %v500, %v532
  %v549 = vsel %vm517, %v501, %v533
  %v550 = vsel %vm518, %v502, %v534
  %v551 = vsel %vm519, %v503, %v535
  %v552 = vsel %vm520, %v504, %v536
  %v553 = vsel %vm521, %v505, %v537
  %v554 = vsel %vm522, %v506, %v538
  %v555 = vsel %vm523, %v507, %v539
  %v556 = vsel %vm524, %v508, %v540
  %v557 = vsel %vm525, %v509, %v541
  %v558 = vsel %vm526, %v510, %v542
  %v559 = vsel %vm527, %v511, %v543
  %v560 = vsel %vm528, %v512, %v544
  %v561 = vsel %vm529, %v513, %v545
  %v562 = vsel %vm530, %v514, %v546
  %v563 = vsel %vm531, %v515, %v547
  %564 = vst.msk [vmem:[%s5] sm:$0xff] %vm346, %v548
  %565 = vst.msk [vmem:[%s5 + $0x8] sm:$0xff] %vm346, %v549
  %566 = vst.msk [vmem:[%s5 + $0x10] sm:$0xff] %vm346, %v550
  %567 = vst.msk [vmem:[%s5 + $0x18] sm:$0xff] %vm346, %v551
  %568 = vst.msk [vmem:[%s5 + $0x20] sm:$0xff] %vm346, %v552
  %569 = vst.msk [vmem:[%s5 + $0x28] sm:$0xff] %vm346, %v553
  %570 = vst.msk [vmem:[%s5 + $0x30] sm:$0xff] %vm346, %v554
  %571 = vst.msk [vmem:[%s5 + $0x38] sm:$0xff] %vm346, %v555
  %572 = vst.msk [vmem:[%s5 + $0x40] sm:$0xff] %vm346, %v556
  %573 = vst.msk [vmem:[%s5 + $0x48] sm:$0xff] %vm346, %v557
  %574 = vst.msk [vmem:[%s5 + $0x50] sm:$0xff] %vm346, %v558
  %575 = vst.msk [vmem:[%s5 + $0x58] sm:$0xff] %vm346, %v559
  %576 = vst.msk [vmem:[%s5 + $0x60] sm:$0xff] %vm346, %v560
  %577 = vst.msk [vmem:[%s5 + $0x68] sm:$0xff] %vm346, %v561
  %578 = vst.msk [vmem:[%s5 + $0x70] sm:$0xff] %vm346, %v562
  %579 = vst.msk [vmem:[%s5 + $0x78] sm:$0xff] %vm346, %v563
  // Predicated region
  $region22: #{discriminator_forward.7} parent=0 // pred_check
    _
  $region23: #{discriminator_forward.7} parent=0 // pred_check_branch
    %581 = sbr.rel (0) target = $region25
  $region24: #{discriminator_forward.7} parent=0 // pred_region
    _
  $region25: #{discriminator_forward.7} parent=0 // pred_fallthru
    _
  // Predicated region
  $region26: #{discriminator_forward.7} parent=0 // pred_check
    _
  $region27: #{discriminator_forward.7} parent=0 // pred_check_branch
    %583 = sbr.rel (0) target = $region29
  $region28: #{discriminator_forward.7} parent=0 // pred_region
    _
  $region29: #{discriminator_forward.7} parent=0 // pred_fallthru
    _

// kernel: discriminator_forward.8
$region0: #{discriminator_forward.8}
  #allocation0 [shape = 'u32[]', space=smem, size = 0x4, offset = 0x4, fixed_abs, tag = 'smem constant byte address 0x4 - core index']
  #allocation1 [shape = 'u32[72,128]{1,0:T(1,128)}', space=vmem, size = 0x9000, scoped, tag = 'internal scratch']
  %s0 = inlined_call_operand.vmem [shape: bf16[32,512], index: 0, kind: input, shape index: {}]
  %s1 = inlined_call_operand.vmem [shape: bf16[512,64], index: 1, kind: input, shape index: {}]
  %s2 = inlined_call_operand.vmem [shape: f32[1,64], index: 2, kind: input, shape index: {}]
  %s3 = inlined_call_operand.vmem [shape: f32[1,64], index: 3, kind: input, shape index: {}]
  %s4 = inlined_call_operand.vmem [shape: f32[1,64], index: 4, kind: input, shape index: {}]
  %s5 = inlined_call_operand.vmem [shape: f32[32,64], index: 5, kind: output, shape index: {}]
  %s6 = sld [smem:[#allocation0]]
  $region30: #{discriminator_forward.8} parent=0
    _
  %s8 = ssub.s32 1, %s6
  %s9 = scalar_select 0, %s8, %s6
  // Predicated region
  $region2: #{discriminator_forward.8} parent=0 // pred_check
    _
  $region3: #{discriminator_forward.8} parent=0 // pred_check_branch
    %11 = sbr.rel (0) target = $region5
  $region4: #{discriminator_forward.8} parent=0 // pred_region
    _
  $region5: #{discriminator_forward.8} parent=0 // pred_fallthru
    _
  // Predicated region
  $region6: #{discriminator_forward.8} parent=0 // pred_check
    _
  $region7: #{discriminator_forward.8} parent=0 // pred_check_branch
    %13 = sbr.rel (0) target = $region9
  $region8: #{discriminator_forward.8} parent=0 // pred_region
    _
  $region9: #{discriminator_forward.8} parent=0 // pred_fallthru
    _
  // Predicated region
  $region10: #{discriminator_forward.8} parent=0 // pred_check
    _
  $region11: #{discriminator_forward.8} parent=0 // pred_check_branch
    %15 = sbr.rel (0) target = $region13
  $region12: #{discriminator_forward.8} parent=0 // pred_region
    _
  $region13: #{discriminator_forward.8} parent=0 // pred_fallthru
    _
  // Predicated region
  $region14: #{discriminator_forward.8} parent=0 // pred_check
    _
  $region15: #{discriminator_forward.8} parent=0 // pred_check_branch
    %17 = sbr.rel (0) target = $region17
  $region16: #{discriminator_forward.8} parent=0 // pred_region
    _
  $region17: #{discriminator_forward.8} parent=0 // pred_fallthru
    _
  // Predicated region
  $region18: #{discriminator_forward.8} parent=0 // pred_check
    _
  $region19: #{discriminator_forward.8} parent=0 // pred_check_branch
    %19 = sbr.rel (0) target = $region21
  $region20: #{discriminator_forward.8} parent=0 // pred_region
    _
  $region21: #{discriminator_forward.8} parent=0 // pred_fallthru
    _
  %v20 = vld [vmem:[%s0] sm:$0xff]
  %v21 = vld [vmem:[%s0 + $0x8] sm:$0xff]
  %v22 = vld [vmem:[%s0 + $0x10] sm:$0xff]
  %v23 = vld [vmem:[%s0 + $0x18] sm:$0xff]
  %v24 = vld [vmem:[%s0 + $0x20] sm:$0xff]
  %v25 = vld [vmem:[%s0 + $0x28] sm:$0xff]
  %v26 = vld [vmem:[%s0 + $0x30] sm:$0xff]
  %v27 = vld [vmem:[%s0 + $0x38] sm:$0xff]
  %v28 = vld [vmem:[%s1] sm:$0xf]
  %v29 = vld [vmem:[%s1 + $0x4] sm:$0xf]
  %v30 = vld [vmem:[%s1 + $0x8] sm:$0xf]
  %v31 = vld [vmem:[%s1 + $0xc] sm:$0xf]
  %v32 = vld [vmem:[%s1 + $0x10] sm:$0xf]
  %v33 = vld [vmem:[%s1 + $0x14] sm:$0xf]
  %v34 = vld [vmem:[%s1 + $0x18] sm:$0xf]
  %v35 = vld [vmem:[%s1 + $0x1c] sm:$0xf]
  %v36 = vld [vmem:[%s1 + $0x20] sm:$0xf]
  %v37 = vld [vmem:[%s1 + $0x24] sm:$0xf]
  %v38 = vld [vmem:[%s1 + $0x28] sm:$0xf]
  %v39 = vld [vmem:[%s1 + $0x2c] sm:$0xf]
  %v40 = vld [vmem:[%s1 + $0x30] sm:$0xf]
  %v41 = vld [vmem:[%s1 + $0x34] sm:$0xf]
  %v42 = vld [vmem:[%s1 + $0x38] sm:$0xf]
  %v43 = vld [vmem:[%s1 + $0x3c] sm:$0xf]
  %v44 = vld [vmem:[%s1 + $0x40] sm:$0xf]
  %v45 = vld [vmem:[%s1 + $0x44] sm:$0xf]
  %v46 = vld [vmem:[%s1 + $0x48] sm:$0xf]
  %v47 = vld [vmem:[%s1 + $0x4c] sm:$0xf]
  %v48 = vld [vmem:[%s1 + $0x50] sm:$0xf]
  %v49 = vld [vmem:[%s1 + $0x54] sm:$0xf]
  %v50 = vld [vmem:[%s1 + $0x58] sm:$0xf]
  %v51 = vld [vmem:[%s1 + $0x5c] sm:$0xf]
  %v52 = vld [vmem:[%s1 + $0x60] sm:$0xf]
  %v53 = vld [vmem:[%s1 + $0x64] sm:$0xf]
  %v54 = vld [vmem:[%s1 + $0x68] sm:$0xf]
  %v55 = vld [vmem:[%s1 + $0x6c] sm:$0xf]
  %v56 = vld [vmem:[%s1 + $0x70] sm:$0xf]
  %v57 = vld [vmem:[%s1 + $0x74] sm:$0xf]
  %v58 = vld [vmem:[%s1 + $0x78] sm:$0xf]
  %v59 = vld [vmem:[%s1 + $0x7c] sm:$0xf]
  %v60 = vld [vmem:[%s1 + $0x80] sm:$0xf]
  %v61 = vld [vmem:[%s1 + $0x84] sm:$0xf]
  %v62 = vld [vmem:[%s1 + $0x88] sm:$0xf]
  %v63 = vld [vmem:[%s1 + $0x8c] sm:$0xf]
  %v64 = vld [vmem:[%s1 + $0x90] sm:$0xf]
  %v65 = vld [vmem:[%s1 + $0x94] sm:$0xf]
  %v66 = vld [vmem:[%s1 + $0x98] sm:$0xf]
  %v67 = vld [vmem:[%s1 + $0x9c] sm:$0xf]
  %v68 = vld [vmem:[%s1 + $0xa0] sm:$0xf]
  %v69 = vld [vmem:[%s1 + $0xa4] sm:$0xf]
  %v70 = vld [vmem:[%s1 + $0xa8] sm:$0xf]
  %v71 = vld [vmem:[%s1 + $0xac] sm:$0xf]
  %v72 = vld [vmem:[%s1 + $0xb0] sm:$0xf]
  %v73 = vld [vmem:[%s1 + $0xb4] sm:$0xf]
  %v74 = vld [vmem:[%s1 + $0xb8] sm:$0xf]
  %v75 = vld [vmem:[%s1 + $0xbc] sm:$0xf]
  %v76 = vld [vmem:[%s1 + $0xc0] sm:$0xf]
  %v77 = vld [vmem:[%s1 + $0xc4] sm:$0xf]
  %v78 = vld [vmem:[%s1 + $0xc8] sm:$0xf]
  %v79 = vld [vmem:[%s1 + $0xcc] sm:$0xf]
  %v80 = vld [vmem:[%s1 + $0xd0] sm:$0xf]
  %v81 = vld [vmem:[%s1 + $0xd4] sm:$0xf]
  %v82 = vld [vmem:[%s1 + $0xd8] sm:$0xf]
  %v83 = vld [vmem:[%s1 + $0xdc] sm:$0xf]
  %v84 = vld [vmem:[%s1 + $0xe0] sm:$0xf]
  %v85 = vld [vmem:[%s1 + $0xe4] sm:$0xf]
  %v86 = vld [vmem:[%s1 + $0xe8] sm:$0xf]
  %v87 = vld [vmem:[%s1 + $0xec] sm:$0xf]
  %v88 = vld [vmem:[%s1 + $0xf0] sm:$0xf]
  %v89 = vld [vmem:[%s1 + $0xf4] sm:$0xf]
  %v90 = vld [vmem:[%s1 + $0xf8] sm:$0xf]
  %v91 = vld [vmem:[%s1 + $0xfc] sm:$0xf]
  %v92 = vld [vmem:[%s2] sm:$0x1]
  %v94 = vperm.slane %v92, 0
  %v104 = vunpack.c.l.b16 %v20
  %v105 = vunpack.c.h.b16 %v20
  %v106 = vunpack.c.l.b16 %v21
  %v107 = vunpack.c.h.b16 %v21
  %v108 = vunpack.c.l.b16 %v22
  %v109 = vunpack.c.h.b16 %v22
  %v110 = vunpack.c.l.b16 %v23
  %v111 = vunpack.c.h.b16 %v23
  %v112 = vunpack.c.l.b16 %v24
  %v113 = vunpack.c.h.b16 %v24
  %v114 = vunpack.c.l.b16 %v25
  %v115 = vunpack.c.h.b16 %v25
  %v116 = vunpack.c.l.b16 %v26
  %v117 = vunpack.c.h.b16 %v26
  %v118 = vunpack.c.l.b16 %v27
  %v119 = vunpack.c.h.b16 %v27
  %v120 = vpack.c.b16 %v108, %v104
  %v121 = vpack.c.b16 %v109, %v105
  %v122 = vpack.c.b16 %v110, %v106
  %v123 = vpack.c.b16 %v111, %v107
  %v124 = vpack.c.b16 %v116, %v112
  %v125 = vpack.c.b16 %v117, %v113
  %v126 = vpack.c.b16 %v118, %v114
  %v127 = vpack.c.b16 %v119, %v115
  %v200 = vunpack.c.l.b16 %v28
  %v201 = vunpack.c.l.b16 %v29
  %v202 = vunpack.c.l.b16 %v30
  %v203 = vunpack.c.l.b16 %v31
  %v204 = vunpack.c.l.b16 %v32
  %v205 = vunpack.c.l.b16 %v33
  %v206 = vunpack.c.l.b16 %v34
  %v207 = vunpack.c.l.b16 %v35
  %v208 = vunpack.c.l.b16 %v36
  %v209 = vunpack.c.l.b16 %v37
  %v210 = vunpack.c.l.b16 %v38
  %v211 = vunpack.c.l.b16 %v39
  %v212 = vunpack.c.l.b16 %v40
  %v213 = vunpack.c.l.b16 %v41
  %v214 = vunpack.c.l.b16 %v42
  %v215 = vunpack.c.l.b16 %v43
  %v216 = vunpack.c.l.b16 %v44
  %v217 = vunpack.c.l.b16 %v45
  %v218 = vunpack.c.l.b16 %v46
  %v219 = vunpack.c.l.b16 %v47
  %v220 = vunpack.c.l.b16 %v48
  %v221 = vunpack.c.l.b16 %v49
  %v222 = vunpack.c.l.b16 %v50
  %v223 = vunpack.c.l.b16 %v51
  %v224 = vunpack.c.l.b16 %v52
  %v225 = vunpack.c.l.b16 %v53
  %v226 = vunpack.c.l.b16 %v54
  %v227 = vunpack.c.l.b16 %v55
  %v228 = vunpack.c.l.b16 %v56
  %v229 = vunpack.c.l.b16 %v57
  %v230 = vunpack.c.l.b16 %v58
  %v231 = vunpack.c.l.b16 %v59
  %v232 = vunpack.c.l.b16 %v60
  %v233 = vunpack.c.l.b16 %v61
  %v234 = vunpack.c.l.b16 %v62
  %v235 = vunpack.c.l.b16 %v63
  %v236 = vunpack.c.l.b16 %v64
  %v237 = vunpack.c.l.b16 %v65
  %v238 = vunpack.c.l.b16 %v66
  %v239 = vunpack.c.l.b16 %v67
  %v240 = vunpack.c.l.b16 %v68
  %v241 = vunpack.c.l.b16 %v69
  %v242 = vunpack.c.l.b16 %v70
  %v243 = vunpack.c.l.b16 %v71
  %v244 = vunpack.c.l.b16 %v72
  %v245 = vunpack.c.l.b16 %v73
  %v246 = vunpack.c.l.b16 %v74
  %v247 = vunpack.c.l.b16 %v75
  %v248 = vunpack.c.l.b16 %v76
  %v249 = vunpack.c.l.b16 %v77
  %v250 = vunpack.c.l.b16 %v78
  %v251 = vunpack.c.l.b16 %v79
  %v252 = vunpack.c.l.b16 %v80
  %v253 = vunpack.c.l.b16 %v81
  %v254 = vunpack.c.l.b16 %v82
  %v255 = vunpack.c.l.b16 %v83
  %v256 = vunpack.c.l.b16 %v84
  %v257 = vunpack.c.l.b16 %v85
  %v258 = vunpack.c.l.b16 %v86
  %v259 = vunpack.c.l.b16 %v87
  %v260 = vunpack.c.l.b16 %v88
  %v261 = vunpack.c.l.b16 %v89
  %v262 = vunpack.c.l.b16 %v90
  %v263 = vunpack.c.l.b16 %v91
  %v264 = vpack.c.b16 %v201, %v200
  %v265 = vpack.c.b16 %v203, %v202
  %v266 = vpack.c.b16 %v205, %v204
  %v267 = vpack.c.b16 %v207, %v206
  %v268 = vpack.c.b16 %v209, %v208
  %v269 = vpack.c.b16 %v211, %v210
  %v270 = vpack.c.b16 %v213, %v212
  %v271 = vpack.c.b16 %v215, %v214
  %v272 = vpack.c.b16 %v217, %v216
  %v273 = vpack.c.b16 %v219, %v218
  %v274 = vpack.c.b16 %v221, %v220
  %v275 = vpack.c.b16 %v223, %v222
  %v276 = vpack.c.b16 %v225, %v224
  %v277 = vpack.c.b16 %v227, %v226
  %v278 = vpack.c.b16 %v229, %v228
  %v279 = vpack.c.b16 %v231, %v230
  %v280 = vpack.c.b16 %v233, %v232
  %v281 = vpack.c.b16 %v235, %v234
  %v282 = vpack.c.b16 %v237, %v236
  %v283 = vpack.c.b16 %v239, %v238
  %v284 = vpack.c.b16 %v241, %v240
  %v285 = vpack.c.b16 %v243, %v242
  %v286 = vpack.c.b16 %v245, %v244
  %v287 = vpack.c.b16 %v247, %v246
  %v288 = vpack.c.b16 %v249, %v248
  %v289 = vpack.c.b16 %v251, %v250
  %v290 = vpack.c.b16 %v253, %v252
  %v291 = vpack.c.b16 %v255, %v254
  %v292 = vpack.c.b16 %v257, %v256
  %v293 = vpack.c.b16 %v259, %v258
  %v294 = vpack.c.b16 %v261, %v260
  %v295 = vpack.c.b16 %v263, %v262
  %328 = vmatpush.bf16.msra.mxu0 %v271
  %329 = vmatpush.bf16.msra.mxu0 %v270
  %330 = vmatpush.bf16.msra.mxu0 %v269
  %331 = vmatpush.bf16.msra.mxu0 %v268
  %332 = vmatpush.bf16.msra.mxu0 %v267
  %333 = vmatpush.bf16.msra.mxu0 %v266
  %334 = vmatpush.bf16.msra.mxu0 %v265
  %335 = vmatpush.bf16.msra.mxu0 %v264
  %336 = vmatmul.bf16.gmra.mxu0 %v120
  %v337 = vpop.f32.mrf.mxu0
  %v338 = vadd.f32 %v94, %v337
  %v339 = vpop.f32.mrf.mxu0
  %v340 = vadd.f32 %v94, %v339
  %341 = vmatmul.bf16.gmra.mxu0 %v124
  %v342 = vpop.f32.mrf.mxu0
  %v343 = vadd.f32 %v94, %v342
  %v344 = vpop.f32.mrf.mxu0
  %v345 = vadd.f32 %v94, %v344
  %346 = vdwg.mxu0
  %347 = vmatpush.bf16.msra.mxu0 %v279
  %348 = vmatpush.bf16.msra.mxu0 %v278
  %349 = vmatpush.bf16.msra.mxu0 %v277
  %350 = vmatpush.bf16.msra.mxu0 %v276
  %351 = vmatpush.bf16.msra.mxu0 %v275
  %352 = vmatpush.bf16.msra.mxu0 %v274
  %353 = vmatpush.bf16.msra.mxu0 %v273
  %354 = vmatpush.bf16.msra.mxu0 %v272
  %355 = vmatmul.bf16.gmra.mxu0 %v121
  %v356 = vpop.f32.mrf.mxu0
  %v357 = vadd.f32 %v338, %v356
  %v358 = vpop.f32.mrf.mxu0
  %v359 = vadd.f32 %v340, %v358
  %360 = vmatmul.bf16.gmra.mxu0 %v125
  %v361 = vpop.f32.mrf.mxu0
  %v362 = vadd.f32 %v343, %v361
  %v363 = vpop.f32.mrf.mxu0
  %v364 = vadd.f32 %v345, %v363
  %365 = vdwg.mxu0
  %366 = vmatpush.bf16.msra.mxu0 %v287
  %367 = vmatpush.bf16.msra.mxu0 %v286
  %368 = vmatpush.bf16.msra.mxu0 %v285
  %369 = vmatpush.bf16.msra.mxu0 %v284
  %370 = vmatpush.bf16.msra.mxu0 %v283
  %371 = vmatpush.bf16.msra.mxu0 %v282
  %372 = vmatpush.bf16.msra.mxu0 %v281
  %373 = vmatpush.bf16.msra.mxu0 %v280
  %374 = vmatmul.bf16.gmra.mxu0 %v122
  %v375 = vpop.f32.mrf.mxu0
  %v376 = vadd.f32 %v357, %v375
  %v377 = vpop.f32.mrf.mxu0
  %v378 = vadd.f32 %v359, %v377
  %379 = vmatmul.bf16.gmra.mxu0 %v126
  %v380 = vpop.f32.mrf.mxu0
  %v381 = vadd.f32 %v362, %v380
  %v382 = vpop.f32.mrf.mxu0
  %v383 = vadd.f32 %v364, %v382
  %384 = vdwg.mxu0
  %385 = vmatpush.bf16.msra.mxu0 %v295
  %386 = vmatpush.bf16.msra.mxu0 %v294
  %387 = vmatpush.bf16.msra.mxu0 %v293
  %388 = vmatpush.bf16.msra.mxu0 %v292
  %389 = vmatpush.bf16.msra.mxu0 %v291
  %390 = vmatpush.bf16.msra.mxu0 %v290
  %391 = vmatpush.bf16.msra.mxu0 %v289
  %392 = vmatpush.bf16.msra.mxu0 %v288
  %393 = vmatmul.bf16.gmra.mxu0 %v123
  %v394 = vpop.f32.mrf.mxu0
  %v395 = vadd.f32 %v376, %v394
  %v396 = vpop.f32.mrf.mxu0
  %v397 = vadd.f32 %v378, %v396
  %398 = vmatmul.bf16.gmra.mxu0 %v127
  %v399 = vpop.f32.mrf.mxu0
  %v400 = vadd.f32 %v381, %v399
  %v401 = vpop.f32.mrf.mxu0
  %v402 = vadd.f32 %v383, %v401
  %403 = vdwg.mxu0
  %vm404 = vcmask 523264
  %v405 = vsel %vm404, %v395, 0.0
  %v406 = vsel %vm404, %v397, 0.0
  %v407 = vadd.f32 %v405, %v406
  %v408 = vsel %vm404, %v400, 0.0
  %v409 = vadd.f32 %v407, %v408
  %v410 = vsel %vm404, %v402, 0.0
  %v411 = vadd.f32 %v409, %v410
  %v412 = vrot.slane %v411, 4
  %v413 = vadd.f32 %v411, %v412
  %v414 = vrot.slane %v413, 2
  %v415 = vadd.f32 %v413, %v414
  %v416 = vrot.slane %v415, 1
  %v417 = vadd.f32 %v415, %v416
  %v418 = vrcp.pop 32.0
  %v419 = vmul.f32 32.0, %v418
  %v420 = vsub.f32 1.0, %v419
  %v421 = vmul.f32 %v418, %v420
  %v422 = vadd.f32 %v418, %v421
  %vm423 = vweird.f32 %v418
  %v424 = vsel %vm423, %v418, %v422
  %v425 = vmul.f32 %v417, %v424
  %v426 = vsub.f32 %v395, %v425
  %v427 = vsub.f32 %v397, %v425
  %v428 = vsub.f32 %v400, %v425
  %v429 = vsub.f32 %v402, %v425
  %v430 = vmul.f32 %v426, %v426
  %v431 = vmul.f32 %v427, %v427
  %v432 = vmul.f32 %v428, %v428
  %v433 = vmul.f32 %v429, %v429
  %v434 = vsel %vm404, %v430, 0.0
  %v435 = vsel %vm404, %v431, 0.0
  %v436 = vadd.f32 %v434, %v435
  %v437 = vsel %vm404, %v432, 0.0
  %v438 = vadd.f32 %v436, %v437
  %v439 = vsel %vm404, %v433, 0.0
  %v440 = vadd.f32 %v438, %v439
  %v441 = vrot.slane %v440, 4
  %v442 = vadd.f32 %v440, %v441
  %v443 = vrot.slane %v442, 2
  %v444 = vadd.f32 %v442, %v443
  %v445 = vrot.slane %v444, 1
  %v446 = vadd.f32 %v444, %v445
  %v447 = vmul.f32 %v446, %v424
  %v448 = vld [vmem:[%s3] sm:$0x1]
  %v449 = vadd.f32 %v447, 1e-05
  %v450 = vrsqrt.pop %v449
  %v451 = vmul.f32 %v450, %v449
  %v452 = vmul.f32 %v451, %v450
  %v453 = vmul.f32 0.5, %v452
  %v454 = vsub.f32 1.5, %v453
  %v455 = vmul.f32 %v450, %v454
  %vm456 = vweird.f32 %v449
  %vm457 = vweird.f32 %v450
  %vm458 = vmor %vm456, %vm457
  %v459 = vsel %vm458, %v450, %v455
  %v460 = vmul.f32 %v448, %v459
  %v461 = vld [vmem:[%s4] sm:$0x1]
  %v462 = vmul.f32 %v425, %v460
  %v463 = vsub.f32 %v461, %v462
  %v465 = vperm.slane %v460, 0
  %v467 = vmul.f32 %v395, %v465
  %v468 = vmul.f32 %v397, %v465
  %v469 = vmul.f32 %v400, %v465
  %v470 = vmul.f32 %v402, %v465
  %v472 = vperm.slane %v463, 0
  %v474 = vadd.f32 %v467, %v472
  %v475 = vadd.f32 %v468, %v472
  %v476 = vadd.f32 %v469, %v472
  %v477 = vadd.f32 %v470, %v472
  %vm478 = vcmp.ge.f32.partialorder %v474, 0.0
  %vm479 = vcmp.ge.f32.partialorder %v475, 0.0
  %vm480 = vcmp.ge.f32.partialorder %v476, 0.0
  %vm481 = vcmp.ge.f32.partialorder %v477, 0.0
  %v482 = vmul.f32 %v474, 0.01
  %v483 = vmul.f32 %v475, 0.01
  %v484 = vmul.f32 %v476, 0.01
  %v485 = vmul.f32 %v477, 0.01
  %v486 = vsel %vm478, %v474, %v482
  %v487 = vsel %vm479, %v475, %v483
  %v488 = vsel %vm480, %v476, %v484
  %v489 = vsel %vm481, %v477, %v485
  %490 = vst.msk [vmem:[%s5] sm:$0xff] %vm404, %v486
  %491 = vst.msk [vmem:[%s5 + $0x8] sm:$0xff] %vm404, %v487
  %492 = vst.msk [vmem:[%s5 + $0x10] sm:$0xff] %vm404, %v488
  %493 = vst.msk [vmem:[%s5 + $0x18] sm:$0xff] %vm404, %v489
  // Predicated region
  $region22: #{discriminator_forward.8} parent=0 // pred_check
    _
  $region23: #{discriminator_forward.8} parent=0 // pred_check_branch
    %495 = sbr.rel (0) target = $region25
  $region24: #{discriminator_forward.8} parent=0 // pred_region
    _
  $region25: #{discriminator_forward.8} parent=0 // pred_fallthru
    _
  // Predicated region
  $region26: #{discriminator_forward.8} parent=0 // pred_check
    _
  $region27: #{discriminator_forward.8} parent=0 // pred_check_branch
    %497 = sbr.rel (0) target = $region29
  $region28: #{discriminator_forward.8} parent=0 // pred_region
    _
  $region29: #{discriminator_forward.8} parent=0 // pred_fallthru
    _

// kernel: discriminator_forward.9
$region0: #{discriminator_forward.9}
  #allocation0 [shape = 'u32[]', space=smem, size = 0x4, offset = 0x4, fixed_abs, tag = 'smem constant byte address 0x4 - core index']
  #allocation1 [shape = 'u32[72,128]{1,0:T(1,128)}', space=vmem, size = 0x9000, scoped, tag = 'internal scratch']
  %s0 = inlined_call_operand.vmem [shape: bf16[8,1024], index: 0, kind: input, shape index: {}]
  %s1 = inlined_call_operand.vmem [shape: bf16[1024,128], index: 1, kind: input, shape index: {}]
  %s2 = inlined_call_operand.vmem [shape: f32[1,128], index: 2, kind: input, shape index: {}]
  %s3 = inlined_call_operand.vmem [shape: f32[1,128], index: 3, kind: input, shape index: {}]
  %s4 = inlined_call_operand.vmem [shape: f32[1,128], index: 4, kind: input, shape index: {}]
  %s5 = inlined_call_operand.vmem [shape: f32[8,128], index: 5, kind: output, shape index: {}]
  %s6 = sld [smem:[#allocation0]]
  $region30: #{discriminator_forward.9} parent=0
    _
  %s8 = ssub.s32 1, %s6
  %s9 = scalar_select 0, %s8, %s6
  // Predicated region
  $region2: #{discriminator_forward.9} parent=0 // pred_check
    _
  $region3: #{discriminator_forward.9} parent=0 // pred_check_branch
    %11 = sbr.rel (0) target = $region5
  $region4: #{discriminator_forward.9} parent=0 // pred_region
    _
  $region5: #{discriminator_forward.9} parent=0 // pred_fallthru
    _
  // Predicated region
  $region6: #{discriminator_forward.9} parent=0 // pred_check
    _
  $region7: #{discriminator_forward.9} parent=0 // pred_check_branch
    %13 = sbr.rel (0) target = $region9
  $region8: #{discriminator_forward.9} parent=0 // pred_region
    _
  $region9: #{discriminator_forward.9} parent=0 // pred_fallthru
    _
  // Predicated region
  $region10: #{discriminator_forward.9} parent=0 // pred_check
    _
  $region11: #{discriminator_forward.9} parent=0 // pred_check_branch
    %15 = sbr.rel (0) target = $region13
  $region12: #{discriminator_forward.9} parent=0 // pred_region
    _
  $region13: #{discriminator_forward.9} parent=0 // pred_fallthru
    _
  // Predicated region
  $region14: #{discriminator_forward.9} parent=0 // pred_check
    _
  $region15: #{discriminator_forward.9} parent=0 // pred_check_branch
    %17 = sbr.rel (0) target = $region17
  $region16: #{discriminator_forward.9} parent=0 // pred_region
    _
  $region17: #{discriminator_forward.9} parent=0 // pred_fallthru
    _
  // Predicated region
  $region18: #{discriminator_forward.9} parent=0 // pred_check
    _
  $region19: #{discriminator_forward.9} parent=0 // pred_check_branch
    %19 = sbr.rel (0) target = $region21
  $region20: #{discriminator_forward.9} parent=0 // pred_region
    _
  $region21: #{discriminator_forward.9} parent=0 // pred_fallthru
    _
  %v20 = vld [vmem:[%s0] sm:$0xff]
  %v21 = vld [vmem:[%s0 + $0x8] sm:$0xff]
  %v22 = vld [vmem:[%s0 + $0x10] sm:$0xff]
  %v23 = vld [vmem:[%s0 + $0x18] sm:$0xff]
  %v24 = vld [vmem:[%s1] sm:$0xf]
  %v25 = vld [vmem:[%s1 + $0x4] sm:$0xf]
  %v26 = vld [vmem:[%s1 + $0x8] sm:$0xf]
  %v27 = vld [vmem:[%s1 + $0xc] sm:$0xf]
  %v28 = vld [vmem:[%s1 + $0x10] sm:$0xf]
  %v29 = vld [vmem:[%s1 + $0x14] sm:$0xf]
  %v30 = vld [vmem:[%s1 + $0x18] sm:$0xf]
  %v31 = vld [vmem:[%s1 + $0x1c] sm:$0xf]
  %v32 = vld [vmem:[%s1 + $0x20] sm:$0xf]
  %v33 = vld [vmem:[%s1 + $0x24] sm:$0xf]
  %v34 = vld [vmem:[%s1 + $0x28] sm:$0xf]
  %v35 = vld [vmem:[%s1 + $0x2c] sm:$0xf]
  %v36 = vld [vmem:[%s1 + $0x30] sm:$0xf]
  %v37 = vld [vmem:[%s1 + $0x34] sm:$0xf]
  %v38 = vld [vmem:[%s1 + $0x38] sm:$0xf]
  %v39 = vld [vmem:[%s1 + $0x3c] sm:$0xf]
  %v40 = vld [vmem:[%s1 + $0x40] sm:$0xf]
  %v41 = vld [vmem:[%s1 + $0x44] sm:$0xf]
  %v42 = vld [vmem:[%s1 + $0x48] sm:$0xf]
  %v43 = vld [vmem:[%s1 + $0x4c] sm:$0xf]
  %v44 = vld [vmem:[%s1 + $0x50] sm:$0xf]
  %v45 = vld [vmem:[%s1 + $0x54] sm:$0xf]
  %v46 = vld [vmem:[%s1 + $0x58] sm:$0xf]
  %v47 = vld [vmem:[%s1 + $0x5c] sm:$0xf]
  %v48 = vld [vmem:[%s1 + $0x60] sm:$0xf]
  %v49 = vld [vmem:[%s1 + $0x64] sm:$0xf]
  %v50 = vld [vmem:[%s1 + $0x68] sm:$0xf]
  %v51 = vld [vmem:[%s1 + $0x6c] sm:$0xf]
  %v52 = vld [vmem:[%s1 + $0x70] sm:$0xf]
  %v53 = vld [vmem:[%s1 + $0x74] sm:$0xf]
  %v54 = vld [vmem:[%s1 + $0x78] sm:$0xf]
  %v55 = vld [vmem:[%s1 + $0x7c] sm:$0xf]
  %v56 = vld [vmem:[%s1 + $0x80] sm:$0xf]
  %v57 = vld [vmem:[%s1 + $0x84] sm:$0xf]
  %v58 = vld [vmem:[%s1 + $0x88] sm:$0xf]
  %v59 = vld [vmem:[%s1 + $0x8c] sm:$0xf]
  %v60 = vld [vmem:[%s1 + $0x90] sm:$0xf]
  %v61 = vld [vmem:[%s1 + $0x94] sm:$0xf]
  %v62 = vld [vmem:[%s1 + $0x98] sm:$0xf]
  %v63 = vld [vmem:[%s1 + $0x9c] sm:$0xf]
  %v64 = vld [vmem:[%s1 + $0xa0] sm:$0xf]
  %v65 = vld [vmem:[%s1 + $0xa4] sm:$0xf]
  %v66 = vld [vmem:[%s1 + $0xa8] sm:$0xf]
  %v67 = vld [vmem:[%s1 + $0xac] sm:$0xf]
  %v68 = vld [vmem:[%s1 + $0xb0] sm:$0xf]
  %v69 = vld [vmem:[%s1 + $0xb4] sm:$0xf]
  %v70 = vld [vmem:[%s1 + $0xb8] sm:$0xf]
  %v71 = vld [vmem:[%s1 + $0xbc] sm:$0xf]
  %v72 = vld [vmem:[%s1 + $0xc0] sm:$0xf]
  %v73 = vld [vmem:[%s1 + $0xc4] sm:$0xf]
  %v74 = vld [vmem:[%s1 + $0xc8] sm:$0xf]
  %v75 = vld [vmem:[%s1 + $0xcc] sm:$0xf]
  %v76 = vld [vmem:[%s1 + $0xd0] sm:$0xf]
  %v77 = vld [vmem:[%s1 + $0xd4] sm:$0xf]
  %v78 = vld [vmem:[%s1 + $0xd8] sm:$0xf]
  %v79 = vld [vmem:[%s1 + $0xdc] sm:$0xf]
  %v80 = vld [vmem:[%s1 + $0xe0] sm:$0xf]
  %v81 = vld [vmem:[%s1 + $0xe4] sm:$0xf]
  %v82 = vld [vmem:[%s1 + $0xe8] sm:$0xf]
  %v83 = vld [vmem:[%s1 + $0xec] sm:$0xf]
  %v84 = vld [vmem:[%s1 + $0xf0] sm:$0xf]
  %v85 = vld [vmem:[%s1 + $0xf4] sm:$0xf]
  %v86 = vld [vmem:[%s1 + $0xf8] sm:$0xf]
  %v87 = vld [vmem:[%s1 + $0xfc] sm:$0xf]
  %v88 = vld [vmem:[%s1 + $0x100] sm:$0xf]
  %v89 = vld [vmem:[%s1 + $0x104] sm:$0xf]
  %v90 = vld [vmem:[%s1 + $0x108] sm:$0xf]
  %v91 = vld [vmem:[%s1 + $0x10c] sm:$0xf]
  %v92 = vld [vmem:[%s1 + $0x110] sm:$0xf]
  %v93 = vld [vmem:[%s1 + $0x114] sm:$0xf]
  %v94 = vld [vmem:[%s1 + $0x118] sm:$0xf]
  %v95 = vld [vmem:[%s1 + $0x11c] sm:$0xf]
  %v96 = vld [vmem:[%s1 + $0x120] sm:$0xf]
  %v97 = vld [vmem:[%s1 + $0x124] sm:$0xf]
  %v98 = vld [vmem:[%s1 + $0x128] sm:$0xf]
  %v99 = vld [vmem:[%s1 + $0x12c] sm:$0xf]
  %v100 = vld [vmem:[%s1 + $0x130] sm:$0xf]
  %v101 = vld [vmem:[%s1 + $0x134] sm:$0xf]
  %v102 = vld [vmem:[%s1 + $0x138] sm:$0xf]
  %v103 = vld [vmem:[%s1 + $0x13c] sm:$0xf]
  %v104 = vld [vmem:[%s1 + $0x140] sm:$0xf]
  %v105 = vld [vmem:[%s1 + $0x144] sm:$0xf]
  %v106 = vld [vmem:[%s1 + $0x148] sm:$0xf]
  %v107 = vld [vmem:[%s1 + $0x14c] sm:$0xf]
  %v108 = vld [vmem:[%s1 + $0x150] sm:$0xf]
  %v109 = vld [vmem:[%s1 + $0x154] sm:$0xf]
  %v110 = vld [vmem:[%s1 + $0x158] sm:$0xf]
  %v111 = vld [vmem:[%s1 + $0x15c] sm:$0xf]
  %v112 = vld [vmem:[%s1 + $0x160] sm:$0xf]
  %v113 = vld [vmem:[%s1 + $0x164] sm:$0xf]
  %v114 = vld [vmem:[%s1 + $0x168] sm:$0xf]
  %v115 = vld [vmem:[%s1 + $0x16c] sm:$0xf]
  %v116 = vld [vmem:[%s1 + $0x170] sm:$0xf]
  %v117 = vld [vmem:[%s1 + $0x174] sm:$0xf]
  %v118 = vld [vmem:[%s1 + $0x178] sm:$0xf]
  %v119 = vld [vmem:[%s1 + $0x17c] sm:$0xf]
  %v120 = vld [vmem:[%s1 + $0x180] sm:$0xf]
  %v121 = vld [vmem:[%s1 + $0x184] sm:$0xf]
  %v122 = vld [vmem:[%s1 + $0x188] sm:$0xf]
  %v123 = vld [vmem:[%s1 + $0x18c] sm:$0xf]
  %v124 = vld [vmem:[%s1 + $0x190] sm:$0xf]
  %v125 = vld [vmem:[%s1 + $0x194] sm:$0xf]
  %v126 = vld [vmem:[%s1 + $0x198] sm:$0xf]
  %v127 = vld [vmem:[%s1 + $0x19c] sm:$0xf]
  %v128 = vld [vmem:[%s1 + $0x1a0] sm:$0xf]
  %v129 = vld [vmem:[%s1 + $0x1a4] sm:$0xf]
  %v130 = vld [vmem:[%s1 + $0x1a8] sm:$0xf]
  %v131 = vld [vmem:[%s1 + $0x1ac] sm:$0xf]
  %v132 = vld [vmem:[%s1 + $0x1b0] sm:$0xf]
  %v133 = vld [vmem:[%s1 + $0x1b4] sm:$0xf]
  %v134 = vld [vmem:[%s1 + $0x1b8] sm:$0xf]
  %v135 = vld [vmem:[%s1 + $0x1bc] sm:$0xf]
  %v136 = vld [vmem:[%s1 + $0x1c0] sm:$0xf]
  %v137 = vld [vmem:[%s1 + $0x1c4] sm:$0xf]
  %v138 = vld [vmem:[%s1 + $0x1c8] sm:$0xf]
  %v139 = vld [vmem:[%s1 + $0x1cc] sm:$0xf]
  %v140 = vld [vmem:[%s1 + $0x1d0] sm:$0xf]
  %v141 = vld [vmem:[%s1 + $0x1d4] sm:$0xf]
  %v142 = vld [vmem:[%s1 + $0x1d8] sm:$0xf]
  %v143 = vld [vmem:[%s1 + $0x1dc] sm:$0xf]
  %v144 = vld [vmem:[%s1 + $0x1e0] sm:$0xf]
  %v145 = vld [vmem:[%s1 + $0x1e4] sm:$0xf]
  %v146 = vld [vmem:[%s1 + $0x1e8] sm:$0xf]
  %v147 = vld [vmem:[%s1 + $0x1ec] sm:$0xf]
  %v148 = vld [vmem:[%s1 + $0x1f0] sm:$0xf]
  %v149 = vld [vmem:[%s1 + $0x1f4] sm:$0xf]
  %v150 = vld [vmem:[%s1 + $0x1f8] sm:$0xf]
  %v151 = vld [vmem:[%s1 + $0x1fc] sm:$0xf]
  %v152 = vld [vmem:[%s2] sm:$0x1]
  %v154 = vperm.slane %v152, 0
  %v160 = vunpack.c.l.b16 %v20
  %v161 = vunpack.c.h.b16 %v20
  %v162 = vunpack.c.l.b16 %v21
  %v163 = vunpack.c.h.b16 %v21
  %v164 = vunpack.c.l.b16 %v22
  %v165 = vunpack.c.h.b16 %v22
  %v166 = vunpack.c.l.b16 %v23
  %v167 = vunpack.c.h.b16 %v23
  %v168 = vpack.c.b16 %v160, %v160
  %v169 = vpack.c.b16 %v161, %v161
  %v170 = vpack.c.b16 %v162, %v162
  %v171 = vpack.c.b16 %v163, %v163
  %v172 = vpack.c.b16 %v164, %v164
  %v173 = vpack.c.b16 %v165, %v165
  %v174 = vpack.c.b16 %v166, %v166
  %v175 = vpack.c.b16 %v167, %v167
  %v312 = vunpack.c.l.b16 %v24
  %v313 = vunpack.c.l.b16 %v25
  %v314 = vunpack.c.l.b16 %v26
  %v315 = vunpack.c.l.b16 %v27
  %v316 = vunpack.c.l.b16 %v28
  %v317 = vunpack.c.l.b16 %v29
  %v318 = vunpack.c.l.b16 %v30
  %v319 = vunpack.c.l.b16 %v31
  %v320 = vunpack.c.l.b16 %v32
  %v321 = vunpack.c.l.b16 %v33
  %v322 = vunpack.c.l.b16 %v34
  %v323 = vunpack.c.l.b16 %v35
  %v324 = vunpack.c.l.b16 %v36
  %v325 = vunpack.c.l.b16 %v37
  %v326 = vunpack.c.l.b16 %v38
  %v327 = vunpack.c.l.b16 %v39
  %v328 = vunpack.c.l.b16 %v40
  %v329 = vunpack.c.l.b16 %v41
  %v330 = vunpack.c.l.b16 %v42
  %v331 = vunpack.c.l.b16 %v43
  %v332 = vunpack.c.l.b16 %v44
  %v333 = vunpack.c.l.b16 %v45
  %v334 = vunpack.c.l.b16 %v46
  %v335 = vunpack.c.l.b16 %v47
  %v336 = vunpack.c.l.b16 %v48
  %v337 = vunpack.c.l.b16 %v49
  %v338 = vunpack.c.l.b16 %v50
  %v339 = vunpack.c.l.b16 %v51
  %v340 = vunpack.c.l.b16 %v52
  %v341 = vunpack.c.l.b16 %v53
  %v342 = vunpack.c.l.b16 %v54
  %v343 = vunpack.c.l.b16 %v55
  %v344 = vunpack.c.l.b16 %v56
  %v345 = vunpack.c.l.b16 %v57
  %v346 = vunpack.c.l.b16 %v58
  %v347 = vunpack.c.l.b16 %v59
  %v348 = vunpack.c.l.b16 %v60
  %v349 = vunpack.c.l.b16 %v61
  %v350 = vunpack.c.l.b16 %v62
  %v351 = vunpack.c.l.b16 %v63
  %v352 = vunpack.c.l.b16 %v64
  %v353 = vunpack.c.l.b16 %v65
  %v354 = vunpack.c.l.b16 %v66
  %v355 = vunpack.c.l.b16 %v67
  %v356 = vunpack.c.l.b16 %v68
  %v357 = vunpack.c.l.b16 %v69
  %v358 = vunpack.c.l.b16 %v70
  %v359 = vunpack.c.l.b16 %v71
  %v360 = vunpack.c.l.b16 %v72
  %v361 = vunpack.c.l.b16 %v73
  %v362 = vunpack.c.l.b16 %v74
  %v363 = vunpack.c.l.b16 %v75
  %v364 = vunpack.c.l.b16 %v76
  %v365 = vunpack.c.l.b16 %v77
  %v366 = vunpack.c.l.b16 %v78
  %v367 = vunpack.c.l.b16 %v79
  %v368 = vunpack.c.l.b16 %v80
  %v369 = vunpack.c.l.b16 %v81
  %v370 = vunpack.c.l.b16 %v82
  %v371 = vunpack.c.l.b16 %v83
  %v372 = vunpack.c.l.b16 %v84
  %v373 = vunpack.c.l.b16 %v85
  %v374 = vunpack.c.l.b16 %v86
  %v375 = vunpack.c.l.b16 %v87
  %v376 = vunpack.c.l.b16 %v88
  %v377 = vunpack.c.l.b16 %v89
  %v378 = vunpack.c.l.b16 %v90
  %v379 = vunpack.c.l.b16 %v91
  %v380 = vunpack.c.l.b16 %v92
  %v381 = vunpack.c.l.b16 %v93
  %v382 = vunpack.c.l.b16 %v94
  %v383 = vunpack.c.l.b16 %v95
  %v384 = vunpack.c.l.b16 %v96
  %v385 = vunpack.c.l.b16 %v97
  %v386 = vunpack.c.l.b16 %v98
  %v387 = vunpack.c.l.b16 %v99
  %v388 = vunpack.c.l.b16 %v100
  %v389 = vunpack.c.l.b16 %v101
  %v390 = vunpack.c.l.b16 %v102
  %v391 = vunpack.c.l.b16 %v103
  %v392 = vunpack.c.l.b16 %v104
  %v393 = vunpack.c.l.b16 %v105
  %v394 = vunpack.c.l.b16 %v106
  %v395 = vunpack.c.l.b16 %v107
  %v396 = vunpack.c.l.b16 %v108
  %v397 = vunpack.c.l.b16 %v109
  %v398 = vunpack.c.l.b16 %v110
  %v399 = vunpack.c.l.b16 %v111
  %v400 = vunpack.c.l.b16 %v112
  %v401 = vunpack.c.l.b16 %v113
  %v402 = vunpack.c.l.b16 %v114
  %v403 = vunpack.c.l.b16 %v115
  %v404 = vunpack.c.l.b16 %v116
  %v405 = vunpack.c.l.b16 %v117
  %v406 = vunpack.c.l.b16 %v118
  %v407 = vunpack.c.l.b16 %v119
  %v408 = vunpack.c.l.b16 %v120
  %v409 = vunpack.c.l.b16 %v121
  %v410 = vunpack.c.l.b16 %v122
  %v411 = vunpack.c.l.b16 %v123
  %v412 = vunpack.c.l.b16 %v124
  %v413 = vunpack.c.l.b16 %v125
  %v414 = vunpack.c.l.b16 %v126
  %v415 = vunpack.c.l.b16 %v127
  %v416 = vunpack.c.l.b16 %v128
  %v417 = vunpack.c.l.b16 %v129
  %v418 = vunpack.c.l.b16 %v130
  %v419 = vunpack.c.l.b16 %v131
  %v420 = vunpack.c.l.b16 %v132
  %v421 = vunpack.c.l.b16 %v133
  %v422 = vunpack.c.l.b16 %v134
  %v423 = vunpack.c.l.b16 %v135
  %v424 = vunpack.c.l.b16 %v136
  %v425 = vunpack.c.l.b16 %v137
  %v426 = vunpack.c.l.b16 %v138
  %v427 = vunpack.c.l.b16 %v139
  %v428 = vunpack.c.l.b16 %v140
  %v429 = vunpack.c.l.b16 %v141
  %v430 = vunpack.c.l.b16 %v142
  %v431 = vunpack.c.l.b16 %v143
  %v432 = vunpack.c.l.b16 %v144
  %v433 = vunpack.c.l.b16 %v145
  %v434 = vunpack.c.l.b16 %v146
  %v435 = vunpack.c.l.b16 %v147
  %v436 = vunpack.c.l.b16 %v148
  %v437 = vunpack.c.l.b16 %v149
  %v438 = vunpack.c.l.b16 %v150
  %v439 = vunpack.c.l.b16 %v151
  %v440 = vpack.c.b16 %v313, %v312
  %v441 = vpack.c.b16 %v315, %v314
  %v442 = vpack.c.b16 %v317, %v316
  %v443 = vpack.c.b16 %v319, %v318
  %v444 = vpack.c.b16 %v321, %v320
  %v445 = vpack.c.b16 %v323, %v322
  %v446 = vpack.c.b16 %v325, %v324
  %v447 = vpack.c.b16 %v327, %v326
  %v448 = vpack.c.b16 %v329, %v328
  %v449 = vpack.c.b16 %v331, %v330
  %v450 = vpack.c.b16 %v333, %v332
  %v451 = vpack.c.b16 %v335, %v334
  %v452 = vpack.c.b16 %v337, %v336
  %v453 = vpack.c.b16 %v339, %v338
  %v454 = vpack.c.b16 %v341, %v340
  %v455 = vpack.c.b16 %v343, %v342
  %v456 = vpack.c.b16 %v345, %v344
  %v457 = vpack.c.b16 %v347, %v346
  %v458 = vpack.c.b16 %v349, %v348
  %v459 = vpack.c.b16 %v351, %v350
  %v460 = vpack.c.b16 %v353, %v352
  %v461 = vpack.c.b16 %v355, %v354
  %v462 = vpack.c.b16 %v357, %v356
  %v463 = vpack.c.b16 %v359, %v358
  %v464 = vpack.c.b16 %v361, %v360
  %v465 = vpack.c.b16 %v363, %v362
  %v466 = vpack.c.b16 %v365, %v364
  %v467 = vpack.c.b16 %v367, %v366
  %v468 = vpack.c.b16 %v369, %v368
  %v469 = vpack.c.b16 %v371, %v370
  %v470 = vpack.c.b16 %v373, %v372
  %v471 = vpack.c.b16 %v375, %v374
  %v472 = vpack.c.b16 %v377, %v376
  %v473 = vpack.c.b16 %v379, %v378
  %v474 = vpack.c.b16 %v381, %v380
  %v475 = vpack.c.b16 %v383, %v382
  %v476 = vpack.c.b16 %v385, %v384
  %v477 = vpack.c.b16 %v387, %v386
  %v478 = vpack.c.b16 %v389, %v388
  %v479 = vpack.c.b16 %v391, %v390
  %v480 = vpack.c.b16 %v393, %v392
  %v481 = vpack.c.b16 %v395, %v394
  %v482 = vpack.c.b16 %v397, %v396
  %v483 = vpack.c.b16 %v399, %v398
  %v484 = vpack.c.b16 %v401, %v400
  %v485 = vpack.c.b16 %v403, %v402
  %v486 = vpack.c.b16 %v405, %v404
  %v487 = vpack.c.b16 %v407, %v406
  %v488 = vpack.c.b16 %v409, %v408
  %v489 = vpack.c.b16 %v411, %v410
  %v490 = vpack.c.b16 %v413, %v412
  %v491 = vpack.c.b16 %v415, %v414
  %v492 = vpack.c.b16 %v417, %v416
  %v493 = vpack.c.b16 %v419, %v418
  %v494 = vpack.c.b16 %v421, %v420
  %v495 = vpack.c.b16 %v423, %v422
  %v496 = vpack.c.b16 %v425, %v424
  %v497 = vpack.c.b16 %v427, %v426
  %v498 = vpack.c.b16 %v429, %v428
  %v499 = vpack.c.b16 %v431, %v430
  %v500 = vpack.c.b16 %v433, %v432
  %v501 = vpack.c.b16 %v435, %v434
  %v502 = vpack.c.b16 %v437, %v436
  %v503 = vpack.c.b16 %v439, %v438
  %568 = vmatpush.bf16.msra.mxu0 %v447
  %569 = vmatpush.bf16.msra.mxu0 %v446
  %570 = vmatpush.bf16.msra.mxu0 %v445
  %571 = vmatpush.bf16.msra.mxu0 %v444
  %572 = vmatpush.bf16.msra.mxu0 %v443
  %573 = vmatpush.bf16.msra.mxu0 %v442
  %574 = vmatpush.bf16.msra.mxu0 %v441
  %575 = vmatpush.bf16.msra.mxu0 %v440
  %576 = vmatmul.bf16.gmra.mxu0 %v168
  %v577 = vpop.f32.mrf.mxu0
  %v578 = vadd.f32 %v154, %v577
  %v579 = vpop.f32.mrf.mxu0
  %580 = vdwg.mxu0
  %581 = vmatpush.bf16.msra.mxu0 %v455
  %582 = vmatpush.bf16.msra.mxu0 %v454
  %583 = vmatpush.bf16.msra.mxu0 %v453
  %584 = vmatpush.bf16.msra.mxu0 %v452
  %585 = vmatpush.bf16.msra.mxu0 %v451
  %586 = vmatpush.bf16.msra.mxu0 %v450
  %587 = vmatpush.bf16.msra.mxu0 %v449
  %588 = vmatpush.bf16.msra.mxu0 %v448
  %589 = vmatmul.bf16.gmra.mxu0 %v169
  %v590 = vpop.f32.mrf.mxu0
  %v591 = vadd.f32 %v578, %v590
  %v592 = vpop.f32.mrf.mxu0
  %593 = vdwg.mxu0
  %594 = vmatpush.bf16.msra.mxu0 %v463
  %595 = vmatpush.bf16.msra.mxu0 %v462
  %596 = vmatpush.bf16.msra.mxu0 %v461
  %597 = vmatpush.bf16.msra.mxu0 %v460
  %598 = vmatpush.bf16.msra.mxu0 %v459
  %599 = vmatpush.bf16.msra.mxu0 %v458
  %600 = vmatpush.bf16.msra.mxu0 %v457
  %601 = vmatpush.bf16.msra.mxu0 %v456
  %602 = vmatmul.bf16.gmra.mxu0 %v170
  %v603 = vpop.f32.mrf.mxu0
  %v604 = vadd.f32 %v591, %v603
  %v605 = vpop.f32.mrf.mxu0
  %606 = vdwg.mxu0
  %607 = vmatpush.bf16.msra.mxu0 %v471
  %608 = vmatpush.bf16.msra.mxu0 %v470
  %609 = vmatpush.bf16.msra.mxu0 %v469
  %610 = vmatpush.bf16.msra.mxu0 %v468
  %611 = vmatpush.bf16.msra.mxu0 %v467
  %612 = vmatpush.bf16.msra.mxu0 %v466
  %613 = vmatpush.bf16.msra.mxu0 %v465
  %614 = vmatpush.bf16.msra.mxu0 %v464
  %615 = vmatmul.bf16.gmra.mxu0 %v171
  %v616 = vpop.f32.mrf.mxu0
  %v617 = vadd.f32 %v604, %v616
  %v618 = vpop.f32.mrf.mxu0
  %619 = vdwg.mxu0
  %620 = vmatpush.bf16.msra.mxu0 %v479
  %621 = vmatpush.bf16.msra.mxu0 %v478
  %622 = vmatpush.bf16.msra.mxu0 %v477
  %623 = vmatpush.bf16.msra.mxu0 %v476
  %624 = vmatpush.bf16.msra.mxu0 %v475
  %625 = vmatpush.bf16.msra.mxu0 %v474
  %626 = vmatpush.bf16.msra.mxu0 %v473
  %627 = vmatpush.bf16.msra.mxu0 %v472
  %628 = vmatmul.bf16.gmra.mxu0 %v172
  %v629 = vpop.f32.mrf.mxu0
  %v630 = vadd.f32 %v617, %v629
  %v631 = vpop.f32.mrf.mxu0
  %632 = vdwg.mxu0
  %633 = vmatpush.bf16.msra.mxu0 %v487
  %634 = vmatpush.bf16.msra.mxu0 %v486
  %635 = vmatpush.bf16.msra.mxu0 %v485
  %636 = vmatpush.bf16.msra.mxu0 %v484
  %637 = vmatpush.bf16.msra.mxu0 %v483
  %638 = vmatpush.bf16.msra.mxu0 %v482
  %639 = vmatpush.bf16.msra.mxu0 %v481
  %640 = vmatpush.bf16.msra.mxu0 %v480
  %641 = vmatmul.bf16.gmra.mxu0 %v173
  %v642 = vpop.f32.mrf.mxu0
  %v643 = vadd.f32 %v630, %v642
  %v644 = vpop.f32.mrf.mxu0
  %645 = vdwg.mxu0
  %646 = vmatpush.bf16.msra.mxu0 %v495
  %647 = vmatpush.bf16.msra.mxu0 %v494
  %648 = vmatpush.bf16.msra.mxu0 %v493
  %649 = vmatpush.bf16.msra.mxu0 %v492
  %650 = vmatpush.bf16.msra.mxu0 %v491
  %651 = vmatpush.bf16.msra.mxu0 %v490
  %652 = vmatpush.bf16.msra.mxu0 %v489
  %653 = vmatpush.bf16.msra.mxu0 %v488
  %654 = vmatmul.bf16.gmra.mxu0 %v174
  %v655 = vpop.f32.mrf.mxu0
  %v656 = vadd.f32 %v643, %v655
  %v657 = vpop.f32.mrf.mxu0
  %658 = vdwg.mxu0
  %659 = vmatpush.bf16.msra.mxu0 %v503
  %660 = vmatpush.bf16.msra.mxu0 %v502
  %661 = vmatpush.bf16.msra.mxu0 %v501
  %662 = vmatpush.bf16.msra.mxu0 %v500
  %663 = vmatpush.bf16.msra.mxu0 %v499
  %664 = vmatpush.bf16.msra.mxu0 %v498
  %665 = vmatpush.bf16.msra.mxu0 %v497
  %666 = vmatpush.bf16.msra.mxu0 %v496
  %667 = vmatmul.bf16.gmra.mxu0 %v175
  %v668 = vpop.f32.mrf.mxu0
  %v669 = vadd.f32 %v656, %v668
  %v670 = vpop.f32.mrf.mxu0
  %671 = vdwg.mxu0
  %v672 = vrot.slane %v669, 4
  %v673 = vadd.f32 %v669, %v672
  %v674 = vrot.slane %v673, 2
  %v675 = vadd.f32 %v673, %v674
  %v676 = vrot.slane %v675, 1
  %v677 = vadd.f32 %v675, %v676
  %v678 = vrcp.pop 8.0
  %v679 = vmul.f32 8.0, %v678
  %v680 = vsub.f32 1.0, %v679
  %v681 = vmul.f32 %v678, %v680
  %v682 = vadd.f32 %v678, %v681
  %vm683 = vweird.f32 %v678
  %v684 = vsel %vm683, %v678, %v682
  %v685 = vmul.f32 %v677, %v684
  %v686 = vsub.f32 %v669, %v685
  %v687 = vmul.f32 %v686, %v686
  %v688 = vrot.slane %v687, 4
  %v689 = vadd.f32 %v687, %v688
  %v690 = vrot.slane %v689, 2
  %v691 = vadd.f32 %v689, %v690
  %v692 = vrot.slane %v691, 1
  %v693 = vadd.f32 %v691, %v692
  %v694 = vmul.f32 %v693, %v684
  %v695 = vld [vmem:[%s3] sm:$0x1]
  %v696 = vadd.f32 %v694, 1e-05
  %v697 = vrsqrt.pop %v696
  %v698 = vmul.f32 %v697, %v696
  %v699 = vmul.f32 %v698, %v697
  %v700 = vmul.f32 0.5, %v699
  %v701 = vsub.f32 1.5, %v700
  %v702 = vmul.f32 %v697, %v701
  %vm703 = vweird.f32 %v696
  %vm704 = vweird.f32 %v697
  %vm705 = vmor %vm703, %vm704
  %v706 = vsel %vm705, %v697, %v702
  %v707 = vmul.f32 %v695, %v706
  %v708 = vld [vmem:[%s4] sm:$0x1]
  %v709 = vmul.f32 %v685, %v707
  %v710 = vsub.f32 %v708, %v709
  %v712 = vperm.slane %v707, 0
  %v714 = vmul.f32 %v669, %v712
  %v716 = vperm.slane %v710, 0
  %v718 = vadd.f32 %v714, %v716
  %vm719 = vcmp.ge.f32.partialorder %v718, 0.0
  %v720 = vmul.f32 %v718, 0.01
  %v721 = vsel %vm719, %v718, %v720
  %722 = vst [vmem:[%s5] sm:$0xff] %v721
  // Predicated region
  $region22: #{discriminator_forward.9} parent=0 // pred_check
    _
  $region23: #{discriminator_forward.9} parent=0 // pred_check_branch
    %724 = sbr.rel (0) target = $region25
  $region24: #{discriminator_forward.9} parent=0 // pred_region
    _
  $region25: #{discriminator_forward.9} parent=0 // pred_fallthru
    _
  // Predicated region
  $region26: #{discriminator_forward.9} parent=0 // pred_check
    _
  $region27: #{discriminator_forward.9} parent=0 // pred_check_branch
    %726 = sbr.rel (0) target = $region29
  $region28: #{discriminator_forward.9} parent=0 // pred_region
    _
  $region29: #{discriminator_forward.9} parent=0 // pred_fallthru
    _

</llo_original>
